<compile_context>
chip_gen: v7x
topology: tpu7x:2x2x1
jax: 0.10.0
libtpu: 0.0.40
codegen_flags: <defaults>
</compile_context>

<pallas_src>
import math

import jax
import jax.numpy as jnp
from jax.experimental import pallas as pl
from jax.experimental.pallas import tpu as pltpu


# ----------------------------------------------------------------------------
# Helpers
# ----------------------------------------------------------------------------

def _divisor_tile(n, target, step):
    """Largest multiple of `step` that is <= target and divides n; else n (full extent)."""
    if n <= target:
        return n
    t = (target // step) * step
    while t >= step:
        if n % t == 0:
            return t
        t -= step
    return n


# ----------------------------------------------------------------------------
# Fused conv matmul: bf16 MXU matmul (+ optional residual) + per-channel stats
# ----------------------------------------------------------------------------

def _make_conv_matmul_kernel(has_residual):
    if has_residual:
        def kernel(a_ref, b_ref, r_ref, o_ref, s_ref, q_ref):
            @pl.when(pl.program_id(0) == 0)
            def _():
                s_ref[...] = jnp.zeros_like(s_ref)
                q_ref[...] = jnp.zeros_like(q_ref)
            acc = jnp.dot(a_ref[...], b_ref[...], preferred_element_type=jnp.float32)
            acc = acc + r_ref[...].astype(jnp.float32)
            o_ref[...] = acc.astype(o_ref.dtype)
            s_ref[...] += jnp.sum(acc, axis=0, keepdims=True)
            q_ref[...] += jnp.sum(acc * acc, axis=0, keepdims=True)
        return kernel

    def kernel(a_ref, b_ref, o_ref, s_ref, q_ref):
        @pl.when(pl.program_id(0) == 0)
        def _():
            s_ref[...] = jnp.zeros_like(s_ref)
            q_ref[...] = jnp.zeros_like(q_ref)
        acc = jnp.dot(a_ref[...], b_ref[...], preferred_element_type=jnp.float32)
        o_ref[...] = acc.astype(o_ref.dtype)
        s_ref[...] += jnp.sum(acc, axis=0, keepdims=True)
        q_ref[...] += jnp.sum(acc * acc, axis=0, keepdims=True)
    return kernel


def conv_matmul_stats(a_bf16, w_bf16, residual=None, row_tile=512):
    """C = A @ W (+ residual) -> (bf16 (M,N), f32 (N,) col-sum, f32 (N,) col-sum-of-squares).

    A:(M,K) bf16, W:(K,N) bf16, residual:(M,N) bf16 (optional).  K and N are full-extent;
    the grid runs over rows only and is 'arbitrary' because the stats outputs are
    grid-resident accumulators.  row_tile=512 (multiple of 16 for bf16 sublane packing)
    keeps VMEM comfortable even on v7x's 32 MiB scoped default at WRN-28-10 widths.
    """
    M, K = a_bf16.shape
    K2, N = w_bf16.shape
    assert K == K2
    tm = _divisor_tile(M, row_tile, 16)

    in_specs = [pl.BlockSpec((tm, K), lambda i: (i, 0)),
                pl.BlockSpec((K, N), lambda i: (0, 0))]
    operands = [a_bf16, w_bf16]
    if residual is not None:
        assert residual.shape == (M, N)
        in_specs.append(pl.BlockSpec((tm, N), lambda i: (i, 0)))
        operands.append(residual)

    out, s, q = pl.pallas_call(
        _make_conv_matmul_kernel(residual is not None),
        out_shape=(jax.ShapeDtypeStruct((M, N), jnp.bfloat16),
                   jax.ShapeDtypeStruct((1, N), jnp.float32),
                   jax.ShapeDtypeStruct((1, N), jnp.float32)),
        grid_spec=pltpu.PrefetchScalarGridSpec(
            num_scalar_prefetch=0,
            grid=(M // tm,),
            in_specs=in_specs,
            out_specs=(pl.BlockSpec((tm, N), lambda i: (i, 0)),
                       pl.BlockSpec((1, N), lambda i: (0, 0)),
                       pl.BlockSpec((1, N), lambda i: (0, 0))),
        ),
        compiler_params=pltpu.CompilerParams(
            dimension_semantics=("arbitrary",)),
    )(*operands)
    return out, s[0], q[0]


# ----------------------------------------------------------------------------
# Lane-dense affine + ReLU (BN apply) and fused affine + ReLU + global-avg-pool
# ----------------------------------------------------------------------------

def _affine_relu_kernel(x_ref, s_ref, b_ref, o_ref):
    y = jnp.maximum(x_ref[...].astype(jnp.float32) * s_ref[...] + b_ref[...], 0.0)
    o_ref[...] = y.astype(o_ref.dtype)


def affine_relu_pallas(x, scale, bias, out_dtype=jnp.bfloat16):
    """relu(x * scale + bias) per channel; lane-densified when C < 128; bf16 output."""
    orig_shape = x.shape
    C = orig_shape[-1]
    M = x.size // C

    # Lane densification: view (M, C) as (M/k, k*C) with k*C = 128 when possible.
    k = 1
    if C < 128 and 128 % C == 0:
        k = 128 // C
        while k > 1 and M % k != 0:
            k //= 2
    Md, Cd = M // k, C * k

    xd = x.reshape(Md, Cd)
    sd = jnp.tile(scale.astype(jnp.float32), k).reshape(1, Cd)
    bd = jnp.tile(bias.astype(jnp.float32), k).reshape(1, Cd)

    itemsize = jnp.dtype(x.dtype).itemsize
    target_rows = max(256, (2 << 20) // (itemsize * Cd))   # ~2 MiB input tiles
    tm = _divisor_tile(Md, target_rows, 8)

    out = pl.pallas_call(
        _affine_relu_kernel,
        out_shape=jax.ShapeDtypeStruct((Md, Cd), out_dtype),
        grid_spec=pltpu.PrefetchScalarGridSpec(
            num_scalar_prefetch=0,
            grid=(Md // tm,),
            in_specs=[pl.BlockSpec((tm, Cd), lambda i: (i, 0)),
                      pl.BlockSpec((1, Cd), lambda i: (0, 0)),
                      pl.BlockSpec((1, Cd), lambda i: (0, 0))],
            out_specs=pl.BlockSpec((tm, Cd), lambda i: (i, 0)),
        ),
        compiler_params=pltpu.CompilerParams(
            dimension_semantics=("parallel",)),
    )(xd, sd, bd)
    return out.reshape(orig_shape)


def _affine_relu_gap_kernel(x_ref, s_ref, b_ref, o_ref):
    y = jnp.maximum(x_ref[...].astype(jnp.float32) * s_ref[...] + b_ref[...], 0.0)
    o_ref[...] = jnp.mean(y, axis=1)


def affine_relu_gap_pallas(x_nhwc, scale, bias):
    """Fused relu(x*scale+bias) + global average pool over spatial dims -> (N, C) f32."""
    N, H, W, C = x_nhwc.shape
    HW = H * W
    bn = _divisor_tile(N, 8, 8)
    return pl.pallas_call(
        _affine_relu_gap_kernel,
        out_shape=jax.ShapeDtypeStruct((N, C), jnp.float32),
        grid_spec=pltpu.PrefetchScalarGridSpec(
            num_scalar_prefetch=0,
            grid=(N // bn,),
            in_specs=[pl.BlockSpec((bn, HW, C), lambda i: (i, 0, 0)),
                      pl.BlockSpec((1, 1, C), lambda i: (0, 0, 0)),
                      pl.BlockSpec((1, 1, C), lambda i: (0, 0, 0))],
            out_specs=pl.BlockSpec((bn, C), lambda i: (i, 0)),
        ),
        compiler_params=pltpu.CompilerParams(
            dimension_semantics=("parallel",)),
    )(x_nhwc.reshape(N, HW, C),
      scale.astype(jnp.float32).reshape(1, 1, C),
      bias.astype(jnp.float32).reshape(1, 1, C))


# ----------------------------------------------------------------------------
# BatchNorm (train-mode batch stats) folded into per-channel scale / bias
# ----------------------------------------------------------------------------

def bn_from_sums(col_sum, col_sumsq, rows, gamma, beta, eps=1e-5):
    mean = col_sum / rows
    var = jnp.maximum(col_sumsq / rows - mean * mean, 0.0)   # biased var (train-mode BN)
    scale = gamma * jax.lax.rsqrt(var + eps)
    bias = beta - mean * scale
    return scale, bias


# ----------------------------------------------------------------------------
# Conv = im2col (XLA glue, bf16) + fused Pallas matmul
# ----------------------------------------------------------------------------

def _im2col_3x3(x_nhwc, stride, pad_hw):
    """3x3 im2col; returns ((N*Ho*Wo, 9*Cin) bf16 patches, (Ho, Wo)).  (kh,kw,cin) order."""
    N, H, W, Cin = x_nhwc.shape
    xp = jnp.pad(x_nhwc.astype(jnp.bfloat16), ((0, 0), pad_hw[0], pad_hw[1], (0, 0)))
    Hp = H + pad_hw[0][0] + pad_hw[0][1]
    Wp = W + pad_hw[1][0] + pad_hw[1][1]
    Ho = (Hp - 3) // stride + 1
    Wo = (Wp - 3) // stride + 1
    cols = []
    for kh in range(3):
        for kw in range(3):
            cols.append(xp[:, kh:kh + stride * (Ho - 1) + 1:stride,
                           kw:kw + stride * (Wo - 1) + 1:stride, :])
    patches = jnp.concatenate(cols, axis=-1)          # (N, Ho, Wo, 9*Cin)
    return patches.reshape(N * Ho * Wo, 9 * Cin), (Ho, Wo)


# ----------------------------------------------------------------------------
# Model: parameters + forward (faithful to WRN2810Body.forward)
# ----------------------------------------------------------------------------

def _conv_weight(key, kh, kw, cin, cout):
    n = kh * kw * cout
    std = math.sqrt(2.0 / n)
    w = jax.random.normal(key, (kh, kw, cin, cout), jnp.float32) * std
    # Pre-reshape to the matmul layout and pre-cast to bf16 once (MXU-ready weights).
    return w.reshape(kh * kw * cin, cout).astype(jnp.bfloat16)


def init_params(key, depth=10, width=1, num_input_channels=3):
    assert (depth - 4) % 6 == 0
    num_blocks = (depth - 4) // 6
    num_channels = [16, 16 * width, 32 * width, 64 * width]
    keys = iter(jax.random.split(key, 256))

    params = {"num_channels": num_channels[3]}
    params["init_conv"] = _conv_weight(next(keys), 3, 3, num_input_channels, num_channels[0])

    groups = []
    strides = [1, 2, 2]
    for g in range(3):
        in_p, out_p, s = num_channels[g], num_channels[g + 1], strides[g]
        blocks = []
        for i in range(num_blocks):
            bin_p = in_p if i == 0 else out_p
            bstride = s if i == 0 else 1
            blk = {
                "stride": bstride,
                "has_shortcut": bin_p != out_p,
                "bn0_gamma": jnp.ones((bin_p,), jnp.float32),
                "bn0_beta": jnp.zeros((bin_p,), jnp.float32),
                "conv0_w": _conv_weight(next(keys), 3, 3, bin_p, out_p),
                "bn1_gamma": jnp.ones((out_p,), jnp.float32),
                "bn1_beta": jnp.zeros((out_p,), jnp.float32),
                "conv1_w": _conv_weight(next(keys), 3, 3, out_p, out_p),
            }
            if blk["has_shortcut"]:
                shortcut_w = _conv_weight(next(keys), 1, 1, bin_p, out_p)
                # Fold the 1x1 shortcut under conv1: single MXU matmul with K = 9*out_p + bin_p.
                blk["conv1sc_w"] = jnp.concatenate([blk["conv1_w"], shortcut_w], axis=0)
            blocks.append(blk)
        groups.append(blocks)
    params["groups"] = groups
    params["bn_final_gamma"] = jnp.ones((num_channels[3],), jnp.float32)
    params["bn_final_beta"] = jnp.zeros((num_channels[3],), jnp.float32)
    return params


def _block_forward(x_bf16, sum_x, sumsq_x, blk):
    """Pre-activation residual block (matches the adapted WideResNet _Block).

    x_bf16: block input (N,H,W,Cin) bf16 (previous fused matmul output).
    sum_x / sumsq_x: per-channel f32 stats of x, fused into the producer's epilogue.
    Returns (block output bf16 NHWC, its per-channel sum, its per-channel sum-of-squares).
    """
    stride = blk["stride"]
    N, H, W, Cin = x_bf16.shape
    M_in = N * H * W
    Cout = blk["conv1_w"].shape[1]

    # act0 = relu(bn0(x))  -- scale/bias from fused stats, lane-dense affine kernel.
    scale0, bias0 = bn_from_sums(sum_x, sumsq_x, M_in, blk["bn0_gamma"], blk["bn0_beta"])
    act0 = affine_relu_pallas(x_bf16, scale0, bias0)                 # bf16 NHWC

    # conv0 with manual SAME padding (asymmetric (0,1) for stride 2, per adapted _Block).
    pad = ((1, 1), (1, 1)) if stride == 1 else ((0, 1), (0, 1))
    A0, (Ho, Wo) = _im2col_3x3(act0, stride, pad)
    out0, s0, q0 = conv_matmul_stats(A0, blk["conv0_w"])             # bf16 + fused stats
    M_out = N * Ho * Wo

    # act1 = relu(bn1(out0))
    scale1, bias1 = bn_from_sums(s0, q0, M_out, blk["bn1_gamma"], blk["bn1_beta"])
    act1 = affine_relu_pallas(out0.reshape(N, Ho, Wo, Cout), scale1, bias1)

    A1, _ = _im2col_3x3(act1, 1, ((1, 1), (1, 1)))
    if blk["has_shortcut"]:
        # 1x1 shortcut (stride) folded into conv1's K: extra Cin columns = act0 subsampled.
        sc_cols = act0[:, ::stride, ::stride, :].reshape(M_out, Cin)
        A1 = jnp.concatenate([A1, sc_cols], axis=-1)
        y, sy, qy = conv_matmul_stats(A1, blk["conv1sc_w"])
    else:
        # Identity residual (stride == 1, Cin == Cout): fused into the matmul epilogue.
        y, sy, qy = conv_matmul_stats(A1, blk["conv1_w"],
                                      residual=x_bf16.reshape(M_in, Cin))
    return y.reshape(N, Ho, Wo, Cout), sy, qy


def wrn_body_forward(x_nchw, params, padding=0):
    # PyTorch input is NCHW; kernels use NHWC.
    x = x_nchw.astype(jnp.float32)
    if padding > 0:
        x = jnp.pad(x, ((0, 0), (0, 0), (padding, padding), (padding, padding)))
    x = jnp.transpose(x, (0, 2, 3, 1))                               # -> NHWC
    N = x.shape[0]

    A, (Ho, Wo) = _im2col_3x3(x, 1, ((1, 1), (1, 1)))
    out, s, q = conv_matmul_stats(A, params["init_conv"])
    out = out.reshape(N, Ho, Wo, -1)

    for group in params["groups"]:
        for blk in group:
            out, s, q = _block_forward(out, s, q, blk)

    C = out.shape[-1]
    _, H, W, _ = out.shape
    scale_f, bias_f = bn_from_sums(s, q, N * H * W,
                                   params["bn_final_gamma"], params["bn_final_beta"])
    # F.avg_pool2d(out, 8) followed by .view(-1, num_channels): requires 8x8 maps here.
    assert H == 8 and W == 8, "expected 8x8 feature maps before the final avg_pool2d(8)"
    return affine_relu_gap_pallas(out, scale_f, bias_f)              # (N, C) f32


# ----------------------------------------------------------------------------
# Main
# ----------------------------------------------------------------------------

if __name__ == "__main__":
    key = jax.random.PRNGKey(0)
    pkey, xkey = jax.random.split(key)

    # Small-but-consistent config: depth=10 -> 1 block per group, width=1
    # -> channels [16, 16, 32, 64]; exercises both the identity-residual path
    # (fused residual epilogue) and the folded 1x1-shortcut path.
    # Input 32x32 so the final feature map is 8x8 (avg_pool2d(8)).
    depth, width = 10, 1
    params = init_params(pkey, depth=depth, width=width, num_input_channels=3)

    x = jax.random.normal(xkey, (2, 3, 32, 32), jnp.float32)

    fwd = jax.jit(lambda inp: wrn_body_forward(inp, params, padding=0))
    out = jax.block_until_ready(fwd(x))

    assert out.shape == (2, params["num_channels"]), out.shape
    assert bool(jnp.all(jnp.isfinite(out)))
    print("KERNEL_OK")
</pallas_src>

<mosaic_0001>
module attributes {stable_mosaic.version = 11 : i64} {
  func.func @kernel(%arg0: i32, %arg1: memref<512x27xbf16, #tpu.memory_space<vmem>>, %arg2: memref<27x16xbf16, #tpu.memory_space<vmem>>, %arg3: memref<512x16xbf16, #tpu.memory_space<vmem>>, %arg4: memref<1x16xf32, #tpu.memory_space<vmem>>, %arg5: memref<1x16xf32, #tpu.memory_space<vmem>>) attributes {dimension_semantics = [#tpu.dimension_semantics<arbitrary>], iteration_bounds = array<i64: 4>, scalar_prefetch = 0 : i64, scratch_operands = 0 : i64, tpu.core_type = #tpu.core_type<tc>, window_params = [{transform_indices = @transform_0, window_bounds = array<i64: 512, 27>}, {pipeline_mode = #tpu.pipeline_mode<synchronous>, transform_indices = @transform_1, window_bounds = array<i64: 27, 16>}, {transform_indices = @transform_2, window_bounds = array<i64: 512, 16>}, {pipeline_mode = #tpu.pipeline_mode<synchronous>, transform_indices = @transform_3, window_bounds = array<i64: 1, 16>}, {pipeline_mode = #tpu.pipeline_mode<synchronous>, transform_indices = @transform_4, window_bounds = array<i64: 1, 16>}]} {
    %c0_i32 = arith.constant 0 : i32
    %0 = arith.cmpi eq, %arg0, %c0_i32 : i32
    %1 = arith.extui %0 : i1 to i32
    %c0_i32_0 = arith.constant 0 : i32
    %2 = arith.cmpi ne, %1, %c0_i32_0 : i32
    scf.if %2 {
      %cst_16 = arith.constant 0.000000e+00 : f32
      %19 = vector.broadcast %cst_16 : f32 to vector<1x16xf32>
      %c0_17 = arith.constant 0 : index
      %c0_18 = arith.constant 0 : index
      %20 = vector.load %arg4[%c0_17, %c0_18] : memref<1x16xf32, #tpu.memory_space<vmem>>, vector<1x16xf32>
      tpu.vector_store %arg4[%c0_17, %c0_18], %19 {strides = array<i32>} : memref<1x16xf32, #tpu.memory_space<vmem>>, vector<1x16xf32>,
      %cst_19 = arith.constant 0.000000e+00 : f32
      %21 = vector.broadcast %cst_19 : f32 to vector<1x16xf32>
      %c0_20 = arith.constant 0 : index
      %c0_21 = arith.constant 0 : index
      %22 = vector.load %arg5[%c0_20, %c0_21] : memref<1x16xf32, #tpu.memory_space<vmem>>, vector<1x16xf32>
      tpu.vector_store %arg5[%c0_20, %c0_21], %21 {strides = array<i32>} : memref<1x16xf32, #tpu.memory_space<vmem>>, vector<1x16xf32>,
    } else {
    }
    %c0 = arith.constant 0 : index
    %c0_1 = arith.constant 0 : index
    %3 = vector.load %arg1[%c0, %c0_1] : memref<512x27xbf16, #tpu.memory_space<vmem>>, vector<512x27xbf16>
    %c0_2 = arith.constant 0 : index
    %c0_3 = arith.constant 0 : index
    %4 = vector.load %arg2[%c0_2, %c0_3] : memref<27x16xbf16, #tpu.memory_space<vmem>>, vector<27x16xbf16>
    %cst = arith.constant dense<0.000000e+00> : vector<512x16xf32>
    %5 = tpu.matmul %3, %4, %cst {dimension_numbers = #tpu.dot_dimension_numbers<[1], [0], [0], [1], [0, 0, 1, 1], [], []>} : vector<512x27xbf16>, vector<27x16xbf16>, vector<512x16xf32> -> vector<512x16xf32>
    %6 = arith.truncf %5 : vector<512x16xf32> to vector<512x16xbf16>
    %c0_4 = arith.constant 0 : index
    %c0_5 = arith.constant 0 : index
    %7 = vector.load %arg3[%c0_4, %c0_5] : memref<512x16xbf16, #tpu.memory_space<vmem>>, vector<512x16xbf16>
    tpu.vector_store %arg3[%c0_4, %c0_5], %6 {strides = array<i32>} : memref<512x16xbf16, #tpu.memory_space<vmem>>, vector<512x16xbf16>,
    %c0_6 = arith.constant 0 : index
    %c0_7 = arith.constant 0 : index
    %8 = vector.load %arg4[%c0_6, %c0_7] : memref<1x16xf32, #tpu.memory_space<vmem>>, vector<1x16xf32>
    %cst_8 = arith.constant dense<0.000000e+00> : vector<16xf32>
    %9 = vector.multi_reduction <add>, %5, %cst_8 [0] : vector<512x16xf32> to vector<16xf32>
    %10 = vector.shape_cast %9 : vector<16xf32> to vector<1x16xf32>
    %11 = arith.addf %8, %10 : vector<1x16xf32>
    %c0_9 = arith.constant 0 : index
    %c0_10 = arith.constant 0 : index
    %12 = vector.load %arg4[%c0_9, %c0_10] : memref<1x16xf32, #tpu.memory_space<vmem>>, vector<1x16xf32>
    tpu.vector_store %arg4[%c0_9, %c0_10], %11 {strides = array<i32>} : memref<1x16xf32, #tpu.memory_space<vmem>>, vector<1x16xf32>,
    %c0_11 = arith.constant 0 : index
    %c0_12 = arith.constant 0 : index
    %13 = vector.load %arg5[%c0_11, %c0_12] : memref<1x16xf32, #tpu.memory_space<vmem>>, vector<1x16xf32>
    %14 = arith.mulf %5, %5 : vector<512x16xf32>
    %cst_13 = arith.constant dense<0.000000e+00> : vector<16xf32>
    %15 = vector.multi_reduction <add>, %14, %cst_13 [0] : vector<512x16xf32> to vector<16xf32>
    %16 = vector.shape_cast %15 : vector<16xf32> to vector<1x16xf32>
    %17 = arith.addf %13, %16 : vector<1x16xf32>
    %c0_14 = arith.constant 0 : index
    %c0_15 = arith.constant 0 : index
    %18 = vector.load %arg5[%c0_14, %c0_15] : memref<1x16xf32, #tpu.memory_space<vmem>>, vector<1x16xf32>
    tpu.vector_store %arg5[%c0_14, %c0_15], %17 {strides = array<i32>} : memref<1x16xf32, #tpu.memory_space<vmem>>, vector<1x16xf32>,
    return
  }
  func.func @transform_0(%arg0: i32) -> (i32, i32) {
    %c0_i32 = arith.constant 0 : i32
    %c0_i32_0 = arith.constant 0 : i32
    return %arg0, %c0_i32 : i32, i32
  }
  func.func @transform_1(%arg0: i32) -> (i32, i32) {
    %c0_i32 = arith.constant 0 : i32
    %c0_i32_0 = arith.constant 0 : i32
    %c0_i32_1 = arith.constant 0 : i32
    return %c0_i32, %c0_i32_0 : i32, i32
  }
  func.func @transform_2(%arg0: i32) -> (i32, i32) {
    %c0_i32 = arith.constant 0 : i32
    %c0_i32_0 = arith.constant 0 : i32
    return %arg0, %c0_i32 : i32, i32
  }
  func.func @transform_3(%arg0: i32) -> (i32, i32) {
    %c0_i32 = arith.constant 0 : i32
    %c0_i32_0 = arith.constant 0 : i32
    %c0_i32_1 = arith.constant 0 : i32
    return %c0_i32, %c0_i32_0 : i32, i32
  }
  func.func @transform_4(%arg0: i32) -> (i32, i32) {
    %c0_i32 = arith.constant 0 : i32
    %c0_i32_0 = arith.constant 0 : i32
    %c0_i32_1 = arith.constant 0 : i32
    return %c0_i32, %c0_i32_0 : i32, i32
  }
}

module attributes {stable_mosaic.version = 11 : i64} {
  func.func @_affine_relu_kernel(%arg0: i32, %arg1: memref<256x128xbf16, #tpu.memory_space<vmem>>, %arg2: memref<1x128xf32, #tpu.memory_space<vmem>>, %arg3: memref<1x128xf32, #tpu.memory_space<vmem>>, %arg4: memref<256x128xbf16, #tpu.memory_space<vmem>>) attributes {dimension_semantics = [#tpu.dimension_semantics<parallel>], iteration_bounds = array<i64: 1>, scalar_prefetch = 0 : i64, scratch_operands = 0 : i64, tpu.core_type = #tpu.core_type<tc>, window_params = [{transform_indices = @transform_0, window_bounds = array<i64: 256, 128>}, {pipeline_mode = #tpu.pipeline_mode<synchronous>, transform_indices = @transform_1, window_bounds = array<i64: 1, 128>}, {pipeline_mode = #tpu.pipeline_mode<synchronous>, transform_indices = @transform_2, window_bounds = array<i64: 1, 128>}, {transform_indices = @transform_3, window_bounds = array<i64: 256, 128>}]} {
    %c0 = arith.constant 0 : index
    %c0_0 = arith.constant 0 : index
    %0 = vector.load %arg1[%c0, %c0_0] : memref<256x128xbf16, #tpu.memory_space<vmem>>, vector<256x128xbf16>
    %1 = arith.extf %0 : vector<256x128xbf16> to vector<256x128xf32>
    %c0_1 = arith.constant 0 : index
    %c0_2 = arith.constant 0 : index
    %2 = vector.load %arg2[%c0_1, %c0_2] : memref<1x128xf32, #tpu.memory_space<vmem>>, vector<1x128xf32>
    %3 = vector.broadcast %2 : vector<1x128xf32> to vector<256x128xf32>
    %4 = arith.mulf %1, %3 : vector<256x128xf32>
    %c0_3 = arith.constant 0 : index
    %c0_4 = arith.constant 0 : index
    %5 = vector.load %arg3[%c0_3, %c0_4] : memref<1x128xf32, #tpu.memory_space<vmem>>, vector<1x128xf32>
    %6 = vector.broadcast %5 : vector<1x128xf32> to vector<256x128xf32>
    %7 = arith.addf %4, %6 : vector<256x128xf32>
    %cst = arith.constant 0.000000e+00 : f32
    %8 = vector.broadcast %cst : f32 to vector<256x128xf32>
    %9 = arith.maximumf %7, %8 : vector<256x128xf32>
    %10 = arith.truncf %9 : vector<256x128xf32> to vector<256x128xbf16>
    %c0_5 = arith.constant 0 : index
    %c0_6 = arith.constant 0 : index
    %11 = vector.load %arg4[%c0_5, %c0_6] : memref<256x128xbf16, #tpu.memory_space<vmem>>, vector<256x128xbf16>
    tpu.vector_store %arg4[%c0_5, %c0_6], %10 {strides = array<i32>} : memref<256x128xbf16, #tpu.memory_space<vmem>>, vector<256x128xbf16>,
    return
  }
  func.func @transform_0(%arg0: i32) -> (i32, i32) {
    %c0_i32 = arith.constant 0 : i32
    %c0_i32_0 = arith.constant 0 : i32
    return %arg0, %c0_i32 : i32, i32
  }
  func.func @transform_1(%arg0: i32) -> (i32, i32) {
    %c0_i32 = arith.constant 0 : i32
    %c0_i32_0 = arith.constant 0 : i32
    %c0_i32_1 = arith.constant 0 : i32
    return %c0_i32, %c0_i32_0 : i32, i32
  }
  func.func @transform_2(%arg0: i32) -> (i32, i32) {
    %c0_i32 = arith.constant 0 : i32
    %c0_i32_0 = arith.constant 0 : i32
    %c0_i32_1 = arith.constant 0 : i32
    return %c0_i32, %c0_i32_0 : i32, i32
  }
  func.func @transform_3(%arg0: i32) -> (i32, i32) {
    %c0_i32 = arith.constant 0 : i32
    %c0_i32_0 = arith.constant 0 : i32
    return %arg0, %c0_i32 : i32, i32
  }
}

module attributes {stable_mosaic.version = 11 : i64} {
  func.func @kernel(%arg0: i32, %arg1: memref<512x144xbf16, #tpu.memory_space<vmem>>, %arg2: memref<144x16xbf16, #tpu.memory_space<vmem>>, %arg3: memref<512x16xbf16, #tpu.memory_space<vmem>>, %arg4: memref<1x16xf32, #tpu.memory_space<vmem>>, %arg5: memref<1x16xf32, #tpu.memory_space<vmem>>) attributes {dimension_semantics = [#tpu.dimension_semantics<arbitrary>], iteration_bounds = array<i64: 4>, scalar_prefetch = 0 : i64, scratch_operands = 0 : i64, tpu.core_type = #tpu.core_type<tc>, window_params = [{transform_indices = @transform_0, window_bounds = array<i64: 512, 144>}, {pipeline_mode = #tpu.pipeline_mode<synchronous>, transform_indices = @transform_1, window_bounds = array<i64: 144, 16>}, {transform_indices = @transform_2, window_bounds = array<i64: 512, 16>}, {pipeline_mode = #tpu.pipeline_mode<synchronous>, transform_indices = @transform_3, window_bounds = array<i64: 1, 16>}, {pipeline_mode = #tpu.pipeline_mode<synchronous>, transform_indices = @transform_4, window_bounds = array<i64: 1, 16>}]} {
    %c0_i32 = arith.constant 0 : i32
    %0 = arith.cmpi eq, %arg0, %c0_i32 : i32
    %1 = arith.extui %0 : i1 to i32
    %c0_i32_0 = arith.constant 0 : i32
    %2 = arith.cmpi ne, %1, %c0_i32_0 : i32
    scf.if %2 {
      %cst_16 = arith.constant 0.000000e+00 : f32
      %19 = vector.broadcast %cst_16 : f32 to vector<1x16xf32>
      %c0_17 = arith.constant 0 : index
      %c0_18 = arith.constant 0 : index
      %20 = vector.load %arg4[%c0_17, %c0_18] : memref<1x16xf32, #tpu.memory_space<vmem>>, vector<1x16xf32>
      tpu.vector_store %arg4[%c0_17, %c0_18], %19 {strides = array<i32>} : memref<1x16xf32, #tpu.memory_space<vmem>>, vector<1x16xf32>,
      %cst_19 = arith.constant 0.000000e+00 : f32
      %21 = vector.broadcast %cst_19 : f32 to vector<1x16xf32>
      %c0_20 = arith.constant 0 : index
      %c0_21 = arith.constant 0 : index
      %22 = vector.load %arg5[%c0_20, %c0_21] : memref<1x16xf32, #tpu.memory_space<vmem>>, vector<1x16xf32>
      tpu.vector_store %arg5[%c0_20, %c0_21], %21 {strides = array<i32>} : memref<1x16xf32, #tpu.memory_space<vmem>>, vector<1x16xf32>,
    } else {
    }
    %c0 = arith.constant 0 : index
    %c0_1 = arith.constant 0 : index
    %3 = vector.load %arg1[%c0, %c0_1] : memref<512x144xbf16, #tpu.memory_space<vmem>>, vector<512x144xbf16>
    %c0_2 = arith.constant 0 : index
    %c0_3 = arith.constant 0 : index
    %4 = vector.load %arg2[%c0_2, %c0_3] : memref<144x16xbf16, #tpu.memory_space<vmem>>, vector<144x16xbf16>
    %cst = arith.constant dense<0.000000e+00> : vector<512x16xf32>
    %5 = tpu.matmul %3, %4, %cst {dimension_numbers = #tpu.dot_dimension_numbers<[1], [0], [0], [1], [0, 0, 1, 1], [], []>} : vector<512x144xbf16>, vector<144x16xbf16>, vector<512x16xf32> -> vector<512x16xf32>
    %6 = arith.truncf %5 : vector<512x16xf32> to vector<512x16xbf16>
    %c0_4 = arith.constant 0 : index
    %c0_5 = arith.constant 0 : index
    %7 = vector.load %arg3[%c0_4, %c0_5] : memref<512x16xbf16, #tpu.memory_space<vmem>>, vector<512x16xbf16>
    tpu.vector_store %arg3[%c0_4, %c0_5], %6 {strides = array<i32>} : memref<512x16xbf16, #tpu.memory_space<vmem>>, vector<512x16xbf16>,
    %c0_6 = arith.constant 0 : index
    %c0_7 = arith.constant 0 : index
    %8 = vector.load %arg4[%c0_6, %c0_7] : memref<1x16xf32, #tpu.memory_space<vmem>>, vector<1x16xf32>
    %cst_8 = arith.constant dense<0.000000e+00> : vector<16xf32>
    %9 = vector.multi_reduction <add>, %5, %cst_8 [0] : vector<512x16xf32> to vector<16xf32>
    %10 = vector.shape_cast %9 : vector<16xf32> to vector<1x16xf32>
    %11 = arith.addf %8, %10 : vector<1x16xf32>
    %c0_9 = arith.constant 0 : index
    %c0_10 = arith.constant 0 : index
    %12 = vector.load %arg4[%c0_9, %c0_10] : memref<1x16xf32, #tpu.memory_space<vmem>>, vector<1x16xf32>
    tpu.vector_store %arg4[%c0_9, %c0_10], %11 {strides = array<i32>} : memref<1x16xf32, #tpu.memory_space<vmem>>, vector<1x16xf32>,
    %c0_11 = arith.constant 0 : index
    %c0_12 = arith.constant 0 : index
    %13 = vector.load %arg5[%c0_11, %c0_12] : memref<1x16xf32, #tpu.memory_space<vmem>>, vector<1x16xf32>
    %14 = arith.mulf %5, %5 : vector<512x16xf32>
    %cst_13 = arith.constant dense<0.000000e+00> : vector<16xf32>
    %15 = vector.multi_reduction <add>, %14, %cst_13 [0] : vector<512x16xf32> to vector<16xf32>
    %16 = vector.shape_cast %15 : vector<16xf32> to vector<1x16xf32>
    %17 = arith.addf %13, %16 : vector<1x16xf32>
    %c0_14 = arith.constant 0 : index
    %c0_15 = arith.constant 0 : index
    %18 = vector.load %arg5[%c0_14, %c0_15] : memref<1x16xf32, #tpu.memory_space<vmem>>, vector<1x16xf32>
    tpu.vector_store %arg5[%c0_14, %c0_15], %17 {strides = array<i32>} : memref<1x16xf32, #tpu.memory_space<vmem>>, vector<1x16xf32>,
    return
  }
  func.func @transform_0(%arg0: i32) -> (i32, i32) {
    %c0_i32 = arith.constant 0 : i32
    %c0_i32_0 = arith.constant 0 : i32
    return %arg0, %c0_i32 : i32, i32
  }
  func.func @transform_1(%arg0: i32) -> (i32, i32) {
    %c0_i32 = arith.constant 0 : i32
    %c0_i32_0 = arith.constant 0 : i32
    %c0_i32_1 = arith.constant 0 : i32
    return %c0_i32, %c0_i32_0 : i32, i32
  }
  func.func @transform_2(%arg0: i32) -> (i32, i32) {
    %c0_i32 = arith.constant 0 : i32
    %c0_i32_0 = arith.constant 0 : i32
    return %arg0, %c0_i32 : i32, i32
  }
  func.func @transform_3(%arg0: i32) -> (i32, i32) {
    %c0_i32 = arith.constant 0 : i32
    %c0_i32_0 = arith.constant 0 : i32
    %c0_i32_1 = arith.constant 0 : i32
    return %c0_i32, %c0_i32_0 : i32, i32
  }
  func.func @transform_4(%arg0: i32) -> (i32, i32) {
    %c0_i32 = arith.constant 0 : i32
    %c0_i32_0 = arith.constant 0 : i32
    %c0_i32_1 = arith.constant 0 : i32
    return %c0_i32, %c0_i32_0 : i32, i32
  }
}

module attributes {stable_mosaic.version = 11 : i64} {
  func.func @kernel(%arg0: i32, %arg1: memref<512x144xbf16, #tpu.memory_space<vmem>>, %arg2: memref<144x16xbf16, #tpu.memory_space<vmem>>, %arg3: memref<512x16xbf16, #tpu.memory_space<vmem>>, %arg4: memref<512x16xbf16, #tpu.memory_space<vmem>>, %arg5: memref<1x16xf32, #tpu.memory_space<vmem>>, %arg6: memref<1x16xf32, #tpu.memory_space<vmem>>) attributes {dimension_semantics = [#tpu.dimension_semantics<arbitrary>], iteration_bounds = array<i64: 4>, scalar_prefetch = 0 : i64, scratch_operands = 0 : i64, tpu.core_type = #tpu.core_type<tc>, window_params = [{transform_indices = @transform_0, window_bounds = array<i64: 512, 144>}, {pipeline_mode = #tpu.pipeline_mode<synchronous>, transform_indices = @transform_1, window_bounds = array<i64: 144, 16>}, {transform_indices = @transform_2, window_bounds = array<i64: 512, 16>}, {transform_indices = @transform_3, window_bounds = array<i64: 512, 16>}, {pipeline_mode = #tpu.pipeline_mode<synchronous>, transform_indices = @transform_4, window_bounds = array<i64: 1, 16>}, {pipeline_mode = #tpu.pipeline_mode<synchronous>, transform_indices = @transform_5, window_bounds = array<i64: 1, 16>}]} {
    %c0_i32 = arith.constant 0 : i32
    %0 = arith.cmpi eq, %arg0, %c0_i32 : i32
    %1 = arith.extui %0 : i1 to i32
    %c0_i32_0 = arith.constant 0 : i32
    %2 = arith.cmpi ne, %1, %c0_i32_0 : i32
    scf.if %2 {
      %cst_18 = arith.constant 0.000000e+00 : f32
      %22 = vector.broadcast %cst_18 : f32 to vector<1x16xf32>
      %c0_19 = arith.constant 0 : index
      %c0_20 = arith.constant 0 : index
      %23 = vector.load %arg5[%c0_19, %c0_20] : memref<1x16xf32, #tpu.memory_space<vmem>>, vector<1x16xf32>
      tpu.vector_store %arg5[%c0_19, %c0_20], %22 {strides = array<i32>} : memref<1x16xf32, #tpu.memory_space<vmem>>, vector<1x16xf32>,
      %cst_21 = arith.constant 0.000000e+00 : f32
      %24 = vector.broadcast %cst_21 : f32 to vector<1x16xf32>
      %c0_22 = arith.constant 0 : index
      %c0_23 = arith.constant 0 : index
      %25 = vector.load %arg6[%c0_22, %c0_23] : memref<1x16xf32, #tpu.memory_space<vmem>>, vector<1x16xf32>
      tpu.vector_store %arg6[%c0_22, %c0_23], %24 {strides = array<i32>} : memref<1x16xf32, #tpu.memory_space<vmem>>, vector<1x16xf32>,
    } else {
    }
    %c0 = arith.constant 0 : index
    %c0_1 = arith.constant 0 : index
    %3 = vector.load %arg1[%c0, %c0_1] : memref<512x144xbf16, #tpu.memory_space<vmem>>, vector<512x144xbf16>
    %c0_2 = arith.constant 0 : index
    %c0_3 = arith.constant 0 : index
    %4 = vector.load %arg2[%c0_2, %c0_3] : memref<144x16xbf16, #tpu.memory_space<vmem>>, vector<144x16xbf16>
    %cst = arith.constant dense<0.000000e+00> : vector<512x16xf32>
    %5 = tpu.matmul %3, %4, %cst {dimension_numbers = #tpu.dot_dimension_numbers<[1], [0], [0], [1], [0, 0, 1, 1], [], []>} : vector<512x144xbf16>, vector<144x16xbf16>, vector<512x16xf32> -> vector<512x16xf32>
    %c0_4 = arith.constant 0 : index
    %c0_5 = arith.constant 0 : index
    %6 = vector.load %arg3[%c0_4, %c0_5] : memref<512x16xbf16, #tpu.memory_space<vmem>>, vector<512x16xbf16>
    %7 = arith.extf %6 : vector<512x16xbf16> to vector<512x16xf32>
    %8 = arith.addf %5, %7 : vector<512x16xf32>
    %9 = arith.truncf %8 : vector<512x16xf32> to vector<512x16xbf16>
    %c0_6 = arith.constant 0 : index
    %c0_7 = arith.constant 0 : index
    %10 = vector.load %arg4[%c0_6, %c0_7] : memref<512x16xbf16, #tpu.memory_space<vmem>>, vector<512x16xbf16>
    tpu.vector_store %arg4[%c0_6, %c0_7], %9 {strides = array<i32>} : memref<512x16xbf16, #tpu.memory_space<vmem>>, vector<512x16xbf16>,
    %c0_8 = arith.constant 0 : index
    %c0_9 = arith.constant 0 : index
    %11 = vector.load %arg5[%c0_8, %c0_9] : memref<1x16xf32, #tpu.memory_space<vmem>>, vector<1x16xf32>
    %cst_10 = arith.constant dense<0.000000e+00> : vector<16xf32>
    %12 = vector.multi_reduction <add>, %8, %cst_10 [0] : vector<512x16xf32> to vector<16xf32>
    %13 = vector.shape_cast %12 : vector<16xf32> to vector<1x16xf32>
    %14 = arith.addf %11, %13 : vector<1x16xf32>
    %c0_11 = arith.constant 0 : index
    %c0_12 = arith.constant 0 : index
    %15 = vector.load %arg5[%c0_11, %c0_12] : memref<1x16xf32, #tpu.memory_space<vmem>>, vector<1x16xf32>
    tpu.vector_store %arg5[%c0_11, %c0_12], %14 {strides = array<i32>} : memref<1x16xf32, #tpu.memory_space<vmem>>, vector<1x16xf32>,
    %c0_13 = arith.constant 0 : index
    %c0_14 = arith.constant 0 : index
    %16 = vector.load %arg6[%c0_13, %c0_14] : memref<1x16xf32, #tpu.memory_space<vmem>>, vector<1x16xf32>
    %17 = arith.mulf %8, %8 : vector<512x16xf32>
    %cst_15 = arith.constant dense<0.000000e+00> : vector<16xf32>
    %18 = vector.multi_reduction <add>, %17, %cst_15 [0] : vector<512x16xf32> to vector<16xf32>
    %19 = vector.shape_cast %18 : vector<16xf32> to vector<1x16xf32>
    %20 = arith.addf %16, %19 : vector<1x16xf32>
    %c0_16 = arith.constant 0 : index
    %c0_17 = arith.constant 0 : index
    %21 = vector.load %arg6[%c0_16, %c0_17] : memref<1x16xf32, #tpu.memory_space<vmem>>, vector<1x16xf32>
    tpu.vector_store %arg6[%c0_16, %c0_17], %20 {strides = array<i32>} : memref<1x16xf32, #tpu.memory_space<vmem>>, vector<1x16xf32>,
    return
  }
  func.func @transform_0(%arg0: i32) -> (i32, i32) {
    %c0_i32 = arith.constant 0 : i32
    %c0_i32_0 = arith.constant 0 : i32
    return %arg0, %c0_i32 : i32, i32
  }
  func.func @transform_1(%arg0: i32) -> (i32, i32) {
    %c0_i32 = arith.constant 0 : i32
    %c0_i32_0 = arith.constant 0 : i32
    %c0_i32_1 = arith.constant 0 : i32
    return %c0_i32, %c0_i32_0 : i32, i32
  }
  func.func @transform_2(%arg0: i32) -> (i32, i32) {
    %c0_i32 = arith.constant 0 : i32
    %c0_i32_0 = arith.constant 0 : i32
    return %arg0, %c0_i32 : i32, i32
  }
  func.func @transform_3(%arg0: i32) -> (i32, i32) {
    %c0_i32 = arith.constant 0 : i32
    %c0_i32_0 = arith.constant 0 : i32
    return %arg0, %c0_i32 : i32, i32
  }
  func.func @transform_4(%arg0: i32) -> (i32, i32) {
    %c0_i32 = arith.constant 0 : i32
    %c0_i32_0 = arith.constant 0 : i32
    %c0_i32_1 = arith.constant 0 : i32
    return %c0_i32, %c0_i32_0 : i32, i32
  }
  func.func @transform_5(%arg0: i32) -> (i32, i32) {
    %c0_i32 = arith.constant 0 : i32
    %c0_i32_0 = arith.constant 0 : i32
    %c0_i32_1 = arith.constant 0 : i32
    return %c0_i32, %c0_i32_0 : i32, i32
  }
}

module attributes {stable_mosaic.version = 11 : i64} {
  func.func @kernel(%arg0: i32, %arg1: memref<512x144xbf16, #tpu.memory_space<vmem>>, %arg2: memref<144x32xbf16, #tpu.memory_space<vmem>>, %arg3: memref<512x32xbf16, #tpu.memory_space<vmem>>, %arg4: memref<1x32xf32, #tpu.memory_space<vmem>>, %arg5: memref<1x32xf32, #tpu.memory_space<vmem>>) attributes {dimension_semantics = [#tpu.dimension_semantics<arbitrary>], iteration_bounds = array<i64: 1>, scalar_prefetch = 0 : i64, scratch_operands = 0 : i64, tpu.core_type = #tpu.core_type<tc>, window_params = [{transform_indices = @transform_0, window_bounds = array<i64: 512, 144>}, {pipeline_mode = #tpu.pipeline_mode<synchronous>, transform_indices = @transform_1, window_bounds = array<i64: 144, 32>}, {transform_indices = @transform_2, window_bounds = array<i64: 512, 32>}, {pipeline_mode = #tpu.pipeline_mode<synchronous>, transform_indices = @transform_3, window_bounds = array<i64: 1, 32>}, {pipeline_mode = #tpu.pipeline_mode<synchronous>, transform_indices = @transform_4, window_bounds = array<i64: 1, 32>}]} {
    %c0_i32 = arith.constant 0 : i32
    %0 = arith.cmpi eq, %arg0, %c0_i32 : i32
    %1 = arith.extui %0 : i1 to i32
    %c0_i32_0 = arith.constant 0 : i32
    %2 = arith.cmpi ne, %1, %c0_i32_0 : i32
    scf.if %2 {
      %cst_16 = arith.constant 0.000000e+00 : f32
      %19 = vector.broadcast %cst_16 : f32 to vector<1x32xf32>
      %c0_17 = arith.constant 0 : index
      %c0_18 = arith.constant 0 : index
      %20 = vector.load %arg4[%c0_17, %c0_18] : memref<1x32xf32, #tpu.memory_space<vmem>>, vector<1x32xf32>
      tpu.vector_store %arg4[%c0_17, %c0_18], %19 {strides = array<i32>} : memref<1x32xf32, #tpu.memory_space<vmem>>, vector<1x32xf32>,
      %cst_19 = arith.constant 0.000000e+00 : f32
      %21 = vector.broadcast %cst_19 : f32 to vector<1x32xf32>
      %c0_20 = arith.constant 0 : index
      %c0_21 = arith.constant 0 : index
      %22 = vector.load %arg5[%c0_20, %c0_21] : memref<1x32xf32, #tpu.memory_space<vmem>>, vector<1x32xf32>
      tpu.vector_store %arg5[%c0_20, %c0_21], %21 {strides = array<i32>} : memref<1x32xf32, #tpu.memory_space<vmem>>, vector<1x32xf32>,
    } else {
    }
    %c0 = arith.constant 0 : index
    %c0_1 = arith.constant 0 : index
    %3 = vector.load %arg1[%c0, %c0_1] : memref<512x144xbf16, #tpu.memory_space<vmem>>, vector<512x144xbf16>
    %c0_2 = arith.constant 0 : index
    %c0_3 = arith.constant 0 : index
    %4 = vector.load %arg2[%c0_2, %c0_3] : memref<144x32xbf16, #tpu.memory_space<vmem>>, vector<144x32xbf16>
    %cst = arith.constant dense<0.000000e+00> : vector<512x32xf32>
    %5 = tpu.matmul %3, %4, %cst {dimension_numbers = #tpu.dot_dimension_numbers<[1], [0], [0], [1], [0, 0, 1, 1], [], []>} : vector<512x144xbf16>, vector<144x32xbf16>, vector<512x32xf32> -> vector<512x32xf32>
    %6 = arith.truncf %5 : vector<512x32xf32> to vector<512x32xbf16>
    %c0_4 = arith.constant 0 : index
    %c0_5 = arith.constant 0 : index
    %7 = vector.load %arg3[%c0_4, %c0_5] : memref<512x32xbf16, #tpu.memory_space<vmem>>, vector<512x32xbf16>
    tpu.vector_store %arg3[%c0_4, %c0_5], %6 {strides = array<i32>} : memref<512x32xbf16, #tpu.memory_space<vmem>>, vector<512x32xbf16>,
    %c0_6 = arith.constant 0 : index
    %c0_7 = arith.constant 0 : index
    %8 = vector.load %arg4[%c0_6, %c0_7] : memref<1x32xf32, #tpu.memory_space<vmem>>, vector<1x32xf32>
    %cst_8 = arith.constant dense<0.000000e+00> : vector<32xf32>
    %9 = vector.multi_reduction <add>, %5, %cst_8 [0] : vector<512x32xf32> to vector<32xf32>
    %10 = vector.shape_cast %9 : vector<32xf32> to vector<1x32xf32>
    %11 = arith.addf %8, %10 : vector<1x32xf32>
    %c0_9 = arith.constant 0 : index
    %c0_10 = arith.constant 0 : index
    %12 = vector.load %arg4[%c0_9, %c0_10] : memref<1x32xf32, #tpu.memory_space<vmem>>, vector<1x32xf32>
    tpu.vector_store %arg4[%c0_9, %c0_10], %11 {strides = array<i32>} : memref<1x32xf32, #tpu.memory_space<vmem>>, vector<1x32xf32>,
    %c0_11 = arith.constant 0 : index
    %c0_12 = arith.constant 0 : index
    %13 = vector.load %arg5[%c0_11, %c0_12] : memref<1x32xf32, #tpu.memory_space<vmem>>, vector<1x32xf32>
    %14 = arith.mulf %5, %5 : vector<512x32xf32>
    %cst_13 = arith.constant dense<0.000000e+00> : vector<32xf32>
    %15 = vector.multi_reduction <add>, %14, %cst_13 [0] : vector<512x32xf32> to vector<32xf32>
    %16 = vector.shape_cast %15 : vector<32xf32> to vector<1x32xf32>
    %17 = arith.addf %13, %16 : vector<1x32xf32>
    %c0_14 = arith.constant 0 : index
    %c0_15 = arith.constant 0 : index
    %18 = vector.load %arg5[%c0_14, %c0_15] : memref<1x32xf32, #tpu.memory_space<vmem>>, vector<1x32xf32>
    tpu.vector_store %arg5[%c0_14, %c0_15], %17 {strides = array<i32>} : memref<1x32xf32, #tpu.memory_space<vmem>>, vector<1x32xf32>,
    return
  }
  func.func @transform_0(%arg0: i32) -> (i32, i32) {
    %c0_i32 = arith.constant 0 : i32
    %c0_i32_0 = arith.constant 0 : i32
    return %arg0, %c0_i32 : i32, i32
  }
  func.func @transform_1(%arg0: i32) -> (i32, i32) {
    %c0_i32 = arith.constant 0 : i32
    %c0_i32_0 = arith.constant 0 : i32
    %c0_i32_1 = arith.constant 0 : i32
    return %c0_i32, %c0_i32_0 : i32, i32
  }
  func.func @transform_2(%arg0: i32) -> (i32, i32) {
    %c0_i32 = arith.constant 0 : i32
    %c0_i32_0 = arith.constant 0 : i32
    return %arg0, %c0_i32 : i32, i32
  }
  func.func @transform_3(%arg0: i32) -> (i32, i32) {
    %c0_i32 = arith.constant 0 : i32
    %c0_i32_0 = arith.constant 0 : i32
    %c0_i32_1 = arith.constant 0 : i32
    return %c0_i32, %c0_i32_0 : i32, i32
  }
  func.func @transform_4(%arg0: i32) -> (i32, i32) {
    %c0_i32 = arith.constant 0 : i32
    %c0_i32_0 = arith.constant 0 : i32
    %c0_i32_1 = arith.constant 0 : i32
    return %c0_i32, %c0_i32_0 : i32, i32
  }
}

module attributes {stable_mosaic.version = 11 : i64} {
  func.func @_affine_relu_kernel(%arg0: i32, %arg1: memref<128x128xbf16, #tpu.memory_space<vmem>>, %arg2: memref<1x128xf32, #tpu.memory_space<vmem>>, %arg3: memref<1x128xf32, #tpu.memory_space<vmem>>, %arg4: memref<128x128xbf16, #tpu.memory_space<vmem>>) attributes {dimension_semantics = [#tpu.dimension_semantics<parallel>], iteration_bounds = array<i64: 1>, scalar_prefetch = 0 : i64, scratch_operands = 0 : i64, tpu.core_type = #tpu.core_type<tc>, window_params = [{transform_indices = @transform_0, window_bounds = array<i64: 128, 128>}, {pipeline_mode = #tpu.pipeline_mode<synchronous>, transform_indices = @transform_1, window_bounds = array<i64: 1, 128>}, {pipeline_mode = #tpu.pipeline_mode<synchronous>, transform_indices = @transform_2, window_bounds = array<i64: 1, 128>}, {transform_indices = @transform_3, window_bounds = array<i64: 128, 128>}]} {
    %c0 = arith.constant 0 : index
    %c0_0 = arith.constant 0 : index
    %0 = vector.load %arg1[%c0, %c0_0] : memref<128x128xbf16, #tpu.memory_space<vmem>>, vector<128x128xbf16>
    %1 = arith.extf %0 : vector<128x128xbf16> to vector<128x128xf32>
    %c0_1 = arith.constant 0 : index
    %c0_2 = arith.constant 0 : index
    %2 = vector.load %arg2[%c0_1, %c0_2] : memref<1x128xf32, #tpu.memory_space<vmem>>, vector<1x128xf32>
    %3 = vector.broadcast %2 : vector<1x128xf32> to vector<128x128xf32>
    %4 = arith.mulf %1, %3 : vector<128x128xf32>
    %c0_3 = arith.constant 0 : index
    %c0_4 = arith.constant 0 : index
    %5 = vector.load %arg3[%c0_3, %c0_4] : memref<1x128xf32, #tpu.memory_space<vmem>>, vector<1x128xf32>
    %6 = vector.broadcast %5 : vector<1x128xf32> to vector<128x128xf32>
    %7 = arith.addf %4, %6 : vector<128x128xf32>
    %cst = arith.constant 0.000000e+00 : f32
    %8 = vector.broadcast %cst : f32 to vector<128x128xf32>
    %9 = arith.maximumf %7, %8 : vector<128x128xf32>
    %10 = arith.truncf %9 : vector<128x128xf32> to vector<128x128xbf16>
    %c0_5 = arith.constant 0 : index
    %c0_6 = arith.constant 0 : index
    %11 = vector.load %arg4[%c0_5, %c0_6] : memref<128x128xbf16, #tpu.memory_space<vmem>>, vector<128x128xbf16>
    tpu.vector_store %arg4[%c0_5, %c0_6], %10 {strides = array<i32>} : memref<128x128xbf16, #tpu.memory_space<vmem>>, vector<128x128xbf16>,
    return
  }
  func.func @transform_0(%arg0: i32) -> (i32, i32) {
    %c0_i32 = arith.constant 0 : i32
    %c0_i32_0 = arith.constant 0 : i32
    return %arg0, %c0_i32 : i32, i32
  }
  func.func @transform_1(%arg0: i32) -> (i32, i32) {
    %c0_i32 = arith.constant 0 : i32
    %c0_i32_0 = arith.constant 0 : i32
    %c0_i32_1 = arith.constant 0 : i32
    return %c0_i32, %c0_i32_0 : i32, i32
  }
  func.func @transform_2(%arg0: i32) -> (i32, i32) {
    %c0_i32 = arith.constant 0 : i32
    %c0_i32_0 = arith.constant 0 : i32
    %c0_i32_1 = arith.constant 0 : i32
    return %c0_i32, %c0_i32_0 : i32, i32
  }
  func.func @transform_3(%arg0: i32) -> (i32, i32) {
    %c0_i32 = arith.constant 0 : i32
    %c0_i32_0 = arith.constant 0 : i32
    return %arg0, %c0_i32 : i32, i32
  }
}

module attributes {stable_mosaic.version = 11 : i64} {
  func.func @kernel(%arg0: i32, %arg1: memref<512x304xbf16, #tpu.memory_space<vmem>>, %arg2: memref<304x32xbf16, #tpu.memory_space<vmem>>, %arg3: memref<512x32xbf16, #tpu.memory_space<vmem>>, %arg4: memref<1x32xf32, #tpu.memory_space<vmem>>, %arg5: memref<1x32xf32, #tpu.memory_space<vmem>>) attributes {dimension_semantics = [#tpu.dimension_semantics<arbitrary>], iteration_bounds = array<i64: 1>, scalar_prefetch = 0 : i64, scratch_operands = 0 : i64, tpu.core_type = #tpu.core_type<tc>, window_params = [{transform_indices = @transform_0, window_bounds = array<i64: 512, 304>}, {pipeline_mode = #tpu.pipeline_mode<synchronous>, transform_indices = @transform_1, window_bounds = array<i64: 304, 32>}, {transform_indices = @transform_2, window_bounds = array<i64: 512, 32>}, {pipeline_mode = #tpu.pipeline_mode<synchronous>, transform_indices = @transform_3, window_bounds = array<i64: 1, 32>}, {pipeline_mode = #tpu.pipeline_mode<synchronous>, transform_indices = @transform_4, window_bounds = array<i64: 1, 32>}]} {
    %c0_i32 = arith.constant 0 : i32
    %0 = arith.cmpi eq, %arg0, %c0_i32 : i32
    %1 = arith.extui %0 : i1 to i32
    %c0_i32_0 = arith.constant 0 : i32
    %2 = arith.cmpi ne, %1, %c0_i32_0 : i32
    scf.if %2 {
      %cst_16 = arith.constant 0.000000e+00 : f32
      %19 = vector.broadcast %cst_16 : f32 to vector<1x32xf32>
      %c0_17 = arith.constant 0 : index
      %c0_18 = arith.constant 0 : index
      %20 = vector.load %arg4[%c0_17, %c0_18] : memref<1x32xf32, #tpu.memory_space<vmem>>, vector<1x32xf32>
      tpu.vector_store %arg4[%c0_17, %c0_18], %19 {strides = array<i32>} : memref<1x32xf32, #tpu.memory_space<vmem>>, vector<1x32xf32>,
      %cst_19 = arith.constant 0.000000e+00 : f32
      %21 = vector.broadcast %cst_19 : f32 to vector<1x32xf32>
      %c0_20 = arith.constant 0 : index
      %c0_21 = arith.constant 0 : index
      %22 = vector.load %arg5[%c0_20, %c0_21] : memref<1x32xf32, #tpu.memory_space<vmem>>, vector<1x32xf32>
      tpu.vector_store %arg5[%c0_20, %c0_21], %21 {strides = array<i32>} : memref<1x32xf32, #tpu.memory_space<vmem>>, vector<1x32xf32>,
    } else {
    }
    %c0 = arith.constant 0 : index
    %c0_1 = arith.constant 0 : index
    %3 = vector.load %arg1[%c0, %c0_1] : memref<512x304xbf16, #tpu.memory_space<vmem>>, vector<512x304xbf16>
    %c0_2 = arith.constant 0 : index
    %c0_3 = arith.constant 0 : index
    %4 = vector.load %arg2[%c0_2, %c0_3] : memref<304x32xbf16, #tpu.memory_space<vmem>>, vector<304x32xbf16>
    %cst = arith.constant dense<0.000000e+00> : vector<512x32xf32>
    %5 = tpu.matmul %3, %4, %cst {dimension_numbers = #tpu.dot_dimension_numbers<[1], [0], [0], [1], [0, 0, 1, 1], [], []>} : vector<512x304xbf16>, vector<304x32xbf16>, vector<512x32xf32> -> vector<512x32xf32>
    %6 = arith.truncf %5 : vector<512x32xf32> to vector<512x32xbf16>
    %c0_4 = arith.constant 0 : index
    %c0_5 = arith.constant 0 : index
    %7 = vector.load %arg3[%c0_4, %c0_5] : memref<512x32xbf16, #tpu.memory_space<vmem>>, vector<512x32xbf16>
    tpu.vector_store %arg3[%c0_4, %c0_5], %6 {strides = array<i32>} : memref<512x32xbf16, #tpu.memory_space<vmem>>, vector<512x32xbf16>,
    %c0_6 = arith.constant 0 : index
    %c0_7 = arith.constant 0 : index
    %8 = vector.load %arg4[%c0_6, %c0_7] : memref<1x32xf32, #tpu.memory_space<vmem>>, vector<1x32xf32>
    %cst_8 = arith.constant dense<0.000000e+00> : vector<32xf32>
    %9 = vector.multi_reduction <add>, %5, %cst_8 [0] : vector<512x32xf32> to vector<32xf32>
    %10 = vector.shape_cast %9 : vector<32xf32> to vector<1x32xf32>
    %11 = arith.addf %8, %10 : vector<1x32xf32>
    %c0_9 = arith.constant 0 : index
    %c0_10 = arith.constant 0 : index
    %12 = vector.load %arg4[%c0_9, %c0_10] : memref<1x32xf32, #tpu.memory_space<vmem>>, vector<1x32xf32>
    tpu.vector_store %arg4[%c0_9, %c0_10], %11 {strides = array<i32>} : memref<1x32xf32, #tpu.memory_space<vmem>>, vector<1x32xf32>,
    %c0_11 = arith.constant 0 : index
    %c0_12 = arith.constant 0 : index
    %13 = vector.load %arg5[%c0_11, %c0_12] : memref<1x32xf32, #tpu.memory_space<vmem>>, vector<1x32xf32>
    %14 = arith.mulf %5, %5 : vector<512x32xf32>
    %cst_13 = arith.constant dense<0.000000e+00> : vector<32xf32>
    %15 = vector.multi_reduction <add>, %14, %cst_13 [0] : vector<512x32xf32> to vector<32xf32>
    %16 = vector.shape_cast %15 : vector<32xf32> to vector<1x32xf32>
    %17 = arith.addf %13, %16 : vector<1x32xf32>
    %c0_14 = arith.constant 0 : index
    %c0_15 = arith.constant 0 : index
    %18 = vector.load %arg5[%c0_14, %c0_15] : memref<1x32xf32, #tpu.memory_space<vmem>>, vector<1x32xf32>
    tpu.vector_store %arg5[%c0_14, %c0_15], %17 {strides = array<i32>} : memref<1x32xf32, #tpu.memory_space<vmem>>, vector<1x32xf32>,
    return
  }
  func.func @transform_0(%arg0: i32) -> (i32, i32) {
    %c0_i32 = arith.constant 0 : i32
    %c0_i32_0 = arith.constant 0 : i32
    return %arg0, %c0_i32 : i32, i32
  }
  func.func @transform_1(%arg0: i32) -> (i32, i32) {
    %c0_i32 = arith.constant 0 : i32
    %c0_i32_0 = arith.constant 0 : i32
    %c0_i32_1 = arith.constant 0 : i32
    return %c0_i32, %c0_i32_0 : i32, i32
  }
  func.func @transform_2(%arg0: i32) -> (i32, i32) {
    %c0_i32 = arith.constant 0 : i32
    %c0_i32_0 = arith.constant 0 : i32
    return %arg0, %c0_i32 : i32, i32
  }
  func.func @transform_3(%arg0: i32) -> (i32, i32) {
    %c0_i32 = arith.constant 0 : i32
    %c0_i32_0 = arith.constant 0 : i32
    %c0_i32_1 = arith.constant 0 : i32
    return %c0_i32, %c0_i32_0 : i32, i32
  }
  func.func @transform_4(%arg0: i32) -> (i32, i32) {
    %c0_i32 = arith.constant 0 : i32
    %c0_i32_0 = arith.constant 0 : i32
    %c0_i32_1 = arith.constant 0 : i32
    return %c0_i32, %c0_i32_0 : i32, i32
  }
}

module attributes {stable_mosaic.version = 11 : i64} {
  func.func @_affine_relu_kernel(%arg0: i32, %arg1: memref<64x128xbf16, #tpu.memory_space<vmem>>, %arg2: memref<1x128xf32, #tpu.memory_space<vmem>>, %arg3: memref<1x128xf32, #tpu.memory_space<vmem>>, %arg4: memref<64x128xbf16, #tpu.memory_space<vmem>>) attributes {dimension_semantics = [#tpu.dimension_semantics<parallel>], iteration_bounds = array<i64: 1>, scalar_prefetch = 0 : i64, scratch_operands = 0 : i64, tpu.core_type = #tpu.core_type<tc>, window_params = [{transform_indices = @transform_0, window_bounds = array<i64: 64, 128>}, {pipeline_mode = #tpu.pipeline_mode<synchronous>, transform_indices = @transform_1, window_bounds = array<i64: 1, 128>}, {pipeline_mode = #tpu.pipeline_mode<synchronous>, transform_indices = @transform_2, window_bounds = array<i64: 1, 128>}, {transform_indices = @transform_3, window_bounds = array<i64: 64, 128>}]} {
    %c0 = arith.constant 0 : index
    %c0_0 = arith.constant 0 : index
    %0 = vector.load %arg1[%c0, %c0_0] : memref<64x128xbf16, #tpu.memory_space<vmem>>, vector<64x128xbf16>
    %1 = arith.extf %0 : vector<64x128xbf16> to vector<64x128xf32>
    %c0_1 = arith.constant 0 : index
    %c0_2 = arith.constant 0 : index
    %2 = vector.load %arg2[%c0_1, %c0_2] : memref<1x128xf32, #tpu.memory_space<vmem>>, vector<1x128xf32>
    %3 = vector.broadcast %2 : vector<1x128xf32> to vector<64x128xf32>
    %4 = arith.mulf %1, %3 : vector<64x128xf32>
    %c0_3 = arith.constant 0 : index
    %c0_4 = arith.constant 0 : index
    %5 = vector.load %arg3[%c0_3, %c0_4] : memref<1x128xf32, #tpu.memory_space<vmem>>, vector<1x128xf32>
    %6 = vector.broadcast %5 : vector<1x128xf32> to vector<64x128xf32>
    %7 = arith.addf %4, %6 : vector<64x128xf32>
    %cst = arith.constant 0.000000e+00 : f32
    %8 = vector.broadcast %cst : f32 to vector<64x128xf32>
    %9 = arith.maximumf %7, %8 : vector<64x128xf32>
    %10 = arith.truncf %9 : vector<64x128xf32> to vector<64x128xbf16>
    %c0_5 = arith.constant 0 : index
    %c0_6 = arith.constant 0 : index
    %11 = vector.load %arg4[%c0_5, %c0_6] : memref<64x128xbf16, #tpu.memory_space<vmem>>, vector<64x128xbf16>
    tpu.vector_store %arg4[%c0_5, %c0_6], %10 {strides = array<i32>} : memref<64x128xbf16, #tpu.memory_space<vmem>>, vector<64x128xbf16>,
    return
  }
  func.func @transform_0(%arg0: i32) -> (i32, i32) {
    %c0_i32 = arith.constant 0 : i32
    %c0_i32_0 = arith.constant 0 : i32
    return %arg0, %c0_i32 : i32, i32
  }
  func.func @transform_1(%arg0: i32) -> (i32, i32) {
    %c0_i32 = arith.constant 0 : i32
    %c0_i32_0 = arith.constant 0 : i32
    %c0_i32_1 = arith.constant 0 : i32
    return %c0_i32, %c0_i32_0 : i32, i32
  }
  func.func @transform_2(%arg0: i32) -> (i32, i32) {
    %c0_i32 = arith.constant 0 : i32
    %c0_i32_0 = arith.constant 0 : i32
    %c0_i32_1 = arith.constant 0 : i32
    return %c0_i32, %c0_i32_0 : i32, i32
  }
  func.func @transform_3(%arg0: i32) -> (i32, i32) {
    %c0_i32 = arith.constant 0 : i32
    %c0_i32_0 = arith.constant 0 : i32
    return %arg0, %c0_i32 : i32, i32
  }
}

module attributes {stable_mosaic.version = 11 : i64} {
  func.func @kernel(%arg0: i32, %arg1: memref<128x288xbf16, #tpu.memory_space<vmem>>, %arg2: memref<288x64xbf16, #tpu.memory_space<vmem>>, %arg3: memref<128x64xbf16, #tpu.memory_space<vmem>>, %arg4: memref<1x64xf32, #tpu.memory_space<vmem>>, %arg5: memref<1x64xf32, #tpu.memory_space<vmem>>) attributes {dimension_semantics = [#tpu.dimension_semantics<arbitrary>], iteration_bounds = array<i64: 1>, scalar_prefetch = 0 : i64, scratch_operands = 0 : i64, tpu.core_type = #tpu.core_type<tc>, window_params = [{transform_indices = @transform_0, window_bounds = array<i64: 128, 288>}, {pipeline_mode = #tpu.pipeline_mode<synchronous>, transform_indices = @transform_1, window_bounds = array<i64: 288, 64>}, {transform_indices = @transform_2, window_bounds = array<i64: 128, 64>}, {pipeline_mode = #tpu.pipeline_mode<synchronous>, transform_indices = @transform_3, window_bounds = array<i64: 1, 64>}, {pipeline_mode = #tpu.pipeline_mode<synchronous>, transform_indices = @transform_4, window_bounds = array<i64: 1, 64>}]} {
    %c0_i32 = arith.constant 0 : i32
    %0 = arith.cmpi eq, %arg0, %c0_i32 : i32
    %1 = arith.extui %0 : i1 to i32
    %c0_i32_0 = arith.constant 0 : i32
    %2 = arith.cmpi ne, %1, %c0_i32_0 : i32
    scf.if %2 {
      %cst_16 = arith.constant 0.000000e+00 : f32
      %19 = vector.broadcast %cst_16 : f32 to vector<1x64xf32>
      %c0_17 = arith.constant 0 : index
      %c0_18 = arith.constant 0 : index
      %20 = vector.load %arg4[%c0_17, %c0_18] : memref<1x64xf32, #tpu.memory_space<vmem>>, vector<1x64xf32>
      tpu.vector_store %arg4[%c0_17, %c0_18], %19 {strides = array<i32>} : memref<1x64xf32, #tpu.memory_space<vmem>>, vector<1x64xf32>,
      %cst_19 = arith.constant 0.000000e+00 : f32
      %21 = vector.broadcast %cst_19 : f32 to vector<1x64xf32>
      %c0_20 = arith.constant 0 : index
      %c0_21 = arith.constant 0 : index
      %22 = vector.load %arg5[%c0_20, %c0_21] : memref<1x64xf32, #tpu.memory_space<vmem>>, vector<1x64xf32>
      tpu.vector_store %arg5[%c0_20, %c0_21], %21 {strides = array<i32>} : memref<1x64xf32, #tpu.memory_space<vmem>>, vector<1x64xf32>,
    } else {
    }
    %c0 = arith.constant 0 : index
    %c0_1 = arith.constant 0 : index
    %3 = vector.load %arg1[%c0, %c0_1] : memref<128x288xbf16, #tpu.memory_space<vmem>>, vector<128x288xbf16>
    %c0_2 = arith.constant 0 : index
    %c0_3 = arith.constant 0 : index
    %4 = vector.load %arg2[%c0_2, %c0_3] : memref<288x64xbf16, #tpu.memory_space<vmem>>, vector<288x64xbf16>
    %cst = arith.constant dense<0.000000e+00> : vector<128x64xf32>
    %5 = tpu.matmul %3, %4, %cst {dimension_numbers = #tpu.dot_dimension_numbers<[1], [0], [0], [1], [0, 0, 1, 1], [], []>} : vector<128x288xbf16>, vector<288x64xbf16>, vector<128x64xf32> -> vector<128x64xf32>
    %6 = arith.truncf %5 : vector<128x64xf32> to vector<128x64xbf16>
    %c0_4 = arith.constant 0 : index
    %c0_5 = arith.constant 0 : index
    %7 = vector.load %arg3[%c0_4, %c0_5] : memref<128x64xbf16, #tpu.memory_space<vmem>>, vector<128x64xbf16>
    tpu.vector_store %arg3[%c0_4, %c0_5], %6 {strides = array<i32>} : memref<128x64xbf16, #tpu.memory_space<vmem>>, vector<128x64xbf16>,
    %c0_6 = arith.constant 0 : index
    %c0_7 = arith.constant 0 : index
    %8 = vector.load %arg4[%c0_6, %c0_7] : memref<1x64xf32, #tpu.memory_space<vmem>>, vector<1x64xf32>
    %cst_8 = arith.constant dense<0.000000e+00> : vector<64xf32>
    %9 = vector.multi_reduction <add>, %5, %cst_8 [0] : vector<128x64xf32> to vector<64xf32>
    %10 = vector.shape_cast %9 : vector<64xf32> to vector<1x64xf32>
    %11 = arith.addf %8, %10 : vector<1x64xf32>
    %c0_9 = arith.constant 0 : index
    %c0_10 = arith.constant 0 : index
    %12 = vector.load %arg4[%c0_9, %c0_10] : memref<1x64xf32, #tpu.memory_space<vmem>>, vector<1x64xf32>
    tpu.vector_store %arg4[%c0_9, %c0_10], %11 {strides = array<i32>} : memref<1x64xf32, #tpu.memory_space<vmem>>, vector<1x64xf32>,
    %c0_11 = arith.constant 0 : index
    %c0_12 = arith.constant 0 : index
    %13 = vector.load %arg5[%c0_11, %c0_12] : memref<1x64xf32, #tpu.memory_space<vmem>>, vector<1x64xf32>
    %14 = arith.mulf %5, %5 : vector<128x64xf32>
    %cst_13 = arith.constant dense<0.000000e+00> : vector<64xf32>
    %15 = vector.multi_reduction <add>, %14, %cst_13 [0] : vector<128x64xf32> to vector<64xf32>
    %16 = vector.shape_cast %15 : vector<64xf32> to vector<1x64xf32>
    %17 = arith.addf %13, %16 : vector<1x64xf32>
    %c0_14 = arith.constant 0 : index
    %c0_15 = arith.constant 0 : index
    %18 = vector.load %arg5[%c0_14, %c0_15] : memref<1x64xf32, #tpu.memory_space<vmem>>, vector<1x64xf32>
    tpu.vector_store %arg5[%c0_14, %c0_15], %17 {strides = array<i32>} : memref<1x64xf32, #tpu.memory_space<vmem>>, vector<1x64xf32>,
    return
  }
  func.func @transform_0(%arg0: i32) -> (i32, i32) {
    %c0_i32 = arith.constant 0 : i32
    %c0_i32_0 = arith.constant 0 : i32
    return %arg0, %c0_i32 : i32, i32
  }
  func.func @transform_1(%arg0: i32) -> (i32, i32) {
    %c0_i32 = arith.constant 0 : i32
    %c0_i32_0 = arith.constant 0 : i32
    %c0_i32_1 = arith.constant 0 : i32
    return %c0_i32, %c0_i32_0 : i32, i32
  }
  func.func @transform_2(%arg0: i32) -> (i32, i32) {
    %c0_i32 = arith.constant 0 : i32
    %c0_i32_0 = arith.constant 0 : i32
    return %arg0, %c0_i32 : i32, i32
  }
  func.func @transform_3(%arg0: i32) -> (i32, i32) {
    %c0_i32 = arith.constant 0 : i32
    %c0_i32_0 = arith.constant 0 : i32
    %c0_i32_1 = arith.constant 0 : i32
    return %c0_i32, %c0_i32_0 : i32, i32
  }
  func.func @transform_4(%arg0: i32) -> (i32, i32) {
    %c0_i32 = arith.constant 0 : i32
    %c0_i32_0 = arith.constant 0 : i32
    %c0_i32_1 = arith.constant 0 : i32
    return %c0_i32, %c0_i32_0 : i32, i32
  }
}

module attributes {stable_mosaic.version = 11 : i64} {
  func.func @kernel(%arg0: i32, %arg1: memref<128x608xbf16, #tpu.memory_space<vmem>>, %arg2: memref<608x64xbf16, #tpu.memory_space<vmem>>, %arg3: memref<128x64xbf16, #tpu.memory_space<vmem>>, %arg4: memref<1x64xf32, #tpu.memory_space<vmem>>, %arg5: memref<1x64xf32, #tpu.memory_space<vmem>>) attributes {dimension_semantics = [#tpu.dimension_semantics<arbitrary>], iteration_bounds = array<i64: 1>, scalar_prefetch = 0 : i64, scratch_operands = 0 : i64, tpu.core_type = #tpu.core_type<tc>, window_params = [{transform_indices = @transform_0, window_bounds = array<i64: 128, 608>}, {pipeline_mode = #tpu.pipeline_mode<synchronous>, transform_indices = @transform_1, window_bounds = array<i64: 608, 64>}, {transform_indices = @transform_2, window_bounds = array<i64: 128, 64>}, {pipeline_mode = #tpu.pipeline_mode<synchronous>, transform_indices = @transform_3, window_bounds = array<i64: 1, 64>}, {pipeline_mode = #tpu.pipeline_mode<synchronous>, transform_indices = @transform_4, window_bounds = array<i64: 1, 64>}]} {
    %c0_i32 = arith.constant 0 : i32
    %0 = arith.cmpi eq, %arg0, %c0_i32 : i32
    %1 = arith.extui %0 : i1 to i32
    %c0_i32_0 = arith.constant 0 : i32
    %2 = arith.cmpi ne, %1, %c0_i32_0 : i32
    scf.if %2 {
      %cst_16 = arith.constant 0.000000e+00 : f32
      %19 = vector.broadcast %cst_16 : f32 to vector<1x64xf32>
      %c0_17 = arith.constant 0 : index
      %c0_18 = arith.constant 0 : index
      %20 = vector.load %arg4[%c0_17, %c0_18] : memref<1x64xf32, #tpu.memory_space<vmem>>, vector<1x64xf32>
      tpu.vector_store %arg4[%c0_17, %c0_18], %19 {strides = array<i32>} : memref<1x64xf32, #tpu.memory_space<vmem>>, vector<1x64xf32>,
      %cst_19 = arith.constant 0.000000e+00 : f32
      %21 = vector.broadcast %cst_19 : f32 to vector<1x64xf32>
      %c0_20 = arith.constant 0 : index
      %c0_21 = arith.constant 0 : index
      %22 = vector.load %arg5[%c0_20, %c0_21] : memref<1x64xf32, #tpu.memory_space<vmem>>, vector<1x64xf32>
      tpu.vector_store %arg5[%c0_20, %c0_21], %21 {strides = array<i32>} : memref<1x64xf32, #tpu.memory_space<vmem>>, vector<1x64xf32>,
    } else {
    }
    %c0 = arith.constant 0 : index
    %c0_1 = arith.constant 0 : index
    %3 = vector.load %arg1[%c0, %c0_1] : memref<128x608xbf16, #tpu.memory_space<vmem>>, vector<128x608xbf16>
    %c0_2 = arith.constant 0 : index
    %c0_3 = arith.constant 0 : index
    %4 = vector.load %arg2[%c0_2, %c0_3] : memref<608x64xbf16, #tpu.memory_space<vmem>>, vector<608x64xbf16>
    %cst = arith.constant dense<0.000000e+00> : vector<128x64xf32>
    %5 = tpu.matmul %3, %4, %cst {dimension_numbers = #tpu.dot_dimension_numbers<[1], [0], [0], [1], [0, 0, 1, 1], [], []>} : vector<128x608xbf16>, vector<608x64xbf16>, vector<128x64xf32> -> vector<128x64xf32>
    %6 = arith.truncf %5 : vector<128x64xf32> to vector<128x64xbf16>
    %c0_4 = arith.constant 0 : index
    %c0_5 = arith.constant 0 : index
    %7 = vector.load %arg3[%c0_4, %c0_5] : memref<128x64xbf16, #tpu.memory_space<vmem>>, vector<128x64xbf16>
    tpu.vector_store %arg3[%c0_4, %c0_5], %6 {strides = array<i32>} : memref<128x64xbf16, #tpu.memory_space<vmem>>, vector<128x64xbf16>,
    %c0_6 = arith.constant 0 : index
    %c0_7 = arith.constant 0 : index
    %8 = vector.load %arg4[%c0_6, %c0_7] : memref<1x64xf32, #tpu.memory_space<vmem>>, vector<1x64xf32>
    %cst_8 = arith.constant dense<0.000000e+00> : vector<64xf32>
    %9 = vector.multi_reduction <add>, %5, %cst_8 [0] : vector<128x64xf32> to vector<64xf32>
    %10 = vector.shape_cast %9 : vector<64xf32> to vector<1x64xf32>
    %11 = arith.addf %8, %10 : vector<1x64xf32>
    %c0_9 = arith.constant 0 : index
    %c0_10 = arith.constant 0 : index
    %12 = vector.load %arg4[%c0_9, %c0_10] : memref<1x64xf32, #tpu.memory_space<vmem>>, vector<1x64xf32>
    tpu.vector_store %arg4[%c0_9, %c0_10], %11 {strides = array<i32>} : memref<1x64xf32, #tpu.memory_space<vmem>>, vector<1x64xf32>,
    %c0_11 = arith.constant 0 : index
    %c0_12 = arith.constant 0 : index
    %13 = vector.load %arg5[%c0_11, %c0_12] : memref<1x64xf32, #tpu.memory_space<vmem>>, vector<1x64xf32>
    %14 = arith.mulf %5, %5 : vector<128x64xf32>
    %cst_13 = arith.constant dense<0.000000e+00> : vector<64xf32>
    %15 = vector.multi_reduction <add>, %14, %cst_13 [0] : vector<128x64xf32> to vector<64xf32>
    %16 = vector.shape_cast %15 : vector<64xf32> to vector<1x64xf32>
    %17 = arith.addf %13, %16 : vector<1x64xf32>
    %c0_14 = arith.constant 0 : index
    %c0_15 = arith.constant 0 : index
    %18 = vector.load %arg5[%c0_14, %c0_15] : memref<1x64xf32, #tpu.memory_space<vmem>>, vector<1x64xf32>
    tpu.vector_store %arg5[%c0_14, %c0_15], %17 {strides = array<i32>} : memref<1x64xf32, #tpu.memory_space<vmem>>, vector<1x64xf32>,
    return
  }
  func.func @transform_0(%arg0: i32) -> (i32, i32) {
    %c0_i32 = arith.constant 0 : i32
    %c0_i32_0 = arith.constant 0 : i32
    return %arg0, %c0_i32 : i32, i32
  }
  func.func @transform_1(%arg0: i32) -> (i32, i32) {
    %c0_i32 = arith.constant 0 : i32
    %c0_i32_0 = arith.constant 0 : i32
    %c0_i32_1 = arith.constant 0 : i32
    return %c0_i32, %c0_i32_0 : i32, i32
  }
  func.func @transform_2(%arg0: i32) -> (i32, i32) {
    %c0_i32 = arith.constant 0 : i32
    %c0_i32_0 = arith.constant 0 : i32
    return %arg0, %c0_i32 : i32, i32
  }
  func.func @transform_3(%arg0: i32) -> (i32, i32) {
    %c0_i32 = arith.constant 0 : i32
    %c0_i32_0 = arith.constant 0 : i32
    %c0_i32_1 = arith.constant 0 : i32
    return %c0_i32, %c0_i32_0 : i32, i32
  }
  func.func @transform_4(%arg0: i32) -> (i32, i32) {
    %c0_i32 = arith.constant 0 : i32
    %c0_i32_0 = arith.constant 0 : i32
    %c0_i32_1 = arith.constant 0 : i32
    return %c0_i32, %c0_i32_0 : i32, i32
  }
}

module attributes {stable_mosaic.version = 11 : i64} {
  func.func @_affine_relu_gap_kernel(%arg0: i32, %arg1: memref<2x64x64xbf16, #tpu.memory_space<vmem>>, %arg2: memref<1x1x64xf32, #tpu.memory_space<vmem>>, %arg3: memref<1x1x64xf32, #tpu.memory_space<vmem>>, %arg4: memref<2x64xf32, #tpu.memory_space<vmem>>) attributes {dimension_semantics = [#tpu.dimension_semantics<parallel>], iteration_bounds = array<i64: 1>, scalar_prefetch = 0 : i64, scratch_operands = 0 : i64, tpu.core_type = #tpu.core_type<tc>, window_params = [{transform_indices = @transform_0, window_bounds = array<i64: 2, 64, 64>}, {pipeline_mode = #tpu.pipeline_mode<synchronous>, transform_indices = @transform_1, window_bounds = array<i64: 1, 1, 64>}, {pipeline_mode = #tpu.pipeline_mode<synchronous>, transform_indices = @transform_2, window_bounds = array<i64: 1, 1, 64>}, {transform_indices = @transform_3, window_bounds = array<i64: 2, 64>}]} {
    %c0 = arith.constant 0 : index
    %c0_0 = arith.constant 0 : index
    %c0_1 = arith.constant 0 : index
    %0 = vector.load %arg1[%c0, %c0_0, %c0_1] : memref<2x64x64xbf16, #tpu.memory_space<vmem>>, vector<2x64x64xbf16>
    %1 = arith.extf %0 : vector<2x64x64xbf16> to vector<2x64x64xf32>
    %c0_2 = arith.constant 0 : index
    %c0_3 = arith.constant 0 : index
    %c0_4 = arith.constant 0 : index
    %2 = vector.load %arg2[%c0_2, %c0_3, %c0_4] : memref<1x1x64xf32, #tpu.memory_space<vmem>>, vector<1x1x64xf32>
    %3 = vector.broadcast %2 : vector<1x1x64xf32> to vector<2x64x64xf32>
    %4 = arith.mulf %1, %3 : vector<2x64x64xf32>
    %c0_5 = arith.constant 0 : index
    %c0_6 = arith.constant 0 : index
    %c0_7 = arith.constant 0 : index
    %5 = vector.load %arg3[%c0_5, %c0_6, %c0_7] : memref<1x1x64xf32, #tpu.memory_space<vmem>>, vector<1x1x64xf32>
    %6 = vector.broadcast %5 : vector<1x1x64xf32> to vector<2x64x64xf32>
    %7 = arith.addf %4, %6 : vector<2x64x64xf32>
    %cst = arith.constant 0.000000e+00 : f32
    %8 = vector.broadcast %cst : f32 to vector<2x64x64xf32>
    %9 = arith.maximumf %7, %8 : vector<2x64x64xf32>
    %cst_8 = arith.constant dense<0.000000e+00> : vector<2x64xf32>
    %10 = vector.multi_reduction <add>, %9, %cst_8 [1] : vector<2x64x64xf32> to vector<2x64xf32>
    %cst_9 = arith.constant 6.400000e+01 : f32
    %11 = vector.broadcast %cst_9 : f32 to vector<2x64xf32>
    %12 = arith.divf %10, %11 : vector<2x64xf32>
    %c0_10 = arith.constant 0 : index
    %c0_11 = arith.constant 0 : index
    %13 = vector.load %arg4[%c0_10, %c0_11] : memref<2x64xf32, #tpu.memory_space<vmem>>, vector<2x64xf32>
    tpu.vector_store %arg4[%c0_10, %c0_11], %12 {strides = array<i32>} : memref<2x64xf32, #tpu.memory_space<vmem>>, vector<2x64xf32>,
    return
  }
  func.func @transform_0(%arg0: i32) -> (i32, i32, i32) {
    %c0_i32 = arith.constant 0 : i32
    %c0_i32_0 = arith.constant 0 : i32
    %c0_i32_1 = arith.constant 0 : i32
    return %arg0, %c0_i32, %c0_i32_0 : i32, i32, i32
  }
  func.func @transform_1(%arg0: i32) -> (i32, i32, i32) {
    %c0_i32 = arith.constant 0 : i32
    %c0_i32_0 = arith.constant 0 : i32
    %c0_i32_1 = arith.constant 0 : i32
    %c0_i32_2 = arith.constant 0 : i32
    return %c0_i32, %c0_i32_0, %c0_i32_1 : i32, i32, i32
  }
  func.func @transform_2(%arg0: i32) -> (i32, i32, i32) {
    %c0_i32 = arith.constant 0 : i32
    %c0_i32_0 = arith.constant 0 : i32
    %c0_i32_1 = arith.constant 0 : i32
    %c0_i32_2 = arith.constant 0 : i32
    return %c0_i32, %c0_i32_0, %c0_i32_1 : i32, i32, i32
  }
  func.func @transform_3(%arg0: i32) -> (i32, i32) {
    %c0_i32 = arith.constant 0 : i32
    %c0_i32_0 = arith.constant 0 : i32
    return %arg0, %c0_i32 : i32, i32
  }
}

</mosaic_0001>

<llo_original>
// kernel: tile.63
$region0: #{tile.63}
  #allocation0 [shape = 's32[1]{0}', space=sflag, size = 0x4, scoped, tag = 'scoped memory for tile.63']
  %s0 = inlined_call_operand.vmem [shape: f32[16], index: 0, kind: input, shape index: {}]
  %s1 = inlined_call_operand.vmem [shape: f32[8,16], index: 1, kind: output, shape index: {}]
  // Predicated region
  $region2: #{tile.63} parent=0 // pred_check
    _
  $region3: #{tile.63} parent=0 // pred_check_branch
    %3 = sbr.rel (0) target = $region5
  $region4: #{tile.63} parent=0 // pred_region
    _
  $region5: #{tile.63} parent=0 // pred_fallthru
    _
  %v4 = vld [vmem:[%s0] ss:$0 sm:$0xff]
  %5 = vst [vmem:[%s1] sm:$0xff] %v4

// kernel: tile.64
$region0: #{tile.64}
  %s0 = inlined_call_operand.vmem [shape: f32[8,16], index: 0, kind: input, shape index: {}]
  %s1 = inlined_call_operand.vmem [shape: f32[1,128], index: 1, kind: output, shape index: {}]
  $region1: #{tile.64} parent=0
    #allocation0 [shape = 'u8[4096]{0}', space=vmem, size = 0x1000, scoped, tag = 'scoped mem for output reshape']
    %v2 = vld [vmem:[%s0] sm:$0x1]
    %vm3 = vcmask 130048
    %4 = vst.msk [vmem:[#allocation0] sm:$0x1] %vm3, %v2
    %s5 = scalar_lea.vmem %s0, 7
    %v6 = vld [vmem:[%s5] sm:$0x1]
    %7 = vrot.lane.b32.xlu0 %v6, 112
    %v8 = vpop.permute.xlu0 %7
    %vm9 = vcmask 1048448
    %10 = vst.msk [vmem:[#allocation0] sm:$0x1] %vm9, %v8
    %s11 = scalar_lea.vmem %s0, 6
    %v12 = vld [vmem:[%s11] sm:$0x1]
    %13 = vrot.lane.b32.xlu0 %v12, 96
    %v14 = vpop.permute.xlu0 %13
    %vm15 = vcmask 917248
    %16 = vst.msk [vmem:[#allocation0] sm:$0x1] %vm15, %v14
    %s17 = scalar_lea.vmem %s0, 5
    %v18 = vld [vmem:[%s17] sm:$0x1]
    %19 = vrot.lane.b32.xlu0 %v18, 80
    %v20 = vpop.permute.xlu0 %19
    %vm21 = vcmask 786048
    %22 = vst.msk [vmem:[#allocation0] sm:$0x1] %vm21, %v20
    %s23 = scalar_lea.vmem %s0, 4
    %v24 = vld [vmem:[%s23] sm:$0x1]
    %25 = vrot.lane.b32.xlu0 %v24, 64
    %v26 = vpop.permute.xlu0 %25
    %vm27 = vcmask 654848
    %28 = vst.msk [vmem:[#allocation0] sm:$0x1] %vm27, %v26
    %s29 = scalar_lea.vmem %s0, 3
    %v30 = vld [vmem:[%s29] sm:$0x1]
    %31 = vrot.lane.b32.xlu0 %v30, 48
    %v32 = vpop.permute.xlu0 %31
    %vm33 = vcmask 523648
    %34 = vst.msk [vmem:[#allocation0] sm:$0x1] %vm33, %v32
    %s35 = scalar_lea.vmem %s0, 2
    %v36 = vld [vmem:[%s35] sm:$0x1]
    %37 = vrot.lane.b32.xlu0 %v36, 32
    %v38 = vpop.permute.xlu0 %37
    %vm39 = vcmask 392448
    %40 = vst.msk [vmem:[#allocation0] sm:$0x1] %vm39, %v38
    %s41 = scalar_lea.vmem %s0, 1
    %v42 = vld [vmem:[%s41] sm:$0x1]
    %43 = vrot.lane.b32.xlu0 %v42, 16
    %v44 = vpop.permute.xlu0 %43
    %vm45 = vcmask 261248
    %46 = vst.msk [vmem:[#allocation0] sm:$0x1] %vm45, %v44
    %s48 = sshllo.u32 0, 1
    %v50 = vld [vmem:[#allocation0] sm:%s48]
    %s51 = sshllo.u32 0, 1
    %52 = vst [vmem:[%s1] sm:%s51] %v50

// kernel: _lambda_.15
$region0: #{_lambda_.15}
  #allocation0 [shape = 'u32[]', space=smem, size = 0x4, offset = 0x4, fixed_abs, tag = 'smem constant byte address 0x4 - core index']
  #allocation1 [shape = 'u32[144,128]{1,0:T(1,128)}', space=vmem, size = 0x12000, scoped, tag = 'internal scratch']
  %s0 = inlined_call_operand.vmem [shape: bf16[256,128], index: 0, kind: input, shape index: {}]
  %s1 = inlined_call_operand.vmem [shape: f32[1,128], index: 1, kind: input, shape index: {}]
  %s2 = inlined_call_operand.vmem [shape: f32[1,128], index: 2, kind: input, shape index: {}]
  %s3 = inlined_call_operand.vmem [shape: bf16[256,128], index: 3, kind: output, shape index: {}]
  %s4 = sld [smem:[#allocation0]]
  $region22: #{_lambda_.15} parent=0
    _
  %s6 = ssub.s32 1, %s4
  %s7 = scalar_select 0, %s6, %s4
  // Predicated region
  $region2: #{_lambda_.15} parent=0 // pred_check
    _
  $region3: #{_lambda_.15} parent=0 // pred_check_branch
    %9 = sbr.rel (0) target = $region5
  $region4: #{_lambda_.15} parent=0 // pred_region
    _
  $region5: #{_lambda_.15} parent=0 // pred_fallthru
    _
  // Predicated region
  $region6: #{_lambda_.15} parent=0 // pred_check
    _
  $region7: #{_lambda_.15} parent=0 // pred_check_branch
    %11 = sbr.rel (0) target = $region9
  $region8: #{_lambda_.15} parent=0 // pred_region
    _
  $region9: #{_lambda_.15} parent=0 // pred_fallthru
    _
  // Predicated region
  $region10: #{_lambda_.15} parent=0 // pred_check
    _
  $region11: #{_lambda_.15} parent=0 // pred_check_branch
    %13 = sbr.rel (0) target = $region13
  $region12: #{_lambda_.15} parent=0 // pred_region
    _
  $region13: #{_lambda_.15} parent=0 // pred_fallthru
    _
  %v14 = vld [vmem:[%s0] sm:$0xf]
  %v15 = vld [vmem:[%s0 + $0x4] sm:$0xf]
  %v16 = vld [vmem:[%s0 + $0x8] sm:$0xf]
  %v17 = vld [vmem:[%s0 + $0xc] sm:$0xf]
  %v18 = vld [vmem:[%s0 + $0x10] sm:$0xf]
  %v19 = vld [vmem:[%s0 + $0x14] sm:$0xf]
  %v20 = vld [vmem:[%s0 + $0x18] sm:$0xf]
  %v21 = vld [vmem:[%s0 + $0x1c] sm:$0xf]
  %v22 = vld [vmem:[%s0 + $0x20] sm:$0xf]
  %v23 = vld [vmem:[%s0 + $0x24] sm:$0xf]
  %v24 = vld [vmem:[%s0 + $0x28] sm:$0xf]
  %v25 = vld [vmem:[%s0 + $0x2c] sm:$0xf]
  %v26 = vld [vmem:[%s0 + $0x30] sm:$0xf]
  %v27 = vld [vmem:[%s0 + $0x34] sm:$0xf]
  %v28 = vld [vmem:[%s0 + $0x38] sm:$0xf]
  %v29 = vld [vmem:[%s0 + $0x3c] sm:$0xf]
  %v30 = vld [vmem:[%s0 + $0x40] sm:$0xf]
  %v31 = vld [vmem:[%s0 + $0x44] sm:$0xf]
  %v32 = vld [vmem:[%s0 + $0x48] sm:$0xf]
  %v33 = vld [vmem:[%s0 + $0x4c] sm:$0xf]
  %v34 = vld [vmem:[%s0 + $0x50] sm:$0xf]
  %v35 = vld [vmem:[%s0 + $0x54] sm:$0xf]
  %v36 = vld [vmem:[%s0 + $0x58] sm:$0xf]
  %v37 = vld [vmem:[%s0 + $0x5c] sm:$0xf]
  %v38 = vld [vmem:[%s0 + $0x60] sm:$0xf]
  %v39 = vld [vmem:[%s0 + $0x64] sm:$0xf]
  %v40 = vld [vmem:[%s0 + $0x68] sm:$0xf]
  %v41 = vld [vmem:[%s0 + $0x6c] sm:$0xf]
  %v42 = vld [vmem:[%s0 + $0x70] sm:$0xf]
  %v43 = vld [vmem:[%s0 + $0x74] sm:$0xf]
  %v44 = vld [vmem:[%s0 + $0x78] sm:$0xf]
  %v45 = vld [vmem:[%s0 + $0x7c] sm:$0xf]
  %v46 = vunpack.c.l.bf16 %v14
  %v47 = vunpack.c.l.bf16 %v15
  %v48 = vunpack.c.l.bf16 %v16
  %v49 = vunpack.c.l.bf16 %v17
  %v50 = vunpack.c.l.bf16 %v18
  %v51 = vunpack.c.l.bf16 %v19
  %v52 = vunpack.c.l.bf16 %v20
  %v53 = vunpack.c.l.bf16 %v21
  %v54 = vunpack.c.l.bf16 %v22
  %v55 = vunpack.c.l.bf16 %v23
  %v56 = vunpack.c.l.bf16 %v24
  %v57 = vunpack.c.l.bf16 %v25
  %v58 = vunpack.c.l.bf16 %v26
  %v59 = vunpack.c.l.bf16 %v27
  %v60 = vunpack.c.l.bf16 %v28
  %v61 = vunpack.c.l.bf16 %v29
  %v62 = vunpack.c.l.bf16 %v30
  %v63 = vunpack.c.l.bf16 %v31
  %v64 = vunpack.c.l.bf16 %v32
  %v65 = vunpack.c.l.bf16 %v33
  %v66 = vunpack.c.l.bf16 %v34
  %v67 = vunpack.c.l.bf16 %v35
  %v68 = vunpack.c.l.bf16 %v36
  %v69 = vunpack.c.l.bf16 %v37
  %v70 = vunpack.c.l.bf16 %v38
  %v71 = vunpack.c.l.bf16 %v39
  %v72 = vunpack.c.l.bf16 %v40
  %v73 = vunpack.c.l.bf16 %v41
  %v74 = vunpack.c.l.bf16 %v42
  %v75 = vunpack.c.l.bf16 %v43
  %v76 = vunpack.c.l.bf16 %v44
  %v77 = vunpack.c.l.bf16 %v45
  %v78 = vld [vmem:[%s1] sm:$0x1]
  %v80 = vlaneseq
  %v81 = vshrl.u32 %v80, 7
  %v82 = vsub.s32 0, %v81
  %v83 = vrot.slane %v78, %v82
  %v85 = vmul.f32 %v46, %v83
  %v86 = vmul.f32 %v47, %v83
  %v87 = vmul.f32 %v48, %v83
  %v88 = vmul.f32 %v49, %v83
  %v89 = vmul.f32 %v50, %v83
  %v90 = vmul.f32 %v51, %v83
  %v91 = vmul.f32 %v52, %v83
  %v92 = vmul.f32 %v53, %v83
  %v93 = vmul.f32 %v54, %v83
  %v94 = vmul.f32 %v55, %v83
  %v95 = vmul.f32 %v56, %v83
  %v96 = vmul.f32 %v57, %v83
  %v97 = vmul.f32 %v58, %v83
  %v98 = vmul.f32 %v59, %v83
  %v99 = vmul.f32 %v60, %v83
  %v100 = vmul.f32 %v61, %v83
  %v101 = vmul.f32 %v62, %v83
  %v102 = vmul.f32 %v63, %v83
  %v103 = vmul.f32 %v64, %v83
  %v104 = vmul.f32 %v65, %v83
  %v105 = vmul.f32 %v66, %v83
  %v106 = vmul.f32 %v67, %v83
  %v107 = vmul.f32 %v68, %v83
  %v108 = vmul.f32 %v69, %v83
  %v109 = vmul.f32 %v70, %v83
  %v110 = vmul.f32 %v71, %v83
  %v111 = vmul.f32 %v72, %v83
  %v112 = vmul.f32 %v73, %v83
  %v113 = vmul.f32 %v74, %v83
  %v114 = vmul.f32 %v75, %v83
  %v115 = vmul.f32 %v76, %v83
  %v116 = vmul.f32 %v77, %v83
  %v117 = vld [vmem:[%s2] sm:$0x1]
  %v119 = vlaneseq
  %v120 = vshrl.u32 %v119, 7
  %v121 = vsub.s32 0, %v120
  %v122 = vrot.slane %v117, %v121
  %v124 = vadd.f32 %v85, %v122
  %v125 = vadd.f32 %v86, %v122
  %v126 = vadd.f32 %v87, %v122
  %v127 = vadd.f32 %v88, %v122
  %v128 = vadd.f32 %v89, %v122
  %v129 = vadd.f32 %v90, %v122
  %v130 = vadd.f32 %v91, %v122
  %v131 = vadd.f32 %v92, %v122
  %v132 = vadd.f32 %v93, %v122
  %v133 = vadd.f32 %v94, %v122
  %v134 = vadd.f32 %v95, %v122
  %v135 = vadd.f32 %v96, %v122
  %v136 = vadd.f32 %v97, %v122
  %v137 = vadd.f32 %v98, %v122
  %v138 = vadd.f32 %v99, %v122
  %v139 = vadd.f32 %v100, %v122
  %v140 = vadd.f32 %v101, %v122
  %v141 = vadd.f32 %v102, %v122
  %v142 = vadd.f32 %v103, %v122
  %v143 = vadd.f32 %v104, %v122
  %v144 = vadd.f32 %v105, %v122
  %v145 = vadd.f32 %v106, %v122
  %v146 = vadd.f32 %v107, %v122
  %v147 = vadd.f32 %v108, %v122
  %v148 = vadd.f32 %v109, %v122
  %v149 = vadd.f32 %v110, %v122
  %v150 = vadd.f32 %v111, %v122
  %v151 = vadd.f32 %v112, %v122
  %v152 = vadd.f32 %v113, %v122
  %v153 = vadd.f32 %v114, %v122
  %v154 = vadd.f32 %v115, %v122
  %v155 = vadd.f32 %v116, %v122
  %v156 = vmax.f32 %v124, 0.0
  %v157 = vmax.f32 %v125, 0.0
  %v158 = vmax.f32 %v126, 0.0
  %v159 = vmax.f32 %v127, 0.0
  %v160 = vmax.f32 %v128, 0.0
  %v161 = vmax.f32 %v129, 0.0
  %v162 = vmax.f32 %v130, 0.0
  %v163 = vmax.f32 %v131, 0.0
  %v164 = vmax.f32 %v132, 0.0
  %v165 = vmax.f32 %v133, 0.0
  %v166 = vmax.f32 %v134, 0.0
  %v167 = vmax.f32 %v135, 0.0
  %v168 = vmax.f32 %v136, 0.0
  %v169 = vmax.f32 %v137, 0.0
  %v170 = vmax.f32 %v138, 0.0
  %v171 = vmax.f32 %v139, 0.0
  %v172 = vmax.f32 %v140, 0.0
  %v173 = vmax.f32 %v141, 0.0
  %v174 = vmax.f32 %v142, 0.0
  %v175 = vmax.f32 %v143, 0.0
  %v176 = vmax.f32 %v144, 0.0
  %v177 = vmax.f32 %v145, 0.0
  %v178 = vmax.f32 %v146, 0.0
  %v179 = vmax.f32 %v147, 0.0
  %v180 = vmax.f32 %v148, 0.0
  %v181 = vmax.f32 %v149, 0.0
  %v182 = vmax.f32 %v150, 0.0
  %v183 = vmax.f32 %v151, 0.0
  %v184 = vmax.f32 %v152, 0.0
  %v185 = vmax.f32 %v153, 0.0
  %v186 = vmax.f32 %v154, 0.0
  %v187 = vmax.f32 %v155, 0.0
  %v188 = vpack.c.bf16 %v157, %v156
  %v189 = vpack.c.bf16 %v159, %v158
  %v190 = vpack.c.bf16 %v161, %v160
  %v191 = vpack.c.bf16 %v163, %v162
  %v192 = vpack.c.bf16 %v165, %v164
  %v193 = vpack.c.bf16 %v167, %v166
  %v194 = vpack.c.bf16 %v169, %v168
  %v195 = vpack.c.bf16 %v171, %v170
  %v196 = vpack.c.bf16 %v173, %v172
  %v197 = vpack.c.bf16 %v175, %v174
  %v198 = vpack.c.bf16 %v177, %v176
  %v199 = vpack.c.bf16 %v179, %v178
  %v200 = vpack.c.bf16 %v181, %v180
  %v201 = vpack.c.bf16 %v183, %v182
  %v202 = vpack.c.bf16 %v185, %v184
  %v203 = vpack.c.bf16 %v187, %v186
  %v220 = vunpack.c.l.b16 %v188
  %v221 = vunpack.c.h.b16 %v188
  %v222 = vunpack.c.l.b16 %v189
  %v223 = vunpack.c.h.b16 %v189
  %v224 = vunpack.c.l.b16 %v190
  %v225 = vunpack.c.h.b16 %v190
  %v226 = vunpack.c.l.b16 %v191
  %v227 = vunpack.c.h.b16 %v191
  %v228 = vunpack.c.l.b16 %v192
  %v229 = vunpack.c.h.b16 %v192
  %v230 = vunpack.c.l.b16 %v193
  %v231 = vunpack.c.h.b16 %v193
  %v232 = vunpack.c.l.b16 %v194
  %v233 = vunpack.c.h.b16 %v194
  %v234 = vunpack.c.l.b16 %v195
  %v235 = vunpack.c.h.b16 %v195
  %v236 = vunpack.c.l.b16 %v196
  %v237 = vunpack.c.h.b16 %v196
  %v238 = vunpack.c.l.b16 %v197
  %v239 = vunpack.c.h.b16 %v197
  %v240 = vunpack.c.l.b16 %v198
  %v241 = vunpack.c.h.b16 %v198
  %v242 = vunpack.c.l.b16 %v199
  %v243 = vunpack.c.h.b16 %v199
  %v244 = vunpack.c.l.b16 %v200
  %v245 = vunpack.c.h.b16 %v200
  %v246 = vunpack.c.l.b16 %v201
  %v247 = vunpack.c.h.b16 %v201
  %v248 = vunpack.c.l.b16 %v202
  %v249 = vunpack.c.h.b16 %v202
  %v250 = vunpack.c.l.b16 %v203
  %v251 = vunpack.c.h.b16 %v203
  %v252 = vpack.c.b16 %v220, %v220
  %v253 = vpack.c.b16 %v221, %v221
  %v254 = vpack.c.b16 %v222, %v222
  %v255 = vpack.c.b16 %v223, %v223
  %v256 = vpack.c.b16 %v224, %v224
  %v257 = vpack.c.b16 %v225, %v225
  %v258 = vpack.c.b16 %v226, %v226
  %v259 = vpack.c.b16 %v227, %v227
  %v260 = vpack.c.b16 %v228, %v228
  %v261 = vpack.c.b16 %v229, %v229
  %v262 = vpack.c.b16 %v230, %v230
  %v263 = vpack.c.b16 %v231, %v231
  %v264 = vpack.c.b16 %v232, %v232
  %v265 = vpack.c.b16 %v233, %v233
  %v266 = vpack.c.b16 %v234, %v234
  %v267 = vpack.c.b16 %v235, %v235
  %v268 = vpack.c.b16 %v236, %v236
  %v269 = vpack.c.b16 %v237, %v237
  %v270 = vpack.c.b16 %v238, %v238
  %v271 = vpack.c.b16 %v239, %v239
  %v272 = vpack.c.b16 %v240, %v240
  %v273 = vpack.c.b16 %v241, %v241
  %v274 = vpack.c.b16 %v242, %v242
  %v275 = vpack.c.b16 %v243, %v243
  %v276 = vpack.c.b16 %v244, %v244
  %v277 = vpack.c.b16 %v245, %v245
  %v278 = vpack.c.b16 %v246, %v246
  %v279 = vpack.c.b16 %v247, %v247
  %v280 = vpack.c.b16 %v248, %v248
  %v281 = vpack.c.b16 %v249, %v249
  %v282 = vpack.c.b16 %v250, %v250
  %v283 = vpack.c.b16 %v251, %v251
  %316 = vst [vmem:[%s3] sm:$0xf] %v252
  %317 = vst [vmem:[%s3 + $0x4] sm:$0xf] %v253
  %318 = vst [vmem:[%s3 + $0x8] sm:$0xf] %v254
  %319 = vst [vmem:[%s3 + $0xc] sm:$0xf] %v255
  %320 = vst [vmem:[%s3 + $0x10] sm:$0xf] %v256
  %321 = vst [vmem:[%s3 + $0x14] sm:$0xf] %v257
  %322 = vst [vmem:[%s3 + $0x18] sm:$0xf] %v258
  %323 = vst [vmem:[%s3 + $0x1c] sm:$0xf] %v259
  %324 = vst [vmem:[%s3 + $0x20] sm:$0xf] %v260
  %325 = vst [vmem:[%s3 + $0x24] sm:$0xf] %v261
  %326 = vst [vmem:[%s3 + $0x28] sm:$0xf] %v262
  %327 = vst [vmem:[%s3 + $0x2c] sm:$0xf] %v263
  %328 = vst [vmem:[%s3 + $0x30] sm:$0xf] %v264
  %329 = vst [vmem:[%s3 + $0x34] sm:$0xf] %v265
  %330 = vst [vmem:[%s3 + $0x38] sm:$0xf] %v266
  %331 = vst [vmem:[%s3 + $0x3c] sm:$0xf] %v267
  %332 = vst [vmem:[%s3 + $0x40] sm:$0xf] %v268
  %333 = vst [vmem:[%s3 + $0x44] sm:$0xf] %v269
  %334 = vst [vmem:[%s3 + $0x48] sm:$0xf] %v270
  %335 = vst [vmem:[%s3 + $0x4c] sm:$0xf] %v271
  %336 = vst [vmem:[%s3 + $0x50] sm:$0xf] %v272
  %337 = vst [vmem:[%s3 + $0x54] sm:$0xf] %v273
  %338 = vst [vmem:[%s3 + $0x58] sm:$0xf] %v274
  %339 = vst [vmem:[%s3 + $0x5c] sm:$0xf] %v275
  %340 = vst [vmem:[%s3 + $0x60] sm:$0xf] %v276
  %341 = vst [vmem:[%s3 + $0x64] sm:$0xf] %v277
  %342 = vst [vmem:[%s3 + $0x68] sm:$0xf] %v278
  %343 = vst [vmem:[%s3 + $0x6c] sm:$0xf] %v279
  %344 = vst [vmem:[%s3 + $0x70] sm:$0xf] %v280
  %345 = vst [vmem:[%s3 + $0x74] sm:$0xf] %v281
  %346 = vst [vmem:[%s3 + $0x78] sm:$0xf] %v282
  %347 = vst [vmem:[%s3 + $0x7c] sm:$0xf] %v283
  // Predicated region
  $region14: #{_lambda_.15} parent=0 // pred_check
    _
  $region15: #{_lambda_.15} parent=0 // pred_check_branch
    %349 = sbr.rel (0) target = $region17
  $region16: #{_lambda_.15} parent=0 // pred_region
    _
  $region17: #{_lambda_.15} parent=0 // pred_fallthru
    _
  // Predicated region
  $region18: #{_lambda_.15} parent=0 // pred_check
    _
  $region19: #{_lambda_.15} parent=0 // pred_check_branch
    %351 = sbr.rel (0) target = $region21
  $region20: #{_lambda_.15} parent=0 // pred_region
    _
  $region21: #{_lambda_.15} parent=0 // pred_fallthru
    _

// kernel: _lambda_.14
$region0: #{_lambda_.14}
  #allocation0 [shape = 'u32[]', space=smem, size = 0x4, offset = 0x4, fixed_abs, tag = 'smem constant byte address 0x4 - core index']
  #allocation1 [shape = 'u32[144,128]{1,0:T(1,128)}', space=vmem, size = 0x12000, scoped, tag = 'internal scratch']
  %s0 = inlined_call_operand.vmem [shape: bf16[2048,27], index: 0, kind: input, shape index: {}]
  %s1 = inlined_call_operand.vmem [shape: bf16[27,16], index: 1, kind: input, shape index: {}]
  %s2 = inlined_call_operand.vmem [shape: bf16[2048,16], index: 2, kind: output, shape index: {0}]
  %s3 = inlined_call_operand.vmem [shape: f32[1,16], index: 3, kind: output, shape index: {1}]
  %s4 = inlined_call_operand.vmem [shape: f32[1,16], index: 4, kind: output, shape index: {2}]
  %5 = xla_tuple %s2, %s3, %s4
  %s6 = sld [smem:[#allocation0]]
  $region61: #{_lambda_.14} parent=0
    _
  %s8 = ssub.s32 1, %s6
  %s9 = scalar_select 0, %s8, %s6
  loop: start=0, step=1, limit=6
  $region2: #{_lambda_.14} parent=0 // loop_pre_header
    _
  $region3: #{_lambda_.14} parent=0 // loop_header
    %s11 = sphi 0, %s15
    %p12 = scmp.ge.s32.totalorder %s11, 6
    %s21 = sphi 0, %s23
    %s24 = sphi 0, %s21
    %s25 = sphi 0, %s24
    %s41 = sphi 0, %s25
    %s45 = sphi 0, %s45
    %s47 = sphi 0, %s45
    %s48 = sphi 0, %s47
    %s62 = sphi 0, %s48
    %s68 = sphi 0, %s70
    %s71 = sphi 0, %s68
    %s72 = sphi 0, %s71
    %s88 = sphi 0, %s72
    %s92 = sphi 0, %s92
    %s94 = sphi 0, %s92
    %s95 = sphi 0, %s94
    %s109 = sphi 0, %s95
    %s113 = sphi 0, %s113
    %s115 = sphi 0, %s113
    %s116 = sphi 0, %s115
    %s130 = sphi 0, %s116
  $region4: #{_lambda_.14} parent=0 // loop_header_branch
    %14 = sbr.rel (%p12) target = $region8
  $region5: #{_lambda_.14} parent=0 // loop_body
    %s16 = ssub.s32 %s11, 1
    %s17 = ssub.s32 %s11, 2
    %s18 = sadd.s32 %s11, 1
    %s19 = ssub.s32 %s11, %s18
    %p20 = scmp.eq.s32.totalorder %s19, 0
    %s22 = sadd.s32 %s21, 1
    %s23 = scalar_select %p20, %s21, %s22
    %p26 = pneg %p20
    %p27 = scmp.eq.s32.totalorder %s11, 3
    %p28 = por %p26, %p27
    %p29 = scmp.ne.s32.totalorder %s21, %s24
    %p30 = scmp.eq.s32.totalorder %s11, 0
    %p31 = por %p29, %p30
    %p32 = scmp.ne.s32.totalorder %s21, %s24
    %p33 = scmp.eq.s32.totalorder %s16, 3
    %p34 = por %p32, %p33
    %p35 = scmp.ne.s32.totalorder %s24, %s25
    %p36 = scmp.eq.s32.totalorder %s16, 0
    %p37 = por %p35, %p36
    %p38 = scmp.ne.s32.totalorder %s24, %s25
    %p39 = scmp.eq.s32.totalorder %s17, 3
    %p40 = por %p38, %p39
    %p42 = scmp.ne.s32.totalorder %s25, %s41
    %p43 = scmp.eq.s32.totalorder %s17, 0
    %p44 = por %p42, %p43
    %s46 = sadd.s32 %s45, 1
    %p49 = scmp.eq.s32.totalorder %s11, 3
    %p50 = scmp.ne.s32.totalorder %s45, %s47
    %p51 = scmp.eq.s32.totalorder %s11, 0
    %p52 = por %p50, %p51
    %p53 = scmp.ne.s32.totalorder %s45, %s47
    %p54 = scmp.eq.s32.totalorder %s16, 3
    %p55 = por %p53, %p54
    %p56 = scmp.ne.s32.totalorder %s47, %s48
    %p57 = scmp.eq.s32.totalorder %s16, 0
    %p58 = por %p56, %p57
    %p59 = scmp.ne.s32.totalorder %s47, %s48
    %p60 = scmp.eq.s32.totalorder %s17, 3
    %p61 = por %p59, %p60
    %p63 = scmp.ne.s32.totalorder %s48, %s62
    %p64 = scmp.eq.s32.totalorder %s17, 0
    %p65 = por %p63, %p64
    %s66 = ssub.s32 %s11, %s18
    %p67 = scmp.eq.s32.totalorder %s66, 0
    %s69 = sadd.s32 %s68, 1
    %s70 = scalar_select %p67, %s68, %s69
    %p73 = pneg %p67
    %p74 = scmp.eq.s32.totalorder %s11, 3
    %p75 = por %p73, %p74
    %p76 = scmp.ne.s32.totalorder %s68, %s71
    %p77 = scmp.eq.s32.totalorder %s11, 0
    %p78 = por %p76, %p77
    %p79 = scmp.ne.s32.totalorder %s68, %s71
    %p80 = scmp.eq.s32.totalorder %s16, 3
    %p81 = por %p79, %p80
    %p82 = scmp.ne.s32.totalorder %s71, %s72
    %p83 = scmp.eq.s32.totalorder %s16, 0
    %p84 = por %p82, %p83
    %p85 = scmp.ne.s32.totalorder %s71, %s72
    %p86 = scmp.eq.s32.totalorder %s17, 3
    %p87 = por %p85, %p86
    %p89 = scmp.ne.s32.totalorder %s72, %s88
    %p90 = scmp.eq.s32.totalorder %s17, 0
    %p91 = por %p89, %p90
    %s93 = sadd.s32 %s92, 1
    %p96 = scmp.eq.s32.totalorder %s11, 3
    %p97 = scmp.ne.s32.totalorder %s92, %s94
    %p98 = scmp.eq.s32.totalorder %s11, 0
    %p99 = por %p97, %p98
    %p100 = scmp.ne.s32.totalorder %s92, %s94
    %p101 = scmp.eq.s32.totalorder %s16, 3
    %p102 = por %p100, %p101
    %p103 = scmp.ne.s32.totalorder %s94, %s95
    %p104 = scmp.eq.s32.totalorder %s16, 0
    %p105 = por %p103, %p104
    %p106 = scmp.ne.s32.totalorder %s94, %s95
    %p107 = scmp.eq.s32.totalorder %s17, 3
    %p108 = por %p106, %p107
    %p110 = scmp.ne.s32.totalorder %s95, %s109
    %p111 = scmp.eq.s32.totalorder %s17, 0
    %p112 = por %p110, %p111
    %s114 = sadd.s32 %s113, 1
    %p117 = scmp.eq.s32.totalorder %s11, 3
    %p118 = scmp.ne.s32.totalorder %s113, %s115
    %p119 = scmp.eq.s32.totalorder %s11, 0
    %p120 = por %p118, %p119
    %p121 = scmp.ne.s32.totalorder %s113, %s115
    %p122 = scmp.eq.s32.totalorder %s16, 3
    %p123 = por %p121, %p122
    %p124 = scmp.ne.s32.totalorder %s115, %s116
    %p125 = scmp.eq.s32.totalorder %s16, 0
    %p126 = por %p124, %p125
    %p127 = scmp.ne.s32.totalorder %s115, %s116
    %p128 = scmp.eq.s32.totalorder %s17, 3
    %p129 = por %p127, %p128
    %p131 = scmp.ne.s32.totalorder %s116, %s130
    %p132 = scmp.eq.s32.totalorder %s17, 0
    %p133 = por %p131, %p132
    %p134 = scmp.le.s32.totalorder 1, %s11
    %p135 = scmp.lt.s32.totalorder %s11, 5
    %p136 = pnand %p134, %p135
    %p137 = pneg %p136
    // Predicated region
    $region9: #{_lambda_.14} parent=5 // pred_check
      _
    $region10: #{_lambda_.14} parent=5 // pred_check_branch
      %139 = sbr.rel (%p136) target = $region12
    $region11: #{_lambda_.14} parent=5 // pred_region
      %s140 = ssub.s32 %s11, 1
      // Predicated region
      $region13: #{_lambda_.14} parent=11 // pred_check
        %p141 = pneg %p58
      $region14: #{_lambda_.14} parent=11 // pred_check_branch
        %143 = sbr.rel (%p141) target = $region16
      $region15: #{_lambda_.14} parent=11 // pred_region
        _
      $region16: #{_lambda_.14} parent=11 // pred_fallthru
        _
    $region12: #{_lambda_.14} parent=5 // pred_fallthru
      _
    %p144 = scmp.lt.s32.totalorder %s11, 4
    // Predicated region
    $region17: #{_lambda_.14} parent=5 // pred_check
      %p145 = pneg %p144
    $region18: #{_lambda_.14} parent=5 // pred_check_branch
      %147 = sbr.rel (%p145) target = $region20
    $region19: #{_lambda_.14} parent=5 // pred_region
      // Predicated region
      $region21: #{_lambda_.14} parent=19 // pred_check
        %p148 = pneg %p31
      $region22: #{_lambda_.14} parent=19 // pred_check_branch
        %150 = sbr.rel (%p148) target = $region24
      $region23: #{_lambda_.14} parent=19 // pred_region
        %s151 = smul.u32 64, %s11
        %p152 = scmp.lt.s32.totalorder %s151, 255
        %s153 = scalar_select %p152, %s151, 255
        %s154 = smul.addr %s153, 4
        %s155 = scalar_lea.vmem %s0, %s154
        %s156 = smul.u32 64, %s11
      $region24: #{_lambda_.14} parent=19 // pred_fallthru
        _
    $region20: #{_lambda_.14} parent=5 // pred_fallthru
      _
    %p157 = scmp.le.s32.totalorder 1, %s11
    %p158 = scmp.lt.s32.totalorder %s11, 5
    %p159 = pnand %p157, %p158
    %p160 = pneg %p159
    // Predicated region
    $region25: #{_lambda_.14} parent=5 // pred_check
      _
    $region26: #{_lambda_.14} parent=5 // pred_check_branch
      %162 = sbr.rel (%p159) target = $region28
    $region27: #{_lambda_.14} parent=5 // pred_region
      %s163 = ssub.s32 %s11, 1
      %s164 = smul.u32 64, %s16
      %p165 = scmp.lt.s32.totalorder %s164, 255
      %s166 = scalar_select %p165, %s164, 255
      %s167 = smul.addr %s166, 4
      %s168 = scalar_lea.vmem %s0, %s167
      %p169 = pneg %p37
      %p170 = pneg %p34
      %p171 = pneg %p58
      %p172 = pneg %p55
      %p173 = pneg %p84
      %p174 = pneg %p81
      %s175 = smul.u32 64, %s16
      %p176 = scmp.lt.s32.totalorder %s175, 255
      %s177 = scalar_select %p176, %s175, 255
      %s178 = smul.addr %s177, 4
      %s179 = scalar_lea.vmem %s2, %s178
      %p180 = pneg %p105
      %p181 = pneg %p102
      %p182 = pneg %p126
      %p183 = pneg %p123
      %s184 = smul.u32 64, %s16
      %p185 = scmp.lt.s32.totalorder %s184, 255
      %s186 = scalar_select %p185, %s184, 255
      %s187 = smul.addr %s186, 4
      %s188 = scalar_lea.vmem %s0, %s187
      %s189 = smul.u32 64, %s16
      %s190 = smul.u32 64, %s16
      %p191 = scmp.lt.s32.totalorder %s190, 255
      %s192 = scalar_select %p191, %s190, 255
      %s193 = smul.addr %s192, 4
      %s194 = scalar_lea.vmem %s2, %s193
      %s195 = smul.u32 64, %s16
      %p197 = scmp.eq.s32.totalorder %s16, 0
      // Predicated region
      $region29: #{_lambda_.14} parent=27 // pred_check
        %p198 = pneg %p197
      $region30: #{_lambda_.14} parent=27 // pred_check_branch
        %200 = sbr.rel (%p198) target = $region32
      $region31: #{_lambda_.14} parent=27 // pred_region
        %vm201 = vcmask 122880
        %202 = vst.msk [vmem:[%s3] sm:$0x1] %vm201, 0.0
        %203 = vst.msk [vmem:[%s4] sm:$0x1] %vm201, 0.0
      $region32: #{_lambda_.14} parent=27 // pred_fallthru
        _
      %v204 = vld [vmem:[%s188] sm:$0xf]
      %v205 = vld [vmem:[%s188 + $0x4] sm:$0xf]
      %v206 = vld [vmem:[%s188 + $0x8] sm:$0xf]
      %v207 = vld [vmem:[%s188 + $0xc] sm:$0xf]
      %v208 = vld [vmem:[%s188 + $0x10] sm:$0xf]
      %v209 = vld [vmem:[%s188 + $0x14] sm:$0xf]
      %v210 = vld [vmem:[%s188 + $0x18] sm:$0xf]
      %v211 = vld [vmem:[%s188 + $0x1c] sm:$0xf]
      %v212 = vld [vmem:[%s188 + $0x20] sm:$0xf]
      %v213 = vld [vmem:[%s188 + $0x24] sm:$0xf]
      %v214 = vld [vmem:[%s188 + $0x28] sm:$0xf]
      %v215 = vld [vmem:[%s188 + $0x2c] sm:$0xf]
      %v216 = vld [vmem:[%s188 + $0x30] sm:$0xf]
      %v217 = vld [vmem:[%s188 + $0x34] sm:$0xf]
      %v218 = vld [vmem:[%s188 + $0x38] sm:$0xf]
      %v219 = vld [vmem:[%s188 + $0x3c] sm:$0xf]
      %v220 = vld [vmem:[%s188 + $0x40] sm:$0xf]
      %v221 = vld [vmem:[%s188 + $0x44] sm:$0xf]
      %v222 = vld [vmem:[%s188 + $0x48] sm:$0xf]
      %v223 = vld [vmem:[%s188 + $0x4c] sm:$0xf]
      %v224 = vld [vmem:[%s188 + $0x50] sm:$0xf]
      %v225 = vld [vmem:[%s188 + $0x54] sm:$0xf]
      %v226 = vld [vmem:[%s188 + $0x58] sm:$0xf]
      %v227 = vld [vmem:[%s188 + $0x5c] sm:$0xf]
      %v228 = vld [vmem:[%s188 + $0x60] sm:$0xf]
      %v229 = vld [vmem:[%s188 + $0x64] sm:$0xf]
      %v230 = vld [vmem:[%s188 + $0x68] sm:$0xf]
      %v231 = vld [vmem:[%s188 + $0x6c] sm:$0xf]
      %v232 = vld [vmem:[%s188 + $0x70] sm:$0xf]
      %v233 = vld [vmem:[%s188 + $0x74] sm:$0xf]
      %v234 = vld [vmem:[%s188 + $0x78] sm:$0xf]
      %v235 = vld [vmem:[%s188 + $0x7c] sm:$0xf]
      %v236 = vld [vmem:[%s188 + $0x80] sm:$0xf]
      %v237 = vld [vmem:[%s188 + $0x84] sm:$0xf]
      %v238 = vld [vmem:[%s188 + $0x88] sm:$0xf]
      %v239 = vld [vmem:[%s188 + $0x8c] sm:$0xf]
      %v240 = vld [vmem:[%s188 + $0x90] sm:$0xf]
      %v241 = vld [vmem:[%s188 + $0x94] sm:$0xf]
      %v242 = vld [vmem:[%s188 + $0x98] sm:$0xf]
      %v243 = vld [vmem:[%s188 + $0x9c] sm:$0xf]
      %v244 = vld [vmem:[%s188 + $0xa0] sm:$0xf]
      %v245 = vld [vmem:[%s188 + $0xa4] sm:$0xf]
      %v246 = vld [vmem:[%s188 + $0xa8] sm:$0xf]
      %v247 = vld [vmem:[%s188 + $0xac] sm:$0xf]
      %v248 = vld [vmem:[%s188 + $0xb0] sm:$0xf]
      %v249 = vld [vmem:[%s188 + $0xb4] sm:$0xf]
      %v250 = vld [vmem:[%s188 + $0xb8] sm:$0xf]
      %v251 = vld [vmem:[%s188 + $0xbc] sm:$0xf]
      %v252 = vld [vmem:[%s188 + $0xc0] sm:$0xf]
      %v253 = vld [vmem:[%s188 + $0xc4] sm:$0xf]
      %v254 = vld [vmem:[%s188 + $0xc8] sm:$0xf]
      %v255 = vld [vmem:[%s188 + $0xcc] sm:$0xf]
      %v256 = vld [vmem:[%s188 + $0xd0] sm:$0xf]
      %v257 = vld [vmem:[%s188 + $0xd4] sm:$0xf]
      %v258 = vld [vmem:[%s188 + $0xd8] sm:$0xf]
      %v259 = vld [vmem:[%s188 + $0xdc] sm:$0xf]
      %v260 = vld [vmem:[%s188 + $0xe0] sm:$0xf]
      %v261 = vld [vmem:[%s188 + $0xe4] sm:$0xf]
      %v262 = vld [vmem:[%s188 + $0xe8] sm:$0xf]
      %v263 = vld [vmem:[%s188 + $0xec] sm:$0xf]
      %v264 = vld [vmem:[%s188 + $0xf0] sm:$0xf]
      %v265 = vld [vmem:[%s188 + $0xf4] sm:$0xf]
      %v266 = vld [vmem:[%s188 + $0xf8] sm:$0xf]
      %v267 = vld [vmem:[%s188 + $0xfc] sm:$0xf]
      %v268 = vld [vmem:[%s1] sm:$0xf]
      %v269 = vld [vmem:[%s1 + $0x4] sm:$0xf]
      %v270 = vld [vmem:[%s1 + $0x8] sm:$0xf]
      %v271 = vld [vmem:[%s1 + $0xc] sm:$0x3]
      %v336 = vunpack.c.l.b16 %v204
      %v337 = vunpack.c.l.b16 %v205
      %v338 = vunpack.c.l.b16 %v206
      %v339 = vunpack.c.l.b16 %v207
      %v340 = vunpack.c.l.b16 %v208
      %v341 = vunpack.c.l.b16 %v209
      %v342 = vunpack.c.l.b16 %v210
      %v343 = vunpack.c.l.b16 %v211
      %v344 = vunpack.c.l.b16 %v212
      %v345 = vunpack.c.l.b16 %v213
      %v346 = vunpack.c.l.b16 %v214
      %v347 = vunpack.c.l.b16 %v215
      %v348 = vunpack.c.l.b16 %v216
      %v349 = vunpack.c.l.b16 %v217
      %v350 = vunpack.c.l.b16 %v218
      %v351 = vunpack.c.l.b16 %v219
      %v352 = vunpack.c.l.b16 %v220
      %v353 = vunpack.c.l.b16 %v221
      %v354 = vunpack.c.l.b16 %v222
      %v355 = vunpack.c.l.b16 %v223
      %v356 = vunpack.c.l.b16 %v224
      %v357 = vunpack.c.l.b16 %v225
      %v358 = vunpack.c.l.b16 %v226
      %v359 = vunpack.c.l.b16 %v227
      %v360 = vunpack.c.l.b16 %v228
      %v361 = vunpack.c.l.b16 %v229
      %v362 = vunpack.c.l.b16 %v230
      %v363 = vunpack.c.l.b16 %v231
      %v364 = vunpack.c.l.b16 %v232
      %v365 = vunpack.c.l.b16 %v233
      %v366 = vunpack.c.l.b16 %v234
      %v367 = vunpack.c.l.b16 %v235
      %v368 = vunpack.c.l.b16 %v236
      %v369 = vunpack.c.l.b16 %v237
      %v370 = vunpack.c.l.b16 %v238
      %v371 = vunpack.c.l.b16 %v239
      %v372 = vunpack.c.l.b16 %v240
      %v373 = vunpack.c.l.b16 %v241
      %v374 = vunpack.c.l.b16 %v242
      %v375 = vunpack.c.l.b16 %v243
      %v376 = vunpack.c.l.b16 %v244
      %v377 = vunpack.c.l.b16 %v245
      %v378 = vunpack.c.l.b16 %v246
      %v379 = vunpack.c.l.b16 %v247
      %v380 = vunpack.c.l.b16 %v248
      %v381 = vunpack.c.l.b16 %v249
      %v382 = vunpack.c.l.b16 %v250
      %v383 = vunpack.c.l.b16 %v251
      %v384 = vunpack.c.l.b16 %v252
      %v385 = vunpack.c.l.b16 %v253
      %v386 = vunpack.c.l.b16 %v254
      %v387 = vunpack.c.l.b16 %v255
      %v388 = vunpack.c.l.b16 %v256
      %v389 = vunpack.c.l.b16 %v257
      %v390 = vunpack.c.l.b16 %v258
      %v391 = vunpack.c.l.b16 %v259
      %v392 = vunpack.c.l.b16 %v260
      %v393 = vunpack.c.l.b16 %v261
      %v394 = vunpack.c.l.b16 %v262
      %v395 = vunpack.c.l.b16 %v263
      %v396 = vunpack.c.l.b16 %v264
      %v397 = vunpack.c.l.b16 %v265
      %v398 = vunpack.c.l.b16 %v266
      %v399 = vunpack.c.l.b16 %v267
      %v400 = vpack.c.b16 %v337, %v336
      %v401 = vpack.c.b16 %v339, %v338
      %v402 = vpack.c.b16 %v341, %v340
      %v403 = vpack.c.b16 %v343, %v342
      %v404 = vpack.c.b16 %v345, %v344
      %v405 = vpack.c.b16 %v347, %v346
      %v406 = vpack.c.b16 %v349, %v348
      %v407 = vpack.c.b16 %v351, %v350
      %v408 = vpack.c.b16 %v353, %v352
      %v409 = vpack.c.b16 %v355, %v354
      %v410 = vpack.c.b16 %v357, %v356
      %v411 = vpack.c.b16 %v359, %v358
      %v412 = vpack.c.b16 %v361, %v360
      %v413 = vpack.c.b16 %v363, %v362
      %v414 = vpack.c.b16 %v365, %v364
      %v415 = vpack.c.b16 %v367, %v366
      %v416 = vpack.c.b16 %v369, %v368
      %v417 = vpack.c.b16 %v371, %v370
      %v418 = vpack.c.b16 %v373, %v372
      %v419 = vpack.c.b16 %v375, %v374
      %v420 = vpack.c.b16 %v377, %v376
      %v421 = vpack.c.b16 %v379, %v378
      %v422 = vpack.c.b16 %v381, %v380
      %v423 = vpack.c.b16 %v383, %v382
      %v424 = vpack.c.b16 %v385, %v384
      %v425 = vpack.c.b16 %v387, %v386
      %v426 = vpack.c.b16 %v389, %v388
      %v427 = vpack.c.b16 %v391, %v390
      %v428 = vpack.c.b16 %v393, %v392
      %v429 = vpack.c.b16 %v395, %v394
      %v430 = vpack.c.b16 %v397, %v396
      %v431 = vpack.c.b16 %v399, %v398
      %v436 = vunpack.c.l.b16 %v268
      %v437 = vunpack.c.l.b16 %v269
      %v438 = vunpack.c.l.b16 %v270
      %v439 = vunpack.c.l.b16 %v271
      %v440 = vpack.c.b16 %v437, %v436
      %v441 = vpack.c.b16 %v439, %v438
      %vm443 = vcmask 220160
      %v445 = vsel %vm443, %v400, 0
      %v448 = vsel %vm443, %v401, 0
      %v451 = vsel %vm443, %v402, 0
      %v454 = vsel %vm443, %v403, 0
      %v457 = vsel %vm443, %v404, 0
      %v460 = vsel %vm443, %v405, 0
      %v463 = vsel %vm443, %v406, 0
      %v466 = vsel %vm443, %v407, 0
      %v469 = vsel %vm443, %v408, 0
      %v472 = vsel %vm443, %v409, 0
      %v475 = vsel %vm443, %v410, 0
      %v478 = vsel %vm443, %v411, 0
      %v481 = vsel %vm443, %v412, 0
      %v484 = vsel %vm443, %v413, 0
      %v487 = vsel %vm443, %v414, 0
      %v490 = vsel %vm443, %v415, 0
      %v493 = vsel %vm443, %v416, 0
      %v496 = vsel %vm443, %v417, 0
      %v499 = vsel %vm443, %v418, 0
      %v502 = vsel %vm443, %v419, 0
      %v505 = vsel %vm443, %v420, 0
      %v508 = vsel %vm443, %v421, 0
      %v511 = vsel %vm443, %v422, 0
      %v514 = vsel %vm443, %v423, 0
      %v517 = vsel %vm443, %v424, 0
      %v520 = vsel %vm443, %v425, 0
      %v523 = vsel %vm443, %v426, 0
      %v526 = vsel %vm443, %v427, 0
      %v529 = vsel %vm443, %v428, 0
      %v532 = vsel %vm443, %v429, 0
      %v535 = vsel %vm443, %v430, 0
      %v538 = vsel %vm443, %v431, 0
      %vm540 = vcmask 1044480
      %vm541 = vcmask 1045504
      %v542 = vsel %vm540, 4294967295, 65535
      %v543 = vsel %vm541, %v542, 0
      %v545 = vand.u32 %v441, %v543
      %547 = vmatprep.subr.bf16.mxu0 0
      %548 = vmatpush1.bf16.msra.mxu0 %v440
      %549 = vmatprep.subr.bf16.mxu0 0
      %550 = vmatpush1.bf16.msra.mxu0 %v545
      %551 = vmatprep.subr.bf16.mxu0 0
      %552 = vmatpush1.bf16.msra.mxu0 0
      %553 = vmatprep.subr.bf16.mxu0 0
      %554 = vmatpush1.bf16.msra.mxu0 0
      %555 = vmatprep.subr.bf16.mxu0 0
      %556 = vmatpush1.bf16.msra.mxu0 0
      %557 = vmatprep.subr.bf16.mxu0 0
      %558 = vmatpush1.bf16.msra.mxu0 0
      %559 = vmatprep.subr.bf16.mxu0 0
      %560 = vmatpush1.bf16.msra.mxu0 0
      %561 = vmatprep.subr.bf16.mxu0 0
      %562 = vmatpush1.bf16.msra.mxu0 0
      %563 = vmatprep.subr.bf16.mxu0 0
      %564 = vmatpush1.bf16.msra.mxu0 0
      %565 = vmatprep.subr.bf16.mxu0 0
      %566 = vmatpush1.bf16.msra.mxu0 0
      %567 = vmatprep.subr.bf16.mxu0 0
      %568 = vmatpush1.bf16.msra.mxu0 0
      %569 = vmatprep.subr.bf16.mxu0 0
      %570 = vmatpush1.bf16.msra.mxu0 0
      %571 = vmatprep.subr.bf16.mxu0 0
      %572 = vmatpush1.bf16.msra.mxu0 0
      %573 = vmatprep.subr.bf16.mxu0 0
      %574 = vmatpush1.bf16.msra.mxu0 0
      %575 = vmatprep.subr.bf16.mxu0 0
      %576 = vmatpush1.bf16.msra.mxu0 0
      %577 = vmatprep.subr.bf16.mxu0 0
      %578 = vmatpush1.bf16.msra.mxu0 0
      %579 = vmatprep.mubr.bf16.mxu0 0
      %580 = vmatmul.mubr.bf16.gmra.mrb[0].mxu0 %v445
      %v581 = vpop.f32.mrb[0].mxu0
      %v582 = vadd.f32 0.0, %v581
      %v583 = vpop.f32.mrb[0].mxu0
      %v584 = vpop.f32.mrb[0].mxu0
      %v585 = vadd.f32 0.0, %v584
      %v586 = vpop.f32.mrb[0].mxu0
      %587 = vmatprep.mubr.bf16.mxu0 0
      %588 = vmatmul.mubr.bf16.gmra.mrb[0].mxu0 %v448
      %v589 = vpop.f32.mrb[0].mxu0
      %v590 = vadd.f32 0.0, %v589
      %v591 = vpop.f32.mrb[0].mxu0
      %v592 = vpop.f32.mrb[0].mxu0
      %v593 = vadd.f32 0.0, %v592
      %v594 = vpop.f32.mrb[0].mxu0
      %595 = vmatprep.mubr.bf16.mxu0 0
      %596 = vmatmul.mubr.bf16.gmra.mrb[0].mxu0 %v451
      %v597 = vpop.f32.mrb[0].mxu0
      %v598 = vadd.f32 0.0, %v597
      %v599 = vpop.f32.mrb[0].mxu0
      %v600 = vpop.f32.mrb[0].mxu0
      %v601 = vadd.f32 0.0, %v600
      %v602 = vpop.f32.mrb[0].mxu0
      %603 = vmatprep.mubr.bf16.mxu0 0
      %604 = vmatmul.mubr.bf16.gmra.mrb[0].mxu0 %v454
      %v605 = vpop.f32.mrb[0].mxu0
      %v606 = vadd.f32 0.0, %v605
      %v607 = vpop.f32.mrb[0].mxu0
      %v608 = vpop.f32.mrb[0].mxu0
      %v609 = vadd.f32 0.0, %v608
      %v610 = vpop.f32.mrb[0].mxu0
      %611 = vmatprep.mubr.bf16.mxu0 0
      %612 = vmatmul.mubr.bf16.gmra.mrb[0].mxu0 %v457
      %v613 = vpop.f32.mrb[0].mxu0
      %v614 = vadd.f32 0.0, %v613
      %v615 = vpop.f32.mrb[0].mxu0
      %v616 = vpop.f32.mrb[0].mxu0
      %v617 = vadd.f32 0.0, %v616
      %v618 = vpop.f32.mrb[0].mxu0
      %619 = vmatprep.mubr.bf16.mxu0 0
      %620 = vmatmul.mubr.bf16.gmra.mrb[0].mxu0 %v460
      %v621 = vpop.f32.mrb[0].mxu0
      %v622 = vadd.f32 0.0, %v621
      %v623 = vpop.f32.mrb[0].mxu0
      %v624 = vpop.f32.mrb[0].mxu0
      %v625 = vadd.f32 0.0, %v624
      %v626 = vpop.f32.mrb[0].mxu0
      %627 = vmatprep.mubr.bf16.mxu0 0
      %628 = vmatmul.mubr.bf16.gmra.mrb[0].mxu0 %v463
      %v629 = vpop.f32.mrb[0].mxu0
      %v630 = vadd.f32 0.0, %v629
      %v631 = vpop.f32.mrb[0].mxu0
      %v632 = vpop.f32.mrb[0].mxu0
      %v633 = vadd.f32 0.0, %v632
      %v634 = vpop.f32.mrb[0].mxu0
      %635 = vmatprep.mubr.bf16.mxu0 0
      %636 = vmatmul.mubr.bf16.gmra.mrb[0].mxu0 %v466
      %v637 = vpop.f32.mrb[0].mxu0
      %v638 = vadd.f32 0.0, %v637
      %v639 = vpop.f32.mrb[0].mxu0
      %v640 = vpop.f32.mrb[0].mxu0
      %v641 = vadd.f32 0.0, %v640
      %v642 = vpop.f32.mrb[0].mxu0
      %643 = vmatprep.mubr.bf16.mxu0 0
      %644 = vmatmul.mubr.bf16.gmra.mrb[0].mxu0 %v469
      %v645 = vpop.f32.mrb[0].mxu0
      %v646 = vadd.f32 0.0, %v645
      %v647 = vpop.f32.mrb[0].mxu0
      %v648 = vpop.f32.mrb[0].mxu0
      %v649 = vadd.f32 0.0, %v648
      %v650 = vpop.f32.mrb[0].mxu0
      %651 = vmatprep.mubr.bf16.mxu0 0
      %652 = vmatmul.mubr.bf16.gmra.mrb[0].mxu0 %v472
      %v653 = vpop.f32.mrb[0].mxu0
      %v654 = vadd.f32 0.0, %v653
      %v655 = vpop.f32.mrb[0].mxu0
      %v656 = vpop.f32.mrb[0].mxu0
      %v657 = vadd.f32 0.0, %v656
      %v658 = vpop.f32.mrb[0].mxu0
      %659 = vmatprep.mubr.bf16.mxu0 0
      %660 = vmatmul.mubr.bf16.gmra.mrb[0].mxu0 %v475
      %v661 = vpop.f32.mrb[0].mxu0
      %v662 = vadd.f32 0.0, %v661
      %v663 = vpop.f32.mrb[0].mxu0
      %v664 = vpop.f32.mrb[0].mxu0
      %v665 = vadd.f32 0.0, %v664
      %v666 = vpop.f32.mrb[0].mxu0
      %667 = vmatprep.mubr.bf16.mxu0 0
      %668 = vmatmul.mubr.bf16.gmra.mrb[0].mxu0 %v478
      %v669 = vpop.f32.mrb[0].mxu0
      %v670 = vadd.f32 0.0, %v669
      %v671 = vpop.f32.mrb[0].mxu0
      %v672 = vpop.f32.mrb[0].mxu0
      %v673 = vadd.f32 0.0, %v672
      %v674 = vpop.f32.mrb[0].mxu0
      %675 = vmatprep.mubr.bf16.mxu0 0
      %676 = vmatmul.mubr.bf16.gmra.mrb[0].mxu0 %v481
      %v677 = vpop.f32.mrb[0].mxu0
      %v678 = vadd.f32 0.0, %v677
      %v679 = vpop.f32.mrb[0].mxu0
      %v680 = vpop.f32.mrb[0].mxu0
      %v681 = vadd.f32 0.0, %v680
      %v682 = vpop.f32.mrb[0].mxu0
      %683 = vmatprep.mubr.bf16.mxu0 0
      %684 = vmatmul.mubr.bf16.gmra.mrb[0].mxu0 %v484
      %v685 = vpop.f32.mrb[0].mxu0
      %v686 = vadd.f32 0.0, %v685
      %v687 = vpop.f32.mrb[0].mxu0
      %v688 = vpop.f32.mrb[0].mxu0
      %v689 = vadd.f32 0.0, %v688
      %v690 = vpop.f32.mrb[0].mxu0
      %691 = vmatprep.mubr.bf16.mxu0 0
      %692 = vmatmul.mubr.bf16.gmra.mrb[0].mxu0 %v487
      %v693 = vpop.f32.mrb[0].mxu0
      %v694 = vadd.f32 0.0, %v693
      %v695 = vpop.f32.mrb[0].mxu0
      %v696 = vpop.f32.mrb[0].mxu0
      %v697 = vadd.f32 0.0, %v696
      %v698 = vpop.f32.mrb[0].mxu0
      %699 = vmatprep.mubr.bf16.mxu0 0
      %700 = vmatmul.mubr.bf16.gmra.mrb[0].mxu0 %v490
      %v701 = vpop.f32.mrb[0].mxu0
      %v702 = vadd.f32 0.0, %v701
      %v703 = vpop.f32.mrb[0].mxu0
      %v704 = vpop.f32.mrb[0].mxu0
      %v705 = vadd.f32 0.0, %v704
      %v706 = vpop.f32.mrb[0].mxu0
      %707 = vmatprep.mubr.bf16.mxu0 0
      %708 = vmatmul.mubr.bf16.gmra.mrb[0].mxu0 %v493
      %v709 = vpop.f32.mrb[0].mxu0
      %v710 = vadd.f32 0.0, %v709
      %v711 = vpop.f32.mrb[0].mxu0
      %v712 = vpop.f32.mrb[0].mxu0
      %v713 = vadd.f32 0.0, %v712
      %v714 = vpop.f32.mrb[0].mxu0
      %715 = vmatprep.mubr.bf16.mxu0 0
      %716 = vmatmul.mubr.bf16.gmra.mrb[0].mxu0 %v496
      %v717 = vpop.f32.mrb[0].mxu0
      %v718 = vadd.f32 0.0, %v717
      %v719 = vpop.f32.mrb[0].mxu0
      %v720 = vpop.f32.mrb[0].mxu0
      %v721 = vadd.f32 0.0, %v720
      %v722 = vpop.f32.mrb[0].mxu0
      %723 = vmatprep.mubr.bf16.mxu0 0
      %724 = vmatmul.mubr.bf16.gmra.mrb[0].mxu0 %v499
      %v725 = vpop.f32.mrb[0].mxu0
      %v726 = vadd.f32 0.0, %v725
      %v727 = vpop.f32.mrb[0].mxu0
      %v728 = vpop.f32.mrb[0].mxu0
      %v729 = vadd.f32 0.0, %v728
      %v730 = vpop.f32.mrb[0].mxu0
      %731 = vmatprep.mubr.bf16.mxu0 0
      %732 = vmatmul.mubr.bf16.gmra.mrb[0].mxu0 %v502
      %v733 = vpop.f32.mrb[0].mxu0
      %v734 = vadd.f32 0.0, %v733
      %v735 = vpop.f32.mrb[0].mxu0
      %v736 = vpop.f32.mrb[0].mxu0
      %v737 = vadd.f32 0.0, %v736
      %v738 = vpop.f32.mrb[0].mxu0
      %739 = vmatprep.mubr.bf16.mxu0 0
      %740 = vmatmul.mubr.bf16.gmra.mrb[0].mxu0 %v505
      %v741 = vpop.f32.mrb[0].mxu0
      %v742 = vadd.f32 0.0, %v741
      %v743 = vpop.f32.mrb[0].mxu0
      %v744 = vpop.f32.mrb[0].mxu0
      %v745 = vadd.f32 0.0, %v744
      %v746 = vpop.f32.mrb[0].mxu0
      %747 = vmatprep.mubr.bf16.mxu0 0
      %748 = vmatmul.mubr.bf16.gmra.mrb[0].mxu0 %v508
      %v749 = vpop.f32.mrb[0].mxu0
      %v750 = vadd.f32 0.0, %v749
      %v751 = vpop.f32.mrb[0].mxu0
      %v752 = vpop.f32.mrb[0].mxu0
      %v753 = vadd.f32 0.0, %v752
      %v754 = vpop.f32.mrb[0].mxu0
      %755 = vmatprep.mubr.bf16.mxu0 0
      %756 = vmatmul.mubr.bf16.gmra.mrb[0].mxu0 %v511
      %v757 = vpop.f32.mrb[0].mxu0
      %v758 = vadd.f32 0.0, %v757
      %v759 = vpop.f32.mrb[0].mxu0
      %v760 = vpop.f32.mrb[0].mxu0
      %v761 = vadd.f32 0.0, %v760
      %v762 = vpop.f32.mrb[0].mxu0
      %763 = vmatprep.mubr.bf16.mxu0 0
      %764 = vmatmul.mubr.bf16.gmra.mrb[0].mxu0 %v514
      %v765 = vpop.f32.mrb[0].mxu0
      %v766 = vadd.f32 0.0, %v765
      %v767 = vpop.f32.mrb[0].mxu0
      %v768 = vpop.f32.mrb[0].mxu0
      %v769 = vadd.f32 0.0, %v768
      %v770 = vpop.f32.mrb[0].mxu0
      %771 = vmatprep.mubr.bf16.mxu0 0
      %772 = vmatmul.mubr.bf16.gmra.mrb[0].mxu0 %v517
      %v773 = vpop.f32.mrb[0].mxu0
      %v774 = vadd.f32 0.0, %v773
      %v775 = vpop.f32.mrb[0].mxu0
      %v776 = vpop.f32.mrb[0].mxu0
      %v777 = vadd.f32 0.0, %v776
      %v778 = vpop.f32.mrb[0].mxu0
      %779 = vmatprep.mubr.bf16.mxu0 0
      %780 = vmatmul.mubr.bf16.gmra.mrb[0].mxu0 %v520
      %v781 = vpop.f32.mrb[0].mxu0
      %v782 = vadd.f32 0.0, %v781
      %v783 = vpop.f32.mrb[0].mxu0
      %v784 = vpop.f32.mrb[0].mxu0
      %v785 = vadd.f32 0.0, %v784
      %v786 = vpop.f32.mrb[0].mxu0
      %787 = vmatprep.mubr.bf16.mxu0 0
      %788 = vmatmul.mubr.bf16.gmra.mrb[0].mxu0 %v523
      %v789 = vpop.f32.mrb[0].mxu0
      %v790 = vadd.f32 0.0, %v789
      %v791 = vpop.f32.mrb[0].mxu0
      %v792 = vpop.f32.mrb[0].mxu0
      %v793 = vadd.f32 0.0, %v792
      %v794 = vpop.f32.mrb[0].mxu0
      %795 = vmatprep.mubr.bf16.mxu0 0
      %796 = vmatmul.mubr.bf16.gmra.mrb[0].mxu0 %v526
      %v797 = vpop.f32.mrb[0].mxu0
      %v798 = vadd.f32 0.0, %v797
      %v799 = vpop.f32.mrb[0].mxu0
      %v800 = vpop.f32.mrb[0].mxu0
      %v801 = vadd.f32 0.0, %v800
      %v802 = vpop.f32.mrb[0].mxu0
      %803 = vmatprep.mubr.bf16.mxu0 0
      %804 = vmatmul.mubr.bf16.gmra.mrb[0].mxu0 %v529
      %v805 = vpop.f32.mrb[0].mxu0
      %v806 = vadd.f32 0.0, %v805
      %v807 = vpop.f32.mrb[0].mxu0
      %v808 = vpop.f32.mrb[0].mxu0
      %v809 = vadd.f32 0.0, %v808
      %v810 = vpop.f32.mrb[0].mxu0
      %811 = vmatprep.mubr.bf16.mxu0 0
      %812 = vmatmul.mubr.bf16.gmra.mrb[0].mxu0 %v532
      %v813 = vpop.f32.mrb[0].mxu0
      %v814 = vadd.f32 0.0, %v813
      %v815 = vpop.f32.mrb[0].mxu0
      %v816 = vpop.f32.mrb[0].mxu0
      %v817 = vadd.f32 0.0, %v816
      %v818 = vpop.f32.mrb[0].mxu0
      %819 = vmatprep.mubr.bf16.mxu0 0
      %820 = vmatmul.mubr.bf16.gmra.mrb[0].mxu0 %v535
      %v821 = vpop.f32.mrb[0].mxu0
      %v822 = vadd.f32 0.0, %v821
      %v823 = vpop.f32.mrb[0].mxu0
      %v824 = vpop.f32.mrb[0].mxu0
      %v825 = vadd.f32 0.0, %v824
      %v826 = vpop.f32.mrb[0].mxu0
      %827 = vmatprep.mubr.bf16.mxu0 0
      %828 = vmatmul.mubr.bf16.gmra.mrb[0].mxu0 %v538
      %v829 = vpop.f32.mrb[0].mxu0
      %v830 = vadd.f32 0.0, %v829
      %v831 = vpop.f32.mrb[0].mxu0
      %v832 = vpop.f32.mrb[0].mxu0
      %v833 = vadd.f32 0.0, %v832
      %v834 = vpop.f32.mrb[0].mxu0
      %835 = vdwg.mxu0
      %v836 = vpack.c.bf16 %v585, %v582
      %v837 = vpack.c.bf16 %v593, %v590
      %v838 = vpack.c.bf16 %v601, %v598
      %v839 = vpack.c.bf16 %v609, %v606
      %v840 = vpack.c.bf16 %v617, %v614
      %v841 = vpack.c.bf16 %v625, %v622
      %v842 = vpack.c.bf16 %v633, %v630
      %v843 = vpack.c.bf16 %v641, %v638
      %v844 = vpack.c.bf16 %v649, %v646
      %v845 = vpack.c.bf16 %v657, %v654
      %v846 = vpack.c.bf16 %v665, %v662
      %v847 = vpack.c.bf16 %v673, %v670
      %v848 = vpack.c.bf16 %v681, %v678
      %v849 = vpack.c.bf16 %v689, %v686
      %v850 = vpack.c.bf16 %v697, %v694
      %v851 = vpack.c.bf16 %v705, %v702
      %v852 = vpack.c.bf16 %v713, %v710
      %v853 = vpack.c.bf16 %v721, %v718
      %v854 = vpack.c.bf16 %v729, %v726
      %v855 = vpack.c.bf16 %v737, %v734
      %v856 = vpack.c.bf16 %v745, %v742
      %v857 = vpack.c.bf16 %v753, %v750
      %v858 = vpack.c.bf16 %v761, %v758
      %v859 = vpack.c.bf16 %v769, %v766
      %v860 = vpack.c.bf16 %v777, %v774
      %v861 = vpack.c.bf16 %v785, %v782
      %v862 = vpack.c.bf16 %v793, %v790
      %v863 = vpack.c.bf16 %v801, %v798
      %v864 = vpack.c.bf16 %v809, %v806
      %v865 = vpack.c.bf16 %v817, %v814
      %v866 = vpack.c.bf16 %v825, %v822
      %v867 = vpack.c.bf16 %v833, %v830
      %v900 = vunpack.c.l.b16 %v836
      %v901 = vunpack.c.h.b16 %v836
      %v902 = vunpack.c.l.b16 %v837
      %v903 = vunpack.c.h.b16 %v837
      %v904 = vunpack.c.l.b16 %v838
      %v905 = vunpack.c.h.b16 %v838
      %v906 = vunpack.c.l.b16 %v839
      %v907 = vunpack.c.h.b16 %v839
      %v908 = vunpack.c.l.b16 %v840
      %v909 = vunpack.c.h.b16 %v840
      %v910 = vunpack.c.l.b16 %v841
      %v911 = vunpack.c.h.b16 %v841
      %v912 = vunpack.c.l.b16 %v842
      %v913 = vunpack.c.h.b16 %v842
      %v914 = vunpack.c.l.b16 %v843
      %v915 = vunpack.c.h.b16 %v843
      %v916 = vunpack.c.l.b16 %v844
      %v917 = vunpack.c.h.b16 %v844
      %v918 = vunpack.c.l.b16 %v845
      %v919 = vunpack.c.h.b16 %v845
      %v920 = vunpack.c.l.b16 %v846
      %v921 = vunpack.c.h.b16 %v846
      %v922 = vunpack.c.l.b16 %v847
      %v923 = vunpack.c.h.b16 %v847
      %v924 = vunpack.c.l.b16 %v848
      %v925 = vunpack.c.h.b16 %v848
      %v926 = vunpack.c.l.b16 %v849
      %v927 = vunpack.c.h.b16 %v849
      %v928 = vunpack.c.l.b16 %v850
      %v929 = vunpack.c.h.b16 %v850
      %v930 = vunpack.c.l.b16 %v851
      %v931 = vunpack.c.h.b16 %v851
      %v932 = vunpack.c.l.b16 %v852
      %v933 = vunpack.c.h.b16 %v852
      %v934 = vunpack.c.l.b16 %v853
      %v935 = vunpack.c.h.b16 %v853
      %v936 = vunpack.c.l.b16 %v854
      %v937 = vunpack.c.h.b16 %v854
      %v938 = vunpack.c.l.b16 %v855
      %v939 = vunpack.c.h.b16 %v855
      %v940 = vunpack.c.l.b16 %v856
      %v941 = vunpack.c.h.b16 %v856
      %v942 = vunpack.c.l.b16 %v857
      %v943 = vunpack.c.h.b16 %v857
      %v944 = vunpack.c.l.b16 %v858
      %v945 = vunpack.c.h.b16 %v858
      %v946 = vunpack.c.l.b16 %v859
      %v947 = vunpack.c.h.b16 %v859
      %v948 = vunpack.c.l.b16 %v860
      %v949 = vunpack.c.h.b16 %v860
      %v950 = vunpack.c.l.b16 %v861
      %v951 = vunpack.c.h.b16 %v861
      %v952 = vunpack.c.l.b16 %v862
      %v953 = vunpack.c.h.b16 %v862
      %v954 = vunpack.c.l.b16 %v863
      %v955 = vunpack.c.h.b16 %v863
      %v956 = vunpack.c.l.b16 %v864
      %v957 = vunpack.c.h.b16 %v864
      %v958 = vunpack.c.l.b16 %v865
      %v959 = vunpack.c.h.b16 %v865
      %v960 = vunpack.c.l.b16 %v866
      %v961 = vunpack.c.h.b16 %v866
      %v962 = vunpack.c.l.b16 %v867
      %v963 = vunpack.c.h.b16 %v867
      %v964 = vpack.c.b16 %v900, %v900
      %v965 = vpack.c.b16 %v901, %v901
      %v966 = vpack.c.b16 %v902, %v902
      %v967 = vpack.c.b16 %v903, %v903
      %v968 = vpack.c.b16 %v904, %v904
      %v969 = vpack.c.b16 %v905, %v905
      %v970 = vpack.c.b16 %v906, %v906
      %v971 = vpack.c.b16 %v907, %v907
      %v972 = vpack.c.b16 %v908, %v908
      %v973 = vpack.c.b16 %v909, %v909
      %v974 = vpack.c.b16 %v910, %v910
      %v975 = vpack.c.b16 %v911, %v911
      %v976 = vpack.c.b16 %v912, %v912
      %v977 = vpack.c.b16 %v913, %v913
      %v978 = vpack.c.b16 %v914, %v914
      %v979 = vpack.c.b16 %v915, %v915
      %v980 = vpack.c.b16 %v916, %v916
      %v981 = vpack.c.b16 %v917, %v917
      %v982 = vpack.c.b16 %v918, %v918
      %v983 = vpack.c.b16 %v919, %v919
      %v984 = vpack.c.b16 %v920, %v920
      %v985 = vpack.c.b16 %v921, %v921
      %v986 = vpack.c.b16 %v922, %v922
      %v987 = vpack.c.b16 %v923, %v923
      %v988 = vpack.c.b16 %v924, %v924
      %v989 = vpack.c.b16 %v925, %v925
      %v990 = vpack.c.b16 %v926, %v926
      %v991 = vpack.c.b16 %v927, %v927
      %v992 = vpack.c.b16 %v928, %v928
      %v993 = vpack.c.b16 %v929, %v929
      %v994 = vpack.c.b16 %v930, %v930
      %v995 = vpack.c.b16 %v931, %v931
      %v996 = vpack.c.b16 %v932, %v932
      %v997 = vpack.c.b16 %v933, %v933
      %v998 = vpack.c.b16 %v934, %v934
      %v999 = vpack.c.b16 %v935, %v935
      %v1000 = vpack.c.b16 %v936, %v936
      %v1001 = vpack.c.b16 %v937, %v937
      %v1002 = vpack.c.b16 %v938, %v938
      %v1003 = vpack.c.b16 %v939, %v939
      %v1004 = vpack.c.b16 %v940, %v940
      %v1005 = vpack.c.b16 %v941, %v941
      %v1006 = vpack.c.b16 %v942, %v942
      %v1007 = vpack.c.b16 %v943, %v943
      %v1008 = vpack.c.b16 %v944, %v944
      %v1009 = vpack.c.b16 %v945, %v945
      %v1010 = vpack.c.b16 %v946, %v946
      %v1011 = vpack.c.b16 %v947, %v947
      %v1012 = vpack.c.b16 %v948, %v948
      %v1013 = vpack.c.b16 %v949, %v949
      %v1014 = vpack.c.b16 %v950, %v950
      %v1015 = vpack.c.b16 %v951, %v951
      %v1016 = vpack.c.b16 %v952, %v952
      %v1017 = vpack.c.b16 %v953, %v953
      %v1018 = vpack.c.b16 %v954, %v954
      %v1019 = vpack.c.b16 %v955, %v955
      %v1020 = vpack.c.b16 %v956, %v956
      %v1021 = vpack.c.b16 %v957, %v957
      %v1022 = vpack.c.b16 %v958, %v958
      %v1023 = vpack.c.b16 %v959, %v959
      %v1024 = vpack.c.b16 %v960, %v960
      %v1025 = vpack.c.b16 %v961, %v961
      %v1026 = vpack.c.b16 %v962, %v962
      %v1027 = vpack.c.b16 %v963, %v963
      %vm1092 = vcmask 125952
      %1093 = vst.msk [vmem:[%s194] sm:$0xf] %vm1092, %v964
      %1094 = vst.msk [vmem:[%s194 + $0x4] sm:$0xf] %vm1092, %v965
      %1095 = vst.msk [vmem:[%s194 + $0x8] sm:$0xf] %vm1092, %v966
      %1096 = vst.msk [vmem:[%s194 + $0xc] sm:$0xf] %vm1092, %v967
      %1097 = vst.msk [vmem:[%s194 + $0x10] sm:$0xf] %vm1092, %v968
      %1098 = vst.msk [vmem:[%s194 + $0x14] sm:$0xf] %vm1092, %v969
      %1099 = vst.msk [vmem:[%s194 + $0x18] sm:$0xf] %vm1092, %v970
      %1100 = vst.msk [vmem:[%s194 + $0x1c] sm:$0xf] %vm1092, %v971
      %1101 = vst.msk [vmem:[%s194 + $0x20] sm:$0xf] %vm1092, %v972
      %1102 = vst.msk [vmem:[%s194 + $0x24] sm:$0xf] %vm1092, %v973
      %1103 = vst.msk [vmem:[%s194 + $0x28] sm:$0xf] %vm1092, %v974
      %1104 = vst.msk [vmem:[%s194 + $0x2c] sm:$0xf] %vm1092, %v975
      %1105 = vst.msk [vmem:[%s194 + $0x30] sm:$0xf] %vm1092, %v976
      %1106 = vst.msk [vmem:[%s194 + $0x34] sm:$0xf] %vm1092, %v977
      %1107 = vst.msk [vmem:[%s194 + $0x38] sm:$0xf] %vm1092, %v978
      %1108 = vst.msk [vmem:[%s194 + $0x3c] sm:$0xf] %vm1092, %v979
      %1109 = vst.msk [vmem:[%s194 + $0x40] sm:$0xf] %vm1092, %v980
      %1110 = vst.msk [vmem:[%s194 + $0x44] sm:$0xf] %vm1092, %v981
      %1111 = vst.msk [vmem:[%s194 + $0x48] sm:$0xf] %vm1092, %v982
      %1112 = vst.msk [vmem:[%s194 + $0x4c] sm:$0xf] %vm1092, %v983
      %1113 = vst.msk [vmem:[%s194 + $0x50] sm:$0xf] %vm1092, %v984
      %1114 = vst.msk [vmem:[%s194 + $0x54] sm:$0xf] %vm1092, %v985
      %1115 = vst.msk [vmem:[%s194 + $0x58] sm:$0xf] %vm1092, %v986
      %1116 = vst.msk [vmem:[%s194 + $0x5c] sm:$0xf] %vm1092, %v987
      %1117 = vst.msk [vmem:[%s194 + $0x60] sm:$0xf] %vm1092, %v988
      %1118 = vst.msk [vmem:[%s194 + $0x64] sm:$0xf] %vm1092, %v989
      %1119 = vst.msk [vmem:[%s194 + $0x68] sm:$0xf] %vm1092, %v990
      %1120 = vst.msk [vmem:[%s194 + $0x6c] sm:$0xf] %vm1092, %v991
      %1121 = vst.msk [vmem:[%s194 + $0x70] sm:$0xf] %vm1092, %v992
      %1122 = vst.msk [vmem:[%s194 + $0x74] sm:$0xf] %vm1092, %v993
      %1123 = vst.msk [vmem:[%s194 + $0x78] sm:$0xf] %vm1092, %v994
      %1124 = vst.msk [vmem:[%s194 + $0x7c] sm:$0xf] %vm1092, %v995
      %1125 = vst.msk [vmem:[%s194 + $0x80] sm:$0xf] %vm1092, %v996
      %1126 = vst.msk [vmem:[%s194 + $0x84] sm:$0xf] %vm1092, %v997
      %1127 = vst.msk [vmem:[%s194 + $0x88] sm:$0xf] %vm1092, %v998
      %1128 = vst.msk [vmem:[%s194 + $0x8c] sm:$0xf] %vm1092, %v999
      %1129 = vst.msk [vmem:[%s194 + $0x90] sm:$0xf] %vm1092, %v1000
      %1130 = vst.msk [vmem:[%s194 + $0x94] sm:$0xf] %vm1092, %v1001
      %1131 = vst.msk [vmem:[%s194 + $0x98] sm:$0xf] %vm1092, %v1002
      %1132 = vst.msk [vmem:[%s194 + $0x9c] sm:$0xf] %vm1092, %v1003
      %1133 = vst.msk [vmem:[%s194 + $0xa0] sm:$0xf] %vm1092, %v1004
      %1134 = vst.msk [vmem:[%s194 + $0xa4] sm:$0xf] %vm1092, %v1005
      %1135 = vst.msk [vmem:[%s194 + $0xa8] sm:$0xf] %vm1092, %v1006
      %1136 = vst.msk [vmem:[%s194 + $0xac] sm:$0xf] %vm1092, %v1007
      %1137 = vst.msk [vmem:[%s194 + $0xb0] sm:$0xf] %vm1092, %v1008
      %1138 = vst.msk [vmem:[%s194 + $0xb4] sm:$0xf] %vm1092, %v1009
      %1139 = vst.msk [vmem:[%s194 + $0xb8] sm:$0xf] %vm1092, %v1010
      %1140 = vst.msk [vmem:[%s194 + $0xbc] sm:$0xf] %vm1092, %v1011
      %1141 = vst.msk [vmem:[%s194 + $0xc0] sm:$0xf] %vm1092, %v1012
      %1142 = vst.msk [vmem:[%s194 + $0xc4] sm:$0xf] %vm1092, %v1013
      %1143 = vst.msk [vmem:[%s194 + $0xc8] sm:$0xf] %vm1092, %v1014
      %1144 = vst.msk [vmem:[%s194 + $0xcc] sm:$0xf] %vm1092, %v1015
      %1145 = vst.msk [vmem:[%s194 + $0xd0] sm:$0xf] %vm1092, %v1016
      %1146 = vst.msk [vmem:[%s194 + $0xd4] sm:$0xf] %vm1092, %v1017
      %1147 = vst.msk [vmem:[%s194 + $0xd8] sm:$0xf] %vm1092, %v1018
      %1148 = vst.msk [vmem:[%s194 + $0xdc] sm:$0xf] %vm1092, %v1019
      %1149 = vst.msk [vmem:[%s194 + $0xe0] sm:$0xf] %vm1092, %v1020
      %1150 = vst.msk [vmem:[%s194 + $0xe4] sm:$0xf] %vm1092, %v1021
      %1151 = vst.msk [vmem:[%s194 + $0xe8] sm:$0xf] %vm1092, %v1022
      %1152 = vst.msk [vmem:[%s194 + $0xec] sm:$0xf] %vm1092, %v1023
      %1153 = vst.msk [vmem:[%s194 + $0xf0] sm:$0xf] %vm1092, %v1024
      %1154 = vst.msk [vmem:[%s194 + $0xf4] sm:$0xf] %vm1092, %v1025
      %1155 = vst.msk [vmem:[%s194 + $0xf8] sm:$0xf] %vm1092, %v1026
      %1156 = vst.msk [vmem:[%s194 + $0xfc] sm:$0xf] %vm1092, %v1027
      %v1157 = vld [vmem:[%s3] sm:$0x1]
      %vm1158 = vcmask 130048
      %v1159 = vsel %vm1158, %v582, 0.0
      %v1160 = vsel %vm1158, %v585, 0.0
      %v1161 = vadd.f32 %v1159, %v1160
      %v1162 = vsel %vm1158, %v590, 0.0
      %v1163 = vadd.f32 %v1161, %v1162
      %v1164 = vsel %vm1158, %v593, 0.0
      %v1165 = vadd.f32 %v1163, %v1164
      %v1166 = vsel %vm1158, %v598, 0.0
      %v1167 = vadd.f32 %v1165, %v1166
      %v1168 = vsel %vm1158, %v601, 0.0
      %v1169 = vadd.f32 %v1167, %v1168
      %v1170 = vsel %vm1158, %v606, 0.0
      %v1171 = vadd.f32 %v1169, %v1170
      %v1172 = vsel %vm1158, %v609, 0.0
      %v1173 = vadd.f32 %v1171, %v1172
      %v1174 = vsel %vm1158, %v614, 0.0
      %v1175 = vadd.f32 %v1173, %v1174
      %v1176 = vsel %vm1158, %v617, 0.0
      %v1177 = vadd.f32 %v1175, %v1176
      %v1178 = vsel %vm1158, %v622, 0.0
      %v1179 = vadd.f32 %v1177, %v1178
      %v1180 = vsel %vm1158, %v625, 0.0
      %v1181 = vadd.f32 %v1179, %v1180
      %v1182 = vsel %vm1158, %v630, 0.0
      %v1183 = vadd.f32 %v1181, %v1182
      %v1184 = vsel %vm1158, %v633, 0.0
      %v1185 = vadd.f32 %v1183, %v1184
      %v1186 = vsel %vm1158, %v638, 0.0
      %v1187 = vadd.f32 %v1185, %v1186
      %v1188 = vsel %vm1158, %v641, 0.0
      %v1189 = vadd.f32 %v1187, %v1188
      %v1190 = vsel %vm1158, %v646, 0.0
      %v1191 = vadd.f32 %v1189, %v1190
      %v1192 = vsel %vm1158, %v649, 0.0
      %v1193 = vadd.f32 %v1191, %v1192
      %v1194 = vsel %vm1158, %v654, 0.0
      %v1195 = vadd.f32 %v1193, %v1194
      %v1196 = vsel %vm1158, %v657, 0.0
      %v1197 = vadd.f32 %v1195, %v1196
      %v1198 = vsel %vm1158, %v662, 0.0
      %v1199 = vadd.f32 %v1197, %v1198
      %v1200 = vsel %vm1158, %v665, 0.0
      %v1201 = vadd.f32 %v1199, %v1200
      %v1202 = vsel %vm1158, %v670, 0.0
      %v1203 = vadd.f32 %v1201, %v1202
      %v1204 = vsel %vm1158, %v673, 0.0
      %v1205 = vadd.f32 %v1203, %v1204
      %v1206 = vsel %vm1158, %v678, 0.0
      %v1207 = vadd.f32 %v1205, %v1206
      %v1208 = vsel %vm1158, %v681, 0.0
      %v1209 = vadd.f32 %v1207, %v1208
      %v1210 = vsel %vm1158, %v686, 0.0
      %v1211 = vadd.f32 %v1209, %v1210
      %v1212 = vsel %vm1158, %v689, 0.0
      %v1213 = vadd.f32 %v1211, %v1212
      %v1214 = vsel %vm1158, %v694, 0.0
      %v1215 = vadd.f32 %v1213, %v1214
      %v1216 = vsel %vm1158, %v697, 0.0
      %v1217 = vadd.f32 %v1215, %v1216
      %v1218 = vsel %vm1158, %v702, 0.0
      %v1219 = vadd.f32 %v1217, %v1218
      %v1220 = vsel %vm1158, %v705, 0.0
      %v1221 = vadd.f32 %v1219, %v1220
      %v1222 = vsel %vm1158, %v710, 0.0
      %v1223 = vadd.f32 %v1221, %v1222
      %v1224 = vsel %vm1158, %v713, 0.0
      %v1225 = vadd.f32 %v1223, %v1224
      %v1226 = vsel %vm1158, %v718, 0.0
      %v1227 = vadd.f32 %v1225, %v1226
      %v1228 = vsel %vm1158, %v721, 0.0
      %v1229 = vadd.f32 %v1227, %v1228
      %v1230 = vsel %vm1158, %v726, 0.0
      %v1231 = vadd.f32 %v1229, %v1230
      %v1232 = vsel %vm1158, %v729, 0.0
      %v1233 = vadd.f32 %v1231, %v1232
      %v1234 = vsel %vm1158, %v734, 0.0
      %v1235 = vadd.f32 %v1233, %v1234
      %v1236 = vsel %vm1158, %v737, 0.0
      %v1237 = vadd.f32 %v1235, %v1236
      %v1238 = vsel %vm1158, %v742, 0.0
      %v1239 = vadd.f32 %v1237, %v1238
      %v1240 = vsel %vm1158, %v745, 0.0
      %v1241 = vadd.f32 %v1239, %v1240
      %v1242 = vsel %vm1158, %v750, 0.0
      %v1243 = vadd.f32 %v1241, %v1242
      %v1244 = vsel %vm1158, %v753, 0.0
      %v1245 = vadd.f32 %v1243, %v1244
      %v1246 = vsel %vm1158, %v758, 0.0
      %v1247 = vadd.f32 %v1245, %v1246
      %v1248 = vsel %vm1158, %v761, 0.0
      %v1249 = vadd.f32 %v1247, %v1248
      %v1250 = vsel %vm1158, %v766, 0.0
      %v1251 = vadd.f32 %v1249, %v1250
      %v1252 = vsel %vm1158, %v769, 0.0
      %v1253 = vadd.f32 %v1251, %v1252
      %v1254 = vsel %vm1158, %v774, 0.0
      %v1255 = vadd.f32 %v1253, %v1254
      %v1256 = vsel %vm1158, %v777, 0.0
      %v1257 = vadd.f32 %v1255, %v1256
      %v1258 = vsel %vm1158, %v782, 0.0
      %v1259 = vadd.f32 %v1257, %v1258
      %v1260 = vsel %vm1158, %v785, 0.0
      %v1261 = vadd.f32 %v1259, %v1260
      %v1262 = vsel %vm1158, %v790, 0.0
      %v1263 = vadd.f32 %v1261, %v1262
      %v1264 = vsel %vm1158, %v793, 0.0
      %v1265 = vadd.f32 %v1263, %v1264
      %v1266 = vsel %vm1158, %v798, 0.0
      %v1267 = vadd.f32 %v1265, %v1266
      %v1268 = vsel %vm1158, %v801, 0.0
      %v1269 = vadd.f32 %v1267, %v1268
      %v1270 = vsel %vm1158, %v806, 0.0
      %v1271 = vadd.f32 %v1269, %v1270
      %v1272 = vsel %vm1158, %v809, 0.0
      %v1273 = vadd.f32 %v1271, %v1272
      %v1274 = vsel %vm1158, %v814, 0.0
      %v1275 = vadd.f32 %v1273, %v1274
      %v1276 = vsel %vm1158, %v817, 0.0
      %v1277 = vadd.f32 %v1275, %v1276
      %v1278 = vsel %vm1158, %v822, 0.0
      %v1279 = vadd.f32 %v1277, %v1278
      %v1280 = vsel %vm1158, %v825, 0.0
      %v1281 = vadd.f32 %v1279, %v1280
      %v1282 = vsel %vm1158, %v830, 0.0
      %v1283 = vadd.f32 %v1281, %v1282
      %v1284 = vsel %vm1158, %v833, 0.0
      %v1285 = vadd.f32 %v1283, %v1284
      %v1286 = vrot.slane %v1285, 4
      %v1287 = vadd.f32 %v1285, %v1286
      %v1288 = vrot.slane %v1287, 2
      %v1289 = vadd.f32 %v1287, %v1288
      %v1290 = vrot.slane %v1289, 1
      %v1291 = vadd.f32 %v1289, %v1290
      %v1292 = vadd.f32 %v1157, %v1291
      %vm1293 = vcmask 122880
      %1294 = vst.msk [vmem:[%s3] sm:$0x1] %vm1293, %v1292
      %v1295 = vld [vmem:[%s4] sm:$0x1]
      %v1296 = vmul.f32 %v582, %v582
      %v1297 = vmul.f32 %v585, %v585
      %v1298 = vmul.f32 %v590, %v590
      %v1299 = vmul.f32 %v593, %v593
      %v1300 = vmul.f32 %v598, %v598
      %v1301 = vmul.f32 %v601, %v601
      %v1302 = vmul.f32 %v606, %v606
      %v1303 = vmul.f32 %v609, %v609
      %v1304 = vmul.f32 %v614, %v614
      %v1305 = vmul.f32 %v617, %v617
      %v1306 = vmul.f32 %v622, %v622
      %v1307 = vmul.f32 %v625, %v625
      %v1308 = vmul.f32 %v630, %v630
      %v1309 = vmul.f32 %v633, %v633
      %v1310 = vmul.f32 %v638, %v638
      %v1311 = vmul.f32 %v641, %v641
      %v1312 = vmul.f32 %v646, %v646
      %v1313 = vmul.f32 %v649, %v649
      %v1314 = vmul.f32 %v654, %v654
      %v1315 = vmul.f32 %v657, %v657
      %v1316 = vmul.f32 %v662, %v662
      %v1317 = vmul.f32 %v665, %v665
      %v1318 = vmul.f32 %v670, %v670
      %v1319 = vmul.f32 %v673, %v673
      %v1320 = vmul.f32 %v678, %v678
      %v1321 = vmul.f32 %v681, %v681
      %v1322 = vmul.f32 %v686, %v686
      %v1323 = vmul.f32 %v689, %v689
      %v1324 = vmul.f32 %v694, %v694
      %v1325 = vmul.f32 %v697, %v697
      %v1326 = vmul.f32 %v702, %v702
      %v1327 = vmul.f32 %v705, %v705
      %v1328 = vmul.f32 %v710, %v710
      %v1329 = vmul.f32 %v713, %v713
      %v1330 = vmul.f32 %v718, %v718
      %v1331 = vmul.f32 %v721, %v721
      %v1332 = vmul.f32 %v726, %v726
      %v1333 = vmul.f32 %v729, %v729
      %v1334 = vmul.f32 %v734, %v734
      %v1335 = vmul.f32 %v737, %v737
      %v1336 = vmul.f32 %v742, %v742
      %v1337 = vmul.f32 %v745, %v745
      %v1338 = vmul.f32 %v750, %v750
      %v1339 = vmul.f32 %v753, %v753
      %v1340 = vmul.f32 %v758, %v758
      %v1341 = vmul.f32 %v761, %v761
      %v1342 = vmul.f32 %v766, %v766
      %v1343 = vmul.f32 %v769, %v769
      %v1344 = vmul.f32 %v774, %v774
      %v1345 = vmul.f32 %v777, %v777
      %v1346 = vmul.f32 %v782, %v782
      %v1347 = vmul.f32 %v785, %v785
      %v1348 = vmul.f32 %v790, %v790
      %v1349 = vmul.f32 %v793, %v793
      %v1350 = vmul.f32 %v798, %v798
      %v1351 = vmul.f32 %v801, %v801
      %v1352 = vmul.f32 %v806, %v806
      %v1353 = vmul.f32 %v809, %v809
      %v1354 = vmul.f32 %v814, %v814
      %v1355 = vmul.f32 %v817, %v817
      %v1356 = vmul.f32 %v822, %v822
      %v1357 = vmul.f32 %v825, %v825
      %v1358 = vmul.f32 %v830, %v830
      %v1359 = vmul.f32 %v833, %v833
      %v1360 = vsel %vm1158, %v1296, 0.0
      %v1361 = vsel %vm1158, %v1297, 0.0
      %v1362 = vadd.f32 %v1360, %v1361
      %v1363 = vsel %vm1158, %v1298, 0.0
      %v1364 = vadd.f32 %v1362, %v1363
      %v1365 = vsel %vm1158, %v1299, 0.0
      %v1366 = vadd.f32 %v1364, %v1365
      %v1367 = vsel %vm1158, %v1300, 0.0
      %v1368 = vadd.f32 %v1366, %v1367
      %v1369 = vsel %vm1158, %v1301, 0.0
      %v1370 = vadd.f32 %v1368, %v1369
      %v1371 = vsel %vm1158, %v1302, 0.0
      %v1372 = vadd.f32 %v1370, %v1371
      %v1373 = vsel %vm1158, %v1303, 0.0
      %v1374 = vadd.f32 %v1372, %v1373
      %v1375 = vsel %vm1158, %v1304, 0.0
      %v1376 = vadd.f32 %v1374, %v1375
      %v1377 = vsel %vm1158, %v1305, 0.0
      %v1378 = vadd.f32 %v1376, %v1377
      %v1379 = vsel %vm1158, %v1306, 0.0
      %v1380 = vadd.f32 %v1378, %v1379
      %v1381 = vsel %vm1158, %v1307, 0.0
      %v1382 = vadd.f32 %v1380, %v1381
      %v1383 = vsel %vm1158, %v1308, 0.0
      %v1384 = vadd.f32 %v1382, %v1383
      %v1385 = vsel %vm1158, %v1309, 0.0
      %v1386 = vadd.f32 %v1384, %v1385
      %v1387 = vsel %vm1158, %v1310, 0.0
      %v1388 = vadd.f32 %v1386, %v1387
      %v1389 = vsel %vm1158, %v1311, 0.0
      %v1390 = vadd.f32 %v1388, %v1389
      %v1391 = vsel %vm1158, %v1312, 0.0
      %v1392 = vadd.f32 %v1390, %v1391
      %v1393 = vsel %vm1158, %v1313, 0.0
      %v1394 = vadd.f32 %v1392, %v1393
      %v1395 = vsel %vm1158, %v1314, 0.0
      %v1396 = vadd.f32 %v1394, %v1395
      %v1397 = vsel %vm1158, %v1315, 0.0
      %v1398 = vadd.f32 %v1396, %v1397
      %v1399 = vsel %vm1158, %v1316, 0.0
      %v1400 = vadd.f32 %v1398, %v1399
      %v1401 = vsel %vm1158, %v1317, 0.0
      %v1402 = vadd.f32 %v1400, %v1401
      %v1403 = vsel %vm1158, %v1318, 0.0
      %v1404 = vadd.f32 %v1402, %v1403
      %v1405 = vsel %vm1158, %v1319, 0.0
      %v1406 = vadd.f32 %v1404, %v1405
      %v1407 = vsel %vm1158, %v1320, 0.0
      %v1408 = vadd.f32 %v1406, %v1407
      %v1409 = vsel %vm1158, %v1321, 0.0
      %v1410 = vadd.f32 %v1408, %v1409
      %v1411 = vsel %vm1158, %v1322, 0.0
      %v1412 = vadd.f32 %v1410, %v1411
      %v1413 = vsel %vm1158, %v1323, 0.0
      %v1414 = vadd.f32 %v1412, %v1413
      %v1415 = vsel %vm1158, %v1324, 0.0
      %v1416 = vadd.f32 %v1414, %v1415
      %v1417 = vsel %vm1158, %v1325, 0.0
      %v1418 = vadd.f32 %v1416, %v1417
      %v1419 = vsel %vm1158, %v1326, 0.0
      %v1420 = vadd.f32 %v1418, %v1419
      %v1421 = vsel %vm1158, %v1327, 0.0
      %v1422 = vadd.f32 %v1420, %v1421
      %v1423 = vsel %vm1158, %v1328, 0.0
      %v1424 = vadd.f32 %v1422, %v1423
      %v1425 = vsel %vm1158, %v1329, 0.0
      %v1426 = vadd.f32 %v1424, %v1425
      %v1427 = vsel %vm1158, %v1330, 0.0
      %v1428 = vadd.f32 %v1426, %v1427
      %v1429 = vsel %vm1158, %v1331, 0.0
      %v1430 = vadd.f32 %v1428, %v1429
      %v1431 = vsel %vm1158, %v1332, 0.0
      %v1432 = vadd.f32 %v1430, %v1431
      %v1433 = vsel %vm1158, %v1333, 0.0
      %v1434 = vadd.f32 %v1432, %v1433
      %v1435 = vsel %vm1158, %v1334, 0.0
      %v1436 = vadd.f32 %v1434, %v1435
      %v1437 = vsel %vm1158, %v1335, 0.0
      %v1438 = vadd.f32 %v1436, %v1437
      %v1439 = vsel %vm1158, %v1336, 0.0
      %v1440 = vadd.f32 %v1438, %v1439
      %v1441 = vsel %vm1158, %v1337, 0.0
      %v1442 = vadd.f32 %v1440, %v1441
      %v1443 = vsel %vm1158, %v1338, 0.0
      %v1444 = vadd.f32 %v1442, %v1443
      %v1445 = vsel %vm1158, %v1339, 0.0
      %v1446 = vadd.f32 %v1444, %v1445
      %v1447 = vsel %vm1158, %v1340, 0.0
      %v1448 = vadd.f32 %v1446, %v1447
      %v1449 = vsel %vm1158, %v1341, 0.0
      %v1450 = vadd.f32 %v1448, %v1449
      %v1451 = vsel %vm1158, %v1342, 0.0
      %v1452 = vadd.f32 %v1450, %v1451
      %v1453 = vsel %vm1158, %v1343, 0.0
      %v1454 = vadd.f32 %v1452, %v1453
      %v1455 = vsel %vm1158, %v1344, 0.0
      %v1456 = vadd.f32 %v1454, %v1455
      %v1457 = vsel %vm1158, %v1345, 0.0
      %v1458 = vadd.f32 %v1456, %v1457
      %v1459 = vsel %vm1158, %v1346, 0.0
      %v1460 = vadd.f32 %v1458, %v1459
      %v1461 = vsel %vm1158, %v1347, 0.0
      %v1462 = vadd.f32 %v1460, %v1461
      %v1463 = vsel %vm1158, %v1348, 0.0
      %v1464 = vadd.f32 %v1462, %v1463
      %v1465 = vsel %vm1158, %v1349, 0.0
      %v1466 = vadd.f32 %v1464, %v1465
      %v1467 = vsel %vm1158, %v1350, 0.0
      %v1468 = vadd.f32 %v1466, %v1467
      %v1469 = vsel %vm1158, %v1351, 0.0
      %v1470 = vadd.f32 %v1468, %v1469
      %v1471 = vsel %vm1158, %v1352, 0.0
      %v1472 = vadd.f32 %v1470, %v1471
      %v1473 = vsel %vm1158, %v1353, 0.0
      %v1474 = vadd.f32 %v1472, %v1473
      %v1475 = vsel %vm1158, %v1354, 0.0
      %v1476 = vadd.f32 %v1474, %v1475
      %v1477 = vsel %vm1158, %v1355, 0.0
      %v1478 = vadd.f32 %v1476, %v1477
      %v1479 = vsel %vm1158, %v1356, 0.0
      %v1480 = vadd.f32 %v1478, %v1479
      %v1481 = vsel %vm1158, %v1357, 0.0
      %v1482 = vadd.f32 %v1480, %v1481
      %v1483 = vsel %vm1158, %v1358, 0.0
      %v1484 = vadd.f32 %v1482, %v1483
      %v1485 = vsel %vm1158, %v1359, 0.0
      %v1486 = vadd.f32 %v1484, %v1485
      %v1487 = vrot.slane %v1486, 4
      %v1488 = vadd.f32 %v1486, %v1487
      %v1489 = vrot.slane %v1488, 2
      %v1490 = vadd.f32 %v1488, %v1489
      %v1491 = vrot.slane %v1490, 1
      %v1492 = vadd.f32 %v1490, %v1491
      %v1493 = vadd.f32 %v1295, %v1492
      %1494 = vst.msk [vmem:[%s4] sm:$0x1] %vm1293, %v1493
      %s1495 = smul.u32 64, %s16
      %p1496 = scmp.lt.s32.totalorder %s1495, 255
      %s1497 = scalar_select %p1496, %s1495, 255
      %s1498 = smul.addr %s1497, 4
      %s1499 = scalar_lea.vmem %s2, %s1498
      // Predicated region
      $region33: #{_lambda_.14} parent=27 // pred_check
        %p1500 = pneg %p81
      $region34: #{_lambda_.14} parent=27 // pred_check_branch
        %1502 = sbr.rel (%p1500) target = $region36
      $region35: #{_lambda_.14} parent=27 // pred_region
        %s1503 = smul.u32 64, %s16
      $region36: #{_lambda_.14} parent=27 // pred_fallthru
        _
      // Predicated region
      $region37: #{_lambda_.14} parent=27 // pred_check
        %p1504 = pneg %p102
      $region38: #{_lambda_.14} parent=27 // pred_check_branch
        %1506 = sbr.rel (%p1504) target = $region40
      $region39: #{_lambda_.14} parent=27 // pred_region
        _
      $region40: #{_lambda_.14} parent=27 // pred_fallthru
        _
      // Predicated region
      $region41: #{_lambda_.14} parent=27 // pred_check
        %p1507 = pneg %p123
      $region42: #{_lambda_.14} parent=27 // pred_check_branch
        %1509 = sbr.rel (%p1507) target = $region44
      $region43: #{_lambda_.14} parent=27 // pred_region
        _
      $region44: #{_lambda_.14} parent=27 // pred_fallthru
        _
      // Predicated region
      $region45: #{_lambda_.14} parent=27 // pred_check
        %p1510 = pneg %p102
      $region46: #{_lambda_.14} parent=27 // pred_check_branch
        %1512 = sbr.rel (%p1510) target = $region48
      $region47: #{_lambda_.14} parent=27 // pred_region
        _
      $region48: #{_lambda_.14} parent=27 // pred_fallthru
        _
      // Predicated region
      $region49: #{_lambda_.14} parent=27 // pred_check
        %p1513 = pneg %p123
      $region50: #{_lambda_.14} parent=27 // pred_check_branch
        %1515 = sbr.rel (%p1513) target = $region52
      $region51: #{_lambda_.14} parent=27 // pred_region
        _
      $region52: #{_lambda_.14} parent=27 // pred_fallthru
        _
    $region28: #{_lambda_.14} parent=5 // pred_fallthru
      _
    %p1516 = scmp.le.s32.totalorder 2, %s11
    // Predicated region
    $region53: #{_lambda_.14} parent=5 // pred_check
      %p1517 = pneg %p1516
    $region54: #{_lambda_.14} parent=5 // pred_check_branch
      %1519 = sbr.rel (%p1517) target = $region56
    $region55: #{_lambda_.14} parent=5 // pred_region
      %s1520 = ssub.s32 %s11, 2
      // Predicated region
      $region57: #{_lambda_.14} parent=55 // pred_check
        %p1521 = pneg %p87
      $region58: #{_lambda_.14} parent=55 // pred_check_branch
        %1523 = sbr.rel (%p1521) target = $region60
      $region59: #{_lambda_.14} parent=55 // pred_region
        %s1524 = smul.u32 64, %s17
        %p1525 = scmp.lt.s32.totalorder %s1524, 255
        %s1526 = scalar_select %p1525, %s1524, 255
        %s1527 = smul.addr %s1526, 4
        %s1528 = scalar_lea.vmem %s2, %s1527
      $region60: #{_lambda_.14} parent=55 // pred_fallthru
        _
    $region56: #{_lambda_.14} parent=5 // pred_fallthru
      _
  $region6: #{_lambda_.14} parent=0 // loop_footer
    %s15 = sadd.s32 1, %s11
  $region7: #{_lambda_.14} parent=0 // loop_footer_branch
    %10 = sbr.rel target = $region3
  $region8: #{_lambda_.14} parent=0 // loop_exit
    _

// kernel: _lambda_.16
$region0: #{_lambda_.16}
  #allocation0 [shape = 'u32[]', space=smem, size = 0x4, offset = 0x4, fixed_abs, tag = 'smem constant byte address 0x4 - core index']
  #allocation1 [shape = 'u32[144,128]{1,0:T(1,128)}', space=vmem, size = 0x12000, scoped, tag = 'internal scratch']
  %s0 = inlined_call_operand.vmem [shape: bf16[2048,144], index: 0, kind: input, shape index: {}]
  %s1 = inlined_call_operand.vmem [shape: bf16[144,16], index: 1, kind: input, shape index: {}]
  %s2 = inlined_call_operand.vmem [shape: bf16[2048,16], index: 2, kind: output, shape index: {0}]
  %s3 = inlined_call_operand.vmem [shape: f32[1,16], index: 3, kind: output, shape index: {1}]
  %s4 = inlined_call_operand.vmem [shape: f32[1,16], index: 4, kind: output, shape index: {2}]
  %5 = xla_tuple %s2, %s3, %s4
  %s6 = sld [smem:[#allocation0]]
  $region61: #{_lambda_.16} parent=0
    _
  %s8 = ssub.s32 1, %s6
  %s9 = scalar_select 0, %s8, %s6
  loop: start=0, step=1, limit=6
  $region2: #{_lambda_.16} parent=0 // loop_pre_header
    _
  $region3: #{_lambda_.16} parent=0 // loop_header
    %s11 = sphi 0, %s15
    %p12 = scmp.ge.s32.totalorder %s11, 6
    %s21 = sphi 0, %s23
    %s24 = sphi 0, %s21
    %s25 = sphi 0, %s24
    %s41 = sphi 0, %s25
    %s45 = sphi 0, %s45
    %s47 = sphi 0, %s45
    %s48 = sphi 0, %s47
    %s62 = sphi 0, %s48
    %s68 = sphi 0, %s70
    %s71 = sphi 0, %s68
    %s72 = sphi 0, %s71
    %s88 = sphi 0, %s72
    %s92 = sphi 0, %s92
    %s94 = sphi 0, %s92
    %s95 = sphi 0, %s94
    %s109 = sphi 0, %s95
    %s113 = sphi 0, %s113
    %s115 = sphi 0, %s113
    %s116 = sphi 0, %s115
    %s130 = sphi 0, %s116
  $region4: #{_lambda_.16} parent=0 // loop_header_branch
    %14 = sbr.rel (%p12) target = $region8
  $region5: #{_lambda_.16} parent=0 // loop_body
    %s16 = ssub.s32 %s11, 1
    %s17 = ssub.s32 %s11, 2
    %s18 = sadd.s32 %s11, 1
    %s19 = ssub.s32 %s11, %s18
    %p20 = scmp.eq.s32.totalorder %s19, 0
    %s22 = sadd.s32 %s21, 1
    %s23 = scalar_select %p20, %s21, %s22
    %p26 = pneg %p20
    %p27 = scmp.eq.s32.totalorder %s11, 3
    %p28 = por %p26, %p27
    %p29 = scmp.ne.s32.totalorder %s21, %s24
    %p30 = scmp.eq.s32.totalorder %s11, 0
    %p31 = por %p29, %p30
    %p32 = scmp.ne.s32.totalorder %s21, %s24
    %p33 = scmp.eq.s32.totalorder %s16, 3
    %p34 = por %p32, %p33
    %p35 = scmp.ne.s32.totalorder %s24, %s25
    %p36 = scmp.eq.s32.totalorder %s16, 0
    %p37 = por %p35, %p36
    %p38 = scmp.ne.s32.totalorder %s24, %s25
    %p39 = scmp.eq.s32.totalorder %s17, 3
    %p40 = por %p38, %p39
    %p42 = scmp.ne.s32.totalorder %s25, %s41
    %p43 = scmp.eq.s32.totalorder %s17, 0
    %p44 = por %p42, %p43
    %s46 = sadd.s32 %s45, 1
    %p49 = scmp.eq.s32.totalorder %s11, 3
    %p50 = scmp.ne.s32.totalorder %s45, %s47
    %p51 = scmp.eq.s32.totalorder %s11, 0
    %p52 = por %p50, %p51
    %p53 = scmp.ne.s32.totalorder %s45, %s47
    %p54 = scmp.eq.s32.totalorder %s16, 3
    %p55 = por %p53, %p54
    %p56 = scmp.ne.s32.totalorder %s47, %s48
    %p57 = scmp.eq.s32.totalorder %s16, 0
    %p58 = por %p56, %p57
    %p59 = scmp.ne.s32.totalorder %s47, %s48
    %p60 = scmp.eq.s32.totalorder %s17, 3
    %p61 = por %p59, %p60
    %p63 = scmp.ne.s32.totalorder %s48, %s62
    %p64 = scmp.eq.s32.totalorder %s17, 0
    %p65 = por %p63, %p64
    %s66 = ssub.s32 %s11, %s18
    %p67 = scmp.eq.s32.totalorder %s66, 0
    %s69 = sadd.s32 %s68, 1
    %s70 = scalar_select %p67, %s68, %s69
    %p73 = pneg %p67
    %p74 = scmp.eq.s32.totalorder %s11, 3
    %p75 = por %p73, %p74
    %p76 = scmp.ne.s32.totalorder %s68, %s71
    %p77 = scmp.eq.s32.totalorder %s11, 0
    %p78 = por %p76, %p77
    %p79 = scmp.ne.s32.totalorder %s68, %s71
    %p80 = scmp.eq.s32.totalorder %s16, 3
    %p81 = por %p79, %p80
    %p82 = scmp.ne.s32.totalorder %s71, %s72
    %p83 = scmp.eq.s32.totalorder %s16, 0
    %p84 = por %p82, %p83
    %p85 = scmp.ne.s32.totalorder %s71, %s72
    %p86 = scmp.eq.s32.totalorder %s17, 3
    %p87 = por %p85, %p86
    %p89 = scmp.ne.s32.totalorder %s72, %s88
    %p90 = scmp.eq.s32.totalorder %s17, 0
    %p91 = por %p89, %p90
    %s93 = sadd.s32 %s92, 1
    %p96 = scmp.eq.s32.totalorder %s11, 3
    %p97 = scmp.ne.s32.totalorder %s92, %s94
    %p98 = scmp.eq.s32.totalorder %s11, 0
    %p99 = por %p97, %p98
    %p100 = scmp.ne.s32.totalorder %s92, %s94
    %p101 = scmp.eq.s32.totalorder %s16, 3
    %p102 = por %p100, %p101
    %p103 = scmp.ne.s32.totalorder %s94, %s95
    %p104 = scmp.eq.s32.totalorder %s16, 0
    %p105 = por %p103, %p104
    %p106 = scmp.ne.s32.totalorder %s94, %s95
    %p107 = scmp.eq.s32.totalorder %s17, 3
    %p108 = por %p106, %p107
    %p110 = scmp.ne.s32.totalorder %s95, %s109
    %p111 = scmp.eq.s32.totalorder %s17, 0
    %p112 = por %p110, %p111
    %s114 = sadd.s32 %s113, 1
    %p117 = scmp.eq.s32.totalorder %s11, 3
    %p118 = scmp.ne.s32.totalorder %s113, %s115
    %p119 = scmp.eq.s32.totalorder %s11, 0
    %p120 = por %p118, %p119
    %p121 = scmp.ne.s32.totalorder %s113, %s115
    %p122 = scmp.eq.s32.totalorder %s16, 3
    %p123 = por %p121, %p122
    %p124 = scmp.ne.s32.totalorder %s115, %s116
    %p125 = scmp.eq.s32.totalorder %s16, 0
    %p126 = por %p124, %p125
    %p127 = scmp.ne.s32.totalorder %s115, %s116
    %p128 = scmp.eq.s32.totalorder %s17, 3
    %p129 = por %p127, %p128
    %p131 = scmp.ne.s32.totalorder %s116, %s130
    %p132 = scmp.eq.s32.totalorder %s17, 0
    %p133 = por %p131, %p132
    %p134 = scmp.le.s32.totalorder 1, %s11
    %p135 = scmp.lt.s32.totalorder %s11, 5
    %p136 = pnand %p134, %p135
    %p137 = pneg %p136
    // Predicated region
    $region9: #{_lambda_.16} parent=5 // pred_check
      _
    $region10: #{_lambda_.16} parent=5 // pred_check_branch
      %139 = sbr.rel (%p136) target = $region12
    $region11: #{_lambda_.16} parent=5 // pred_region
      %s140 = ssub.s32 %s11, 1
      // Predicated region
      $region13: #{_lambda_.16} parent=11 // pred_check
        %p141 = pneg %p58
      $region14: #{_lambda_.16} parent=11 // pred_check_branch
        %143 = sbr.rel (%p141) target = $region16
      $region15: #{_lambda_.16} parent=11 // pred_region
        _
      $region16: #{_lambda_.16} parent=11 // pred_fallthru
        _
    $region12: #{_lambda_.16} parent=5 // pred_fallthru
      _
    %p144 = scmp.lt.s32.totalorder %s11, 4
    // Predicated region
    $region17: #{_lambda_.16} parent=5 // pred_check
      %p145 = pneg %p144
    $region18: #{_lambda_.16} parent=5 // pred_check_branch
      %147 = sbr.rel (%p145) target = $region20
    $region19: #{_lambda_.16} parent=5 // pred_region
      // Predicated region
      $region21: #{_lambda_.16} parent=19 // pred_check
        %p148 = pneg %p31
      $region22: #{_lambda_.16} parent=19 // pred_check_branch
        %150 = sbr.rel (%p148) target = $region24
      $region23: #{_lambda_.16} parent=19 // pred_region
        %s151 = smul.u32 64, %s11
        %p152 = scmp.lt.s32.totalorder %s151, 255
        %s153 = scalar_select %p152, %s151, 255
        %s154 = smul.addr %s153, 2
        %s155 = smul.addr %s154, 4
        %s156 = scalar_lea.vmem %s0, %s155
        %s157 = smul.u32 64, %s11
      $region24: #{_lambda_.16} parent=19 // pred_fallthru
        _
    $region20: #{_lambda_.16} parent=5 // pred_fallthru
      _
    %p158 = scmp.le.s32.totalorder 1, %s11
    %p159 = scmp.lt.s32.totalorder %s11, 5
    %p160 = pnand %p158, %p159
    %p161 = pneg %p160
    // Predicated region
    $region25: #{_lambda_.16} parent=5 // pred_check
      _
    $region26: #{_lambda_.16} parent=5 // pred_check_branch
      %163 = sbr.rel (%p160) target = $region28
    $region27: #{_lambda_.16} parent=5 // pred_region
      %s164 = ssub.s32 %s11, 1
      %s165 = smul.u32 64, %s16
      %p166 = scmp.lt.s32.totalorder %s165, 255
      %s167 = scalar_select %p166, %s165, 255
      %s168 = smul.addr %s167, 2
      %s169 = smul.addr %s168, 4
      %s170 = scalar_lea.vmem %s0, %s169
      %p171 = pneg %p37
      %p172 = pneg %p34
      %p173 = pneg %p58
      %p174 = pneg %p55
      %p175 = pneg %p84
      %p176 = pneg %p81
      %s177 = smul.u32 64, %s16
      %p178 = scmp.lt.s32.totalorder %s177, 255
      %s179 = scalar_select %p178, %s177, 255
      %s180 = smul.addr %s179, 4
      %s181 = scalar_lea.vmem %s2, %s180
      %p182 = pneg %p105
      %p183 = pneg %p102
      %p184 = pneg %p126
      %p185 = pneg %p123
      %s186 = smul.u32 64, %s16
      %p187 = scmp.lt.s32.totalorder %s186, 255
      %s188 = scalar_select %p187, %s186, 255
      %s189 = smul.addr %s188, 2
      %s190 = smul.addr %s189, 4
      %s191 = scalar_lea.vmem %s0, %s190
      %s192 = smul.u32 64, %s16
      %s193 = smul.u32 64, %s16
      %p194 = scmp.lt.s32.totalorder %s193, 255
      %s195 = scalar_select %p194, %s193, 255
      %s196 = smul.addr %s195, 4
      %s197 = scalar_lea.vmem %s2, %s196
      %s198 = smul.u32 64, %s16
      %p200 = scmp.eq.s32.totalorder %s16, 0
      // Predicated region
      $region29: #{_lambda_.16} parent=27 // pred_check
        %p201 = pneg %p200
      $region30: #{_lambda_.16} parent=27 // pred_check_branch
        %203 = sbr.rel (%p201) target = $region32
      $region31: #{_lambda_.16} parent=27 // pred_region
        %vm204 = vcmask 122880
        %205 = vst.msk [vmem:[%s3] sm:$0x1] %vm204, 0.0
        %206 = vst.msk [vmem:[%s4] sm:$0x1] %vm204, 0.0
      $region32: #{_lambda_.16} parent=27 // pred_fallthru
        _
      %v207 = vld [vmem:[%s191] sm:$0xff]
      %v208 = vld [vmem:[%s191 + $0x8] sm:$0xff]
      %v209 = vld [vmem:[%s191 + $0x10] sm:$0xff]
      %v210 = vld [vmem:[%s191 + $0x18] sm:$0xff]
      %v211 = vld [vmem:[%s191 + $0x20] sm:$0xff]
      %v212 = vld [vmem:[%s191 + $0x28] sm:$0xff]
      %v213 = vld [vmem:[%s191 + $0x30] sm:$0xff]
      %v214 = vld [vmem:[%s191 + $0x38] sm:$0xff]
      %v215 = vld [vmem:[%s191 + $0x40] sm:$0xff]
      %v216 = vld [vmem:[%s191 + $0x48] sm:$0xff]
      %v217 = vld [vmem:[%s191 + $0x50] sm:$0xff]
      %v218 = vld [vmem:[%s191 + $0x58] sm:$0xff]
      %v219 = vld [vmem:[%s191 + $0x60] sm:$0xff]
      %v220 = vld [vmem:[%s191 + $0x68] sm:$0xff]
      %v221 = vld [vmem:[%s191 + $0x70] sm:$0xff]
      %v222 = vld [vmem:[%s191 + $0x78] sm:$0xff]
      %v223 = vld [vmem:[%s191 + $0x80] sm:$0xff]
      %v224 = vld [vmem:[%s191 + $0x88] sm:$0xff]
      %v225 = vld [vmem:[%s191 + $0x90] sm:$0xff]
      %v226 = vld [vmem:[%s191 + $0x98] sm:$0xff]
      %v227 = vld [vmem:[%s191 + $0xa0] sm:$0xff]
      %v228 = vld [vmem:[%s191 + $0xa8] sm:$0xff]
      %v229 = vld [vmem:[%s191 + $0xb0] sm:$0xff]
      %v230 = vld [vmem:[%s191 + $0xb8] sm:$0xff]
      %v231 = vld [vmem:[%s191 + $0xc0] sm:$0xff]
      %v232 = vld [vmem:[%s191 + $0xc8] sm:$0xff]
      %v233 = vld [vmem:[%s191 + $0xd0] sm:$0xff]
      %v234 = vld [vmem:[%s191 + $0xd8] sm:$0xff]
      %v235 = vld [vmem:[%s191 + $0xe0] sm:$0xff]
      %v236 = vld [vmem:[%s191 + $0xe8] sm:$0xff]
      %v237 = vld [vmem:[%s191 + $0xf0] sm:$0xff]
      %v238 = vld [vmem:[%s191 + $0xf8] sm:$0xff]
      %v239 = vld [vmem:[%s191 + $0x100] sm:$0xff]
      %v240 = vld [vmem:[%s191 + $0x108] sm:$0xff]
      %v241 = vld [vmem:[%s191 + $0x110] sm:$0xff]
      %v242 = vld [vmem:[%s191 + $0x118] sm:$0xff]
      %v243 = vld [vmem:[%s191 + $0x120] sm:$0xff]
      %v244 = vld [vmem:[%s191 + $0x128] sm:$0xff]
      %v245 = vld [vmem:[%s191 + $0x130] sm:$0xff]
      %v246 = vld [vmem:[%s191 + $0x138] sm:$0xff]
      %v247 = vld [vmem:[%s191 + $0x140] sm:$0xff]
      %v248 = vld [vmem:[%s191 + $0x148] sm:$0xff]
      %v249 = vld [vmem:[%s191 + $0x150] sm:$0xff]
      %v250 = vld [vmem:[%s191 + $0x158] sm:$0xff]
      %v251 = vld [vmem:[%s191 + $0x160] sm:$0xff]
      %v252 = vld [vmem:[%s191 + $0x168] sm:$0xff]
      %v253 = vld [vmem:[%s191 + $0x170] sm:$0xff]
      %v254 = vld [vmem:[%s191 + $0x178] sm:$0xff]
      %v255 = vld [vmem:[%s191 + $0x180] sm:$0xff]
      %v256 = vld [vmem:[%s191 + $0x188] sm:$0xff]
      %v257 = vld [vmem:[%s191 + $0x190] sm:$0xff]
      %v258 = vld [vmem:[%s191 + $0x198] sm:$0xff]
      %v259 = vld [vmem:[%s191 + $0x1a0] sm:$0xff]
      %v260 = vld [vmem:[%s191 + $0x1a8] sm:$0xff]
      %v261 = vld [vmem:[%s191 + $0x1b0] sm:$0xff]
      %v262 = vld [vmem:[%s191 + $0x1b8] sm:$0xff]
      %v263 = vld [vmem:[%s191 + $0x1c0] sm:$0xff]
      %v264 = vld [vmem:[%s191 + $0x1c8] sm:$0xff]
      %v265 = vld [vmem:[%s191 + $0x1d0] sm:$0xff]
      %v266 = vld [vmem:[%s191 + $0x1d8] sm:$0xff]
      %v267 = vld [vmem:[%s191 + $0x1e0] sm:$0xff]
      %v268 = vld [vmem:[%s191 + $0x1e8] sm:$0xff]
      %v269 = vld [vmem:[%s191 + $0x1f0] sm:$0xff]
      %v270 = vld [vmem:[%s191 + $0x1f8] sm:$0xff]
      %v271 = vld [vmem:[%s1] sm:$0xf]
      %v272 = vld [vmem:[%s1 + $0x4] sm:$0xf]
      %v273 = vld [vmem:[%s1 + $0x8] sm:$0xf]
      %v274 = vld [vmem:[%s1 + $0xc] sm:$0xf]
      %v275 = vld [vmem:[%s1 + $0x10] sm:$0xf]
      %v276 = vld [vmem:[%s1 + $0x14] sm:$0xf]
      %v277 = vld [vmem:[%s1 + $0x18] sm:$0xf]
      %v278 = vld [vmem:[%s1 + $0x1c] sm:$0xf]
      %v279 = vld [vmem:[%s1 + $0x20] sm:$0xf]
      %v280 = vld [vmem:[%s1 + $0x24] sm:$0xf]
      %v281 = vld [vmem:[%s1 + $0x28] sm:$0xf]
      %v282 = vld [vmem:[%s1 + $0x2c] sm:$0xf]
      %v283 = vld [vmem:[%s1 + $0x30] sm:$0xf]
      %v284 = vld [vmem:[%s1 + $0x34] sm:$0xf]
      %v285 = vld [vmem:[%s1 + $0x38] sm:$0xf]
      %v286 = vld [vmem:[%s1 + $0x3c] sm:$0xf]
      %v287 = vld [vmem:[%s1 + $0x40] sm:$0xf]
      %v288 = vld [vmem:[%s1 + $0x44] sm:$0xf]
      %v353 = vunpack.c.l.b16 %v207
      %v354 = vunpack.c.h.b16 %v207
      %v355 = vunpack.c.l.b16 %v208
      %v356 = vunpack.c.h.b16 %v208
      %v357 = vunpack.c.l.b16 %v209
      %v358 = vunpack.c.h.b16 %v209
      %v359 = vunpack.c.l.b16 %v210
      %v360 = vunpack.c.h.b16 %v210
      %v361 = vunpack.c.l.b16 %v211
      %v362 = vunpack.c.h.b16 %v211
      %v363 = vunpack.c.l.b16 %v212
      %v364 = vunpack.c.h.b16 %v212
      %v365 = vunpack.c.l.b16 %v213
      %v366 = vunpack.c.h.b16 %v213
      %v367 = vunpack.c.l.b16 %v214
      %v368 = vunpack.c.h.b16 %v214
      %v369 = vunpack.c.l.b16 %v215
      %v370 = vunpack.c.h.b16 %v215
      %v371 = vunpack.c.l.b16 %v216
      %v372 = vunpack.c.h.b16 %v216
      %v373 = vunpack.c.l.b16 %v217
      %v374 = vunpack.c.h.b16 %v217
      %v375 = vunpack.c.l.b16 %v218
      %v376 = vunpack.c.h.b16 %v218
      %v377 = vunpack.c.l.b16 %v219
      %v378 = vunpack.c.h.b16 %v219
      %v379 = vunpack.c.l.b16 %v220
      %v380 = vunpack.c.h.b16 %v220
      %v381 = vunpack.c.l.b16 %v221
      %v382 = vunpack.c.h.b16 %v221
      %v383 = vunpack.c.l.b16 %v222
      %v384 = vunpack.c.h.b16 %v222
      %v385 = vunpack.c.l.b16 %v223
      %v386 = vunpack.c.h.b16 %v223
      %v387 = vunpack.c.l.b16 %v224
      %v388 = vunpack.c.h.b16 %v224
      %v389 = vunpack.c.l.b16 %v225
      %v390 = vunpack.c.h.b16 %v225
      %v391 = vunpack.c.l.b16 %v226
      %v392 = vunpack.c.h.b16 %v226
      %v393 = vunpack.c.l.b16 %v227
      %v394 = vunpack.c.h.b16 %v227
      %v395 = vunpack.c.l.b16 %v228
      %v396 = vunpack.c.h.b16 %v228
      %v397 = vunpack.c.l.b16 %v229
      %v398 = vunpack.c.h.b16 %v229
      %v399 = vunpack.c.l.b16 %v230
      %v400 = vunpack.c.h.b16 %v230
      %v401 = vunpack.c.l.b16 %v231
      %v402 = vunpack.c.h.b16 %v231
      %v403 = vunpack.c.l.b16 %v232
      %v404 = vunpack.c.h.b16 %v232
      %v405 = vunpack.c.l.b16 %v233
      %v406 = vunpack.c.h.b16 %v233
      %v407 = vunpack.c.l.b16 %v234
      %v408 = vunpack.c.h.b16 %v234
      %v409 = vunpack.c.l.b16 %v235
      %v410 = vunpack.c.h.b16 %v235
      %v411 = vunpack.c.l.b16 %v236
      %v412 = vunpack.c.h.b16 %v236
      %v413 = vunpack.c.l.b16 %v237
      %v414 = vunpack.c.h.b16 %v237
      %v415 = vunpack.c.l.b16 %v238
      %v416 = vunpack.c.h.b16 %v238
      %v417 = vunpack.c.l.b16 %v239
      %v418 = vunpack.c.h.b16 %v239
      %v419 = vunpack.c.l.b16 %v240
      %v420 = vunpack.c.h.b16 %v240
      %v421 = vunpack.c.l.b16 %v241
      %v422 = vunpack.c.h.b16 %v241
      %v423 = vunpack.c.l.b16 %v242
      %v424 = vunpack.c.h.b16 %v242
      %v425 = vunpack.c.l.b16 %v243
      %v426 = vunpack.c.h.b16 %v243
      %v427 = vunpack.c.l.b16 %v244
      %v428 = vunpack.c.h.b16 %v244
      %v429 = vunpack.c.l.b16 %v245
      %v430 = vunpack.c.h.b16 %v245
      %v431 = vunpack.c.l.b16 %v246
      %v432 = vunpack.c.h.b16 %v246
      %v433 = vunpack.c.l.b16 %v247
      %v434 = vunpack.c.h.b16 %v247
      %v435 = vunpack.c.l.b16 %v248
      %v436 = vunpack.c.h.b16 %v248
      %v437 = vunpack.c.l.b16 %v249
      %v438 = vunpack.c.h.b16 %v249
      %v439 = vunpack.c.l.b16 %v250
      %v440 = vunpack.c.h.b16 %v250
      %v441 = vunpack.c.l.b16 %v251
      %v442 = vunpack.c.h.b16 %v251
      %v443 = vunpack.c.l.b16 %v252
      %v444 = vunpack.c.h.b16 %v252
      %v445 = vunpack.c.l.b16 %v253
      %v446 = vunpack.c.h.b16 %v253
      %v447 = vunpack.c.l.b16 %v254
      %v448 = vunpack.c.h.b16 %v254
      %v449 = vunpack.c.l.b16 %v255
      %v450 = vunpack.c.h.b16 %v255
      %v451 = vunpack.c.l.b16 %v256
      %v452 = vunpack.c.h.b16 %v256
      %v453 = vunpack.c.l.b16 %v257
      %v454 = vunpack.c.h.b16 %v257
      %v455 = vunpack.c.l.b16 %v258
      %v456 = vunpack.c.h.b16 %v258
      %v457 = vunpack.c.l.b16 %v259
      %v458 = vunpack.c.h.b16 %v259
      %v459 = vunpack.c.l.b16 %v260
      %v460 = vunpack.c.h.b16 %v260
      %v461 = vunpack.c.l.b16 %v261
      %v462 = vunpack.c.h.b16 %v261
      %v463 = vunpack.c.l.b16 %v262
      %v464 = vunpack.c.h.b16 %v262
      %v465 = vunpack.c.l.b16 %v263
      %v466 = vunpack.c.h.b16 %v263
      %v467 = vunpack.c.l.b16 %v264
      %v468 = vunpack.c.h.b16 %v264
      %v469 = vunpack.c.l.b16 %v265
      %v470 = vunpack.c.h.b16 %v265
      %v471 = vunpack.c.l.b16 %v266
      %v472 = vunpack.c.h.b16 %v266
      %v473 = vunpack.c.l.b16 %v267
      %v474 = vunpack.c.h.b16 %v267
      %v475 = vunpack.c.l.b16 %v268
      %v476 = vunpack.c.h.b16 %v268
      %v477 = vunpack.c.l.b16 %v269
      %v478 = vunpack.c.h.b16 %v269
      %v479 = vunpack.c.l.b16 %v270
      %v480 = vunpack.c.h.b16 %v270
      %v481 = vpack.c.b16 %v355, %v353
      %v482 = vpack.c.b16 %v356, %v354
      %v483 = vpack.c.b16 %v359, %v357
      %v484 = vpack.c.b16 %v360, %v358
      %v485 = vpack.c.b16 %v363, %v361
      %v486 = vpack.c.b16 %v364, %v362
      %v487 = vpack.c.b16 %v367, %v365
      %v488 = vpack.c.b16 %v368, %v366
      %v489 = vpack.c.b16 %v371, %v369
      %v490 = vpack.c.b16 %v372, %v370
      %v491 = vpack.c.b16 %v375, %v373
      %v492 = vpack.c.b16 %v376, %v374
      %v493 = vpack.c.b16 %v379, %v377
      %v494 = vpack.c.b16 %v380, %v378
      %v495 = vpack.c.b16 %v383, %v381
      %v496 = vpack.c.b16 %v384, %v382
      %v497 = vpack.c.b16 %v387, %v385
      %v498 = vpack.c.b16 %v388, %v386
      %v499 = vpack.c.b16 %v391, %v389
      %v500 = vpack.c.b16 %v392, %v390
      %v501 = vpack.c.b16 %v395, %v393
      %v502 = vpack.c.b16 %v396, %v394
      %v503 = vpack.c.b16 %v399, %v397
      %v504 = vpack.c.b16 %v400, %v398
      %v505 = vpack.c.b16 %v403, %v401
      %v506 = vpack.c.b16 %v404, %v402
      %v507 = vpack.c.b16 %v407, %v405
      %v508 = vpack.c.b16 %v408, %v406
      %v509 = vpack.c.b16 %v411, %v409
      %v510 = vpack.c.b16 %v412, %v410
      %v511 = vpack.c.b16 %v415, %v413
      %v512 = vpack.c.b16 %v416, %v414
      %v513 = vpack.c.b16 %v419, %v417
      %v514 = vpack.c.b16 %v420, %v418
      %v515 = vpack.c.b16 %v423, %v421
      %v516 = vpack.c.b16 %v424, %v422
      %v517 = vpack.c.b16 %v427, %v425
      %v518 = vpack.c.b16 %v428, %v426
      %v519 = vpack.c.b16 %v431, %v429
      %v520 = vpack.c.b16 %v432, %v430
      %v521 = vpack.c.b16 %v435, %v433
      %v522 = vpack.c.b16 %v436, %v434
      %v523 = vpack.c.b16 %v439, %v437
      %v524 = vpack.c.b16 %v440, %v438
      %v525 = vpack.c.b16 %v443, %v441
      %v526 = vpack.c.b16 %v444, %v442
      %v527 = vpack.c.b16 %v447, %v445
      %v528 = vpack.c.b16 %v448, %v446
      %v529 = vpack.c.b16 %v451, %v449
      %v530 = vpack.c.b16 %v452, %v450
      %v531 = vpack.c.b16 %v455, %v453
      %v532 = vpack.c.b16 %v456, %v454
      %v533 = vpack.c.b16 %v459, %v457
      %v534 = vpack.c.b16 %v460, %v458
      %v535 = vpack.c.b16 %v463, %v461
      %v536 = vpack.c.b16 %v464, %v462
      %v537 = vpack.c.b16 %v467, %v465
      %v538 = vpack.c.b16 %v468, %v466
      %v539 = vpack.c.b16 %v471, %v469
      %v540 = vpack.c.b16 %v472, %v470
      %v541 = vpack.c.b16 %v475, %v473
      %v542 = vpack.c.b16 %v476, %v474
      %v543 = vpack.c.b16 %v479, %v477
      %v544 = vpack.c.b16 %v480, %v478
      %v595 = vunpack.c.l.b16 %v271
      %v596 = vunpack.c.l.b16 %v272
      %v597 = vunpack.c.l.b16 %v273
      %v598 = vunpack.c.l.b16 %v274
      %v599 = vunpack.c.l.b16 %v275
      %v600 = vunpack.c.l.b16 %v276
      %v601 = vunpack.c.l.b16 %v277
      %v602 = vunpack.c.l.b16 %v278
      %v603 = vunpack.c.l.b16 %v279
      %v604 = vunpack.c.l.b16 %v280
      %v605 = vunpack.c.l.b16 %v281
      %v606 = vunpack.c.l.b16 %v282
      %v607 = vunpack.c.l.b16 %v283
      %v608 = vunpack.c.l.b16 %v284
      %v609 = vunpack.c.l.b16 %v285
      %v610 = vunpack.c.l.b16 %v286
      %v611 = vunpack.c.l.b16 %v287
      %v612 = vunpack.c.l.b16 %v288
      %v613 = vpack.c.b16 %v596, %v595
      %v614 = vpack.c.b16 %v598, %v597
      %v615 = vpack.c.b16 %v600, %v599
      %v616 = vpack.c.b16 %v602, %v601
      %v617 = vpack.c.b16 %v604, %v603
      %v618 = vpack.c.b16 %v606, %v605
      %v619 = vpack.c.b16 %v608, %v607
      %v620 = vpack.c.b16 %v610, %v609
      %v621 = vpack.c.b16 %v612, %v611
      %vm631 = vcmask 130048
      %v633 = vsel %vm631, %v482, 0
      %v636 = vsel %vm631, %v484, 0
      %v639 = vsel %vm631, %v486, 0
      %v642 = vsel %vm631, %v488, 0
      %v645 = vsel %vm631, %v490, 0
      %v648 = vsel %vm631, %v492, 0
      %v651 = vsel %vm631, %v494, 0
      %v654 = vsel %vm631, %v496, 0
      %v657 = vsel %vm631, %v498, 0
      %v660 = vsel %vm631, %v500, 0
      %v663 = vsel %vm631, %v502, 0
      %v666 = vsel %vm631, %v504, 0
      %v669 = vsel %vm631, %v506, 0
      %v672 = vsel %vm631, %v508, 0
      %v675 = vsel %vm631, %v510, 0
      %v678 = vsel %vm631, %v512, 0
      %v681 = vsel %vm631, %v514, 0
      %v684 = vsel %vm631, %v516, 0
      %v687 = vsel %vm631, %v518, 0
      %v690 = vsel %vm631, %v520, 0
      %v693 = vsel %vm631, %v522, 0
      %v696 = vsel %vm631, %v524, 0
      %v699 = vsel %vm631, %v526, 0
      %v702 = vsel %vm631, %v528, 0
      %v705 = vsel %vm631, %v530, 0
      %v708 = vsel %vm631, %v532, 0
      %v711 = vsel %vm631, %v534, 0
      %v714 = vsel %vm631, %v536, 0
      %v717 = vsel %vm631, %v538, 0
      %v720 = vsel %vm631, %v540, 0
      %v723 = vsel %vm631, %v542, 0
      %v726 = vsel %vm631, %v544, 0
      %728 = vmatprep.subr.bf16.mxu0 0
      %729 = vmatpush1.bf16.msra.mxu0 %v613
      %730 = vmatprep.subr.bf16.mxu0 0
      %731 = vmatpush1.bf16.msra.mxu0 %v614
      %732 = vmatprep.subr.bf16.mxu0 0
      %733 = vmatpush1.bf16.msra.mxu0 %v615
      %734 = vmatprep.subr.bf16.mxu0 0
      %735 = vmatpush1.bf16.msra.mxu0 %v616
      %736 = vmatprep.subr.bf16.mxu0 0
      %737 = vmatpush1.bf16.msra.mxu0 %v617
      %738 = vmatprep.subr.bf16.mxu0 0
      %739 = vmatpush1.bf16.msra.mxu0 %v618
      %740 = vmatprep.subr.bf16.mxu0 0
      %741 = vmatpush1.bf16.msra.mxu0 %v619
      %742 = vmatprep.subr.bf16.mxu0 0
      %743 = vmatpush1.bf16.msra.mxu0 %v620
      %744 = vmatprep.subr.bf16.mxu0 0
      %745 = vmatpush1.bf16.msra.mxu0 %v621
      %746 = vmatprep.subr.bf16.mxu0 0
      %747 = vmatpush1.bf16.msra.mxu0 0
      %748 = vmatprep.subr.bf16.mxu0 0
      %749 = vmatpush1.bf16.msra.mxu0 0
      %750 = vmatprep.subr.bf16.mxu0 0
      %751 = vmatpush1.bf16.msra.mxu0 0
      %752 = vmatprep.subr.bf16.mxu0 0
      %753 = vmatpush1.bf16.msra.mxu0 0
      %754 = vmatprep.subr.bf16.mxu0 0
      %755 = vmatpush1.bf16.msra.mxu0 0
      %756 = vmatprep.subr.bf16.mxu0 0
      %757 = vmatpush1.bf16.msra.mxu0 0
      %758 = vmatprep.subr.bf16.mxu0 0
      %759 = vmatpush1.bf16.msra.mxu0 0
      %760 = vmatprep.mubr.bf16.mxu0 %v633
      %761 = vmatmul.mubr.bf16.gmra.mrb[0].mxu0 %v481
      %v762 = vpop.f32.mrb[0].mxu0
      %v763 = vadd.f32 0.0, %v762
      %v764 = vpop.f32.mrb[0].mxu0
      %v765 = vpop.f32.mrb[0].mxu0
      %v766 = vadd.f32 0.0, %v765
      %v767 = vpop.f32.mrb[0].mxu0
      %768 = vmatprep.mubr.bf16.mxu0 %v636
      %769 = vmatmul.mubr.bf16.gmra.mrb[0].mxu0 %v483
      %v770 = vpop.f32.mrb[0].mxu0
      %v771 = vadd.f32 0.0, %v770
      %v772 = vpop.f32.mrb[0].mxu0
      %v773 = vpop.f32.mrb[0].mxu0
      %v774 = vadd.f32 0.0, %v773
      %v775 = vpop.f32.mrb[0].mxu0
      %776 = vmatprep.mubr.bf16.mxu0 %v639
      %777 = vmatmul.mubr.bf16.gmra.mrb[0].mxu0 %v485
      %v778 = vpop.f32.mrb[0].mxu0
      %v779 = vadd.f32 0.0, %v778
      %v780 = vpop.f32.mrb[0].mxu0
      %v781 = vpop.f32.mrb[0].mxu0
      %v782 = vadd.f32 0.0, %v781
      %v783 = vpop.f32.mrb[0].mxu0
      %784 = vmatprep.mubr.bf16.mxu0 %v642
      %785 = vmatmul.mubr.bf16.gmra.mrb[0].mxu0 %v487
      %v786 = vpop.f32.mrb[0].mxu0
      %v787 = vadd.f32 0.0, %v786
      %v788 = vpop.f32.mrb[0].mxu0
      %v789 = vpop.f32.mrb[0].mxu0
      %v790 = vadd.f32 0.0, %v789
      %v791 = vpop.f32.mrb[0].mxu0
      %792 = vmatprep.mubr.bf16.mxu0 %v645
      %793 = vmatmul.mubr.bf16.gmra.mrb[0].mxu0 %v489
      %v794 = vpop.f32.mrb[0].mxu0
      %v795 = vadd.f32 0.0, %v794
      %v796 = vpop.f32.mrb[0].mxu0
      %v797 = vpop.f32.mrb[0].mxu0
      %v798 = vadd.f32 0.0, %v797
      %v799 = vpop.f32.mrb[0].mxu0
      %800 = vmatprep.mubr.bf16.mxu0 %v648
      %801 = vmatmul.mubr.bf16.gmra.mrb[0].mxu0 %v491
      %v802 = vpop.f32.mrb[0].mxu0
      %v803 = vadd.f32 0.0, %v802
      %v804 = vpop.f32.mrb[0].mxu0
      %v805 = vpop.f32.mrb[0].mxu0
      %v806 = vadd.f32 0.0, %v805
      %v807 = vpop.f32.mrb[0].mxu0
      %808 = vmatprep.mubr.bf16.mxu0 %v651
      %809 = vmatmul.mubr.bf16.gmra.mrb[0].mxu0 %v493
      %v810 = vpop.f32.mrb[0].mxu0
      %v811 = vadd.f32 0.0, %v810
      %v812 = vpop.f32.mrb[0].mxu0
      %v813 = vpop.f32.mrb[0].mxu0
      %v814 = vadd.f32 0.0, %v813
      %v815 = vpop.f32.mrb[0].mxu0
      %816 = vmatprep.mubr.bf16.mxu0 %v654
      %817 = vmatmul.mubr.bf16.gmra.mrb[0].mxu0 %v495
      %v818 = vpop.f32.mrb[0].mxu0
      %v819 = vadd.f32 0.0, %v818
      %v820 = vpop.f32.mrb[0].mxu0
      %v821 = vpop.f32.mrb[0].mxu0
      %v822 = vadd.f32 0.0, %v821
      %v823 = vpop.f32.mrb[0].mxu0
      %824 = vmatprep.mubr.bf16.mxu0 %v657
      %825 = vmatmul.mubr.bf16.gmra.mrb[0].mxu0 %v497
      %v826 = vpop.f32.mrb[0].mxu0
      %v827 = vadd.f32 0.0, %v826
      %v828 = vpop.f32.mrb[0].mxu0
      %v829 = vpop.f32.mrb[0].mxu0
      %v830 = vadd.f32 0.0, %v829
      %v831 = vpop.f32.mrb[0].mxu0
      %832 = vmatprep.mubr.bf16.mxu0 %v660
      %833 = vmatmul.mubr.bf16.gmra.mrb[0].mxu0 %v499
      %v834 = vpop.f32.mrb[0].mxu0
      %v835 = vadd.f32 0.0, %v834
      %v836 = vpop.f32.mrb[0].mxu0
      %v837 = vpop.f32.mrb[0].mxu0
      %v838 = vadd.f32 0.0, %v837
      %v839 = vpop.f32.mrb[0].mxu0
      %840 = vmatprep.mubr.bf16.mxu0 %v663
      %841 = vmatmul.mubr.bf16.gmra.mrb[0].mxu0 %v501
      %v842 = vpop.f32.mrb[0].mxu0
      %v843 = vadd.f32 0.0, %v842
      %v844 = vpop.f32.mrb[0].mxu0
      %v845 = vpop.f32.mrb[0].mxu0
      %v846 = vadd.f32 0.0, %v845
      %v847 = vpop.f32.mrb[0].mxu0
      %848 = vmatprep.mubr.bf16.mxu0 %v666
      %849 = vmatmul.mubr.bf16.gmra.mrb[0].mxu0 %v503
      %v850 = vpop.f32.mrb[0].mxu0
      %v851 = vadd.f32 0.0, %v850
      %v852 = vpop.f32.mrb[0].mxu0
      %v853 = vpop.f32.mrb[0].mxu0
      %v854 = vadd.f32 0.0, %v853
      %v855 = vpop.f32.mrb[0].mxu0
      %856 = vmatprep.mubr.bf16.mxu0 %v669
      %857 = vmatmul.mubr.bf16.gmra.mrb[0].mxu0 %v505
      %v858 = vpop.f32.mrb[0].mxu0
      %v859 = vadd.f32 0.0, %v858
      %v860 = vpop.f32.mrb[0].mxu0
      %v861 = vpop.f32.mrb[0].mxu0
      %v862 = vadd.f32 0.0, %v861
      %v863 = vpop.f32.mrb[0].mxu0
      %864 = vmatprep.mubr.bf16.mxu0 %v672
      %865 = vmatmul.mubr.bf16.gmra.mrb[0].mxu0 %v507
      %v866 = vpop.f32.mrb[0].mxu0
      %v867 = vadd.f32 0.0, %v866
      %v868 = vpop.f32.mrb[0].mxu0
      %v869 = vpop.f32.mrb[0].mxu0
      %v870 = vadd.f32 0.0, %v869
      %v871 = vpop.f32.mrb[0].mxu0
      %872 = vmatprep.mubr.bf16.mxu0 %v675
      %873 = vmatmul.mubr.bf16.gmra.mrb[0].mxu0 %v509
      %v874 = vpop.f32.mrb[0].mxu0
      %v875 = vadd.f32 0.0, %v874
      %v876 = vpop.f32.mrb[0].mxu0
      %v877 = vpop.f32.mrb[0].mxu0
      %v878 = vadd.f32 0.0, %v877
      %v879 = vpop.f32.mrb[0].mxu0
      %880 = vmatprep.mubr.bf16.mxu0 %v678
      %881 = vmatmul.mubr.bf16.gmra.mrb[0].mxu0 %v511
      %v882 = vpop.f32.mrb[0].mxu0
      %v883 = vadd.f32 0.0, %v882
      %v884 = vpop.f32.mrb[0].mxu0
      %v885 = vpop.f32.mrb[0].mxu0
      %v886 = vadd.f32 0.0, %v885
      %v887 = vpop.f32.mrb[0].mxu0
      %888 = vmatprep.mubr.bf16.mxu0 %v681
      %889 = vmatmul.mubr.bf16.gmra.mrb[0].mxu0 %v513
      %v890 = vpop.f32.mrb[0].mxu0
      %v891 = vadd.f32 0.0, %v890
      %v892 = vpop.f32.mrb[0].mxu0
      %v893 = vpop.f32.mrb[0].mxu0
      %v894 = vadd.f32 0.0, %v893
      %v895 = vpop.f32.mrb[0].mxu0
      %896 = vmatprep.mubr.bf16.mxu0 %v684
      %897 = vmatmul.mubr.bf16.gmra.mrb[0].mxu0 %v515
      %v898 = vpop.f32.mrb[0].mxu0
      %v899 = vadd.f32 0.0, %v898
      %v900 = vpop.f32.mrb[0].mxu0
      %v901 = vpop.f32.mrb[0].mxu0
      %v902 = vadd.f32 0.0, %v901
      %v903 = vpop.f32.mrb[0].mxu0
      %904 = vmatprep.mubr.bf16.mxu0 %v687
      %905 = vmatmul.mubr.bf16.gmra.mrb[0].mxu0 %v517
      %v906 = vpop.f32.mrb[0].mxu0
      %v907 = vadd.f32 0.0, %v906
      %v908 = vpop.f32.mrb[0].mxu0
      %v909 = vpop.f32.mrb[0].mxu0
      %v910 = vadd.f32 0.0, %v909
      %v911 = vpop.f32.mrb[0].mxu0
      %912 = vmatprep.mubr.bf16.mxu0 %v690
      %913 = vmatmul.mubr.bf16.gmra.mrb[0].mxu0 %v519
      %v914 = vpop.f32.mrb[0].mxu0
      %v915 = vadd.f32 0.0, %v914
      %v916 = vpop.f32.mrb[0].mxu0
      %v917 = vpop.f32.mrb[0].mxu0
      %v918 = vadd.f32 0.0, %v917
      %v919 = vpop.f32.mrb[0].mxu0
      %920 = vmatprep.mubr.bf16.mxu0 %v693
      %921 = vmatmul.mubr.bf16.gmra.mrb[0].mxu0 %v521
      %v922 = vpop.f32.mrb[0].mxu0
      %v923 = vadd.f32 0.0, %v922
      %v924 = vpop.f32.mrb[0].mxu0
      %v925 = vpop.f32.mrb[0].mxu0
      %v926 = vadd.f32 0.0, %v925
      %v927 = vpop.f32.mrb[0].mxu0
      %928 = vmatprep.mubr.bf16.mxu0 %v696
      %929 = vmatmul.mubr.bf16.gmra.mrb[0].mxu0 %v523
      %v930 = vpop.f32.mrb[0].mxu0
      %v931 = vadd.f32 0.0, %v930
      %v932 = vpop.f32.mrb[0].mxu0
      %v933 = vpop.f32.mrb[0].mxu0
      %v934 = vadd.f32 0.0, %v933
      %v935 = vpop.f32.mrb[0].mxu0
      %936 = vmatprep.mubr.bf16.mxu0 %v699
      %937 = vmatmul.mubr.bf16.gmra.mrb[0].mxu0 %v525
      %v938 = vpop.f32.mrb[0].mxu0
      %v939 = vadd.f32 0.0, %v938
      %v940 = vpop.f32.mrb[0].mxu0
      %v941 = vpop.f32.mrb[0].mxu0
      %v942 = vadd.f32 0.0, %v941
      %v943 = vpop.f32.mrb[0].mxu0
      %944 = vmatprep.mubr.bf16.mxu0 %v702
      %945 = vmatmul.mubr.bf16.gmra.mrb[0].mxu0 %v527
      %v946 = vpop.f32.mrb[0].mxu0
      %v947 = vadd.f32 0.0, %v946
      %v948 = vpop.f32.mrb[0].mxu0
      %v949 = vpop.f32.mrb[0].mxu0
      %v950 = vadd.f32 0.0, %v949
      %v951 = vpop.f32.mrb[0].mxu0
      %952 = vmatprep.mubr.bf16.mxu0 %v705
      %953 = vmatmul.mubr.bf16.gmra.mrb[0].mxu0 %v529
      %v954 = vpop.f32.mrb[0].mxu0
      %v955 = vadd.f32 0.0, %v954
      %v956 = vpop.f32.mrb[0].mxu0
      %v957 = vpop.f32.mrb[0].mxu0
      %v958 = vadd.f32 0.0, %v957
      %v959 = vpop.f32.mrb[0].mxu0
      %960 = vmatprep.mubr.bf16.mxu0 %v708
      %961 = vmatmul.mubr.bf16.gmra.mrb[0].mxu0 %v531
      %v962 = vpop.f32.mrb[0].mxu0
      %v963 = vadd.f32 0.0, %v962
      %v964 = vpop.f32.mrb[0].mxu0
      %v965 = vpop.f32.mrb[0].mxu0
      %v966 = vadd.f32 0.0, %v965
      %v967 = vpop.f32.mrb[0].mxu0
      %968 = vmatprep.mubr.bf16.mxu0 %v711
      %969 = vmatmul.mubr.bf16.gmra.mrb[0].mxu0 %v533
      %v970 = vpop.f32.mrb[0].mxu0
      %v971 = vadd.f32 0.0, %v970
      %v972 = vpop.f32.mrb[0].mxu0
      %v973 = vpop.f32.mrb[0].mxu0
      %v974 = vadd.f32 0.0, %v973
      %v975 = vpop.f32.mrb[0].mxu0
      %976 = vmatprep.mubr.bf16.mxu0 %v714
      %977 = vmatmul.mubr.bf16.gmra.mrb[0].mxu0 %v535
      %v978 = vpop.f32.mrb[0].mxu0
      %v979 = vadd.f32 0.0, %v978
      %v980 = vpop.f32.mrb[0].mxu0
      %v981 = vpop.f32.mrb[0].mxu0
      %v982 = vadd.f32 0.0, %v981
      %v983 = vpop.f32.mrb[0].mxu0
      %984 = vmatprep.mubr.bf16.mxu0 %v717
      %985 = vmatmul.mubr.bf16.gmra.mrb[0].mxu0 %v537
      %v986 = vpop.f32.mrb[0].mxu0
      %v987 = vadd.f32 0.0, %v986
      %v988 = vpop.f32.mrb[0].mxu0
      %v989 = vpop.f32.mrb[0].mxu0
      %v990 = vadd.f32 0.0, %v989
      %v991 = vpop.f32.mrb[0].mxu0
      %992 = vmatprep.mubr.bf16.mxu0 %v720
      %993 = vmatmul.mubr.bf16.gmra.mrb[0].mxu0 %v539
      %v994 = vpop.f32.mrb[0].mxu0
      %v995 = vadd.f32 0.0, %v994
      %v996 = vpop.f32.mrb[0].mxu0
      %v997 = vpop.f32.mrb[0].mxu0
      %v998 = vadd.f32 0.0, %v997
      %v999 = vpop.f32.mrb[0].mxu0
      %1000 = vmatprep.mubr.bf16.mxu0 %v723
      %1001 = vmatmul.mubr.bf16.gmra.mrb[0].mxu0 %v541
      %v1002 = vpop.f32.mrb[0].mxu0
      %v1003 = vadd.f32 0.0, %v1002
      %v1004 = vpop.f32.mrb[0].mxu0
      %v1005 = vpop.f32.mrb[0].mxu0
      %v1006 = vadd.f32 0.0, %v1005
      %v1007 = vpop.f32.mrb[0].mxu0
      %1008 = vmatprep.mubr.bf16.mxu0 %v726
      %1009 = vmatmul.mubr.bf16.gmra.mrb[0].mxu0 %v543
      %v1010 = vpop.f32.mrb[0].mxu0
      %v1011 = vadd.f32 0.0, %v1010
      %v1012 = vpop.f32.mrb[0].mxu0
      %v1013 = vpop.f32.mrb[0].mxu0
      %v1014 = vadd.f32 0.0, %v1013
      %v1015 = vpop.f32.mrb[0].mxu0
      %1016 = vdwg.mxu0
      %v1017 = vpack.c.bf16 %v766, %v763
      %v1018 = vpack.c.bf16 %v774, %v771
      %v1019 = vpack.c.bf16 %v782, %v779
      %v1020 = vpack.c.bf16 %v790, %v787
      %v1021 = vpack.c.bf16 %v798, %v795
      %v1022 = vpack.c.bf16 %v806, %v803
      %v1023 = vpack.c.bf16 %v814, %v811
      %v1024 = vpack.c.bf16 %v822, %v819
      %v1025 = vpack.c.bf16 %v830, %v827
      %v1026 = vpack.c.bf16 %v838, %v835
      %v1027 = vpack.c.bf16 %v846, %v843
      %v1028 = vpack.c.bf16 %v854, %v851
      %v1029 = vpack.c.bf16 %v862, %v859
      %v1030 = vpack.c.bf16 %v870, %v867
      %v1031 = vpack.c.bf16 %v878, %v875
      %v1032 = vpack.c.bf16 %v886, %v883
      %v1033 = vpack.c.bf16 %v894, %v891
      %v1034 = vpack.c.bf16 %v902, %v899
      %v1035 = vpack.c.bf16 %v910, %v907
      %v1036 = vpack.c.bf16 %v918, %v915
      %v1037 = vpack.c.bf16 %v926, %v923
      %v1038 = vpack.c.bf16 %v934, %v931
      %v1039 = vpack.c.bf16 %v942, %v939
      %v1040 = vpack.c.bf16 %v950, %v947
      %v1041 = vpack.c.bf16 %v958, %v955
      %v1042 = vpack.c.bf16 %v966, %v963
      %v1043 = vpack.c.bf16 %v974, %v971
      %v1044 = vpack.c.bf16 %v982, %v979
      %v1045 = vpack.c.bf16 %v990, %v987
      %v1046 = vpack.c.bf16 %v998, %v995
      %v1047 = vpack.c.bf16 %v1006, %v1003
      %v1048 = vpack.c.bf16 %v1014, %v1011
      %v1081 = vunpack.c.l.b16 %v1017
      %v1082 = vunpack.c.h.b16 %v1017
      %v1083 = vunpack.c.l.b16 %v1018
      %v1084 = vunpack.c.h.b16 %v1018
      %v1085 = vunpack.c.l.b16 %v1019
      %v1086 = vunpack.c.h.b16 %v1019
      %v1087 = vunpack.c.l.b16 %v1020
      %v1088 = vunpack.c.h.b16 %v1020
      %v1089 = vunpack.c.l.b16 %v1021
      %v1090 = vunpack.c.h.b16 %v1021
      %v1091 = vunpack.c.l.b16 %v1022
      %v1092 = vunpack.c.h.b16 %v1022
      %v1093 = vunpack.c.l.b16 %v1023
      %v1094 = vunpack.c.h.b16 %v1023
      %v1095 = vunpack.c.l.b16 %v1024
      %v1096 = vunpack.c.h.b16 %v1024
      %v1097 = vunpack.c.l.b16 %v1025
      %v1098 = vunpack.c.h.b16 %v1025
      %v1099 = vunpack.c.l.b16 %v1026
      %v1100 = vunpack.c.h.b16 %v1026
      %v1101 = vunpack.c.l.b16 %v1027
      %v1102 = vunpack.c.h.b16 %v1027
      %v1103 = vunpack.c.l.b16 %v1028
      %v1104 = vunpack.c.h.b16 %v1028
      %v1105 = vunpack.c.l.b16 %v1029
      %v1106 = vunpack.c.h.b16 %v1029
      %v1107 = vunpack.c.l.b16 %v1030
      %v1108 = vunpack.c.h.b16 %v1030
      %v1109 = vunpack.c.l.b16 %v1031
      %v1110 = vunpack.c.h.b16 %v1031
      %v1111 = vunpack.c.l.b16 %v1032
      %v1112 = vunpack.c.h.b16 %v1032
      %v1113 = vunpack.c.l.b16 %v1033
      %v1114 = vunpack.c.h.b16 %v1033
      %v1115 = vunpack.c.l.b16 %v1034
      %v1116 = vunpack.c.h.b16 %v1034
      %v1117 = vunpack.c.l.b16 %v1035
      %v1118 = vunpack.c.h.b16 %v1035
      %v1119 = vunpack.c.l.b16 %v1036
      %v1120 = vunpack.c.h.b16 %v1036
      %v1121 = vunpack.c.l.b16 %v1037
      %v1122 = vunpack.c.h.b16 %v1037
      %v1123 = vunpack.c.l.b16 %v1038
      %v1124 = vunpack.c.h.b16 %v1038
      %v1125 = vunpack.c.l.b16 %v1039
      %v1126 = vunpack.c.h.b16 %v1039
      %v1127 = vunpack.c.l.b16 %v1040
      %v1128 = vunpack.c.h.b16 %v1040
      %v1129 = vunpack.c.l.b16 %v1041
      %v1130 = vunpack.c.h.b16 %v1041
      %v1131 = vunpack.c.l.b16 %v1042
      %v1132 = vunpack.c.h.b16 %v1042
      %v1133 = vunpack.c.l.b16 %v1043
      %v1134 = vunpack.c.h.b16 %v1043
      %v1135 = vunpack.c.l.b16 %v1044
      %v1136 = vunpack.c.h.b16 %v1044
      %v1137 = vunpack.c.l.b16 %v1045
      %v1138 = vunpack.c.h.b16 %v1045
      %v1139 = vunpack.c.l.b16 %v1046
      %v1140 = vunpack.c.h.b16 %v1046
      %v1141 = vunpack.c.l.b16 %v1047
      %v1142 = vunpack.c.h.b16 %v1047
      %v1143 = vunpack.c.l.b16 %v1048
      %v1144 = vunpack.c.h.b16 %v1048
      %v1145 = vpack.c.b16 %v1081, %v1081
      %v1146 = vpack.c.b16 %v1082, %v1082
      %v1147 = vpack.c.b16 %v1083, %v1083
      %v1148 = vpack.c.b16 %v1084, %v1084
      %v1149 = vpack.c.b16 %v1085, %v1085
      %v1150 = vpack.c.b16 %v1086, %v1086
      %v1151 = vpack.c.b16 %v1087, %v1087
      %v1152 = vpack.c.b16 %v1088, %v1088
      %v1153 = vpack.c.b16 %v1089, %v1089
      %v1154 = vpack.c.b16 %v1090, %v1090
      %v1155 = vpack.c.b16 %v1091, %v1091
      %v1156 = vpack.c.b16 %v1092, %v1092
      %v1157 = vpack.c.b16 %v1093, %v1093
      %v1158 = vpack.c.b16 %v1094, %v1094
      %v1159 = vpack.c.b16 %v1095, %v1095
      %v1160 = vpack.c.b16 %v1096, %v1096
      %v1161 = vpack.c.b16 %v1097, %v1097
      %v1162 = vpack.c.b16 %v1098, %v1098
      %v1163 = vpack.c.b16 %v1099, %v1099
      %v1164 = vpack.c.b16 %v1100, %v1100
      %v1165 = vpack.c.b16 %v1101, %v1101
      %v1166 = vpack.c.b16 %v1102, %v1102
      %v1167 = vpack.c.b16 %v1103, %v1103
      %v1168 = vpack.c.b16 %v1104, %v1104
      %v1169 = vpack.c.b16 %v1105, %v1105
      %v1170 = vpack.c.b16 %v1106, %v1106
      %v1171 = vpack.c.b16 %v1107, %v1107
      %v1172 = vpack.c.b16 %v1108, %v1108
      %v1173 = vpack.c.b16 %v1109, %v1109
      %v1174 = vpack.c.b16 %v1110, %v1110
      %v1175 = vpack.c.b16 %v1111, %v1111
      %v1176 = vpack.c.b16 %v1112, %v1112
      %v1177 = vpack.c.b16 %v1113, %v1113
      %v1178 = vpack.c.b16 %v1114, %v1114
      %v1179 = vpack.c.b16 %v1115, %v1115
      %v1180 = vpack.c.b16 %v1116, %v1116
      %v1181 = vpack.c.b16 %v1117, %v1117
      %v1182 = vpack.c.b16 %v1118, %v1118
      %v1183 = vpack.c.b16 %v1119, %v1119
      %v1184 = vpack.c.b16 %v1120, %v1120
      %v1185 = vpack.c.b16 %v1121, %v1121
      %v1186 = vpack.c.b16 %v1122, %v1122
      %v1187 = vpack.c.b16 %v1123, %v1123
      %v1188 = vpack.c.b16 %v1124, %v1124
      %v1189 = vpack.c.b16 %v1125, %v1125
      %v1190 = vpack.c.b16 %v1126, %v1126
      %v1191 = vpack.c.b16 %v1127, %v1127
      %v1192 = vpack.c.b16 %v1128, %v1128
      %v1193 = vpack.c.b16 %v1129, %v1129
      %v1194 = vpack.c.b16 %v1130, %v1130
      %v1195 = vpack.c.b16 %v1131, %v1131
      %v1196 = vpack.c.b16 %v1132, %v1132
      %v1197 = vpack.c.b16 %v1133, %v1133
      %v1198 = vpack.c.b16 %v1134, %v1134
      %v1199 = vpack.c.b16 %v1135, %v1135
      %v1200 = vpack.c.b16 %v1136, %v1136
      %v1201 = vpack.c.b16 %v1137, %v1137
      %v1202 = vpack.c.b16 %v1138, %v1138
      %v1203 = vpack.c.b16 %v1139, %v1139
      %v1204 = vpack.c.b16 %v1140, %v1140
      %v1205 = vpack.c.b16 %v1141, %v1141
      %v1206 = vpack.c.b16 %v1142, %v1142
      %v1207 = vpack.c.b16 %v1143, %v1143
      %v1208 = vpack.c.b16 %v1144, %v1144
      %vm1273 = vcmask 125952
      %1274 = vst.msk [vmem:[%s197] sm:$0xf] %vm1273, %v1145
      %1275 = vst.msk [vmem:[%s197 + $0x4] sm:$0xf] %vm1273, %v1146
      %1276 = vst.msk [vmem:[%s197 + $0x8] sm:$0xf] %vm1273, %v1147
      %1277 = vst.msk [vmem:[%s197 + $0xc] sm:$0xf] %vm1273, %v1148
      %1278 = vst.msk [vmem:[%s197 + $0x10] sm:$0xf] %vm1273, %v1149
      %1279 = vst.msk [vmem:[%s197 + $0x14] sm:$0xf] %vm1273, %v1150
      %1280 = vst.msk [vmem:[%s197 + $0x18] sm:$0xf] %vm1273, %v1151
      %1281 = vst.msk [vmem:[%s197 + $0x1c] sm:$0xf] %vm1273, %v1152
      %1282 = vst.msk [vmem:[%s197 + $0x20] sm:$0xf] %vm1273, %v1153
      %1283 = vst.msk [vmem:[%s197 + $0x24] sm:$0xf] %vm1273, %v1154
      %1284 = vst.msk [vmem:[%s197 + $0x28] sm:$0xf] %vm1273, %v1155
      %1285 = vst.msk [vmem:[%s197 + $0x2c] sm:$0xf] %vm1273, %v1156
      %1286 = vst.msk [vmem:[%s197 + $0x30] sm:$0xf] %vm1273, %v1157
      %1287 = vst.msk [vmem:[%s197 + $0x34] sm:$0xf] %vm1273, %v1158
      %1288 = vst.msk [vmem:[%s197 + $0x38] sm:$0xf] %vm1273, %v1159
      %1289 = vst.msk [vmem:[%s197 + $0x3c] sm:$0xf] %vm1273, %v1160
      %1290 = vst.msk [vmem:[%s197 + $0x40] sm:$0xf] %vm1273, %v1161
      %1291 = vst.msk [vmem:[%s197 + $0x44] sm:$0xf] %vm1273, %v1162
      %1292 = vst.msk [vmem:[%s197 + $0x48] sm:$0xf] %vm1273, %v1163
      %1293 = vst.msk [vmem:[%s197 + $0x4c] sm:$0xf] %vm1273, %v1164
      %1294 = vst.msk [vmem:[%s197 + $0x50] sm:$0xf] %vm1273, %v1165
      %1295 = vst.msk [vmem:[%s197 + $0x54] sm:$0xf] %vm1273, %v1166
      %1296 = vst.msk [vmem:[%s197 + $0x58] sm:$0xf] %vm1273, %v1167
      %1297 = vst.msk [vmem:[%s197 + $0x5c] sm:$0xf] %vm1273, %v1168
      %1298 = vst.msk [vmem:[%s197 + $0x60] sm:$0xf] %vm1273, %v1169
      %1299 = vst.msk [vmem:[%s197 + $0x64] sm:$0xf] %vm1273, %v1170
      %1300 = vst.msk [vmem:[%s197 + $0x68] sm:$0xf] %vm1273, %v1171
      %1301 = vst.msk [vmem:[%s197 + $0x6c] sm:$0xf] %vm1273, %v1172
      %1302 = vst.msk [vmem:[%s197 + $0x70] sm:$0xf] %vm1273, %v1173
      %1303 = vst.msk [vmem:[%s197 + $0x74] sm:$0xf] %vm1273, %v1174
      %1304 = vst.msk [vmem:[%s197 + $0x78] sm:$0xf] %vm1273, %v1175
      %1305 = vst.msk [vmem:[%s197 + $0x7c] sm:$0xf] %vm1273, %v1176
      %1306 = vst.msk [vmem:[%s197 + $0x80] sm:$0xf] %vm1273, %v1177
      %1307 = vst.msk [vmem:[%s197 + $0x84] sm:$0xf] %vm1273, %v1178
      %1308 = vst.msk [vmem:[%s197 + $0x88] sm:$0xf] %vm1273, %v1179
      %1309 = vst.msk [vmem:[%s197 + $0x8c] sm:$0xf] %vm1273, %v1180
      %1310 = vst.msk [vmem:[%s197 + $0x90] sm:$0xf] %vm1273, %v1181
      %1311 = vst.msk [vmem:[%s197 + $0x94] sm:$0xf] %vm1273, %v1182
      %1312 = vst.msk [vmem:[%s197 + $0x98] sm:$0xf] %vm1273, %v1183
      %1313 = vst.msk [vmem:[%s197 + $0x9c] sm:$0xf] %vm1273, %v1184
      %1314 = vst.msk [vmem:[%s197 + $0xa0] sm:$0xf] %vm1273, %v1185
      %1315 = vst.msk [vmem:[%s197 + $0xa4] sm:$0xf] %vm1273, %v1186
      %1316 = vst.msk [vmem:[%s197 + $0xa8] sm:$0xf] %vm1273, %v1187
      %1317 = vst.msk [vmem:[%s197 + $0xac] sm:$0xf] %vm1273, %v1188
      %1318 = vst.msk [vmem:[%s197 + $0xb0] sm:$0xf] %vm1273, %v1189
      %1319 = vst.msk [vmem:[%s197 + $0xb4] sm:$0xf] %vm1273, %v1190
      %1320 = vst.msk [vmem:[%s197 + $0xb8] sm:$0xf] %vm1273, %v1191
      %1321 = vst.msk [vmem:[%s197 + $0xbc] sm:$0xf] %vm1273, %v1192
      %1322 = vst.msk [vmem:[%s197 + $0xc0] sm:$0xf] %vm1273, %v1193
      %1323 = vst.msk [vmem:[%s197 + $0xc4] sm:$0xf] %vm1273, %v1194
      %1324 = vst.msk [vmem:[%s197 + $0xc8] sm:$0xf] %vm1273, %v1195
      %1325 = vst.msk [vmem:[%s197 + $0xcc] sm:$0xf] %vm1273, %v1196
      %1326 = vst.msk [vmem:[%s197 + $0xd0] sm:$0xf] %vm1273, %v1197
      %1327 = vst.msk [vmem:[%s197 + $0xd4] sm:$0xf] %vm1273, %v1198
      %1328 = vst.msk [vmem:[%s197 + $0xd8] sm:$0xf] %vm1273, %v1199
      %1329 = vst.msk [vmem:[%s197 + $0xdc] sm:$0xf] %vm1273, %v1200
      %1330 = vst.msk [vmem:[%s197 + $0xe0] sm:$0xf] %vm1273, %v1201
      %1331 = vst.msk [vmem:[%s197 + $0xe4] sm:$0xf] %vm1273, %v1202
      %1332 = vst.msk [vmem:[%s197 + $0xe8] sm:$0xf] %vm1273, %v1203
      %1333 = vst.msk [vmem:[%s197 + $0xec] sm:$0xf] %vm1273, %v1204
      %1334 = vst.msk [vmem:[%s197 + $0xf0] sm:$0xf] %vm1273, %v1205
      %1335 = vst.msk [vmem:[%s197 + $0xf4] sm:$0xf] %vm1273, %v1206
      %1336 = vst.msk [vmem:[%s197 + $0xf8] sm:$0xf] %vm1273, %v1207
      %1337 = vst.msk [vmem:[%s197 + $0xfc] sm:$0xf] %vm1273, %v1208
      %v1338 = vld [vmem:[%s3] sm:$0x1]
      %v1339 = vsel %vm631, %v763, 0.0
      %v1340 = vsel %vm631, %v766, 0.0
      %v1341 = vadd.f32 %v1339, %v1340
      %v1342 = vsel %vm631, %v771, 0.0
      %v1343 = vadd.f32 %v1341, %v1342
      %v1344 = vsel %vm631, %v774, 0.0
      %v1345 = vadd.f32 %v1343, %v1344
      %v1346 = vsel %vm631, %v779, 0.0
      %v1347 = vadd.f32 %v1345, %v1346
      %v1348 = vsel %vm631, %v782, 0.0
      %v1349 = vadd.f32 %v1347, %v1348
      %v1350 = vsel %vm631, %v787, 0.0
      %v1351 = vadd.f32 %v1349, %v1350
      %v1352 = vsel %vm631, %v790, 0.0
      %v1353 = vadd.f32 %v1351, %v1352
      %v1354 = vsel %vm631, %v795, 0.0
      %v1355 = vadd.f32 %v1353, %v1354
      %v1356 = vsel %vm631, %v798, 0.0
      %v1357 = vadd.f32 %v1355, %v1356
      %v1358 = vsel %vm631, %v803, 0.0
      %v1359 = vadd.f32 %v1357, %v1358
      %v1360 = vsel %vm631, %v806, 0.0
      %v1361 = vadd.f32 %v1359, %v1360
      %v1362 = vsel %vm631, %v811, 0.0
      %v1363 = vadd.f32 %v1361, %v1362
      %v1364 = vsel %vm631, %v814, 0.0
      %v1365 = vadd.f32 %v1363, %v1364
      %v1366 = vsel %vm631, %v819, 0.0
      %v1367 = vadd.f32 %v1365, %v1366
      %v1368 = vsel %vm631, %v822, 0.0
      %v1369 = vadd.f32 %v1367, %v1368
      %v1370 = vsel %vm631, %v827, 0.0
      %v1371 = vadd.f32 %v1369, %v1370
      %v1372 = vsel %vm631, %v830, 0.0
      %v1373 = vadd.f32 %v1371, %v1372
      %v1374 = vsel %vm631, %v835, 0.0
      %v1375 = vadd.f32 %v1373, %v1374
      %v1376 = vsel %vm631, %v838, 0.0
      %v1377 = vadd.f32 %v1375, %v1376
      %v1378 = vsel %vm631, %v843, 0.0
      %v1379 = vadd.f32 %v1377, %v1378
      %v1380 = vsel %vm631, %v846, 0.0
      %v1381 = vadd.f32 %v1379, %v1380
      %v1382 = vsel %vm631, %v851, 0.0
      %v1383 = vadd.f32 %v1381, %v1382
      %v1384 = vsel %vm631, %v854, 0.0
      %v1385 = vadd.f32 %v1383, %v1384
      %v1386 = vsel %vm631, %v859, 0.0
      %v1387 = vadd.f32 %v1385, %v1386
      %v1388 = vsel %vm631, %v862, 0.0
      %v1389 = vadd.f32 %v1387, %v1388
      %v1390 = vsel %vm631, %v867, 0.0
      %v1391 = vadd.f32 %v1389, %v1390
      %v1392 = vsel %vm631, %v870, 0.0
      %v1393 = vadd.f32 %v1391, %v1392
      %v1394 = vsel %vm631, %v875, 0.0
      %v1395 = vadd.f32 %v1393, %v1394
      %v1396 = vsel %vm631, %v878, 0.0
      %v1397 = vadd.f32 %v1395, %v1396
      %v1398 = vsel %vm631, %v883, 0.0
      %v1399 = vadd.f32 %v1397, %v1398
      %v1400 = vsel %vm631, %v886, 0.0
      %v1401 = vadd.f32 %v1399, %v1400
      %v1402 = vsel %vm631, %v891, 0.0
      %v1403 = vadd.f32 %v1401, %v1402
      %v1404 = vsel %vm631, %v894, 0.0
      %v1405 = vadd.f32 %v1403, %v1404
      %v1406 = vsel %vm631, %v899, 0.0
      %v1407 = vadd.f32 %v1405, %v1406
      %v1408 = vsel %vm631, %v902, 0.0
      %v1409 = vadd.f32 %v1407, %v1408
      %v1410 = vsel %vm631, %v907, 0.0
      %v1411 = vadd.f32 %v1409, %v1410
      %v1412 = vsel %vm631, %v910, 0.0
      %v1413 = vadd.f32 %v1411, %v1412
      %v1414 = vsel %vm631, %v915, 0.0
      %v1415 = vadd.f32 %v1413, %v1414
      %v1416 = vsel %vm631, %v918, 0.0
      %v1417 = vadd.f32 %v1415, %v1416
      %v1418 = vsel %vm631, %v923, 0.0
      %v1419 = vadd.f32 %v1417, %v1418
      %v1420 = vsel %vm631, %v926, 0.0
      %v1421 = vadd.f32 %v1419, %v1420
      %v1422 = vsel %vm631, %v931, 0.0
      %v1423 = vadd.f32 %v1421, %v1422
      %v1424 = vsel %vm631, %v934, 0.0
      %v1425 = vadd.f32 %v1423, %v1424
      %v1426 = vsel %vm631, %v939, 0.0
      %v1427 = vadd.f32 %v1425, %v1426
      %v1428 = vsel %vm631, %v942, 0.0
      %v1429 = vadd.f32 %v1427, %v1428
      %v1430 = vsel %vm631, %v947, 0.0
      %v1431 = vadd.f32 %v1429, %v1430
      %v1432 = vsel %vm631, %v950, 0.0
      %v1433 = vadd.f32 %v1431, %v1432
      %v1434 = vsel %vm631, %v955, 0.0
      %v1435 = vadd.f32 %v1433, %v1434
      %v1436 = vsel %vm631, %v958, 0.0
      %v1437 = vadd.f32 %v1435, %v1436
      %v1438 = vsel %vm631, %v963, 0.0
      %v1439 = vadd.f32 %v1437, %v1438
      %v1440 = vsel %vm631, %v966, 0.0
      %v1441 = vadd.f32 %v1439, %v1440
      %v1442 = vsel %vm631, %v971, 0.0
      %v1443 = vadd.f32 %v1441, %v1442
      %v1444 = vsel %vm631, %v974, 0.0
      %v1445 = vadd.f32 %v1443, %v1444
      %v1446 = vsel %vm631, %v979, 0.0
      %v1447 = vadd.f32 %v1445, %v1446
      %v1448 = vsel %vm631, %v982, 0.0
      %v1449 = vadd.f32 %v1447, %v1448
      %v1450 = vsel %vm631, %v987, 0.0
      %v1451 = vadd.f32 %v1449, %v1450
      %v1452 = vsel %vm631, %v990, 0.0
      %v1453 = vadd.f32 %v1451, %v1452
      %v1454 = vsel %vm631, %v995, 0.0
      %v1455 = vadd.f32 %v1453, %v1454
      %v1456 = vsel %vm631, %v998, 0.0
      %v1457 = vadd.f32 %v1455, %v1456
      %v1458 = vsel %vm631, %v1003, 0.0
      %v1459 = vadd.f32 %v1457, %v1458
      %v1460 = vsel %vm631, %v1006, 0.0
      %v1461 = vadd.f32 %v1459, %v1460
      %v1462 = vsel %vm631, %v1011, 0.0
      %v1463 = vadd.f32 %v1461, %v1462
      %v1464 = vsel %vm631, %v1014, 0.0
      %v1465 = vadd.f32 %v1463, %v1464
      %v1466 = vrot.slane %v1465, 4
      %v1467 = vadd.f32 %v1465, %v1466
      %v1468 = vrot.slane %v1467, 2
      %v1469 = vadd.f32 %v1467, %v1468
      %v1470 = vrot.slane %v1469, 1
      %v1471 = vadd.f32 %v1469, %v1470
      %v1472 = vadd.f32 %v1338, %v1471
      %vm1473 = vcmask 122880
      %1474 = vst.msk [vmem:[%s3] sm:$0x1] %vm1473, %v1472
      %v1475 = vld [vmem:[%s4] sm:$0x1]
      %v1476 = vmul.f32 %v763, %v763
      %v1477 = vmul.f32 %v766, %v766
      %v1478 = vmul.f32 %v771, %v771
      %v1479 = vmul.f32 %v774, %v774
      %v1480 = vmul.f32 %v779, %v779
      %v1481 = vmul.f32 %v782, %v782
      %v1482 = vmul.f32 %v787, %v787
      %v1483 = vmul.f32 %v790, %v790
      %v1484 = vmul.f32 %v795, %v795
      %v1485 = vmul.f32 %v798, %v798
      %v1486 = vmul.f32 %v803, %v803
      %v1487 = vmul.f32 %v806, %v806
      %v1488 = vmul.f32 %v811, %v811
      %v1489 = vmul.f32 %v814, %v814
      %v1490 = vmul.f32 %v819, %v819
      %v1491 = vmul.f32 %v822, %v822
      %v1492 = vmul.f32 %v827, %v827
      %v1493 = vmul.f32 %v830, %v830
      %v1494 = vmul.f32 %v835, %v835
      %v1495 = vmul.f32 %v838, %v838
      %v1496 = vmul.f32 %v843, %v843
      %v1497 = vmul.f32 %v846, %v846
      %v1498 = vmul.f32 %v851, %v851
      %v1499 = vmul.f32 %v854, %v854
      %v1500 = vmul.f32 %v859, %v859
      %v1501 = vmul.f32 %v862, %v862
      %v1502 = vmul.f32 %v867, %v867
      %v1503 = vmul.f32 %v870, %v870
      %v1504 = vmul.f32 %v875, %v875
      %v1505 = vmul.f32 %v878, %v878
      %v1506 = vmul.f32 %v883, %v883
      %v1507 = vmul.f32 %v886, %v886
      %v1508 = vmul.f32 %v891, %v891
      %v1509 = vmul.f32 %v894, %v894
      %v1510 = vmul.f32 %v899, %v899
      %v1511 = vmul.f32 %v902, %v902
      %v1512 = vmul.f32 %v907, %v907
      %v1513 = vmul.f32 %v910, %v910
      %v1514 = vmul.f32 %v915, %v915
      %v1515 = vmul.f32 %v918, %v918
      %v1516 = vmul.f32 %v923, %v923
      %v1517 = vmul.f32 %v926, %v926
      %v1518 = vmul.f32 %v931, %v931
      %v1519 = vmul.f32 %v934, %v934
      %v1520 = vmul.f32 %v939, %v939
      %v1521 = vmul.f32 %v942, %v942
      %v1522 = vmul.f32 %v947, %v947
      %v1523 = vmul.f32 %v950, %v950
      %v1524 = vmul.f32 %v955, %v955
      %v1525 = vmul.f32 %v958, %v958
      %v1526 = vmul.f32 %v963, %v963
      %v1527 = vmul.f32 %v966, %v966
      %v1528 = vmul.f32 %v971, %v971
      %v1529 = vmul.f32 %v974, %v974
      %v1530 = vmul.f32 %v979, %v979
      %v1531 = vmul.f32 %v982, %v982
      %v1532 = vmul.f32 %v987, %v987
      %v1533 = vmul.f32 %v990, %v990
      %v1534 = vmul.f32 %v995, %v995
      %v1535 = vmul.f32 %v998, %v998
      %v1536 = vmul.f32 %v1003, %v1003
      %v1537 = vmul.f32 %v1006, %v1006
      %v1538 = vmul.f32 %v1011, %v1011
      %v1539 = vmul.f32 %v1014, %v1014
      %v1540 = vsel %vm631, %v1476, 0.0
      %v1541 = vsel %vm631, %v1477, 0.0
      %v1542 = vadd.f32 %v1540, %v1541
      %v1543 = vsel %vm631, %v1478, 0.0
      %v1544 = vadd.f32 %v1542, %v1543
      %v1545 = vsel %vm631, %v1479, 0.0
      %v1546 = vadd.f32 %v1544, %v1545
      %v1547 = vsel %vm631, %v1480, 0.0
      %v1548 = vadd.f32 %v1546, %v1547
      %v1549 = vsel %vm631, %v1481, 0.0
      %v1550 = vadd.f32 %v1548, %v1549
      %v1551 = vsel %vm631, %v1482, 0.0
      %v1552 = vadd.f32 %v1550, %v1551
      %v1553 = vsel %vm631, %v1483, 0.0
      %v1554 = vadd.f32 %v1552, %v1553
      %v1555 = vsel %vm631, %v1484, 0.0
      %v1556 = vadd.f32 %v1554, %v1555
      %v1557 = vsel %vm631, %v1485, 0.0
      %v1558 = vadd.f32 %v1556, %v1557
      %v1559 = vsel %vm631, %v1486, 0.0
      %v1560 = vadd.f32 %v1558, %v1559
      %v1561 = vsel %vm631, %v1487, 0.0
      %v1562 = vadd.f32 %v1560, %v1561
      %v1563 = vsel %vm631, %v1488, 0.0
      %v1564 = vadd.f32 %v1562, %v1563
      %v1565 = vsel %vm631, %v1489, 0.0
      %v1566 = vadd.f32 %v1564, %v1565
      %v1567 = vsel %vm631, %v1490, 0.0
      %v1568 = vadd.f32 %v1566, %v1567
      %v1569 = vsel %vm631, %v1491, 0.0
      %v1570 = vadd.f32 %v1568, %v1569
      %v1571 = vsel %vm631, %v1492, 0.0
      %v1572 = vadd.f32 %v1570, %v1571
      %v1573 = vsel %vm631, %v1493, 0.0
      %v1574 = vadd.f32 %v1572, %v1573
      %v1575 = vsel %vm631, %v1494, 0.0
      %v1576 = vadd.f32 %v1574, %v1575
      %v1577 = vsel %vm631, %v1495, 0.0
      %v1578 = vadd.f32 %v1576, %v1577
      %v1579 = vsel %vm631, %v1496, 0.0
      %v1580 = vadd.f32 %v1578, %v1579
      %v1581 = vsel %vm631, %v1497, 0.0
      %v1582 = vadd.f32 %v1580, %v1581
      %v1583 = vsel %vm631, %v1498, 0.0
      %v1584 = vadd.f32 %v1582, %v1583
      %v1585 = vsel %vm631, %v1499, 0.0
      %v1586 = vadd.f32 %v1584, %v1585
      %v1587 = vsel %vm631, %v1500, 0.0
      %v1588 = vadd.f32 %v1586, %v1587
      %v1589 = vsel %vm631, %v1501, 0.0
      %v1590 = vadd.f32 %v1588, %v1589
      %v1591 = vsel %vm631, %v1502, 0.0
      %v1592 = vadd.f32 %v1590, %v1591
      %v1593 = vsel %vm631, %v1503, 0.0
      %v1594 = vadd.f32 %v1592, %v1593
      %v1595 = vsel %vm631, %v1504, 0.0
      %v1596 = vadd.f32 %v1594, %v1595
      %v1597 = vsel %vm631, %v1505, 0.0
      %v1598 = vadd.f32 %v1596, %v1597
      %v1599 = vsel %vm631, %v1506, 0.0
      %v1600 = vadd.f32 %v1598, %v1599
      %v1601 = vsel %vm631, %v1507, 0.0
      %v1602 = vadd.f32 %v1600, %v1601
      %v1603 = vsel %vm631, %v1508, 0.0
      %v1604 = vadd.f32 %v1602, %v1603
      %v1605 = vsel %vm631, %v1509, 0.0
      %v1606 = vadd.f32 %v1604, %v1605
      %v1607 = vsel %vm631, %v1510, 0.0
      %v1608 = vadd.f32 %v1606, %v1607
      %v1609 = vsel %vm631, %v1511, 0.0
      %v1610 = vadd.f32 %v1608, %v1609
      %v1611 = vsel %vm631, %v1512, 0.0
      %v1612 = vadd.f32 %v1610, %v1611
      %v1613 = vsel %vm631, %v1513, 0.0
      %v1614 = vadd.f32 %v1612, %v1613
      %v1615 = vsel %vm631, %v1514, 0.0
      %v1616 = vadd.f32 %v1614, %v1615
      %v1617 = vsel %vm631, %v1515, 0.0
      %v1618 = vadd.f32 %v1616, %v1617
      %v1619 = vsel %vm631, %v1516, 0.0
      %v1620 = vadd.f32 %v1618, %v1619
      %v1621 = vsel %vm631, %v1517, 0.0
      %v1622 = vadd.f32 %v1620, %v1621
      %v1623 = vsel %vm631, %v1518, 0.0
      %v1624 = vadd.f32 %v1622, %v1623
      %v1625 = vsel %vm631, %v1519, 0.0
      %v1626 = vadd.f32 %v1624, %v1625
      %v1627 = vsel %vm631, %v1520, 0.0
      %v1628 = vadd.f32 %v1626, %v1627
      %v1629 = vsel %vm631, %v1521, 0.0
      %v1630 = vadd.f32 %v1628, %v1629
      %v1631 = vsel %vm631, %v1522, 0.0
      %v1632 = vadd.f32 %v1630, %v1631
      %v1633 = vsel %vm631, %v1523, 0.0
      %v1634 = vadd.f32 %v1632, %v1633
      %v1635 = vsel %vm631, %v1524, 0.0
      %v1636 = vadd.f32 %v1634, %v1635
      %v1637 = vsel %vm631, %v1525, 0.0
      %v1638 = vadd.f32 %v1636, %v1637
      %v1639 = vsel %vm631, %v1526, 0.0
      %v1640 = vadd.f32 %v1638, %v1639
      %v1641 = vsel %vm631, %v1527, 0.0
      %v1642 = vadd.f32 %v1640, %v1641
      %v1643 = vsel %vm631, %v1528, 0.0
      %v1644 = vadd.f32 %v1642, %v1643
      %v1645 = vsel %vm631, %v1529, 0.0
      %v1646 = vadd.f32 %v1644, %v1645
      %v1647 = vsel %vm631, %v1530, 0.0
      %v1648 = vadd.f32 %v1646, %v1647
      %v1649 = vsel %vm631, %v1531, 0.0
      %v1650 = vadd.f32 %v1648, %v1649
      %v1651 = vsel %vm631, %v1532, 0.0
      %v1652 = vadd.f32 %v1650, %v1651
      %v1653 = vsel %vm631, %v1533, 0.0
      %v1654 = vadd.f32 %v1652, %v1653
      %v1655 = vsel %vm631, %v1534, 0.0
      %v1656 = vadd.f32 %v1654, %v1655
      %v1657 = vsel %vm631, %v1535, 0.0
      %v1658 = vadd.f32 %v1656, %v1657
      %v1659 = vsel %vm631, %v1536, 0.0
      %v1660 = vadd.f32 %v1658, %v1659
      %v1661 = vsel %vm631, %v1537, 0.0
      %v1662 = vadd.f32 %v1660, %v1661
      %v1663 = vsel %vm631, %v1538, 0.0
      %v1664 = vadd.f32 %v1662, %v1663
      %v1665 = vsel %vm631, %v1539, 0.0
      %v1666 = vadd.f32 %v1664, %v1665
      %v1667 = vrot.slane %v1666, 4
      %v1668 = vadd.f32 %v1666, %v1667
      %v1669 = vrot.slane %v1668, 2
      %v1670 = vadd.f32 %v1668, %v1669
      %v1671 = vrot.slane %v1670, 1
      %v1672 = vadd.f32 %v1670, %v1671
      %v1673 = vadd.f32 %v1475, %v1672
      %1674 = vst.msk [vmem:[%s4] sm:$0x1] %vm1473, %v1673
      %s1675 = smul.u32 64, %s16
      %p1676 = scmp.lt.s32.totalorder %s1675, 255
      %s1677 = scalar_select %p1676, %s1675, 255
      %s1678 = smul.addr %s1677, 4
      %s1679 = scalar_lea.vmem %s2, %s1678
      // Predicated region
      $region33: #{_lambda_.16} parent=27 // pred_check
        %p1680 = pneg %p81
      $region34: #{_lambda_.16} parent=27 // pred_check_branch
        %1682 = sbr.rel (%p1680) target = $region36
      $region35: #{_lambda_.16} parent=27 // pred_region
        %s1683 = smul.u32 64, %s16
      $region36: #{_lambda_.16} parent=27 // pred_fallthru
        _
      // Predicated region
      $region37: #{_lambda_.16} parent=27 // pred_check
        %p1684 = pneg %p102
      $region38: #{_lambda_.16} parent=27 // pred_check_branch
        %1686 = sbr.rel (%p1684) target = $region40
      $region39: #{_lambda_.16} parent=27 // pred_region
        _
      $region40: #{_lambda_.16} parent=27 // pred_fallthru
        _
      // Predicated region
      $region41: #{_lambda_.16} parent=27 // pred_check
        %p1687 = pneg %p123
      $region42: #{_lambda_.16} parent=27 // pred_check_branch
        %1689 = sbr.rel (%p1687) target = $region44
      $region43: #{_lambda_.16} parent=27 // pred_region
        _
      $region44: #{_lambda_.16} parent=27 // pred_fallthru
        _
      // Predicated region
      $region45: #{_lambda_.16} parent=27 // pred_check
        %p1690 = pneg %p102
      $region46: #{_lambda_.16} parent=27 // pred_check_branch
        %1692 = sbr.rel (%p1690) target = $region48
      $region47: #{_lambda_.16} parent=27 // pred_region
        _
      $region48: #{_lambda_.16} parent=27 // pred_fallthru
        _
      // Predicated region
      $region49: #{_lambda_.16} parent=27 // pred_check
        %p1693 = pneg %p123
      $region50: #{_lambda_.16} parent=27 // pred_check_branch
        %1695 = sbr.rel (%p1693) target = $region52
      $region51: #{_lambda_.16} parent=27 // pred_region
        _
      $region52: #{_lambda_.16} parent=27 // pred_fallthru
        _
    $region28: #{_lambda_.16} parent=5 // pred_fallthru
      _
    %p1696 = scmp.le.s32.totalorder 2, %s11
    // Predicated region
    $region53: #{_lambda_.16} parent=5 // pred_check
      %p1697 = pneg %p1696
    $region54: #{_lambda_.16} parent=5 // pred_check_branch
      %1699 = sbr.rel (%p1697) target = $region56
    $region55: #{_lambda_.16} parent=5 // pred_region
      %s1700 = ssub.s32 %s11, 2
      // Predicated region
      $region57: #{_lambda_.16} parent=55 // pred_check
        %p1701 = pneg %p87
      $region58: #{_lambda_.16} parent=55 // pred_check_branch
        %1703 = sbr.rel (%p1701) target = $region60
      $region59: #{_lambda_.16} parent=55 // pred_region
        %s1704 = smul.u32 64, %s17
        %p1705 = scmp.lt.s32.totalorder %s1704, 255
        %s1706 = scalar_select %p1705, %s1704, 255
        %s1707 = smul.addr %s1706, 4
        %s1708 = scalar_lea.vmem %s2, %s1707
      $region60: #{_lambda_.16} parent=55 // pred_fallthru
        _
    $region56: #{_lambda_.16} parent=5 // pred_fallthru
      _
  $region6: #{_lambda_.16} parent=0 // loop_footer
    %s15 = sadd.s32 1, %s11
  $region7: #{_lambda_.16} parent=0 // loop_footer_branch
    %10 = sbr.rel target = $region3
  $region8: #{_lambda_.16} parent=0 // loop_exit
    _

// kernel: _lambda_.18
$region0: #{_lambda_.18}
  #allocation0 [shape = 'u32[]', space=smem, size = 0x4, offset = 0x4, fixed_abs, tag = 'smem constant byte address 0x4 - core index']
  #allocation1 [shape = 'u32[144,128]{1,0:T(1,128)}', space=vmem, size = 0x12000, scoped, tag = 'internal scratch']
  %s0 = inlined_call_operand.vmem [shape: bf16[2048,144], index: 0, kind: input, shape index: {}]
  %s1 = inlined_call_operand.vmem [shape: bf16[144,16], index: 1, kind: input, shape index: {}]
  %s2 = inlined_call_operand.vmem [shape: bf16[2048,16], index: 2, kind: input, shape index: {}]
  %s3 = inlined_call_operand.vmem [shape: bf16[2048,16], index: 3, kind: output, shape index: {0}]
  %s4 = inlined_call_operand.vmem [shape: f32[1,16], index: 4, kind: output, shape index: {1}]
  %s5 = inlined_call_operand.vmem [shape: f32[1,16], index: 5, kind: output, shape index: {2}]
  %6 = xla_tuple %s3, %s4, %s5
  %s7 = sld [smem:[#allocation0]]
  $region65: #{_lambda_.18} parent=0
    _
  %s9 = ssub.s32 1, %s7
  %s10 = scalar_select 0, %s9, %s7
  loop: start=0, step=1, limit=6
  $region2: #{_lambda_.18} parent=0 // loop_pre_header
    _
  $region3: #{_lambda_.18} parent=0 // loop_header
    %s12 = sphi 0, %s16
    %p13 = scmp.ge.s32.totalorder %s12, 6
    %s22 = sphi 0, %s24
    %s25 = sphi 0, %s22
    %s26 = sphi 0, %s25
    %s42 = sphi 0, %s26
    %s46 = sphi 0, %s46
    %s48 = sphi 0, %s46
    %s49 = sphi 0, %s48
    %s63 = sphi 0, %s49
    %s69 = sphi 0, %s71
    %s72 = sphi 0, %s69
    %s73 = sphi 0, %s72
    %s89 = sphi 0, %s73
    %s95 = sphi 0, %s97
    %s98 = sphi 0, %s95
    %s99 = sphi 0, %s98
    %s115 = sphi 0, %s99
    %s119 = sphi 0, %s119
    %s121 = sphi 0, %s119
    %s122 = sphi 0, %s121
    %s136 = sphi 0, %s122
    %s140 = sphi 0, %s140
    %s142 = sphi 0, %s140
    %s143 = sphi 0, %s142
    %s157 = sphi 0, %s143
  $region4: #{_lambda_.18} parent=0 // loop_header_branch
    %15 = sbr.rel (%p13) target = $region8
  $region5: #{_lambda_.18} parent=0 // loop_body
    %s17 = ssub.s32 %s12, 1
    %s18 = ssub.s32 %s12, 2
    %s19 = sadd.s32 %s12, 1
    %s20 = ssub.s32 %s12, %s19
    %p21 = scmp.eq.s32.totalorder %s20, 0
    %s23 = sadd.s32 %s22, 1
    %s24 = scalar_select %p21, %s22, %s23
    %p27 = pneg %p21
    %p28 = scmp.eq.s32.totalorder %s12, 3
    %p29 = por %p27, %p28
    %p30 = scmp.ne.s32.totalorder %s22, %s25
    %p31 = scmp.eq.s32.totalorder %s12, 0
    %p32 = por %p30, %p31
    %p33 = scmp.ne.s32.totalorder %s22, %s25
    %p34 = scmp.eq.s32.totalorder %s17, 3
    %p35 = por %p33, %p34
    %p36 = scmp.ne.s32.totalorder %s25, %s26
    %p37 = scmp.eq.s32.totalorder %s17, 0
    %p38 = por %p36, %p37
    %p39 = scmp.ne.s32.totalorder %s25, %s26
    %p40 = scmp.eq.s32.totalorder %s18, 3
    %p41 = por %p39, %p40
    %p43 = scmp.ne.s32.totalorder %s26, %s42
    %p44 = scmp.eq.s32.totalorder %s18, 0
    %p45 = por %p43, %p44
    %s47 = sadd.s32 %s46, 1
    %p50 = scmp.eq.s32.totalorder %s12, 3
    %p51 = scmp.ne.s32.totalorder %s46, %s48
    %p52 = scmp.eq.s32.totalorder %s12, 0
    %p53 = por %p51, %p52
    %p54 = scmp.ne.s32.totalorder %s46, %s48
    %p55 = scmp.eq.s32.totalorder %s17, 3
    %p56 = por %p54, %p55
    %p57 = scmp.ne.s32.totalorder %s48, %s49
    %p58 = scmp.eq.s32.totalorder %s17, 0
    %p59 = por %p57, %p58
    %p60 = scmp.ne.s32.totalorder %s48, %s49
    %p61 = scmp.eq.s32.totalorder %s18, 3
    %p62 = por %p60, %p61
    %p64 = scmp.ne.s32.totalorder %s49, %s63
    %p65 = scmp.eq.s32.totalorder %s18, 0
    %p66 = por %p64, %p65
    %s67 = ssub.s32 %s12, %s19
    %p68 = scmp.eq.s32.totalorder %s67, 0
    %s70 = sadd.s32 %s69, 1
    %s71 = scalar_select %p68, %s69, %s70
    %p74 = pneg %p68
    %p75 = scmp.eq.s32.totalorder %s12, 3
    %p76 = por %p74, %p75
    %p77 = scmp.ne.s32.totalorder %s69, %s72
    %p78 = scmp.eq.s32.totalorder %s12, 0
    %p79 = por %p77, %p78
    %p80 = scmp.ne.s32.totalorder %s69, %s72
    %p81 = scmp.eq.s32.totalorder %s17, 3
    %p82 = por %p80, %p81
    %p83 = scmp.ne.s32.totalorder %s72, %s73
    %p84 = scmp.eq.s32.totalorder %s17, 0
    %p85 = por %p83, %p84
    %p86 = scmp.ne.s32.totalorder %s72, %s73
    %p87 = scmp.eq.s32.totalorder %s18, 3
    %p88 = por %p86, %p87
    %p90 = scmp.ne.s32.totalorder %s73, %s89
    %p91 = scmp.eq.s32.totalorder %s18, 0
    %p92 = por %p90, %p91
    %s93 = ssub.s32 %s12, %s19
    %p94 = scmp.eq.s32.totalorder %s93, 0
    %s96 = sadd.s32 %s95, 1
    %s97 = scalar_select %p94, %s95, %s96
    %p100 = pneg %p94
    %p101 = scmp.eq.s32.totalorder %s12, 3
    %p102 = por %p100, %p101
    %p103 = scmp.ne.s32.totalorder %s95, %s98
    %p104 = scmp.eq.s32.totalorder %s12, 0
    %p105 = por %p103, %p104
    %p106 = scmp.ne.s32.totalorder %s95, %s98
    %p107 = scmp.eq.s32.totalorder %s17, 3
    %p108 = por %p106, %p107
    %p109 = scmp.ne.s32.totalorder %s98, %s99
    %p110 = scmp.eq.s32.totalorder %s17, 0
    %p111 = por %p109, %p110
    %p112 = scmp.ne.s32.totalorder %s98, %s99
    %p113 = scmp.eq.s32.totalorder %s18, 3
    %p114 = por %p112, %p113
    %p116 = scmp.ne.s32.totalorder %s99, %s115
    %p117 = scmp.eq.s32.totalorder %s18, 0
    %p118 = por %p116, %p117
    %s120 = sadd.s32 %s119, 1
    %p123 = scmp.eq.s32.totalorder %s12, 3
    %p124 = scmp.ne.s32.totalorder %s119, %s121
    %p125 = scmp.eq.s32.totalorder %s12, 0
    %p126 = por %p124, %p125
    %p127 = scmp.ne.s32.totalorder %s119, %s121
    %p128 = scmp.eq.s32.totalorder %s17, 3
    %p129 = por %p127, %p128
    %p130 = scmp.ne.s32.totalorder %s121, %s122
    %p131 = scmp.eq.s32.totalorder %s17, 0
    %p132 = por %p130, %p131
    %p133 = scmp.ne.s32.totalorder %s121, %s122
    %p134 = scmp.eq.s32.totalorder %s18, 3
    %p135 = por %p133, %p134
    %p137 = scmp.ne.s32.totalorder %s122, %s136
    %p138 = scmp.eq.s32.totalorder %s18, 0
    %p139 = por %p137, %p138
    %s141 = sadd.s32 %s140, 1
    %p144 = scmp.eq.s32.totalorder %s12, 3
    %p145 = scmp.ne.s32.totalorder %s140, %s142
    %p146 = scmp.eq.s32.totalorder %s12, 0
    %p147 = por %p145, %p146
    %p148 = scmp.ne.s32.totalorder %s140, %s142
    %p149 = scmp.eq.s32.totalorder %s17, 3
    %p150 = por %p148, %p149
    %p151 = scmp.ne.s32.totalorder %s142, %s143
    %p152 = scmp.eq.s32.totalorder %s17, 0
    %p153 = por %p151, %p152
    %p154 = scmp.ne.s32.totalorder %s142, %s143
    %p155 = scmp.eq.s32.totalorder %s18, 3
    %p156 = por %p154, %p155
    %p158 = scmp.ne.s32.totalorder %s143, %s157
    %p159 = scmp.eq.s32.totalorder %s18, 0
    %p160 = por %p158, %p159
    %p161 = scmp.le.s32.totalorder 1, %s12
    %p162 = scmp.lt.s32.totalorder %s12, 5
    %p163 = pnand %p161, %p162
    %p164 = pneg %p163
    // Predicated region
    $region9: #{_lambda_.18} parent=5 // pred_check
      _
    $region10: #{_lambda_.18} parent=5 // pred_check_branch
      %166 = sbr.rel (%p163) target = $region12
    $region11: #{_lambda_.18} parent=5 // pred_region
      %s167 = ssub.s32 %s12, 1
      // Predicated region
      $region13: #{_lambda_.18} parent=11 // pred_check
        %p168 = pneg %p59
      $region14: #{_lambda_.18} parent=11 // pred_check_branch
        %170 = sbr.rel (%p168) target = $region16
      $region15: #{_lambda_.18} parent=11 // pred_region
        _
      $region16: #{_lambda_.18} parent=11 // pred_fallthru
        _
    $region12: #{_lambda_.18} parent=5 // pred_fallthru
      _
    %p171 = scmp.lt.s32.totalorder %s12, 4
    // Predicated region
    $region17: #{_lambda_.18} parent=5 // pred_check
      %p172 = pneg %p171
    $region18: #{_lambda_.18} parent=5 // pred_check_branch
      %174 = sbr.rel (%p172) target = $region20
    $region19: #{_lambda_.18} parent=5 // pred_region
      // Predicated region
      $region21: #{_lambda_.18} parent=19 // pred_check
        %p175 = pneg %p32
      $region22: #{_lambda_.18} parent=19 // pred_check_branch
        %177 = sbr.rel (%p175) target = $region24
      $region23: #{_lambda_.18} parent=19 // pred_region
        %s178 = smul.u32 64, %s12
        %p179 = scmp.lt.s32.totalorder %s178, 255
        %s180 = scalar_select %p179, %s178, 255
        %s181 = smul.addr %s180, 2
        %s182 = smul.addr %s181, 4
        %s183 = scalar_lea.vmem %s0, %s182
        %s184 = smul.u32 64, %s12
      $region24: #{_lambda_.18} parent=19 // pred_fallthru
        _
      // Predicated region
      $region25: #{_lambda_.18} parent=19 // pred_check
        %p185 = pneg %p79
      $region26: #{_lambda_.18} parent=19 // pred_check_branch
        %187 = sbr.rel (%p185) target = $region28
      $region27: #{_lambda_.18} parent=19 // pred_region
        %s188 = smul.u32 64, %s12
        %p189 = scmp.lt.s32.totalorder %s188, 255
        %s190 = scalar_select %p189, %s188, 255
        %s191 = smul.addr %s190, 4
        %s192 = scalar_lea.vmem %s2, %s191
        %s193 = smul.u32 64, %s12
      $region28: #{_lambda_.18} parent=19 // pred_fallthru
        _
    $region20: #{_lambda_.18} parent=5 // pred_fallthru
      _
    %p194 = scmp.le.s32.totalorder 1, %s12
    %p195 = scmp.lt.s32.totalorder %s12, 5
    %p196 = pnand %p194, %p195
    %p197 = pneg %p196
    // Predicated region
    $region29: #{_lambda_.18} parent=5 // pred_check
      _
    $region30: #{_lambda_.18} parent=5 // pred_check_branch
      %199 = sbr.rel (%p196) target = $region32
    $region31: #{_lambda_.18} parent=5 // pred_region
      %s200 = ssub.s32 %s12, 1
      %s201 = smul.u32 64, %s17
      %p202 = scmp.lt.s32.totalorder %s201, 255
      %s203 = scalar_select %p202, %s201, 255
      %s204 = smul.addr %s203, 2
      %s205 = smul.addr %s204, 4
      %s206 = scalar_lea.vmem %s0, %s205
      %p207 = pneg %p38
      %p208 = pneg %p35
      %p209 = pneg %p59
      %p210 = pneg %p56
      %s211 = smul.u32 64, %s17
      %p212 = scmp.lt.s32.totalorder %s211, 255
      %s213 = scalar_select %p212, %s211, 255
      %s214 = smul.addr %s213, 4
      %s215 = scalar_lea.vmem %s2, %s214
      %p216 = pneg %p85
      %p217 = pneg %p82
      %p218 = pneg %p111
      %p219 = pneg %p108
      %s220 = smul.u32 64, %s17
      %p221 = scmp.lt.s32.totalorder %s220, 255
      %s222 = scalar_select %p221, %s220, 255
      %s223 = smul.addr %s222, 4
      %s224 = scalar_lea.vmem %s3, %s223
      %p225 = pneg %p132
      %p226 = pneg %p129
      %p227 = pneg %p153
      %p228 = pneg %p150
      %s229 = smul.u32 64, %s17
      %p230 = scmp.lt.s32.totalorder %s229, 255
      %s231 = scalar_select %p230, %s229, 255
      %s232 = smul.addr %s231, 2
      %s233 = smul.addr %s232, 4
      %s234 = scalar_lea.vmem %s0, %s233
      %s235 = smul.u32 64, %s17
      %s236 = smul.u32 64, %s17
      %p237 = scmp.lt.s32.totalorder %s236, 255
      %s238 = scalar_select %p237, %s236, 255
      %s239 = smul.addr %s238, 4
      %s240 = scalar_lea.vmem %s2, %s239
      %s241 = smul.u32 64, %s17
      %s242 = smul.u32 64, %s17
      %p243 = scmp.lt.s32.totalorder %s242, 255
      %s244 = scalar_select %p243, %s242, 255
      %s245 = smul.addr %s244, 4
      %s246 = scalar_lea.vmem %s3, %s245
      %s247 = smul.u32 64, %s17
      %p249 = scmp.eq.s32.totalorder %s17, 0
      // Predicated region
      $region33: #{_lambda_.18} parent=31 // pred_check
        %p250 = pneg %p249
      $region34: #{_lambda_.18} parent=31 // pred_check_branch
        %252 = sbr.rel (%p250) target = $region36
      $region35: #{_lambda_.18} parent=31 // pred_region
        %vm253 = vcmask 122880
        %254 = vst.msk [vmem:[%s4] sm:$0x1] %vm253, 0.0
        %255 = vst.msk [vmem:[%s5] sm:$0x1] %vm253, 0.0
      $region36: #{_lambda_.18} parent=31 // pred_fallthru
        _
      %v256 = vld [vmem:[%s234] sm:$0xff]
      %v257 = vld [vmem:[%s234 + $0x8] sm:$0xff]
      %v258 = vld [vmem:[%s234 + $0x10] sm:$0xff]
      %v259 = vld [vmem:[%s234 + $0x18] sm:$0xff]
      %v260 = vld [vmem:[%s234 + $0x20] sm:$0xff]
      %v261 = vld [vmem:[%s234 + $0x28] sm:$0xff]
      %v262 = vld [vmem:[%s234 + $0x30] sm:$0xff]
      %v263 = vld [vmem:[%s234 + $0x38] sm:$0xff]
      %v264 = vld [vmem:[%s234 + $0x40] sm:$0xff]
      %v265 = vld [vmem:[%s234 + $0x48] sm:$0xff]
      %v266 = vld [vmem:[%s234 + $0x50] sm:$0xff]
      %v267 = vld [vmem:[%s234 + $0x58] sm:$0xff]
      %v268 = vld [vmem:[%s234 + $0x60] sm:$0xff]
      %v269 = vld [vmem:[%s234 + $0x68] sm:$0xff]
      %v270 = vld [vmem:[%s234 + $0x70] sm:$0xff]
      %v271 = vld [vmem:[%s234 + $0x78] sm:$0xff]
      %v272 = vld [vmem:[%s234 + $0x80] sm:$0xff]
      %v273 = vld [vmem:[%s234 + $0x88] sm:$0xff]
      %v274 = vld [vmem:[%s234 + $0x90] sm:$0xff]
      %v275 = vld [vmem:[%s234 + $0x98] sm:$0xff]
      %v276 = vld [vmem:[%s234 + $0xa0] sm:$0xff]
      %v277 = vld [vmem:[%s234 + $0xa8] sm:$0xff]
      %v278 = vld [vmem:[%s234 + $0xb0] sm:$0xff]
      %v279 = vld [vmem:[%s234 + $0xb8] sm:$0xff]
      %v280 = vld [vmem:[%s234 + $0xc0] sm:$0xff]
      %v281 = vld [vmem:[%s234 + $0xc8] sm:$0xff]
      %v282 = vld [vmem:[%s234 + $0xd0] sm:$0xff]
      %v283 = vld [vmem:[%s234 + $0xd8] sm:$0xff]
      %v284 = vld [vmem:[%s234 + $0xe0] sm:$0xff]
      %v285 = vld [vmem:[%s234 + $0xe8] sm:$0xff]
      %v286 = vld [vmem:[%s234 + $0xf0] sm:$0xff]
      %v287 = vld [vmem:[%s234 + $0xf8] sm:$0xff]
      %v288 = vld [vmem:[%s234 + $0x100] sm:$0xff]
      %v289 = vld [vmem:[%s234 + $0x108] sm:$0xff]
      %v290 = vld [vmem:[%s234 + $0x110] sm:$0xff]
      %v291 = vld [vmem:[%s234 + $0x118] sm:$0xff]
      %v292 = vld [vmem:[%s234 + $0x120] sm:$0xff]
      %v293 = vld [vmem:[%s234 + $0x128] sm:$0xff]
      %v294 = vld [vmem:[%s234 + $0x130] sm:$0xff]
      %v295 = vld [vmem:[%s234 + $0x138] sm:$0xff]
      %v296 = vld [vmem:[%s234 + $0x140] sm:$0xff]
      %v297 = vld [vmem:[%s234 + $0x148] sm:$0xff]
      %v298 = vld [vmem:[%s234 + $0x150] sm:$0xff]
      %v299 = vld [vmem:[%s234 + $0x158] sm:$0xff]
      %v300 = vld [vmem:[%s234 + $0x160] sm:$0xff]
      %v301 = vld [vmem:[%s234 + $0x168] sm:$0xff]
      %v302 = vld [vmem:[%s234 + $0x170] sm:$0xff]
      %v303 = vld [vmem:[%s234 + $0x178] sm:$0xff]
      %v304 = vld [vmem:[%s234 + $0x180] sm:$0xff]
      %v305 = vld [vmem:[%s234 + $0x188] sm:$0xff]
      %v306 = vld [vmem:[%s234 + $0x190] sm:$0xff]
      %v307 = vld [vmem:[%s234 + $0x198] sm:$0xff]
      %v308 = vld [vmem:[%s234 + $0x1a0] sm:$0xff]
      %v309 = vld [vmem:[%s234 + $0x1a8] sm:$0xff]
      %v310 = vld [vmem:[%s234 + $0x1b0] sm:$0xff]
      %v311 = vld [vmem:[%s234 + $0x1b8] sm:$0xff]
      %v312 = vld [vmem:[%s234 + $0x1c0] sm:$0xff]
      %v313 = vld [vmem:[%s234 + $0x1c8] sm:$0xff]
      %v314 = vld [vmem:[%s234 + $0x1d0] sm:$0xff]
      %v315 = vld [vmem:[%s234 + $0x1d8] sm:$0xff]
      %v316 = vld [vmem:[%s234 + $0x1e0] sm:$0xff]
      %v317 = vld [vmem:[%s234 + $0x1e8] sm:$0xff]
      %v318 = vld [vmem:[%s234 + $0x1f0] sm:$0xff]
      %v319 = vld [vmem:[%s234 + $0x1f8] sm:$0xff]
      %v320 = vld [vmem:[%s1] sm:$0xf]
      %v321 = vld [vmem:[%s1 + $0x4] sm:$0xf]
      %v322 = vld [vmem:[%s1 + $0x8] sm:$0xf]
      %v323 = vld [vmem:[%s1 + $0xc] sm:$0xf]
      %v324 = vld [vmem:[%s1 + $0x10] sm:$0xf]
      %v325 = vld [vmem:[%s1 + $0x14] sm:$0xf]
      %v326 = vld [vmem:[%s1 + $0x18] sm:$0xf]
      %v327 = vld [vmem:[%s1 + $0x1c] sm:$0xf]
      %v328 = vld [vmem:[%s1 + $0x20] sm:$0xf]
      %v329 = vld [vmem:[%s1 + $0x24] sm:$0xf]
      %v330 = vld [vmem:[%s1 + $0x28] sm:$0xf]
      %v331 = vld [vmem:[%s1 + $0x2c] sm:$0xf]
      %v332 = vld [vmem:[%s1 + $0x30] sm:$0xf]
      %v333 = vld [vmem:[%s1 + $0x34] sm:$0xf]
      %v334 = vld [vmem:[%s1 + $0x38] sm:$0xf]
      %v335 = vld [vmem:[%s1 + $0x3c] sm:$0xf]
      %v336 = vld [vmem:[%s1 + $0x40] sm:$0xf]
      %v337 = vld [vmem:[%s1 + $0x44] sm:$0xf]
      %v338 = vld [vmem:[%s240] sm:$0xf]
      %v339 = vld [vmem:[%s240 + $0x4] sm:$0xf]
      %v340 = vld [vmem:[%s240 + $0x8] sm:$0xf]
      %v341 = vld [vmem:[%s240 + $0xc] sm:$0xf]
      %v342 = vld [vmem:[%s240 + $0x10] sm:$0xf]
      %v343 = vld [vmem:[%s240 + $0x14] sm:$0xf]
      %v344 = vld [vmem:[%s240 + $0x18] sm:$0xf]
      %v345 = vld [vmem:[%s240 + $0x1c] sm:$0xf]
      %v346 = vld [vmem:[%s240 + $0x20] sm:$0xf]
      %v347 = vld [vmem:[%s240 + $0x24] sm:$0xf]
      %v348 = vld [vmem:[%s240 + $0x28] sm:$0xf]
      %v349 = vld [vmem:[%s240 + $0x2c] sm:$0xf]
      %v350 = vld [vmem:[%s240 + $0x30] sm:$0xf]
      %v351 = vld [vmem:[%s240 + $0x34] sm:$0xf]
      %v352 = vld [vmem:[%s240 + $0x38] sm:$0xf]
      %v353 = vld [vmem:[%s240 + $0x3c] sm:$0xf]
      %v354 = vld [vmem:[%s240 + $0x40] sm:$0xf]
      %v355 = vld [vmem:[%s240 + $0x44] sm:$0xf]
      %v356 = vld [vmem:[%s240 + $0x48] sm:$0xf]
      %v357 = vld [vmem:[%s240 + $0x4c] sm:$0xf]
      %v358 = vld [vmem:[%s240 + $0x50] sm:$0xf]
      %v359 = vld [vmem:[%s240 + $0x54] sm:$0xf]
      %v360 = vld [vmem:[%s240 + $0x58] sm:$0xf]
      %v361 = vld [vmem:[%s240 + $0x5c] sm:$0xf]
      %v362 = vld [vmem:[%s240 + $0x60] sm:$0xf]
      %v363 = vld [vmem:[%s240 + $0x64] sm:$0xf]
      %v364 = vld [vmem:[%s240 + $0x68] sm:$0xf]
      %v365 = vld [vmem:[%s240 + $0x6c] sm:$0xf]
      %v366 = vld [vmem:[%s240 + $0x70] sm:$0xf]
      %v367 = vld [vmem:[%s240 + $0x74] sm:$0xf]
      %v368 = vld [vmem:[%s240 + $0x78] sm:$0xf]
      %v369 = vld [vmem:[%s240 + $0x7c] sm:$0xf]
      %v370 = vld [vmem:[%s240 + $0x80] sm:$0xf]
      %v371 = vld [vmem:[%s240 + $0x84] sm:$0xf]
      %v372 = vld [vmem:[%s240 + $0x88] sm:$0xf]
      %v373 = vld [vmem:[%s240 + $0x8c] sm:$0xf]
      %v374 = vld [vmem:[%s240 + $0x90] sm:$0xf]
      %v375 = vld [vmem:[%s240 + $0x94] sm:$0xf]
      %v376 = vld [vmem:[%s240 + $0x98] sm:$0xf]
      %v377 = vld [vmem:[%s240 + $0x9c] sm:$0xf]
      %v378 = vld [vmem:[%s240 + $0xa0] sm:$0xf]
      %v379 = vld [vmem:[%s240 + $0xa4] sm:$0xf]
      %v380 = vld [vmem:[%s240 + $0xa8] sm:$0xf]
      %v381 = vld [vmem:[%s240 + $0xac] sm:$0xf]
      %v382 = vld [vmem:[%s240 + $0xb0] sm:$0xf]
      %v383 = vld [vmem:[%s240 + $0xb4] sm:$0xf]
      %v384 = vld [vmem:[%s240 + $0xb8] sm:$0xf]
      %v385 = vld [vmem:[%s240 + $0xbc] sm:$0xf]
      %v386 = vld [vmem:[%s240 + $0xc0] sm:$0xf]
      %v387 = vld [vmem:[%s240 + $0xc4] sm:$0xf]
      %v388 = vld [vmem:[%s240 + $0xc8] sm:$0xf]
      %v389 = vld [vmem:[%s240 + $0xcc] sm:$0xf]
      %v390 = vld [vmem:[%s240 + $0xd0] sm:$0xf]
      %v391 = vld [vmem:[%s240 + $0xd4] sm:$0xf]
      %v392 = vld [vmem:[%s240 + $0xd8] sm:$0xf]
      %v393 = vld [vmem:[%s240 + $0xdc] sm:$0xf]
      %v394 = vld [vmem:[%s240 + $0xe0] sm:$0xf]
      %v395 = vld [vmem:[%s240 + $0xe4] sm:$0xf]
      %v396 = vld [vmem:[%s240 + $0xe8] sm:$0xf]
      %v397 = vld [vmem:[%s240 + $0xec] sm:$0xf]
      %v398 = vld [vmem:[%s240 + $0xf0] sm:$0xf]
      %v399 = vld [vmem:[%s240 + $0xf4] sm:$0xf]
      %v400 = vld [vmem:[%s240 + $0xf8] sm:$0xf]
      %v401 = vld [vmem:[%s240 + $0xfc] sm:$0xf]
      %v402 = vunpack.c.l.bf16 %v338
      %v403 = vunpack.c.l.bf16 %v339
      %v404 = vunpack.c.l.bf16 %v340
      %v405 = vunpack.c.l.bf16 %v341
      %v406 = vunpack.c.l.bf16 %v342
      %v407 = vunpack.c.l.bf16 %v343
      %v408 = vunpack.c.l.bf16 %v344
      %v409 = vunpack.c.l.bf16 %v345
      %v410 = vunpack.c.l.bf16 %v346
      %v411 = vunpack.c.l.bf16 %v347
      %v412 = vunpack.c.l.bf16 %v348
      %v413 = vunpack.c.l.bf16 %v349
      %v414 = vunpack.c.l.bf16 %v350
      %v415 = vunpack.c.l.bf16 %v351
      %v416 = vunpack.c.l.bf16 %v352
      %v417 = vunpack.c.l.bf16 %v353
      %v418 = vunpack.c.l.bf16 %v354
      %v419 = vunpack.c.l.bf16 %v355
      %v420 = vunpack.c.l.bf16 %v356
      %v421 = vunpack.c.l.bf16 %v357
      %v422 = vunpack.c.l.bf16 %v358
      %v423 = vunpack.c.l.bf16 %v359
      %v424 = vunpack.c.l.bf16 %v360
      %v425 = vunpack.c.l.bf16 %v361
      %v426 = vunpack.c.l.bf16 %v362
      %v427 = vunpack.c.l.bf16 %v363
      %v428 = vunpack.c.l.bf16 %v364
      %v429 = vunpack.c.l.bf16 %v365
      %v430 = vunpack.c.l.bf16 %v366
      %v431 = vunpack.c.l.bf16 %v367
      %v432 = vunpack.c.l.bf16 %v368
      %v433 = vunpack.c.l.bf16 %v369
      %v434 = vunpack.c.l.bf16 %v370
      %v435 = vunpack.c.l.bf16 %v371
      %v436 = vunpack.c.l.bf16 %v372
      %v437 = vunpack.c.l.bf16 %v373
      %v438 = vunpack.c.l.bf16 %v374
      %v439 = vunpack.c.l.bf16 %v375
      %v440 = vunpack.c.l.bf16 %v376
      %v441 = vunpack.c.l.bf16 %v377
      %v442 = vunpack.c.l.bf16 %v378
      %v443 = vunpack.c.l.bf16 %v379
      %v444 = vunpack.c.l.bf16 %v380
      %v445 = vunpack.c.l.bf16 %v381
      %v446 = vunpack.c.l.bf16 %v382
      %v447 = vunpack.c.l.bf16 %v383
      %v448 = vunpack.c.l.bf16 %v384
      %v449 = vunpack.c.l.bf16 %v385
      %v450 = vunpack.c.l.bf16 %v386
      %v451 = vunpack.c.l.bf16 %v387
      %v452 = vunpack.c.l.bf16 %v388
      %v453 = vunpack.c.l.bf16 %v389
      %v454 = vunpack.c.l.bf16 %v390
      %v455 = vunpack.c.l.bf16 %v391
      %v456 = vunpack.c.l.bf16 %v392
      %v457 = vunpack.c.l.bf16 %v393
      %v458 = vunpack.c.l.bf16 %v394
      %v459 = vunpack.c.l.bf16 %v395
      %v460 = vunpack.c.l.bf16 %v396
      %v461 = vunpack.c.l.bf16 %v397
      %v462 = vunpack.c.l.bf16 %v398
      %v463 = vunpack.c.l.bf16 %v399
      %v464 = vunpack.c.l.bf16 %v400
      %v465 = vunpack.c.l.bf16 %v401
      %v530 = vunpack.c.l.b16 %v256
      %v531 = vunpack.c.h.b16 %v256
      %v532 = vunpack.c.l.b16 %v257
      %v533 = vunpack.c.h.b16 %v257
      %v534 = vunpack.c.l.b16 %v258
      %v535 = vunpack.c.h.b16 %v258
      %v536 = vunpack.c.l.b16 %v259
      %v537 = vunpack.c.h.b16 %v259
      %v538 = vunpack.c.l.b16 %v260
      %v539 = vunpack.c.h.b16 %v260
      %v540 = vunpack.c.l.b16 %v261
      %v541 = vunpack.c.h.b16 %v261
      %v542 = vunpack.c.l.b16 %v262
      %v543 = vunpack.c.h.b16 %v262
      %v544 = vunpack.c.l.b16 %v263
      %v545 = vunpack.c.h.b16 %v263
      %v546 = vunpack.c.l.b16 %v264
      %v547 = vunpack.c.h.b16 %v264
      %v548 = vunpack.c.l.b16 %v265
      %v549 = vunpack.c.h.b16 %v265
      %v550 = vunpack.c.l.b16 %v266
      %v551 = vunpack.c.h.b16 %v266
      %v552 = vunpack.c.l.b16 %v267
      %v553 = vunpack.c.h.b16 %v267
      %v554 = vunpack.c.l.b16 %v268
      %v555 = vunpack.c.h.b16 %v268
      %v556 = vunpack.c.l.b16 %v269
      %v557 = vunpack.c.h.b16 %v269
      %v558 = vunpack.c.l.b16 %v270
      %v559 = vunpack.c.h.b16 %v270
      %v560 = vunpack.c.l.b16 %v271
      %v561 = vunpack.c.h.b16 %v271
      %v562 = vunpack.c.l.b16 %v272
      %v563 = vunpack.c.h.b16 %v272
      %v564 = vunpack.c.l.b16 %v273
      %v565 = vunpack.c.h.b16 %v273
      %v566 = vunpack.c.l.b16 %v274
      %v567 = vunpack.c.h.b16 %v274
      %v568 = vunpack.c.l.b16 %v275
      %v569 = vunpack.c.h.b16 %v275
      %v570 = vunpack.c.l.b16 %v276
      %v571 = vunpack.c.h.b16 %v276
      %v572 = vunpack.c.l.b16 %v277
      %v573 = vunpack.c.h.b16 %v277
      %v574 = vunpack.c.l.b16 %v278
      %v575 = vunpack.c.h.b16 %v278
      %v576 = vunpack.c.l.b16 %v279
      %v577 = vunpack.c.h.b16 %v279
      %v578 = vunpack.c.l.b16 %v280
      %v579 = vunpack.c.h.b16 %v280
      %v580 = vunpack.c.l.b16 %v281
      %v581 = vunpack.c.h.b16 %v281
      %v582 = vunpack.c.l.b16 %v282
      %v583 = vunpack.c.h.b16 %v282
      %v584 = vunpack.c.l.b16 %v283
      %v585 = vunpack.c.h.b16 %v283
      %v586 = vunpack.c.l.b16 %v284
      %v587 = vunpack.c.h.b16 %v284
      %v588 = vunpack.c.l.b16 %v285
      %v589 = vunpack.c.h.b16 %v285
      %v590 = vunpack.c.l.b16 %v286
      %v591 = vunpack.c.h.b16 %v286
      %v592 = vunpack.c.l.b16 %v287
      %v593 = vunpack.c.h.b16 %v287
      %v594 = vunpack.c.l.b16 %v288
      %v595 = vunpack.c.h.b16 %v288
      %v596 = vunpack.c.l.b16 %v289
      %v597 = vunpack.c.h.b16 %v289
      %v598 = vunpack.c.l.b16 %v290
      %v599 = vunpack.c.h.b16 %v290
      %v600 = vunpack.c.l.b16 %v291
      %v601 = vunpack.c.h.b16 %v291
      %v602 = vunpack.c.l.b16 %v292
      %v603 = vunpack.c.h.b16 %v292
      %v604 = vunpack.c.l.b16 %v293
      %v605 = vunpack.c.h.b16 %v293
      %v606 = vunpack.c.l.b16 %v294
      %v607 = vunpack.c.h.b16 %v294
      %v608 = vunpack.c.l.b16 %v295
      %v609 = vunpack.c.h.b16 %v295
      %v610 = vunpack.c.l.b16 %v296
      %v611 = vunpack.c.h.b16 %v296
      %v612 = vunpack.c.l.b16 %v297
      %v613 = vunpack.c.h.b16 %v297
      %v614 = vunpack.c.l.b16 %v298
      %v615 = vunpack.c.h.b16 %v298
      %v616 = vunpack.c.l.b16 %v299
      %v617 = vunpack.c.h.b16 %v299
      %v618 = vunpack.c.l.b16 %v300
      %v619 = vunpack.c.h.b16 %v300
      %v620 = vunpack.c.l.b16 %v301
      %v621 = vunpack.c.h.b16 %v301
      %v622 = vunpack.c.l.b16 %v302
      %v623 = vunpack.c.h.b16 %v302
      %v624 = vunpack.c.l.b16 %v303
      %v625 = vunpack.c.h.b16 %v303
      %v626 = vunpack.c.l.b16 %v304
      %v627 = vunpack.c.h.b16 %v304
      %v628 = vunpack.c.l.b16 %v305
      %v629 = vunpack.c.h.b16 %v305
      %v630 = vunpack.c.l.b16 %v306
      %v631 = vunpack.c.h.b16 %v306
      %v632 = vunpack.c.l.b16 %v307
      %v633 = vunpack.c.h.b16 %v307
      %v634 = vunpack.c.l.b16 %v308
      %v635 = vunpack.c.h.b16 %v308
      %v636 = vunpack.c.l.b16 %v309
      %v637 = vunpack.c.h.b16 %v309
      %v638 = vunpack.c.l.b16 %v310
      %v639 = vunpack.c.h.b16 %v310
      %v640 = vunpack.c.l.b16 %v311
      %v641 = vunpack.c.h.b16 %v311
      %v642 = vunpack.c.l.b16 %v312
      %v643 = vunpack.c.h.b16 %v312
      %v644 = vunpack.c.l.b16 %v313
      %v645 = vunpack.c.h.b16 %v313
      %v646 = vunpack.c.l.b16 %v314
      %v647 = vunpack.c.h.b16 %v314
      %v648 = vunpack.c.l.b16 %v315
      %v649 = vunpack.c.h.b16 %v315
      %v650 = vunpack.c.l.b16 %v316
      %v651 = vunpack.c.h.b16 %v316
      %v652 = vunpack.c.l.b16 %v317
      %v653 = vunpack.c.h.b16 %v317
      %v654 = vunpack.c.l.b16 %v318
      %v655 = vunpack.c.h.b16 %v318
      %v656 = vunpack.c.l.b16 %v319
      %v657 = vunpack.c.h.b16 %v319
      %v658 = vpack.c.b16 %v532, %v530
      %v659 = vpack.c.b16 %v533, %v531
      %v660 = vpack.c.b16 %v536, %v534
      %v661 = vpack.c.b16 %v537, %v535
      %v662 = vpack.c.b16 %v540, %v538
      %v663 = vpack.c.b16 %v541, %v539
      %v664 = vpack.c.b16 %v544, %v542
      %v665 = vpack.c.b16 %v545, %v543
      %v666 = vpack.c.b16 %v548, %v546
      %v667 = vpack.c.b16 %v549, %v547
      %v668 = vpack.c.b16 %v552, %v550
      %v669 = vpack.c.b16 %v553, %v551
      %v670 = vpack.c.b16 %v556, %v554
      %v671 = vpack.c.b16 %v557, %v555
      %v672 = vpack.c.b16 %v560, %v558
      %v673 = vpack.c.b16 %v561, %v559
      %v674 = vpack.c.b16 %v564, %v562
      %v675 = vpack.c.b16 %v565, %v563
      %v676 = vpack.c.b16 %v568, %v566
      %v677 = vpack.c.b16 %v569, %v567
      %v678 = vpack.c.b16 %v572, %v570
      %v679 = vpack.c.b16 %v573, %v571
      %v680 = vpack.c.b16 %v576, %v574
      %v681 = vpack.c.b16 %v577, %v575
      %v682 = vpack.c.b16 %v580, %v578
      %v683 = vpack.c.b16 %v581, %v579
      %v684 = vpack.c.b16 %v584, %v582
      %v685 = vpack.c.b16 %v585, %v583
      %v686 = vpack.c.b16 %v588, %v586
      %v687 = vpack.c.b16 %v589, %v587
      %v688 = vpack.c.b16 %v592, %v590
      %v689 = vpack.c.b16 %v593, %v591
      %v690 = vpack.c.b16 %v596, %v594
      %v691 = vpack.c.b16 %v597, %v595
      %v692 = vpack.c.b16 %v600, %v598
      %v693 = vpack.c.b16 %v601, %v599
      %v694 = vpack.c.b16 %v604, %v602
      %v695 = vpack.c.b16 %v605, %v603
      %v696 = vpack.c.b16 %v608, %v606
      %v697 = vpack.c.b16 %v609, %v607
      %v698 = vpack.c.b16 %v612, %v610
      %v699 = vpack.c.b16 %v613, %v611
      %v700 = vpack.c.b16 %v616, %v614
      %v701 = vpack.c.b16 %v617, %v615
      %v702 = vpack.c.b16 %v620, %v618
      %v703 = vpack.c.b16 %v621, %v619
      %v704 = vpack.c.b16 %v624, %v622
      %v705 = vpack.c.b16 %v625, %v623
      %v706 = vpack.c.b16 %v628, %v626
      %v707 = vpack.c.b16 %v629, %v627
      %v708 = vpack.c.b16 %v632, %v630
      %v709 = vpack.c.b16 %v633, %v631
      %v710 = vpack.c.b16 %v636, %v634
      %v711 = vpack.c.b16 %v637, %v635
      %v712 = vpack.c.b16 %v640, %v638
      %v713 = vpack.c.b16 %v641, %v639
      %v714 = vpack.c.b16 %v644, %v642
      %v715 = vpack.c.b16 %v645, %v643
      %v716 = vpack.c.b16 %v648, %v646
      %v717 = vpack.c.b16 %v649, %v647
      %v718 = vpack.c.b16 %v652, %v650
      %v719 = vpack.c.b16 %v653, %v651
      %v720 = vpack.c.b16 %v656, %v654
      %v721 = vpack.c.b16 %v657, %v655
      %v772 = vunpack.c.l.b16 %v320
      %v773 = vunpack.c.l.b16 %v321
      %v774 = vunpack.c.l.b16 %v322
      %v775 = vunpack.c.l.b16 %v323
      %v776 = vunpack.c.l.b16 %v324
      %v777 = vunpack.c.l.b16 %v325
      %v778 = vunpack.c.l.b16 %v326
      %v779 = vunpack.c.l.b16 %v327
      %v780 = vunpack.c.l.b16 %v328
      %v781 = vunpack.c.l.b16 %v329
      %v782 = vunpack.c.l.b16 %v330
      %v783 = vunpack.c.l.b16 %v331
      %v784 = vunpack.c.l.b16 %v332
      %v785 = vunpack.c.l.b16 %v333
      %v786 = vunpack.c.l.b16 %v334
      %v787 = vunpack.c.l.b16 %v335
      %v788 = vunpack.c.l.b16 %v336
      %v789 = vunpack.c.l.b16 %v337
      %v790 = vpack.c.b16 %v773, %v772
      %v791 = vpack.c.b16 %v775, %v774
      %v792 = vpack.c.b16 %v777, %v776
      %v793 = vpack.c.b16 %v779, %v778
      %v794 = vpack.c.b16 %v781, %v780
      %v795 = vpack.c.b16 %v783, %v782
      %v796 = vpack.c.b16 %v785, %v784
      %v797 = vpack.c.b16 %v787, %v786
      %v798 = vpack.c.b16 %v789, %v788
      %vm808 = vcmask 130048
      %v810 = vsel %vm808, %v659, 0
      %v813 = vsel %vm808, %v661, 0
      %v816 = vsel %vm808, %v663, 0
      %v819 = vsel %vm808, %v665, 0
      %v822 = vsel %vm808, %v667, 0
      %v825 = vsel %vm808, %v669, 0
      %v828 = vsel %vm808, %v671, 0
      %v831 = vsel %vm808, %v673, 0
      %v834 = vsel %vm808, %v675, 0
      %v837 = vsel %vm808, %v677, 0
      %v840 = vsel %vm808, %v679, 0
      %v843 = vsel %vm808, %v681, 0
      %v846 = vsel %vm808, %v683, 0
      %v849 = vsel %vm808, %v685, 0
      %v852 = vsel %vm808, %v687, 0
      %v855 = vsel %vm808, %v689, 0
      %v858 = vsel %vm808, %v691, 0
      %v861 = vsel %vm808, %v693, 0
      %v864 = vsel %vm808, %v695, 0
      %v867 = vsel %vm808, %v697, 0
      %v870 = vsel %vm808, %v699, 0
      %v873 = vsel %vm808, %v701, 0
      %v876 = vsel %vm808, %v703, 0
      %v879 = vsel %vm808, %v705, 0
      %v882 = vsel %vm808, %v707, 0
      %v885 = vsel %vm808, %v709, 0
      %v888 = vsel %vm808, %v711, 0
      %v891 = vsel %vm808, %v713, 0
      %v894 = vsel %vm808, %v715, 0
      %v897 = vsel %vm808, %v717, 0
      %v900 = vsel %vm808, %v719, 0
      %v903 = vsel %vm808, %v721, 0
      %905 = vmatprep.subr.bf16.mxu0 0
      %906 = vmatpush1.bf16.msra.mxu0 %v790
      %907 = vmatprep.subr.bf16.mxu0 0
      %908 = vmatpush1.bf16.msra.mxu0 %v791
      %909 = vmatprep.subr.bf16.mxu0 0
      %910 = vmatpush1.bf16.msra.mxu0 %v792
      %911 = vmatprep.subr.bf16.mxu0 0
      %912 = vmatpush1.bf16.msra.mxu0 %v793
      %913 = vmatprep.subr.bf16.mxu0 0
      %914 = vmatpush1.bf16.msra.mxu0 %v794
      %915 = vmatprep.subr.bf16.mxu0 0
      %916 = vmatpush1.bf16.msra.mxu0 %v795
      %917 = vmatprep.subr.bf16.mxu0 0
      %918 = vmatpush1.bf16.msra.mxu0 %v796
      %919 = vmatprep.subr.bf16.mxu0 0
      %920 = vmatpush1.bf16.msra.mxu0 %v797
      %921 = vmatprep.subr.bf16.mxu0 0
      %922 = vmatpush1.bf16.msra.mxu0 %v798
      %923 = vmatprep.subr.bf16.mxu0 0
      %924 = vmatpush1.bf16.msra.mxu0 0
      %925 = vmatprep.subr.bf16.mxu0 0
      %926 = vmatpush1.bf16.msra.mxu0 0
      %927 = vmatprep.subr.bf16.mxu0 0
      %928 = vmatpush1.bf16.msra.mxu0 0
      %929 = vmatprep.subr.bf16.mxu0 0
      %930 = vmatpush1.bf16.msra.mxu0 0
      %931 = vmatprep.subr.bf16.mxu0 0
      %932 = vmatpush1.bf16.msra.mxu0 0
      %933 = vmatprep.subr.bf16.mxu0 0
      %934 = vmatpush1.bf16.msra.mxu0 0
      %935 = vmatprep.subr.bf16.mxu0 0
      %936 = vmatpush1.bf16.msra.mxu0 0
      %937 = vmatprep.mubr.bf16.mxu0 %v810
      %938 = vmatmul.mubr.bf16.gmra.mrb[0].mxu0 %v658
      %v939 = vpop.f32.mrb[0].mxu0
      %v940 = vadd.f32 %v402, %v939
      %v941 = vpop.f32.mrb[0].mxu0
      %v942 = vpop.f32.mrb[0].mxu0
      %v943 = vadd.f32 %v403, %v942
      %v944 = vpop.f32.mrb[0].mxu0
      %945 = vmatprep.mubr.bf16.mxu0 %v813
      %946 = vmatmul.mubr.bf16.gmra.mrb[0].mxu0 %v660
      %v947 = vpop.f32.mrb[0].mxu0
      %v948 = vadd.f32 %v404, %v947
      %v949 = vpop.f32.mrb[0].mxu0
      %v950 = vpop.f32.mrb[0].mxu0
      %v951 = vadd.f32 %v405, %v950
      %v952 = vpop.f32.mrb[0].mxu0
      %953 = vmatprep.mubr.bf16.mxu0 %v816
      %954 = vmatmul.mubr.bf16.gmra.mrb[0].mxu0 %v662
      %v955 = vpop.f32.mrb[0].mxu0
      %v956 = vadd.f32 %v406, %v955
      %v957 = vpop.f32.mrb[0].mxu0
      %v958 = vpop.f32.mrb[0].mxu0
      %v959 = vadd.f32 %v407, %v958
      %v960 = vpop.f32.mrb[0].mxu0
      %961 = vmatprep.mubr.bf16.mxu0 %v819
      %962 = vmatmul.mubr.bf16.gmra.mrb[0].mxu0 %v664
      %v963 = vpop.f32.mrb[0].mxu0
      %v964 = vadd.f32 %v408, %v963
      %v965 = vpop.f32.mrb[0].mxu0
      %v966 = vpop.f32.mrb[0].mxu0
      %v967 = vadd.f32 %v409, %v966
      %v968 = vpop.f32.mrb[0].mxu0
      %969 = vmatprep.mubr.bf16.mxu0 %v822
      %970 = vmatmul.mubr.bf16.gmra.mrb[0].mxu0 %v666
      %v971 = vpop.f32.mrb[0].mxu0
      %v972 = vadd.f32 %v410, %v971
      %v973 = vpop.f32.mrb[0].mxu0
      %v974 = vpop.f32.mrb[0].mxu0
      %v975 = vadd.f32 %v411, %v974
      %v976 = vpop.f32.mrb[0].mxu0
      %977 = vmatprep.mubr.bf16.mxu0 %v825
      %978 = vmatmul.mubr.bf16.gmra.mrb[0].mxu0 %v668
      %v979 = vpop.f32.mrb[0].mxu0
      %v980 = vadd.f32 %v412, %v979
      %v981 = vpop.f32.mrb[0].mxu0
      %v982 = vpop.f32.mrb[0].mxu0
      %v983 = vadd.f32 %v413, %v982
      %v984 = vpop.f32.mrb[0].mxu0
      %985 = vmatprep.mubr.bf16.mxu0 %v828
      %986 = vmatmul.mubr.bf16.gmra.mrb[0].mxu0 %v670
      %v987 = vpop.f32.mrb[0].mxu0
      %v988 = vadd.f32 %v414, %v987
      %v989 = vpop.f32.mrb[0].mxu0
      %v990 = vpop.f32.mrb[0].mxu0
      %v991 = vadd.f32 %v415, %v990
      %v992 = vpop.f32.mrb[0].mxu0
      %993 = vmatprep.mubr.bf16.mxu0 %v831
      %994 = vmatmul.mubr.bf16.gmra.mrb[0].mxu0 %v672
      %v995 = vpop.f32.mrb[0].mxu0
      %v996 = vadd.f32 %v416, %v995
      %v997 = vpop.f32.mrb[0].mxu0
      %v998 = vpop.f32.mrb[0].mxu0
      %v999 = vadd.f32 %v417, %v998
      %v1000 = vpop.f32.mrb[0].mxu0
      %1001 = vmatprep.mubr.bf16.mxu0 %v834
      %1002 = vmatmul.mubr.bf16.gmra.mrb[0].mxu0 %v674
      %v1003 = vpop.f32.mrb[0].mxu0
      %v1004 = vadd.f32 %v418, %v1003
      %v1005 = vpop.f32.mrb[0].mxu0
      %v1006 = vpop.f32.mrb[0].mxu0
      %v1007 = vadd.f32 %v419, %v1006
      %v1008 = vpop.f32.mrb[0].mxu0
      %1009 = vmatprep.mubr.bf16.mxu0 %v837
      %1010 = vmatmul.mubr.bf16.gmra.mrb[0].mxu0 %v676
      %v1011 = vpop.f32.mrb[0].mxu0
      %v1012 = vadd.f32 %v420, %v1011
      %v1013 = vpop.f32.mrb[0].mxu0
      %v1014 = vpop.f32.mrb[0].mxu0
      %v1015 = vadd.f32 %v421, %v1014
      %v1016 = vpop.f32.mrb[0].mxu0
      %1017 = vmatprep.mubr.bf16.mxu0 %v840
      %1018 = vmatmul.mubr.bf16.gmra.mrb[0].mxu0 %v678
      %v1019 = vpop.f32.mrb[0].mxu0
      %v1020 = vadd.f32 %v422, %v1019
      %v1021 = vpop.f32.mrb[0].mxu0
      %v1022 = vpop.f32.mrb[0].mxu0
      %v1023 = vadd.f32 %v423, %v1022
      %v1024 = vpop.f32.mrb[0].mxu0
      %1025 = vmatprep.mubr.bf16.mxu0 %v843
      %1026 = vmatmul.mubr.bf16.gmra.mrb[0].mxu0 %v680
      %v1027 = vpop.f32.mrb[0].mxu0
      %v1028 = vadd.f32 %v424, %v1027
      %v1029 = vpop.f32.mrb[0].mxu0
      %v1030 = vpop.f32.mrb[0].mxu0
      %v1031 = vadd.f32 %v425, %v1030
      %v1032 = vpop.f32.mrb[0].mxu0
      %1033 = vmatprep.mubr.bf16.mxu0 %v846
      %1034 = vmatmul.mubr.bf16.gmra.mrb[0].mxu0 %v682
      %v1035 = vpop.f32.mrb[0].mxu0
      %v1036 = vadd.f32 %v426, %v1035
      %v1037 = vpop.f32.mrb[0].mxu0
      %v1038 = vpop.f32.mrb[0].mxu0
      %v1039 = vadd.f32 %v427, %v1038
      %v1040 = vpop.f32.mrb[0].mxu0
      %1041 = vmatprep.mubr.bf16.mxu0 %v849
      %1042 = vmatmul.mubr.bf16.gmra.mrb[0].mxu0 %v684
      %v1043 = vpop.f32.mrb[0].mxu0
      %v1044 = vadd.f32 %v428, %v1043
      %v1045 = vpop.f32.mrb[0].mxu0
      %v1046 = vpop.f32.mrb[0].mxu0
      %v1047 = vadd.f32 %v429, %v1046
      %v1048 = vpop.f32.mrb[0].mxu0
      %1049 = vmatprep.mubr.bf16.mxu0 %v852
      %1050 = vmatmul.mubr.bf16.gmra.mrb[0].mxu0 %v686
      %v1051 = vpop.f32.mrb[0].mxu0
      %v1052 = vadd.f32 %v430, %v1051
      %v1053 = vpop.f32.mrb[0].mxu0
      %v1054 = vpop.f32.mrb[0].mxu0
      %v1055 = vadd.f32 %v431, %v1054
      %v1056 = vpop.f32.mrb[0].mxu0
      %1057 = vmatprep.mubr.bf16.mxu0 %v855
      %1058 = vmatmul.mubr.bf16.gmra.mrb[0].mxu0 %v688
      %v1059 = vpop.f32.mrb[0].mxu0
      %v1060 = vadd.f32 %v432, %v1059
      %v1061 = vpop.f32.mrb[0].mxu0
      %v1062 = vpop.f32.mrb[0].mxu0
      %v1063 = vadd.f32 %v433, %v1062
      %v1064 = vpop.f32.mrb[0].mxu0
      %1065 = vmatprep.mubr.bf16.mxu0 %v858
      %1066 = vmatmul.mubr.bf16.gmra.mrb[0].mxu0 %v690
      %v1067 = vpop.f32.mrb[0].mxu0
      %v1068 = vadd.f32 %v434, %v1067
      %v1069 = vpop.f32.mrb[0].mxu0
      %v1070 = vpop.f32.mrb[0].mxu0
      %v1071 = vadd.f32 %v435, %v1070
      %v1072 = vpop.f32.mrb[0].mxu0
      %1073 = vmatprep.mubr.bf16.mxu0 %v861
      %1074 = vmatmul.mubr.bf16.gmra.mrb[0].mxu0 %v692
      %v1075 = vpop.f32.mrb[0].mxu0
      %v1076 = vadd.f32 %v436, %v1075
      %v1077 = vpop.f32.mrb[0].mxu0
      %v1078 = vpop.f32.mrb[0].mxu0
      %v1079 = vadd.f32 %v437, %v1078
      %v1080 = vpop.f32.mrb[0].mxu0
      %1081 = vmatprep.mubr.bf16.mxu0 %v864
      %1082 = vmatmul.mubr.bf16.gmra.mrb[0].mxu0 %v694
      %v1083 = vpop.f32.mrb[0].mxu0
      %v1084 = vadd.f32 %v438, %v1083
      %v1085 = vpop.f32.mrb[0].mxu0
      %v1086 = vpop.f32.mrb[0].mxu0
      %v1087 = vadd.f32 %v439, %v1086
      %v1088 = vpop.f32.mrb[0].mxu0
      %1089 = vmatprep.mubr.bf16.mxu0 %v867
      %1090 = vmatmul.mubr.bf16.gmra.mrb[0].mxu0 %v696
      %v1091 = vpop.f32.mrb[0].mxu0
      %v1092 = vadd.f32 %v440, %v1091
      %v1093 = vpop.f32.mrb[0].mxu0
      %v1094 = vpop.f32.mrb[0].mxu0
      %v1095 = vadd.f32 %v441, %v1094
      %v1096 = vpop.f32.mrb[0].mxu0
      %1097 = vmatprep.mubr.bf16.mxu0 %v870
      %1098 = vmatmul.mubr.bf16.gmra.mrb[0].mxu0 %v698
      %v1099 = vpop.f32.mrb[0].mxu0
      %v1100 = vadd.f32 %v442, %v1099
      %v1101 = vpop.f32.mrb[0].mxu0
      %v1102 = vpop.f32.mrb[0].mxu0
      %v1103 = vadd.f32 %v443, %v1102
      %v1104 = vpop.f32.mrb[0].mxu0
      %1105 = vmatprep.mubr.bf16.mxu0 %v873
      %1106 = vmatmul.mubr.bf16.gmra.mrb[0].mxu0 %v700
      %v1107 = vpop.f32.mrb[0].mxu0
      %v1108 = vadd.f32 %v444, %v1107
      %v1109 = vpop.f32.mrb[0].mxu0
      %v1110 = vpop.f32.mrb[0].mxu0
      %v1111 = vadd.f32 %v445, %v1110
      %v1112 = vpop.f32.mrb[0].mxu0
      %1113 = vmatprep.mubr.bf16.mxu0 %v876
      %1114 = vmatmul.mubr.bf16.gmra.mrb[0].mxu0 %v702
      %v1115 = vpop.f32.mrb[0].mxu0
      %v1116 = vadd.f32 %v446, %v1115
      %v1117 = vpop.f32.mrb[0].mxu0
      %v1118 = vpop.f32.mrb[0].mxu0
      %v1119 = vadd.f32 %v447, %v1118
      %v1120 = vpop.f32.mrb[0].mxu0
      %1121 = vmatprep.mubr.bf16.mxu0 %v879
      %1122 = vmatmul.mubr.bf16.gmra.mrb[0].mxu0 %v704
      %v1123 = vpop.f32.mrb[0].mxu0
      %v1124 = vadd.f32 %v448, %v1123
      %v1125 = vpop.f32.mrb[0].mxu0
      %v1126 = vpop.f32.mrb[0].mxu0
      %v1127 = vadd.f32 %v449, %v1126
      %v1128 = vpop.f32.mrb[0].mxu0
      %1129 = vmatprep.mubr.bf16.mxu0 %v882
      %1130 = vmatmul.mubr.bf16.gmra.mrb[0].mxu0 %v706
      %v1131 = vpop.f32.mrb[0].mxu0
      %v1132 = vadd.f32 %v450, %v1131
      %v1133 = vpop.f32.mrb[0].mxu0
      %v1134 = vpop.f32.mrb[0].mxu0
      %v1135 = vadd.f32 %v451, %v1134
      %v1136 = vpop.f32.mrb[0].mxu0
      %1137 = vmatprep.mubr.bf16.mxu0 %v885
      %1138 = vmatmul.mubr.bf16.gmra.mrb[0].mxu0 %v708
      %v1139 = vpop.f32.mrb[0].mxu0
      %v1140 = vadd.f32 %v452, %v1139
      %v1141 = vpop.f32.mrb[0].mxu0
      %v1142 = vpop.f32.mrb[0].mxu0
      %v1143 = vadd.f32 %v453, %v1142
      %v1144 = vpop.f32.mrb[0].mxu0
      %1145 = vmatprep.mubr.bf16.mxu0 %v888
      %1146 = vmatmul.mubr.bf16.gmra.mrb[0].mxu0 %v710
      %v1147 = vpop.f32.mrb[0].mxu0
      %v1148 = vadd.f32 %v454, %v1147
      %v1149 = vpop.f32.mrb[0].mxu0
      %v1150 = vpop.f32.mrb[0].mxu0
      %v1151 = vadd.f32 %v455, %v1150
      %v1152 = vpop.f32.mrb[0].mxu0
      %1153 = vmatprep.mubr.bf16.mxu0 %v891
      %1154 = vmatmul.mubr.bf16.gmra.mrb[0].mxu0 %v712
      %v1155 = vpop.f32.mrb[0].mxu0
      %v1156 = vadd.f32 %v456, %v1155
      %v1157 = vpop.f32.mrb[0].mxu0
      %v1158 = vpop.f32.mrb[0].mxu0
      %v1159 = vadd.f32 %v457, %v1158
      %v1160 = vpop.f32.mrb[0].mxu0
      %1161 = vmatprep.mubr.bf16.mxu0 %v894
      %1162 = vmatmul.mubr.bf16.gmra.mrb[0].mxu0 %v714
      %v1163 = vpop.f32.mrb[0].mxu0
      %v1164 = vadd.f32 %v458, %v1163
      %v1165 = vpop.f32.mrb[0].mxu0
      %v1166 = vpop.f32.mrb[0].mxu0
      %v1167 = vadd.f32 %v459, %v1166
      %v1168 = vpop.f32.mrb[0].mxu0
      %1169 = vmatprep.mubr.bf16.mxu0 %v897
      %1170 = vmatmul.mubr.bf16.gmra.mrb[0].mxu0 %v716
      %v1171 = vpop.f32.mrb[0].mxu0
      %v1172 = vadd.f32 %v460, %v1171
      %v1173 = vpop.f32.mrb[0].mxu0
      %v1174 = vpop.f32.mrb[0].mxu0
      %v1175 = vadd.f32 %v461, %v1174
      %v1176 = vpop.f32.mrb[0].mxu0
      %1177 = vmatprep.mubr.bf16.mxu0 %v900
      %1178 = vmatmul.mubr.bf16.gmra.mrb[0].mxu0 %v718
      %v1179 = vpop.f32.mrb[0].mxu0
      %v1180 = vadd.f32 %v462, %v1179
      %v1181 = vpop.f32.mrb[0].mxu0
      %v1182 = vpop.f32.mrb[0].mxu0
      %v1183 = vadd.f32 %v463, %v1182
      %v1184 = vpop.f32.mrb[0].mxu0
      %1185 = vmatprep.mubr.bf16.mxu0 %v903
      %1186 = vmatmul.mubr.bf16.gmra.mrb[0].mxu0 %v720
      %v1187 = vpop.f32.mrb[0].mxu0
      %v1188 = vadd.f32 %v464, %v1187
      %v1189 = vpop.f32.mrb[0].mxu0
      %v1190 = vpop.f32.mrb[0].mxu0
      %v1191 = vadd.f32 %v465, %v1190
      %v1192 = vpop.f32.mrb[0].mxu0
      %1193 = vdwg.mxu0
      %v1194 = vpack.c.bf16 %v943, %v940
      %v1195 = vpack.c.bf16 %v951, %v948
      %v1196 = vpack.c.bf16 %v959, %v956
      %v1197 = vpack.c.bf16 %v967, %v964
      %v1198 = vpack.c.bf16 %v975, %v972
      %v1199 = vpack.c.bf16 %v983, %v980
      %v1200 = vpack.c.bf16 %v991, %v988
      %v1201 = vpack.c.bf16 %v999, %v996
      %v1202 = vpack.c.bf16 %v1007, %v1004
      %v1203 = vpack.c.bf16 %v1015, %v1012
      %v1204 = vpack.c.bf16 %v1023, %v1020
      %v1205 = vpack.c.bf16 %v1031, %v1028
      %v1206 = vpack.c.bf16 %v1039, %v1036
      %v1207 = vpack.c.bf16 %v1047, %v1044
      %v1208 = vpack.c.bf16 %v1055, %v1052
      %v1209 = vpack.c.bf16 %v1063, %v1060
      %v1210 = vpack.c.bf16 %v1071, %v1068
      %v1211 = vpack.c.bf16 %v1079, %v1076
      %v1212 = vpack.c.bf16 %v1087, %v1084
      %v1213 = vpack.c.bf16 %v1095, %v1092
      %v1214 = vpack.c.bf16 %v1103, %v1100
      %v1215 = vpack.c.bf16 %v1111, %v1108
      %v1216 = vpack.c.bf16 %v1119, %v1116
      %v1217 = vpack.c.bf16 %v1127, %v1124
      %v1218 = vpack.c.bf16 %v1135, %v1132
      %v1219 = vpack.c.bf16 %v1143, %v1140
      %v1220 = vpack.c.bf16 %v1151, %v1148
      %v1221 = vpack.c.bf16 %v1159, %v1156
      %v1222 = vpack.c.bf16 %v1167, %v1164
      %v1223 = vpack.c.bf16 %v1175, %v1172
      %v1224 = vpack.c.bf16 %v1183, %v1180
      %v1225 = vpack.c.bf16 %v1191, %v1188
      %v1258 = vunpack.c.l.b16 %v1194
      %v1259 = vunpack.c.h.b16 %v1194
      %v1260 = vunpack.c.l.b16 %v1195
      %v1261 = vunpack.c.h.b16 %v1195
      %v1262 = vunpack.c.l.b16 %v1196
      %v1263 = vunpack.c.h.b16 %v1196
      %v1264 = vunpack.c.l.b16 %v1197
      %v1265 = vunpack.c.h.b16 %v1197
      %v1266 = vunpack.c.l.b16 %v1198
      %v1267 = vunpack.c.h.b16 %v1198
      %v1268 = vunpack.c.l.b16 %v1199
      %v1269 = vunpack.c.h.b16 %v1199
      %v1270 = vunpack.c.l.b16 %v1200
      %v1271 = vunpack.c.h.b16 %v1200
      %v1272 = vunpack.c.l.b16 %v1201
      %v1273 = vunpack.c.h.b16 %v1201
      %v1274 = vunpack.c.l.b16 %v1202
      %v1275 = vunpack.c.h.b16 %v1202
      %v1276 = vunpack.c.l.b16 %v1203
      %v1277 = vunpack.c.h.b16 %v1203
      %v1278 = vunpack.c.l.b16 %v1204
      %v1279 = vunpack.c.h.b16 %v1204
      %v1280 = vunpack.c.l.b16 %v1205
      %v1281 = vunpack.c.h.b16 %v1205
      %v1282 = vunpack.c.l.b16 %v1206
      %v1283 = vunpack.c.h.b16 %v1206
      %v1284 = vunpack.c.l.b16 %v1207
      %v1285 = vunpack.c.h.b16 %v1207
      %v1286 = vunpack.c.l.b16 %v1208
      %v1287 = vunpack.c.h.b16 %v1208
      %v1288 = vunpack.c.l.b16 %v1209
      %v1289 = vunpack.c.h.b16 %v1209
      %v1290 = vunpack.c.l.b16 %v1210
      %v1291 = vunpack.c.h.b16 %v1210
      %v1292 = vunpack.c.l.b16 %v1211
      %v1293 = vunpack.c.h.b16 %v1211
      %v1294 = vunpack.c.l.b16 %v1212
      %v1295 = vunpack.c.h.b16 %v1212
      %v1296 = vunpack.c.l.b16 %v1213
      %v1297 = vunpack.c.h.b16 %v1213
      %v1298 = vunpack.c.l.b16 %v1214
      %v1299 = vunpack.c.h.b16 %v1214
      %v1300 = vunpack.c.l.b16 %v1215
      %v1301 = vunpack.c.h.b16 %v1215
      %v1302 = vunpack.c.l.b16 %v1216
      %v1303 = vunpack.c.h.b16 %v1216
      %v1304 = vunpack.c.l.b16 %v1217
      %v1305 = vunpack.c.h.b16 %v1217
      %v1306 = vunpack.c.l.b16 %v1218
      %v1307 = vunpack.c.h.b16 %v1218
      %v1308 = vunpack.c.l.b16 %v1219
      %v1309 = vunpack.c.h.b16 %v1219
      %v1310 = vunpack.c.l.b16 %v1220
      %v1311 = vunpack.c.h.b16 %v1220
      %v1312 = vunpack.c.l.b16 %v1221
      %v1313 = vunpack.c.h.b16 %v1221
      %v1314 = vunpack.c.l.b16 %v1222
      %v1315 = vunpack.c.h.b16 %v1222
      %v1316 = vunpack.c.l.b16 %v1223
      %v1317 = vunpack.c.h.b16 %v1223
      %v1318 = vunpack.c.l.b16 %v1224
      %v1319 = vunpack.c.h.b16 %v1224
      %v1320 = vunpack.c.l.b16 %v1225
      %v1321 = vunpack.c.h.b16 %v1225
      %v1322 = vpack.c.b16 %v1258, %v1258
      %v1323 = vpack.c.b16 %v1259, %v1259
      %v1324 = vpack.c.b16 %v1260, %v1260
      %v1325 = vpack.c.b16 %v1261, %v1261
      %v1326 = vpack.c.b16 %v1262, %v1262
      %v1327 = vpack.c.b16 %v1263, %v1263
      %v1328 = vpack.c.b16 %v1264, %v1264
      %v1329 = vpack.c.b16 %v1265, %v1265
      %v1330 = vpack.c.b16 %v1266, %v1266
      %v1331 = vpack.c.b16 %v1267, %v1267
      %v1332 = vpack.c.b16 %v1268, %v1268
      %v1333 = vpack.c.b16 %v1269, %v1269
      %v1334 = vpack.c.b16 %v1270, %v1270
      %v1335 = vpack.c.b16 %v1271, %v1271
      %v1336 = vpack.c.b16 %v1272, %v1272
      %v1337 = vpack.c.b16 %v1273, %v1273
      %v1338 = vpack.c.b16 %v1274, %v1274
      %v1339 = vpack.c.b16 %v1275, %v1275
      %v1340 = vpack.c.b16 %v1276, %v1276
      %v1341 = vpack.c.b16 %v1277, %v1277
      %v1342 = vpack.c.b16 %v1278, %v1278
      %v1343 = vpack.c.b16 %v1279, %v1279
      %v1344 = vpack.c.b16 %v1280, %v1280
      %v1345 = vpack.c.b16 %v1281, %v1281
      %v1346 = vpack.c.b16 %v1282, %v1282
      %v1347 = vpack.c.b16 %v1283, %v1283
      %v1348 = vpack.c.b16 %v1284, %v1284
      %v1349 = vpack.c.b16 %v1285, %v1285
      %v1350 = vpack.c.b16 %v1286, %v1286
      %v1351 = vpack.c.b16 %v1287, %v1287
      %v1352 = vpack.c.b16 %v1288, %v1288
      %v1353 = vpack.c.b16 %v1289, %v1289
      %v1354 = vpack.c.b16 %v1290, %v1290
      %v1355 = vpack.c.b16 %v1291, %v1291
      %v1356 = vpack.c.b16 %v1292, %v1292
      %v1357 = vpack.c.b16 %v1293, %v1293
      %v1358 = vpack.c.b16 %v1294, %v1294
      %v1359 = vpack.c.b16 %v1295, %v1295
      %v1360 = vpack.c.b16 %v1296, %v1296
      %v1361 = vpack.c.b16 %v1297, %v1297
      %v1362 = vpack.c.b16 %v1298, %v1298
      %v1363 = vpack.c.b16 %v1299, %v1299
      %v1364 = vpack.c.b16 %v1300, %v1300
      %v1365 = vpack.c.b16 %v1301, %v1301
      %v1366 = vpack.c.b16 %v1302, %v1302
      %v1367 = vpack.c.b16 %v1303, %v1303
      %v1368 = vpack.c.b16 %v1304, %v1304
      %v1369 = vpack.c.b16 %v1305, %v1305
      %v1370 = vpack.c.b16 %v1306, %v1306
      %v1371 = vpack.c.b16 %v1307, %v1307
      %v1372 = vpack.c.b16 %v1308, %v1308
      %v1373 = vpack.c.b16 %v1309, %v1309
      %v1374 = vpack.c.b16 %v1310, %v1310
      %v1375 = vpack.c.b16 %v1311, %v1311
      %v1376 = vpack.c.b16 %v1312, %v1312
      %v1377 = vpack.c.b16 %v1313, %v1313
      %v1378 = vpack.c.b16 %v1314, %v1314
      %v1379 = vpack.c.b16 %v1315, %v1315
      %v1380 = vpack.c.b16 %v1316, %v1316
      %v1381 = vpack.c.b16 %v1317, %v1317
      %v1382 = vpack.c.b16 %v1318, %v1318
      %v1383 = vpack.c.b16 %v1319, %v1319
      %v1384 = vpack.c.b16 %v1320, %v1320
      %v1385 = vpack.c.b16 %v1321, %v1321
      %vm1450 = vcmask 125952
      %1451 = vst.msk [vmem:[%s246] sm:$0xf] %vm1450, %v1322
      %1452 = vst.msk [vmem:[%s246 + $0x4] sm:$0xf] %vm1450, %v1323
      %1453 = vst.msk [vmem:[%s246 + $0x8] sm:$0xf] %vm1450, %v1324
      %1454 = vst.msk [vmem:[%s246 + $0xc] sm:$0xf] %vm1450, %v1325
      %1455 = vst.msk [vmem:[%s246 + $0x10] sm:$0xf] %vm1450, %v1326
      %1456 = vst.msk [vmem:[%s246 + $0x14] sm:$0xf] %vm1450, %v1327
      %1457 = vst.msk [vmem:[%s246 + $0x18] sm:$0xf] %vm1450, %v1328
      %1458 = vst.msk [vmem:[%s246 + $0x1c] sm:$0xf] %vm1450, %v1329
      %1459 = vst.msk [vmem:[%s246 + $0x20] sm:$0xf] %vm1450, %v1330
      %1460 = vst.msk [vmem:[%s246 + $0x24] sm:$0xf] %vm1450, %v1331
      %1461 = vst.msk [vmem:[%s246 + $0x28] sm:$0xf] %vm1450, %v1332
      %1462 = vst.msk [vmem:[%s246 + $0x2c] sm:$0xf] %vm1450, %v1333
      %1463 = vst.msk [vmem:[%s246 + $0x30] sm:$0xf] %vm1450, %v1334
      %1464 = vst.msk [vmem:[%s246 + $0x34] sm:$0xf] %vm1450, %v1335
      %1465 = vst.msk [vmem:[%s246 + $0x38] sm:$0xf] %vm1450, %v1336
      %1466 = vst.msk [vmem:[%s246 + $0x3c] sm:$0xf] %vm1450, %v1337
      %1467 = vst.msk [vmem:[%s246 + $0x40] sm:$0xf] %vm1450, %v1338
      %1468 = vst.msk [vmem:[%s246 + $0x44] sm:$0xf] %vm1450, %v1339
      %1469 = vst.msk [vmem:[%s246 + $0x48] sm:$0xf] %vm1450, %v1340
      %1470 = vst.msk [vmem:[%s246 + $0x4c] sm:$0xf] %vm1450, %v1341
      %1471 = vst.msk [vmem:[%s246 + $0x50] sm:$0xf] %vm1450, %v1342
      %1472 = vst.msk [vmem:[%s246 + $0x54] sm:$0xf] %vm1450, %v1343
      %1473 = vst.msk [vmem:[%s246 + $0x58] sm:$0xf] %vm1450, %v1344
      %1474 = vst.msk [vmem:[%s246 + $0x5c] sm:$0xf] %vm1450, %v1345
      %1475 = vst.msk [vmem:[%s246 + $0x60] sm:$0xf] %vm1450, %v1346
      %1476 = vst.msk [vmem:[%s246 + $0x64] sm:$0xf] %vm1450, %v1347
      %1477 = vst.msk [vmem:[%s246 + $0x68] sm:$0xf] %vm1450, %v1348
      %1478 = vst.msk [vmem:[%s246 + $0x6c] sm:$0xf] %vm1450, %v1349
      %1479 = vst.msk [vmem:[%s246 + $0x70] sm:$0xf] %vm1450, %v1350
      %1480 = vst.msk [vmem:[%s246 + $0x74] sm:$0xf] %vm1450, %v1351
      %1481 = vst.msk [vmem:[%s246 + $0x78] sm:$0xf] %vm1450, %v1352
      %1482 = vst.msk [vmem:[%s246 + $0x7c] sm:$0xf] %vm1450, %v1353
      %1483 = vst.msk [vmem:[%s246 + $0x80] sm:$0xf] %vm1450, %v1354
      %1484 = vst.msk [vmem:[%s246 + $0x84] sm:$0xf] %vm1450, %v1355
      %1485 = vst.msk [vmem:[%s246 + $0x88] sm:$0xf] %vm1450, %v1356
      %1486 = vst.msk [vmem:[%s246 + $0x8c] sm:$0xf] %vm1450, %v1357
      %1487 = vst.msk [vmem:[%s246 + $0x90] sm:$0xf] %vm1450, %v1358
      %1488 = vst.msk [vmem:[%s246 + $0x94] sm:$0xf] %vm1450, %v1359
      %1489 = vst.msk [vmem:[%s246 + $0x98] sm:$0xf] %vm1450, %v1360
      %1490 = vst.msk [vmem:[%s246 + $0x9c] sm:$0xf] %vm1450, %v1361
      %1491 = vst.msk [vmem:[%s246 + $0xa0] sm:$0xf] %vm1450, %v1362
      %1492 = vst.msk [vmem:[%s246 + $0xa4] sm:$0xf] %vm1450, %v1363
      %1493 = vst.msk [vmem:[%s246 + $0xa8] sm:$0xf] %vm1450, %v1364
      %1494 = vst.msk [vmem:[%s246 + $0xac] sm:$0xf] %vm1450, %v1365
      %1495 = vst.msk [vmem:[%s246 + $0xb0] sm:$0xf] %vm1450, %v1366
      %1496 = vst.msk [vmem:[%s246 + $0xb4] sm:$0xf] %vm1450, %v1367
      %1497 = vst.msk [vmem:[%s246 + $0xb8] sm:$0xf] %vm1450, %v1368
      %1498 = vst.msk [vmem:[%s246 + $0xbc] sm:$0xf] %vm1450, %v1369
      %1499 = vst.msk [vmem:[%s246 + $0xc0] sm:$0xf] %vm1450, %v1370
      %1500 = vst.msk [vmem:[%s246 + $0xc4] sm:$0xf] %vm1450, %v1371
      %1501 = vst.msk [vmem:[%s246 + $0xc8] sm:$0xf] %vm1450, %v1372
      %1502 = vst.msk [vmem:[%s246 + $0xcc] sm:$0xf] %vm1450, %v1373
      %1503 = vst.msk [vmem:[%s246 + $0xd0] sm:$0xf] %vm1450, %v1374
      %1504 = vst.msk [vmem:[%s246 + $0xd4] sm:$0xf] %vm1450, %v1375
      %1505 = vst.msk [vmem:[%s246 + $0xd8] sm:$0xf] %vm1450, %v1376
      %1506 = vst.msk [vmem:[%s246 + $0xdc] sm:$0xf] %vm1450, %v1377
      %1507 = vst.msk [vmem:[%s246 + $0xe0] sm:$0xf] %vm1450, %v1378
      %1508 = vst.msk [vmem:[%s246 + $0xe4] sm:$0xf] %vm1450, %v1379
      %1509 = vst.msk [vmem:[%s246 + $0xe8] sm:$0xf] %vm1450, %v1380
      %1510 = vst.msk [vmem:[%s246 + $0xec] sm:$0xf] %vm1450, %v1381
      %1511 = vst.msk [vmem:[%s246 + $0xf0] sm:$0xf] %vm1450, %v1382
      %1512 = vst.msk [vmem:[%s246 + $0xf4] sm:$0xf] %vm1450, %v1383
      %1513 = vst.msk [vmem:[%s246 + $0xf8] sm:$0xf] %vm1450, %v1384
      %1514 = vst.msk [vmem:[%s246 + $0xfc] sm:$0xf] %vm1450, %v1385
      %v1515 = vld [vmem:[%s4] sm:$0x1]
      %v1516 = vsel %vm808, %v940, 0.0
      %v1517 = vsel %vm808, %v943, 0.0
      %v1518 = vadd.f32 %v1516, %v1517
      %v1519 = vsel %vm808, %v948, 0.0
      %v1520 = vadd.f32 %v1518, %v1519
      %v1521 = vsel %vm808, %v951, 0.0
      %v1522 = vadd.f32 %v1520, %v1521
      %v1523 = vsel %vm808, %v956, 0.0
      %v1524 = vadd.f32 %v1522, %v1523
      %v1525 = vsel %vm808, %v959, 0.0
      %v1526 = vadd.f32 %v1524, %v1525
      %v1527 = vsel %vm808, %v964, 0.0
      %v1528 = vadd.f32 %v1526, %v1527
      %v1529 = vsel %vm808, %v967, 0.0
      %v1530 = vadd.f32 %v1528, %v1529
      %v1531 = vsel %vm808, %v972, 0.0
      %v1532 = vadd.f32 %v1530, %v1531
      %v1533 = vsel %vm808, %v975, 0.0
      %v1534 = vadd.f32 %v1532, %v1533
      %v1535 = vsel %vm808, %v980, 0.0
      %v1536 = vadd.f32 %v1534, %v1535
      %v1537 = vsel %vm808, %v983, 0.0
      %v1538 = vadd.f32 %v1536, %v1537
      %v1539 = vsel %vm808, %v988, 0.0
      %v1540 = vadd.f32 %v1538, %v1539
      %v1541 = vsel %vm808, %v991, 0.0
      %v1542 = vadd.f32 %v1540, %v1541
      %v1543 = vsel %vm808, %v996, 0.0
      %v1544 = vadd.f32 %v1542, %v1543
      %v1545 = vsel %vm808, %v999, 0.0
      %v1546 = vadd.f32 %v1544, %v1545
      %v1547 = vsel %vm808, %v1004, 0.0
      %v1548 = vadd.f32 %v1546, %v1547
      %v1549 = vsel %vm808, %v1007, 0.0
      %v1550 = vadd.f32 %v1548, %v1549
      %v1551 = vsel %vm808, %v1012, 0.0
      %v1552 = vadd.f32 %v1550, %v1551
      %v1553 = vsel %vm808, %v1015, 0.0
      %v1554 = vadd.f32 %v1552, %v1553
      %v1555 = vsel %vm808, %v1020, 0.0
      %v1556 = vadd.f32 %v1554, %v1555
      %v1557 = vsel %vm808, %v1023, 0.0
      %v1558 = vadd.f32 %v1556, %v1557
      %v1559 = vsel %vm808, %v1028, 0.0
      %v1560 = vadd.f32 %v1558, %v1559
      %v1561 = vsel %vm808, %v1031, 0.0
      %v1562 = vadd.f32 %v1560, %v1561
      %v1563 = vsel %vm808, %v1036, 0.0
      %v1564 = vadd.f32 %v1562, %v1563
      %v1565 = vsel %vm808, %v1039, 0.0
      %v1566 = vadd.f32 %v1564, %v1565
      %v1567 = vsel %vm808, %v1044, 0.0
      %v1568 = vadd.f32 %v1566, %v1567
      %v1569 = vsel %vm808, %v1047, 0.0
      %v1570 = vadd.f32 %v1568, %v1569
      %v1571 = vsel %vm808, %v1052, 0.0
      %v1572 = vadd.f32 %v1570, %v1571
      %v1573 = vsel %vm808, %v1055, 0.0
      %v1574 = vadd.f32 %v1572, %v1573
      %v1575 = vsel %vm808, %v1060, 0.0
      %v1576 = vadd.f32 %v1574, %v1575
      %v1577 = vsel %vm808, %v1063, 0.0
      %v1578 = vadd.f32 %v1576, %v1577
      %v1579 = vsel %vm808, %v1068, 0.0
      %v1580 = vadd.f32 %v1578, %v1579
      %v1581 = vsel %vm808, %v1071, 0.0
      %v1582 = vadd.f32 %v1580, %v1581
      %v1583 = vsel %vm808, %v1076, 0.0
      %v1584 = vadd.f32 %v1582, %v1583
      %v1585 = vsel %vm808, %v1079, 0.0
      %v1586 = vadd.f32 %v1584, %v1585
      %v1587 = vsel %vm808, %v1084, 0.0
      %v1588 = vadd.f32 %v1586, %v1587
      %v1589 = vsel %vm808, %v1087, 0.0
      %v1590 = vadd.f32 %v1588, %v1589
      %v1591 = vsel %vm808, %v1092, 0.0
      %v1592 = vadd.f32 %v1590, %v1591
      %v1593 = vsel %vm808, %v1095, 0.0
      %v1594 = vadd.f32 %v1592, %v1593
      %v1595 = vsel %vm808, %v1100, 0.0
      %v1596 = vadd.f32 %v1594, %v1595
      %v1597 = vsel %vm808, %v1103, 0.0
      %v1598 = vadd.f32 %v1596, %v1597
      %v1599 = vsel %vm808, %v1108, 0.0
      %v1600 = vadd.f32 %v1598, %v1599
      %v1601 = vsel %vm808, %v1111, 0.0
      %v1602 = vadd.f32 %v1600, %v1601
      %v1603 = vsel %vm808, %v1116, 0.0
      %v1604 = vadd.f32 %v1602, %v1603
      %v1605 = vsel %vm808, %v1119, 0.0
      %v1606 = vadd.f32 %v1604, %v1605
      %v1607 = vsel %vm808, %v1124, 0.0
      %v1608 = vadd.f32 %v1606, %v1607
      %v1609 = vsel %vm808, %v1127, 0.0
      %v1610 = vadd.f32 %v1608, %v1609
      %v1611 = vsel %vm808, %v1132, 0.0
      %v1612 = vadd.f32 %v1610, %v1611
      %v1613 = vsel %vm808, %v1135, 0.0
      %v1614 = vadd.f32 %v1612, %v1613
      %v1615 = vsel %vm808, %v1140, 0.0
      %v1616 = vadd.f32 %v1614, %v1615
      %v1617 = vsel %vm808, %v1143, 0.0
      %v1618 = vadd.f32 %v1616, %v1617
      %v1619 = vsel %vm808, %v1148, 0.0
      %v1620 = vadd.f32 %v1618, %v1619
      %v1621 = vsel %vm808, %v1151, 0.0
      %v1622 = vadd.f32 %v1620, %v1621
      %v1623 = vsel %vm808, %v1156, 0.0
      %v1624 = vadd.f32 %v1622, %v1623
      %v1625 = vsel %vm808, %v1159, 0.0
      %v1626 = vadd.f32 %v1624, %v1625
      %v1627 = vsel %vm808, %v1164, 0.0
      %v1628 = vadd.f32 %v1626, %v1627
      %v1629 = vsel %vm808, %v1167, 0.0
      %v1630 = vadd.f32 %v1628, %v1629
      %v1631 = vsel %vm808, %v1172, 0.0
      %v1632 = vadd.f32 %v1630, %v1631
      %v1633 = vsel %vm808, %v1175, 0.0
      %v1634 = vadd.f32 %v1632, %v1633
      %v1635 = vsel %vm808, %v1180, 0.0
      %v1636 = vadd.f32 %v1634, %v1635
      %v1637 = vsel %vm808, %v1183, 0.0
      %v1638 = vadd.f32 %v1636, %v1637
      %v1639 = vsel %vm808, %v1188, 0.0
      %v1640 = vadd.f32 %v1638, %v1639
      %v1641 = vsel %vm808, %v1191, 0.0
      %v1642 = vadd.f32 %v1640, %v1641
      %v1643 = vrot.slane %v1642, 4
      %v1644 = vadd.f32 %v1642, %v1643
      %v1645 = vrot.slane %v1644, 2
      %v1646 = vadd.f32 %v1644, %v1645
      %v1647 = vrot.slane %v1646, 1
      %v1648 = vadd.f32 %v1646, %v1647
      %v1649 = vadd.f32 %v1515, %v1648
      %vm1650 = vcmask 122880
      %1651 = vst.msk [vmem:[%s4] sm:$0x1] %vm1650, %v1649
      %v1652 = vld [vmem:[%s5] sm:$0x1]
      %v1653 = vmul.f32 %v940, %v940
      %v1654 = vmul.f32 %v943, %v943
      %v1655 = vmul.f32 %v948, %v948
      %v1656 = vmul.f32 %v951, %v951
      %v1657 = vmul.f32 %v956, %v956
      %v1658 = vmul.f32 %v959, %v959
      %v1659 = vmul.f32 %v964, %v964
      %v1660 = vmul.f32 %v967, %v967
      %v1661 = vmul.f32 %v972, %v972
      %v1662 = vmul.f32 %v975, %v975
      %v1663 = vmul.f32 %v980, %v980
      %v1664 = vmul.f32 %v983, %v983
      %v1665 = vmul.f32 %v988, %v988
      %v1666 = vmul.f32 %v991, %v991
      %v1667 = vmul.f32 %v996, %v996
      %v1668 = vmul.f32 %v999, %v999
      %v1669 = vmul.f32 %v1004, %v1004
      %v1670 = vmul.f32 %v1007, %v1007
      %v1671 = vmul.f32 %v1012, %v1012
      %v1672 = vmul.f32 %v1015, %v1015
      %v1673 = vmul.f32 %v1020, %v1020
      %v1674 = vmul.f32 %v1023, %v1023
      %v1675 = vmul.f32 %v1028, %v1028
      %v1676 = vmul.f32 %v1031, %v1031
      %v1677 = vmul.f32 %v1036, %v1036
      %v1678 = vmul.f32 %v1039, %v1039
      %v1679 = vmul.f32 %v1044, %v1044
      %v1680 = vmul.f32 %v1047, %v1047
      %v1681 = vmul.f32 %v1052, %v1052
      %v1682 = vmul.f32 %v1055, %v1055
      %v1683 = vmul.f32 %v1060, %v1060
      %v1684 = vmul.f32 %v1063, %v1063
      %v1685 = vmul.f32 %v1068, %v1068
      %v1686 = vmul.f32 %v1071, %v1071
      %v1687 = vmul.f32 %v1076, %v1076
      %v1688 = vmul.f32 %v1079, %v1079
      %v1689 = vmul.f32 %v1084, %v1084
      %v1690 = vmul.f32 %v1087, %v1087
      %v1691 = vmul.f32 %v1092, %v1092
      %v1692 = vmul.f32 %v1095, %v1095
      %v1693 = vmul.f32 %v1100, %v1100
      %v1694 = vmul.f32 %v1103, %v1103
      %v1695 = vmul.f32 %v1108, %v1108
      %v1696 = vmul.f32 %v1111, %v1111
      %v1697 = vmul.f32 %v1116, %v1116
      %v1698 = vmul.f32 %v1119, %v1119
      %v1699 = vmul.f32 %v1124, %v1124
      %v1700 = vmul.f32 %v1127, %v1127
      %v1701 = vmul.f32 %v1132, %v1132
      %v1702 = vmul.f32 %v1135, %v1135
      %v1703 = vmul.f32 %v1140, %v1140
      %v1704 = vmul.f32 %v1143, %v1143
      %v1705 = vmul.f32 %v1148, %v1148
      %v1706 = vmul.f32 %v1151, %v1151
      %v1707 = vmul.f32 %v1156, %v1156
      %v1708 = vmul.f32 %v1159, %v1159
      %v1709 = vmul.f32 %v1164, %v1164
      %v1710 = vmul.f32 %v1167, %v1167
      %v1711 = vmul.f32 %v1172, %v1172
      %v1712 = vmul.f32 %v1175, %v1175
      %v1713 = vmul.f32 %v1180, %v1180
      %v1714 = vmul.f32 %v1183, %v1183
      %v1715 = vmul.f32 %v1188, %v1188
      %v1716 = vmul.f32 %v1191, %v1191
      %v1717 = vsel %vm808, %v1653, 0.0
      %v1718 = vsel %vm808, %v1654, 0.0
      %v1719 = vadd.f32 %v1717, %v1718
      %v1720 = vsel %vm808, %v1655, 0.0
      %v1721 = vadd.f32 %v1719, %v1720
      %v1722 = vsel %vm808, %v1656, 0.0
      %v1723 = vadd.f32 %v1721, %v1722
      %v1724 = vsel %vm808, %v1657, 0.0
      %v1725 = vadd.f32 %v1723, %v1724
      %v1726 = vsel %vm808, %v1658, 0.0
      %v1727 = vadd.f32 %v1725, %v1726
      %v1728 = vsel %vm808, %v1659, 0.0
      %v1729 = vadd.f32 %v1727, %v1728
      %v1730 = vsel %vm808, %v1660, 0.0
      %v1731 = vadd.f32 %v1729, %v1730
      %v1732 = vsel %vm808, %v1661, 0.0
      %v1733 = vadd.f32 %v1731, %v1732
      %v1734 = vsel %vm808, %v1662, 0.0
      %v1735 = vadd.f32 %v1733, %v1734
      %v1736 = vsel %vm808, %v1663, 0.0
      %v1737 = vadd.f32 %v1735, %v1736
      %v1738 = vsel %vm808, %v1664, 0.0
      %v1739 = vadd.f32 %v1737, %v1738
      %v1740 = vsel %vm808, %v1665, 0.0
      %v1741 = vadd.f32 %v1739, %v1740
      %v1742 = vsel %vm808, %v1666, 0.0
      %v1743 = vadd.f32 %v1741, %v1742
      %v1744 = vsel %vm808, %v1667, 0.0
      %v1745 = vadd.f32 %v1743, %v1744
      %v1746 = vsel %vm808, %v1668, 0.0
      %v1747 = vadd.f32 %v1745, %v1746
      %v1748 = vsel %vm808, %v1669, 0.0
      %v1749 = vadd.f32 %v1747, %v1748
      %v1750 = vsel %vm808, %v1670, 0.0
      %v1751 = vadd.f32 %v1749, %v1750
      %v1752 = vsel %vm808, %v1671, 0.0
      %v1753 = vadd.f32 %v1751, %v1752
      %v1754 = vsel %vm808, %v1672, 0.0
      %v1755 = vadd.f32 %v1753, %v1754
      %v1756 = vsel %vm808, %v1673, 0.0
      %v1757 = vadd.f32 %v1755, %v1756
      %v1758 = vsel %vm808, %v1674, 0.0
      %v1759 = vadd.f32 %v1757, %v1758
      %v1760 = vsel %vm808, %v1675, 0.0
      %v1761 = vadd.f32 %v1759, %v1760
      %v1762 = vsel %vm808, %v1676, 0.0
      %v1763 = vadd.f32 %v1761, %v1762
      %v1764 = vsel %vm808, %v1677, 0.0
      %v1765 = vadd.f32 %v1763, %v1764
      %v1766 = vsel %vm808, %v1678, 0.0
      %v1767 = vadd.f32 %v1765, %v1766
      %v1768 = vsel %vm808, %v1679, 0.0
      %v1769 = vadd.f32 %v1767, %v1768
      %v1770 = vsel %vm808, %v1680, 0.0
      %v1771 = vadd.f32 %v1769, %v1770
      %v1772 = vsel %vm808, %v1681, 0.0
      %v1773 = vadd.f32 %v1771, %v1772
      %v1774 = vsel %vm808, %v1682, 0.0
      %v1775 = vadd.f32 %v1773, %v1774
      %v1776 = vsel %vm808, %v1683, 0.0
      %v1777 = vadd.f32 %v1775, %v1776
      %v1778 = vsel %vm808, %v1684, 0.0
      %v1779 = vadd.f32 %v1777, %v1778
      %v1780 = vsel %vm808, %v1685, 0.0
      %v1781 = vadd.f32 %v1779, %v1780
      %v1782 = vsel %vm808, %v1686, 0.0
      %v1783 = vadd.f32 %v1781, %v1782
      %v1784 = vsel %vm808, %v1687, 0.0
      %v1785 = vadd.f32 %v1783, %v1784
      %v1786 = vsel %vm808, %v1688, 0.0
      %v1787 = vadd.f32 %v1785, %v1786
      %v1788 = vsel %vm808, %v1689, 0.0
      %v1789 = vadd.f32 %v1787, %v1788
      %v1790 = vsel %vm808, %v1690, 0.0
      %v1791 = vadd.f32 %v1789, %v1790
      %v1792 = vsel %vm808, %v1691, 0.0
      %v1793 = vadd.f32 %v1791, %v1792
      %v1794 = vsel %vm808, %v1692, 0.0
      %v1795 = vadd.f32 %v1793, %v1794
      %v1796 = vsel %vm808, %v1693, 0.0
      %v1797 = vadd.f32 %v1795, %v1796
      %v1798 = vsel %vm808, %v1694, 0.0
      %v1799 = vadd.f32 %v1797, %v1798
      %v1800 = vsel %vm808, %v1695, 0.0
      %v1801 = vadd.f32 %v1799, %v1800
      %v1802 = vsel %vm808, %v1696, 0.0
      %v1803 = vadd.f32 %v1801, %v1802
      %v1804 = vsel %vm808, %v1697, 0.0
      %v1805 = vadd.f32 %v1803, %v1804
      %v1806 = vsel %vm808, %v1698, 0.0
      %v1807 = vadd.f32 %v1805, %v1806
      %v1808 = vsel %vm808, %v1699, 0.0
      %v1809 = vadd.f32 %v1807, %v1808
      %v1810 = vsel %vm808, %v1700, 0.0
      %v1811 = vadd.f32 %v1809, %v1810
      %v1812 = vsel %vm808, %v1701, 0.0
      %v1813 = vadd.f32 %v1811, %v1812
      %v1814 = vsel %vm808, %v1702, 0.0
      %v1815 = vadd.f32 %v1813, %v1814
      %v1816 = vsel %vm808, %v1703, 0.0
      %v1817 = vadd.f32 %v1815, %v1816
      %v1818 = vsel %vm808, %v1704, 0.0
      %v1819 = vadd.f32 %v1817, %v1818
      %v1820 = vsel %vm808, %v1705, 0.0
      %v1821 = vadd.f32 %v1819, %v1820
      %v1822 = vsel %vm808, %v1706, 0.0
      %v1823 = vadd.f32 %v1821, %v1822
      %v1824 = vsel %vm808, %v1707, 0.0
      %v1825 = vadd.f32 %v1823, %v1824
      %v1826 = vsel %vm808, %v1708, 0.0
      %v1827 = vadd.f32 %v1825, %v1826
      %v1828 = vsel %vm808, %v1709, 0.0
      %v1829 = vadd.f32 %v1827, %v1828
      %v1830 = vsel %vm808, %v1710, 0.0
      %v1831 = vadd.f32 %v1829, %v1830
      %v1832 = vsel %vm808, %v1711, 0.0
      %v1833 = vadd.f32 %v1831, %v1832
      %v1834 = vsel %vm808, %v1712, 0.0
      %v1835 = vadd.f32 %v1833, %v1834
      %v1836 = vsel %vm808, %v1713, 0.0
      %v1837 = vadd.f32 %v1835, %v1836
      %v1838 = vsel %vm808, %v1714, 0.0
      %v1839 = vadd.f32 %v1837, %v1838
      %v1840 = vsel %vm808, %v1715, 0.0
      %v1841 = vadd.f32 %v1839, %v1840
      %v1842 = vsel %vm808, %v1716, 0.0
      %v1843 = vadd.f32 %v1841, %v1842
      %v1844 = vrot.slane %v1843, 4
      %v1845 = vadd.f32 %v1843, %v1844
      %v1846 = vrot.slane %v1845, 2
      %v1847 = vadd.f32 %v1845, %v1846
      %v1848 = vrot.slane %v1847, 1
      %v1849 = vadd.f32 %v1847, %v1848
      %v1850 = vadd.f32 %v1652, %v1849
      %1851 = vst.msk [vmem:[%s5] sm:$0x1] %vm1650, %v1850
      %s1852 = smul.u32 64, %s17
      %p1853 = scmp.lt.s32.totalorder %s1852, 255
      %s1854 = scalar_select %p1853, %s1852, 255
      %s1855 = smul.addr %s1854, 4
      %s1856 = scalar_lea.vmem %s3, %s1855
      // Predicated region
      $region37: #{_lambda_.18} parent=31 // pred_check
        %p1857 = pneg %p108
      $region38: #{_lambda_.18} parent=31 // pred_check_branch
        %1859 = sbr.rel (%p1857) target = $region40
      $region39: #{_lambda_.18} parent=31 // pred_region
        %s1860 = smul.u32 64, %s17
      $region40: #{_lambda_.18} parent=31 // pred_fallthru
        _
      // Predicated region
      $region41: #{_lambda_.18} parent=31 // pred_check
        %p1861 = pneg %p129
      $region42: #{_lambda_.18} parent=31 // pred_check_branch
        %1863 = sbr.rel (%p1861) target = $region44
      $region43: #{_lambda_.18} parent=31 // pred_region
        _
      $region44: #{_lambda_.18} parent=31 // pred_fallthru
        _
      // Predicated region
      $region45: #{_lambda_.18} parent=31 // pred_check
        %p1864 = pneg %p150
      $region46: #{_lambda_.18} parent=31 // pred_check_branch
        %1866 = sbr.rel (%p1864) target = $region48
      $region47: #{_lambda_.18} parent=31 // pred_region
        _
      $region48: #{_lambda_.18} parent=31 // pred_fallthru
        _
      // Predicated region
      $region49: #{_lambda_.18} parent=31 // pred_check
        %p1867 = pneg %p129
      $region50: #{_lambda_.18} parent=31 // pred_check_branch
        %1869 = sbr.rel (%p1867) target = $region52
      $region51: #{_lambda_.18} parent=31 // pred_region
        _
      $region52: #{_lambda_.18} parent=31 // pred_fallthru
        _
      // Predicated region
      $region53: #{_lambda_.18} parent=31 // pred_check
        %p1870 = pneg %p150
      $region54: #{_lambda_.18} parent=31 // pred_check_branch
        %1872 = sbr.rel (%p1870) target = $region56
      $region55: #{_lambda_.18} parent=31 // pred_region
        _
      $region56: #{_lambda_.18} parent=31 // pred_fallthru
        _
    $region32: #{_lambda_.18} parent=5 // pred_fallthru
      _
    %p1873 = scmp.le.s32.totalorder 2, %s12
    // Predicated region
    $region57: #{_lambda_.18} parent=5 // pred_check
      %p1874 = pneg %p1873
    $region58: #{_lambda_.18} parent=5 // pred_check_branch
      %1876 = sbr.rel (%p1874) target = $region60
    $region59: #{_lambda_.18} parent=5 // pred_region
      %s1877 = ssub.s32 %s12, 2
      // Predicated region
      $region61: #{_lambda_.18} parent=59 // pred_check
        %p1878 = pneg %p114
      $region62: #{_lambda_.18} parent=59 // pred_check_branch
        %1880 = sbr.rel (%p1878) target = $region64
      $region63: #{_lambda_.18} parent=59 // pred_region
        %s1881 = smul.u32 64, %s18
        %p1882 = scmp.lt.s32.totalorder %s1881, 255
        %s1883 = scalar_select %p1882, %s1881, 255
        %s1884 = smul.addr %s1883, 4
        %s1885 = scalar_lea.vmem %s3, %s1884
      $region64: #{_lambda_.18} parent=59 // pred_fallthru
        _
    $region60: #{_lambda_.18} parent=5 // pred_fallthru
      _
  $region6: #{_lambda_.18} parent=0 // loop_footer
    %s16 = sadd.s32 1, %s12
  $region7: #{_lambda_.18} parent=0 // loop_footer_branch
    %11 = sbr.rel target = $region3
  $region8: #{_lambda_.18} parent=0 // loop_exit
    _

// kernel: tile.93
$region0: #{tile.93}
  #allocation0 [shape = 's32[1]{0}', space=sflag, size = 0x4, scoped, tag = 'scoped memory for tile.93']
  %s0 = inlined_call_operand.vmem [shape: f32[32], index: 0, kind: input, shape index: {}]
  %s1 = inlined_call_operand.vmem [shape: f32[4,32], index: 1, kind: output, shape index: {}]
  // Predicated region
  $region2: #{tile.93} parent=0 // pred_check
    _
  $region3: #{tile.93} parent=0 // pred_check_branch
    %3 = sbr.rel (0) target = $region5
  $region4: #{tile.93} parent=0 // pred_region
    _
  $region5: #{tile.93} parent=0 // pred_fallthru
    _
  %v4 = vld [vmem:[%s0] ss:$0 sm:$0xff]
  %5 = vst [vmem:[%s1] sm:$0xf] %v4

// kernel: tile.94
$region0: #{tile.94}
  %s0 = inlined_call_operand.vmem [shape: f32[4,32], index: 0, kind: input, shape index: {}]
  %s1 = inlined_call_operand.vmem [shape: f32[1,128], index: 1, kind: output, shape index: {}]
  $region1: #{tile.94} parent=0
    #allocation0 [shape = 'u8[4096]{0}', space=vmem, size = 0x1000, scoped, tag = 'scoped mem for output reshape']
    #allocation1 [shape = 'u8[4096]{0}', space=vmem, size = 0x1000, scoped, tag = 'scoped mem for input reshape']
    %s3 = sshllo.u32 0, 4
    %v4 = vld [vmem:[%s0] sm:%s3]
    %5 = vst [vmem:[#allocation1] sm:%s3] %v4
    %v6 = vld [vmem:[#allocation1] sm:$0x1]
    %vm7 = vcmask 261120
    %8 = vst.msk [vmem:[#allocation0] sm:$0x1] %vm7, %v6
    %s9 = scalar_lea.vmem [#allocation1], 3
    %v10 = vld [vmem:[%s9] sm:$0x1]
    %11 = vrot.lane.b32.xlu0 %v10, 96
    %v12 = vpop.permute.xlu0 %11
    %vm13 = vcmask 1048320
    %14 = vst.msk [vmem:[#allocation0] sm:$0x1] %vm13, %v12
    %s15 = scalar_lea.vmem [#allocation1], 2
    %v16 = vld [vmem:[%s15] sm:$0x1]
    %17 = vrot.lane.b32.xlu0 %v16, 64
    %v18 = vpop.permute.xlu0 %17
    %vm19 = vcmask 785920
    %20 = vst.msk [vmem:[#allocation0] sm:$0x1] %vm19, %v18
    %s21 = scalar_lea.vmem [#allocation1], 1
    %v22 = vld [vmem:[%s21] sm:$0x1]
    %23 = vrot.lane.b32.xlu0 %v22, 32
    %v24 = vpop.permute.xlu0 %23
    %vm25 = vcmask 523520
    %26 = vst.msk [vmem:[#allocation0] sm:$0x1] %vm25, %v24
    %s28 = sshllo.u32 0, 1
    %v30 = vld [vmem:[#allocation0] sm:%s28]
    %s31 = sshllo.u32 0, 1
    %32 = vst [vmem:[%s1] sm:%s31] %v30

// kernel: _lambda_.20
$region0: #{_lambda_.20}
  #allocation0 [shape = 'u32[]', space=smem, size = 0x4, offset = 0x4, fixed_abs, tag = 'smem constant byte address 0x4 - core index']
  #allocation1 [shape = 'u32[144,128]{1,0:T(1,128)}', space=vmem, size = 0x12000, scoped, tag = 'internal scratch']
  %s0 = inlined_call_operand.vmem [shape: bf16[512,144], index: 0, kind: input, shape index: {}]
  %s1 = inlined_call_operand.vmem [shape: bf16[144,32], index: 1, kind: input, shape index: {}]
  %s2 = inlined_call_operand.vmem [shape: bf16[512,32], index: 2, kind: output, shape index: {0}]
  %s3 = inlined_call_operand.vmem [shape: f32[1,32], index: 3, kind: output, shape index: {1}]
  %s4 = inlined_call_operand.vmem [shape: f32[1,32], index: 4, kind: output, shape index: {2}]
  %5 = xla_tuple %s2, %s3, %s4
  %s6 = sld [smem:[#allocation0]]
  $region38: #{_lambda_.20} parent=0
    _
  %s8 = ssub.s32 1, %s6
  %s9 = scalar_select 0, %s8, %s6
  // Predicated region
  $region2: #{_lambda_.20} parent=0 // pred_check
    _
  $region3: #{_lambda_.20} parent=0 // pred_check_branch
    %11 = sbr.rel (0) target = $region5
  $region4: #{_lambda_.20} parent=0 // pred_region
    _
  $region5: #{_lambda_.20} parent=0 // pred_fallthru
    _
  // Predicated region
  $region6: #{_lambda_.20} parent=0 // pred_check
    _
  $region7: #{_lambda_.20} parent=0 // pred_check_branch
    %13 = sbr.rel (0) target = $region9
  $region8: #{_lambda_.20} parent=0 // pred_region
    _
  $region9: #{_lambda_.20} parent=0 // pred_fallthru
    _
  %p15 = scmp.eq.s32.totalorder 0, 0
  // Predicated region
  $region10: #{_lambda_.20} parent=0 // pred_check
    %p16 = pneg %p15
  $region11: #{_lambda_.20} parent=0 // pred_check_branch
    %18 = sbr.rel (%p16) target = $region13
  $region12: #{_lambda_.20} parent=0 // pred_region
    %vm19 = vcmask 253952
    %20 = vst.msk [vmem:[%s3] sm:$0x1] %vm19, 0.0
    %21 = vst.msk [vmem:[%s4] sm:$0x1] %vm19, 0.0
  $region13: #{_lambda_.20} parent=0 // pred_fallthru
    _
  %v22 = vld [vmem:[%s0] sm:$0xff]
  %v23 = vld [vmem:[%s0 + $0x8] sm:$0xff]
  %v24 = vld [vmem:[%s0 + $0x10] sm:$0xff]
  %v25 = vld [vmem:[%s0 + $0x18] sm:$0xff]
  %v26 = vld [vmem:[%s0 + $0x20] sm:$0xff]
  %v27 = vld [vmem:[%s0 + $0x28] sm:$0xff]
  %v28 = vld [vmem:[%s0 + $0x30] sm:$0xff]
  %v29 = vld [vmem:[%s0 + $0x38] sm:$0xff]
  %v30 = vld [vmem:[%s0 + $0x40] sm:$0xff]
  %v31 = vld [vmem:[%s0 + $0x48] sm:$0xff]
  %v32 = vld [vmem:[%s0 + $0x50] sm:$0xff]
  %v33 = vld [vmem:[%s0 + $0x58] sm:$0xff]
  %v34 = vld [vmem:[%s0 + $0x60] sm:$0xff]
  %v35 = vld [vmem:[%s0 + $0x68] sm:$0xff]
  %v36 = vld [vmem:[%s0 + $0x70] sm:$0xff]
  %v37 = vld [vmem:[%s0 + $0x78] sm:$0xff]
  %v38 = vld [vmem:[%s0 + $0x80] sm:$0xff]
  %v39 = vld [vmem:[%s0 + $0x88] sm:$0xff]
  %v40 = vld [vmem:[%s0 + $0x90] sm:$0xff]
  %v41 = vld [vmem:[%s0 + $0x98] sm:$0xff]
  %v42 = vld [vmem:[%s0 + $0xa0] sm:$0xff]
  %v43 = vld [vmem:[%s0 + $0xa8] sm:$0xff]
  %v44 = vld [vmem:[%s0 + $0xb0] sm:$0xff]
  %v45 = vld [vmem:[%s0 + $0xb8] sm:$0xff]
  %v46 = vld [vmem:[%s0 + $0xc0] sm:$0xff]
  %v47 = vld [vmem:[%s0 + $0xc8] sm:$0xff]
  %v48 = vld [vmem:[%s0 + $0xd0] sm:$0xff]
  %v49 = vld [vmem:[%s0 + $0xd8] sm:$0xff]
  %v50 = vld [vmem:[%s0 + $0xe0] sm:$0xff]
  %v51 = vld [vmem:[%s0 + $0xe8] sm:$0xff]
  %v52 = vld [vmem:[%s0 + $0xf0] sm:$0xff]
  %v53 = vld [vmem:[%s0 + $0xf8] sm:$0xff]
  %v54 = vld [vmem:[%s0 + $0x100] sm:$0xff]
  %v55 = vld [vmem:[%s0 + $0x108] sm:$0xff]
  %v56 = vld [vmem:[%s0 + $0x110] sm:$0xff]
  %v57 = vld [vmem:[%s0 + $0x118] sm:$0xff]
  %v58 = vld [vmem:[%s0 + $0x120] sm:$0xff]
  %v59 = vld [vmem:[%s0 + $0x128] sm:$0xff]
  %v60 = vld [vmem:[%s0 + $0x130] sm:$0xff]
  %v61 = vld [vmem:[%s0 + $0x138] sm:$0xff]
  %v62 = vld [vmem:[%s0 + $0x140] sm:$0xff]
  %v63 = vld [vmem:[%s0 + $0x148] sm:$0xff]
  %v64 = vld [vmem:[%s0 + $0x150] sm:$0xff]
  %v65 = vld [vmem:[%s0 + $0x158] sm:$0xff]
  %v66 = vld [vmem:[%s0 + $0x160] sm:$0xff]
  %v67 = vld [vmem:[%s0 + $0x168] sm:$0xff]
  %v68 = vld [vmem:[%s0 + $0x170] sm:$0xff]
  %v69 = vld [vmem:[%s0 + $0x178] sm:$0xff]
  %v70 = vld [vmem:[%s0 + $0x180] sm:$0xff]
  %v71 = vld [vmem:[%s0 + $0x188] sm:$0xff]
  %v72 = vld [vmem:[%s0 + $0x190] sm:$0xff]
  %v73 = vld [vmem:[%s0 + $0x198] sm:$0xff]
  %v74 = vld [vmem:[%s0 + $0x1a0] sm:$0xff]
  %v75 = vld [vmem:[%s0 + $0x1a8] sm:$0xff]
  %v76 = vld [vmem:[%s0 + $0x1b0] sm:$0xff]
  %v77 = vld [vmem:[%s0 + $0x1b8] sm:$0xff]
  %v78 = vld [vmem:[%s0 + $0x1c0] sm:$0xff]
  %v79 = vld [vmem:[%s0 + $0x1c8] sm:$0xff]
  %v80 = vld [vmem:[%s0 + $0x1d0] sm:$0xff]
  %v81 = vld [vmem:[%s0 + $0x1d8] sm:$0xff]
  %v82 = vld [vmem:[%s0 + $0x1e0] sm:$0xff]
  %v83 = vld [vmem:[%s0 + $0x1e8] sm:$0xff]
  %v84 = vld [vmem:[%s0 + $0x1f0] sm:$0xff]
  %v85 = vld [vmem:[%s0 + $0x1f8] sm:$0xff]
  %v86 = vld [vmem:[%s1] sm:$0xf]
  %v87 = vld [vmem:[%s1 + $0x4] sm:$0xf]
  %v88 = vld [vmem:[%s1 + $0x8] sm:$0xf]
  %v89 = vld [vmem:[%s1 + $0xc] sm:$0xf]
  %v90 = vld [vmem:[%s1 + $0x10] sm:$0xf]
  %v91 = vld [vmem:[%s1 + $0x14] sm:$0xf]
  %v92 = vld [vmem:[%s1 + $0x18] sm:$0xf]
  %v93 = vld [vmem:[%s1 + $0x1c] sm:$0xf]
  %v94 = vld [vmem:[%s1 + $0x20] sm:$0xf]
  %v95 = vld [vmem:[%s1 + $0x24] sm:$0xf]
  %v96 = vld [vmem:[%s1 + $0x28] sm:$0xf]
  %v97 = vld [vmem:[%s1 + $0x2c] sm:$0xf]
  %v98 = vld [vmem:[%s1 + $0x30] sm:$0xf]
  %v99 = vld [vmem:[%s1 + $0x34] sm:$0xf]
  %v100 = vld [vmem:[%s1 + $0x38] sm:$0xf]
  %v101 = vld [vmem:[%s1 + $0x3c] sm:$0xf]
  %v102 = vld [vmem:[%s1 + $0x40] sm:$0xf]
  %v103 = vld [vmem:[%s1 + $0x44] sm:$0xf]
  %v168 = vunpack.c.l.b16 %v22
  %v169 = vunpack.c.h.b16 %v22
  %v170 = vunpack.c.l.b16 %v23
  %v171 = vunpack.c.h.b16 %v23
  %v172 = vunpack.c.l.b16 %v24
  %v173 = vunpack.c.h.b16 %v24
  %v174 = vunpack.c.l.b16 %v25
  %v175 = vunpack.c.h.b16 %v25
  %v176 = vunpack.c.l.b16 %v26
  %v177 = vunpack.c.h.b16 %v26
  %v178 = vunpack.c.l.b16 %v27
  %v179 = vunpack.c.h.b16 %v27
  %v180 = vunpack.c.l.b16 %v28
  %v181 = vunpack.c.h.b16 %v28
  %v182 = vunpack.c.l.b16 %v29
  %v183 = vunpack.c.h.b16 %v29
  %v184 = vunpack.c.l.b16 %v30
  %v185 = vunpack.c.h.b16 %v30
  %v186 = vunpack.c.l.b16 %v31
  %v187 = vunpack.c.h.b16 %v31
  %v188 = vunpack.c.l.b16 %v32
  %v189 = vunpack.c.h.b16 %v32
  %v190 = vunpack.c.l.b16 %v33
  %v191 = vunpack.c.h.b16 %v33
  %v192 = vunpack.c.l.b16 %v34
  %v193 = vunpack.c.h.b16 %v34
  %v194 = vunpack.c.l.b16 %v35
  %v195 = vunpack.c.h.b16 %v35
  %v196 = vunpack.c.l.b16 %v36
  %v197 = vunpack.c.h.b16 %v36
  %v198 = vunpack.c.l.b16 %v37
  %v199 = vunpack.c.h.b16 %v37
  %v200 = vunpack.c.l.b16 %v38
  %v201 = vunpack.c.h.b16 %v38
  %v202 = vunpack.c.l.b16 %v39
  %v203 = vunpack.c.h.b16 %v39
  %v204 = vunpack.c.l.b16 %v40
  %v205 = vunpack.c.h.b16 %v40
  %v206 = vunpack.c.l.b16 %v41
  %v207 = vunpack.c.h.b16 %v41
  %v208 = vunpack.c.l.b16 %v42
  %v209 = vunpack.c.h.b16 %v42
  %v210 = vunpack.c.l.b16 %v43
  %v211 = vunpack.c.h.b16 %v43
  %v212 = vunpack.c.l.b16 %v44
  %v213 = vunpack.c.h.b16 %v44
  %v214 = vunpack.c.l.b16 %v45
  %v215 = vunpack.c.h.b16 %v45
  %v216 = vunpack.c.l.b16 %v46
  %v217 = vunpack.c.h.b16 %v46
  %v218 = vunpack.c.l.b16 %v47
  %v219 = vunpack.c.h.b16 %v47
  %v220 = vunpack.c.l.b16 %v48
  %v221 = vunpack.c.h.b16 %v48
  %v222 = vunpack.c.l.b16 %v49
  %v223 = vunpack.c.h.b16 %v49
  %v224 = vunpack.c.l.b16 %v50
  %v225 = vunpack.c.h.b16 %v50
  %v226 = vunpack.c.l.b16 %v51
  %v227 = vunpack.c.h.b16 %v51
  %v228 = vunpack.c.l.b16 %v52
  %v229 = vunpack.c.h.b16 %v52
  %v230 = vunpack.c.l.b16 %v53
  %v231 = vunpack.c.h.b16 %v53
  %v232 = vunpack.c.l.b16 %v54
  %v233 = vunpack.c.h.b16 %v54
  %v234 = vunpack.c.l.b16 %v55
  %v235 = vunpack.c.h.b16 %v55
  %v236 = vunpack.c.l.b16 %v56
  %v237 = vunpack.c.h.b16 %v56
  %v238 = vunpack.c.l.b16 %v57
  %v239 = vunpack.c.h.b16 %v57
  %v240 = vunpack.c.l.b16 %v58
  %v241 = vunpack.c.h.b16 %v58
  %v242 = vunpack.c.l.b16 %v59
  %v243 = vunpack.c.h.b16 %v59
  %v244 = vunpack.c.l.b16 %v60
  %v245 = vunpack.c.h.b16 %v60
  %v246 = vunpack.c.l.b16 %v61
  %v247 = vunpack.c.h.b16 %v61
  %v248 = vunpack.c.l.b16 %v62
  %v249 = vunpack.c.h.b16 %v62
  %v250 = vunpack.c.l.b16 %v63
  %v251 = vunpack.c.h.b16 %v63
  %v252 = vunpack.c.l.b16 %v64
  %v253 = vunpack.c.h.b16 %v64
  %v254 = vunpack.c.l.b16 %v65
  %v255 = vunpack.c.h.b16 %v65
  %v256 = vunpack.c.l.b16 %v66
  %v257 = vunpack.c.h.b16 %v66
  %v258 = vunpack.c.l.b16 %v67
  %v259 = vunpack.c.h.b16 %v67
  %v260 = vunpack.c.l.b16 %v68
  %v261 = vunpack.c.h.b16 %v68
  %v262 = vunpack.c.l.b16 %v69
  %v263 = vunpack.c.h.b16 %v69
  %v264 = vunpack.c.l.b16 %v70
  %v265 = vunpack.c.h.b16 %v70
  %v266 = vunpack.c.l.b16 %v71
  %v267 = vunpack.c.h.b16 %v71
  %v268 = vunpack.c.l.b16 %v72
  %v269 = vunpack.c.h.b16 %v72
  %v270 = vunpack.c.l.b16 %v73
  %v271 = vunpack.c.h.b16 %v73
  %v272 = vunpack.c.l.b16 %v74
  %v273 = vunpack.c.h.b16 %v74
  %v274 = vunpack.c.l.b16 %v75
  %v275 = vunpack.c.h.b16 %v75
  %v276 = vunpack.c.l.b16 %v76
  %v277 = vunpack.c.h.b16 %v76
  %v278 = vunpack.c.l.b16 %v77
  %v279 = vunpack.c.h.b16 %v77
  %v280 = vunpack.c.l.b16 %v78
  %v281 = vunpack.c.h.b16 %v78
  %v282 = vunpack.c.l.b16 %v79
  %v283 = vunpack.c.h.b16 %v79
  %v284 = vunpack.c.l.b16 %v80
  %v285 = vunpack.c.h.b16 %v80
  %v286 = vunpack.c.l.b16 %v81
  %v287 = vunpack.c.h.b16 %v81
  %v288 = vunpack.c.l.b16 %v82
  %v289 = vunpack.c.h.b16 %v82
  %v290 = vunpack.c.l.b16 %v83
  %v291 = vunpack.c.h.b16 %v83
  %v292 = vunpack.c.l.b16 %v84
  %v293 = vunpack.c.h.b16 %v84
  %v294 = vunpack.c.l.b16 %v85
  %v295 = vunpack.c.h.b16 %v85
  %v296 = vpack.c.b16 %v170, %v168
  %v297 = vpack.c.b16 %v171, %v169
  %v298 = vpack.c.b16 %v174, %v172
  %v299 = vpack.c.b16 %v175, %v173
  %v300 = vpack.c.b16 %v178, %v176
  %v301 = vpack.c.b16 %v179, %v177
  %v302 = vpack.c.b16 %v182, %v180
  %v303 = vpack.c.b16 %v183, %v181
  %v304 = vpack.c.b16 %v186, %v184
  %v305 = vpack.c.b16 %v187, %v185
  %v306 = vpack.c.b16 %v190, %v188
  %v307 = vpack.c.b16 %v191, %v189
  %v308 = vpack.c.b16 %v194, %v192
  %v309 = vpack.c.b16 %v195, %v193
  %v310 = vpack.c.b16 %v198, %v196
  %v311 = vpack.c.b16 %v199, %v197
  %v312 = vpack.c.b16 %v202, %v200
  %v313 = vpack.c.b16 %v203, %v201
  %v314 = vpack.c.b16 %v206, %v204
  %v315 = vpack.c.b16 %v207, %v205
  %v316 = vpack.c.b16 %v210, %v208
  %v317 = vpack.c.b16 %v211, %v209
  %v318 = vpack.c.b16 %v214, %v212
  %v319 = vpack.c.b16 %v215, %v213
  %v320 = vpack.c.b16 %v218, %v216
  %v321 = vpack.c.b16 %v219, %v217
  %v322 = vpack.c.b16 %v222, %v220
  %v323 = vpack.c.b16 %v223, %v221
  %v324 = vpack.c.b16 %v226, %v224
  %v325 = vpack.c.b16 %v227, %v225
  %v326 = vpack.c.b16 %v230, %v228
  %v327 = vpack.c.b16 %v231, %v229
  %v328 = vpack.c.b16 %v234, %v232
  %v329 = vpack.c.b16 %v235, %v233
  %v330 = vpack.c.b16 %v238, %v236
  %v331 = vpack.c.b16 %v239, %v237
  %v332 = vpack.c.b16 %v242, %v240
  %v333 = vpack.c.b16 %v243, %v241
  %v334 = vpack.c.b16 %v246, %v244
  %v335 = vpack.c.b16 %v247, %v245
  %v336 = vpack.c.b16 %v250, %v248
  %v337 = vpack.c.b16 %v251, %v249
  %v338 = vpack.c.b16 %v254, %v252
  %v339 = vpack.c.b16 %v255, %v253
  %v340 = vpack.c.b16 %v258, %v256
  %v341 = vpack.c.b16 %v259, %v257
  %v342 = vpack.c.b16 %v262, %v260
  %v343 = vpack.c.b16 %v263, %v261
  %v344 = vpack.c.b16 %v266, %v264
  %v345 = vpack.c.b16 %v267, %v265
  %v346 = vpack.c.b16 %v270, %v268
  %v347 = vpack.c.b16 %v271, %v269
  %v348 = vpack.c.b16 %v274, %v272
  %v349 = vpack.c.b16 %v275, %v273
  %v350 = vpack.c.b16 %v278, %v276
  %v351 = vpack.c.b16 %v279, %v277
  %v352 = vpack.c.b16 %v282, %v280
  %v353 = vpack.c.b16 %v283, %v281
  %v354 = vpack.c.b16 %v286, %v284
  %v355 = vpack.c.b16 %v287, %v285
  %v356 = vpack.c.b16 %v290, %v288
  %v357 = vpack.c.b16 %v291, %v289
  %v358 = vpack.c.b16 %v294, %v292
  %v359 = vpack.c.b16 %v295, %v293
  %v410 = vunpack.c.l.b16 %v86
  %v411 = vunpack.c.l.b16 %v87
  %v412 = vunpack.c.l.b16 %v88
  %v413 = vunpack.c.l.b16 %v89
  %v414 = vunpack.c.l.b16 %v90
  %v415 = vunpack.c.l.b16 %v91
  %v416 = vunpack.c.l.b16 %v92
  %v417 = vunpack.c.l.b16 %v93
  %v418 = vunpack.c.l.b16 %v94
  %v419 = vunpack.c.l.b16 %v95
  %v420 = vunpack.c.l.b16 %v96
  %v421 = vunpack.c.l.b16 %v97
  %v422 = vunpack.c.l.b16 %v98
  %v423 = vunpack.c.l.b16 %v99
  %v424 = vunpack.c.l.b16 %v100
  %v425 = vunpack.c.l.b16 %v101
  %v426 = vunpack.c.l.b16 %v102
  %v427 = vunpack.c.l.b16 %v103
  %v428 = vpack.c.b16 %v411, %v410
  %v429 = vpack.c.b16 %v413, %v412
  %v430 = vpack.c.b16 %v415, %v414
  %v431 = vpack.c.b16 %v417, %v416
  %v432 = vpack.c.b16 %v419, %v418
  %v433 = vpack.c.b16 %v421, %v420
  %v434 = vpack.c.b16 %v423, %v422
  %v435 = vpack.c.b16 %v425, %v424
  %v436 = vpack.c.b16 %v427, %v426
  %vm446 = vcmask 130048
  %v448 = vsel %vm446, %v297, 0
  %v451 = vsel %vm446, %v299, 0
  %v454 = vsel %vm446, %v301, 0
  %v457 = vsel %vm446, %v303, 0
  %v460 = vsel %vm446, %v305, 0
  %v463 = vsel %vm446, %v307, 0
  %v466 = vsel %vm446, %v309, 0
  %v469 = vsel %vm446, %v311, 0
  %v472 = vsel %vm446, %v313, 0
  %v475 = vsel %vm446, %v315, 0
  %v478 = vsel %vm446, %v317, 0
  %v481 = vsel %vm446, %v319, 0
  %v484 = vsel %vm446, %v321, 0
  %v487 = vsel %vm446, %v323, 0
  %v490 = vsel %vm446, %v325, 0
  %v493 = vsel %vm446, %v327, 0
  %v496 = vsel %vm446, %v329, 0
  %v499 = vsel %vm446, %v331, 0
  %v502 = vsel %vm446, %v333, 0
  %v505 = vsel %vm446, %v335, 0
  %v508 = vsel %vm446, %v337, 0
  %v511 = vsel %vm446, %v339, 0
  %v514 = vsel %vm446, %v341, 0
  %v517 = vsel %vm446, %v343, 0
  %v520 = vsel %vm446, %v345, 0
  %v523 = vsel %vm446, %v347, 0
  %v526 = vsel %vm446, %v349, 0
  %v529 = vsel %vm446, %v351, 0
  %v532 = vsel %vm446, %v353, 0
  %v535 = vsel %vm446, %v355, 0
  %v538 = vsel %vm446, %v357, 0
  %v541 = vsel %vm446, %v359, 0
  %543 = vmatprep.subr.bf16.mxu0 0
  %544 = vmatpush1.bf16.msra.mxu0 %v428
  %545 = vmatprep.subr.bf16.mxu0 0
  %546 = vmatpush1.bf16.msra.mxu0 %v429
  %547 = vmatprep.subr.bf16.mxu0 0
  %548 = vmatpush1.bf16.msra.mxu0 %v430
  %549 = vmatprep.subr.bf16.mxu0 0
  %550 = vmatpush1.bf16.msra.mxu0 %v431
  %551 = vmatprep.subr.bf16.mxu0 0
  %552 = vmatpush1.bf16.msra.mxu0 %v432
  %553 = vmatprep.subr.bf16.mxu0 0
  %554 = vmatpush1.bf16.msra.mxu0 %v433
  %555 = vmatprep.subr.bf16.mxu0 0
  %556 = vmatpush1.bf16.msra.mxu0 %v434
  %557 = vmatprep.subr.bf16.mxu0 0
  %558 = vmatpush1.bf16.msra.mxu0 %v435
  %559 = vmatprep.subr.bf16.mxu0 0
  %560 = vmatpush1.bf16.msra.mxu0 %v436
  %561 = vmatprep.subr.bf16.mxu0 0
  %562 = vmatpush1.bf16.msra.mxu0 0
  %563 = vmatprep.subr.bf16.mxu0 0
  %564 = vmatpush1.bf16.msra.mxu0 0
  %565 = vmatprep.subr.bf16.mxu0 0
  %566 = vmatpush1.bf16.msra.mxu0 0
  %567 = vmatprep.subr.bf16.mxu0 0
  %568 = vmatpush1.bf16.msra.mxu0 0
  %569 = vmatprep.subr.bf16.mxu0 0
  %570 = vmatpush1.bf16.msra.mxu0 0
  %571 = vmatprep.subr.bf16.mxu0 0
  %572 = vmatpush1.bf16.msra.mxu0 0
  %573 = vmatprep.subr.bf16.mxu0 0
  %574 = vmatpush1.bf16.msra.mxu0 0
  %575 = vmatprep.mubr.bf16.mxu0 %v448
  %576 = vmatmul.mubr.bf16.gmra.mrb[0].mxu0 %v296
  %v577 = vpop.f32.mrb[0].mxu0
  %v578 = vadd.f32 0.0, %v577
  %v579 = vpop.f32.mrb[0].mxu0
  %v580 = vpop.f32.mrb[0].mxu0
  %v581 = vadd.f32 0.0, %v580
  %v582 = vpop.f32.mrb[0].mxu0
  %583 = vmatprep.mubr.bf16.mxu0 %v451
  %584 = vmatmul.mubr.bf16.gmra.mrb[0].mxu0 %v298
  %v585 = vpop.f32.mrb[0].mxu0
  %v586 = vadd.f32 0.0, %v585
  %v587 = vpop.f32.mrb[0].mxu0
  %v588 = vpop.f32.mrb[0].mxu0
  %v589 = vadd.f32 0.0, %v588
  %v590 = vpop.f32.mrb[0].mxu0
  %591 = vmatprep.mubr.bf16.mxu0 %v454
  %592 = vmatmul.mubr.bf16.gmra.mrb[0].mxu0 %v300
  %v593 = vpop.f32.mrb[0].mxu0
  %v594 = vadd.f32 0.0, %v593
  %v595 = vpop.f32.mrb[0].mxu0
  %v596 = vpop.f32.mrb[0].mxu0
  %v597 = vadd.f32 0.0, %v596
  %v598 = vpop.f32.mrb[0].mxu0
  %599 = vmatprep.mubr.bf16.mxu0 %v457
  %600 = vmatmul.mubr.bf16.gmra.mrb[0].mxu0 %v302
  %v601 = vpop.f32.mrb[0].mxu0
  %v602 = vadd.f32 0.0, %v601
  %v603 = vpop.f32.mrb[0].mxu0
  %v604 = vpop.f32.mrb[0].mxu0
  %v605 = vadd.f32 0.0, %v604
  %v606 = vpop.f32.mrb[0].mxu0
  %607 = vmatprep.mubr.bf16.mxu0 %v460
  %608 = vmatmul.mubr.bf16.gmra.mrb[0].mxu0 %v304
  %v609 = vpop.f32.mrb[0].mxu0
  %v610 = vadd.f32 0.0, %v609
  %v611 = vpop.f32.mrb[0].mxu0
  %v612 = vpop.f32.mrb[0].mxu0
  %v613 = vadd.f32 0.0, %v612
  %v614 = vpop.f32.mrb[0].mxu0
  %615 = vmatprep.mubr.bf16.mxu0 %v463
  %616 = vmatmul.mubr.bf16.gmra.mrb[0].mxu0 %v306
  %v617 = vpop.f32.mrb[0].mxu0
  %v618 = vadd.f32 0.0, %v617
  %v619 = vpop.f32.mrb[0].mxu0
  %v620 = vpop.f32.mrb[0].mxu0
  %v621 = vadd.f32 0.0, %v620
  %v622 = vpop.f32.mrb[0].mxu0
  %623 = vmatprep.mubr.bf16.mxu0 %v466
  %624 = vmatmul.mubr.bf16.gmra.mrb[0].mxu0 %v308
  %v625 = vpop.f32.mrb[0].mxu0
  %v626 = vadd.f32 0.0, %v625
  %v627 = vpop.f32.mrb[0].mxu0
  %v628 = vpop.f32.mrb[0].mxu0
  %v629 = vadd.f32 0.0, %v628
  %v630 = vpop.f32.mrb[0].mxu0
  %631 = vmatprep.mubr.bf16.mxu0 %v469
  %632 = vmatmul.mubr.bf16.gmra.mrb[0].mxu0 %v310
  %v633 = vpop.f32.mrb[0].mxu0
  %v634 = vadd.f32 0.0, %v633
  %v635 = vpop.f32.mrb[0].mxu0
  %v636 = vpop.f32.mrb[0].mxu0
  %v637 = vadd.f32 0.0, %v636
  %v638 = vpop.f32.mrb[0].mxu0
  %639 = vmatprep.mubr.bf16.mxu0 %v472
  %640 = vmatmul.mubr.bf16.gmra.mrb[0].mxu0 %v312
  %v641 = vpop.f32.mrb[0].mxu0
  %v642 = vadd.f32 0.0, %v641
  %v643 = vpop.f32.mrb[0].mxu0
  %v644 = vpop.f32.mrb[0].mxu0
  %v645 = vadd.f32 0.0, %v644
  %v646 = vpop.f32.mrb[0].mxu0
  %647 = vmatprep.mubr.bf16.mxu0 %v475
  %648 = vmatmul.mubr.bf16.gmra.mrb[0].mxu0 %v314
  %v649 = vpop.f32.mrb[0].mxu0
  %v650 = vadd.f32 0.0, %v649
  %v651 = vpop.f32.mrb[0].mxu0
  %v652 = vpop.f32.mrb[0].mxu0
  %v653 = vadd.f32 0.0, %v652
  %v654 = vpop.f32.mrb[0].mxu0
  %655 = vmatprep.mubr.bf16.mxu0 %v478
  %656 = vmatmul.mubr.bf16.gmra.mrb[0].mxu0 %v316
  %v657 = vpop.f32.mrb[0].mxu0
  %v658 = vadd.f32 0.0, %v657
  %v659 = vpop.f32.mrb[0].mxu0
  %v660 = vpop.f32.mrb[0].mxu0
  %v661 = vadd.f32 0.0, %v660
  %v662 = vpop.f32.mrb[0].mxu0
  %663 = vmatprep.mubr.bf16.mxu0 %v481
  %664 = vmatmul.mubr.bf16.gmra.mrb[0].mxu0 %v318
  %v665 = vpop.f32.mrb[0].mxu0
  %v666 = vadd.f32 0.0, %v665
  %v667 = vpop.f32.mrb[0].mxu0
  %v668 = vpop.f32.mrb[0].mxu0
  %v669 = vadd.f32 0.0, %v668
  %v670 = vpop.f32.mrb[0].mxu0
  %671 = vmatprep.mubr.bf16.mxu0 %v484
  %672 = vmatmul.mubr.bf16.gmra.mrb[0].mxu0 %v320
  %v673 = vpop.f32.mrb[0].mxu0
  %v674 = vadd.f32 0.0, %v673
  %v675 = vpop.f32.mrb[0].mxu0
  %v676 = vpop.f32.mrb[0].mxu0
  %v677 = vadd.f32 0.0, %v676
  %v678 = vpop.f32.mrb[0].mxu0
  %679 = vmatprep.mubr.bf16.mxu0 %v487
  %680 = vmatmul.mubr.bf16.gmra.mrb[0].mxu0 %v322
  %v681 = vpop.f32.mrb[0].mxu0
  %v682 = vadd.f32 0.0, %v681
  %v683 = vpop.f32.mrb[0].mxu0
  %v684 = vpop.f32.mrb[0].mxu0
  %v685 = vadd.f32 0.0, %v684
  %v686 = vpop.f32.mrb[0].mxu0
  %687 = vmatprep.mubr.bf16.mxu0 %v490
  %688 = vmatmul.mubr.bf16.gmra.mrb[0].mxu0 %v324
  %v689 = vpop.f32.mrb[0].mxu0
  %v690 = vadd.f32 0.0, %v689
  %v691 = vpop.f32.mrb[0].mxu0
  %v692 = vpop.f32.mrb[0].mxu0
  %v693 = vadd.f32 0.0, %v692
  %v694 = vpop.f32.mrb[0].mxu0
  %695 = vmatprep.mubr.bf16.mxu0 %v493
  %696 = vmatmul.mubr.bf16.gmra.mrb[0].mxu0 %v326
  %v697 = vpop.f32.mrb[0].mxu0
  %v698 = vadd.f32 0.0, %v697
  %v699 = vpop.f32.mrb[0].mxu0
  %v700 = vpop.f32.mrb[0].mxu0
  %v701 = vadd.f32 0.0, %v700
  %v702 = vpop.f32.mrb[0].mxu0
  %703 = vmatprep.mubr.bf16.mxu0 %v496
  %704 = vmatmul.mubr.bf16.gmra.mrb[0].mxu0 %v328
  %v705 = vpop.f32.mrb[0].mxu0
  %v706 = vadd.f32 0.0, %v705
  %v707 = vpop.f32.mrb[0].mxu0
  %v708 = vpop.f32.mrb[0].mxu0
  %v709 = vadd.f32 0.0, %v708
  %v710 = vpop.f32.mrb[0].mxu0
  %711 = vmatprep.mubr.bf16.mxu0 %v499
  %712 = vmatmul.mubr.bf16.gmra.mrb[0].mxu0 %v330
  %v713 = vpop.f32.mrb[0].mxu0
  %v714 = vadd.f32 0.0, %v713
  %v715 = vpop.f32.mrb[0].mxu0
  %v716 = vpop.f32.mrb[0].mxu0
  %v717 = vadd.f32 0.0, %v716
  %v718 = vpop.f32.mrb[0].mxu0
  %719 = vmatprep.mubr.bf16.mxu0 %v502
  %720 = vmatmul.mubr.bf16.gmra.mrb[0].mxu0 %v332
  %v721 = vpop.f32.mrb[0].mxu0
  %v722 = vadd.f32 0.0, %v721
  %v723 = vpop.f32.mrb[0].mxu0
  %v724 = vpop.f32.mrb[0].mxu0
  %v725 = vadd.f32 0.0, %v724
  %v726 = vpop.f32.mrb[0].mxu0
  %727 = vmatprep.mubr.bf16.mxu0 %v505
  %728 = vmatmul.mubr.bf16.gmra.mrb[0].mxu0 %v334
  %v729 = vpop.f32.mrb[0].mxu0
  %v730 = vadd.f32 0.0, %v729
  %v731 = vpop.f32.mrb[0].mxu0
  %v732 = vpop.f32.mrb[0].mxu0
  %v733 = vadd.f32 0.0, %v732
  %v734 = vpop.f32.mrb[0].mxu0
  %735 = vmatprep.mubr.bf16.mxu0 %v508
  %736 = vmatmul.mubr.bf16.gmra.mrb[0].mxu0 %v336
  %v737 = vpop.f32.mrb[0].mxu0
  %v738 = vadd.f32 0.0, %v737
  %v739 = vpop.f32.mrb[0].mxu0
  %v740 = vpop.f32.mrb[0].mxu0
  %v741 = vadd.f32 0.0, %v740
  %v742 = vpop.f32.mrb[0].mxu0
  %743 = vmatprep.mubr.bf16.mxu0 %v511
  %744 = vmatmul.mubr.bf16.gmra.mrb[0].mxu0 %v338
  %v745 = vpop.f32.mrb[0].mxu0
  %v746 = vadd.f32 0.0, %v745
  %v747 = vpop.f32.mrb[0].mxu0
  %v748 = vpop.f32.mrb[0].mxu0
  %v749 = vadd.f32 0.0, %v748
  %v750 = vpop.f32.mrb[0].mxu0
  %751 = vmatprep.mubr.bf16.mxu0 %v514
  %752 = vmatmul.mubr.bf16.gmra.mrb[0].mxu0 %v340
  %v753 = vpop.f32.mrb[0].mxu0
  %v754 = vadd.f32 0.0, %v753
  %v755 = vpop.f32.mrb[0].mxu0
  %v756 = vpop.f32.mrb[0].mxu0
  %v757 = vadd.f32 0.0, %v756
  %v758 = vpop.f32.mrb[0].mxu0
  %759 = vmatprep.mubr.bf16.mxu0 %v517
  %760 = vmatmul.mubr.bf16.gmra.mrb[0].mxu0 %v342
  %v761 = vpop.f32.mrb[0].mxu0
  %v762 = vadd.f32 0.0, %v761
  %v763 = vpop.f32.mrb[0].mxu0
  %v764 = vpop.f32.mrb[0].mxu0
  %v765 = vadd.f32 0.0, %v764
  %v766 = vpop.f32.mrb[0].mxu0
  %767 = vmatprep.mubr.bf16.mxu0 %v520
  %768 = vmatmul.mubr.bf16.gmra.mrb[0].mxu0 %v344
  %v769 = vpop.f32.mrb[0].mxu0
  %v770 = vadd.f32 0.0, %v769
  %v771 = vpop.f32.mrb[0].mxu0
  %v772 = vpop.f32.mrb[0].mxu0
  %v773 = vadd.f32 0.0, %v772
  %v774 = vpop.f32.mrb[0].mxu0
  %775 = vmatprep.mubr.bf16.mxu0 %v523
  %776 = vmatmul.mubr.bf16.gmra.mrb[0].mxu0 %v346
  %v777 = vpop.f32.mrb[0].mxu0
  %v778 = vadd.f32 0.0, %v777
  %v779 = vpop.f32.mrb[0].mxu0
  %v780 = vpop.f32.mrb[0].mxu0
  %v781 = vadd.f32 0.0, %v780
  %v782 = vpop.f32.mrb[0].mxu0
  %783 = vmatprep.mubr.bf16.mxu0 %v526
  %784 = vmatmul.mubr.bf16.gmra.mrb[0].mxu0 %v348
  %v785 = vpop.f32.mrb[0].mxu0
  %v786 = vadd.f32 0.0, %v785
  %v787 = vpop.f32.mrb[0].mxu0
  %v788 = vpop.f32.mrb[0].mxu0
  %v789 = vadd.f32 0.0, %v788
  %v790 = vpop.f32.mrb[0].mxu0
  %791 = vmatprep.mubr.bf16.mxu0 %v529
  %792 = vmatmul.mubr.bf16.gmra.mrb[0].mxu0 %v350
  %v793 = vpop.f32.mrb[0].mxu0
  %v794 = vadd.f32 0.0, %v793
  %v795 = vpop.f32.mrb[0].mxu0
  %v796 = vpop.f32.mrb[0].mxu0
  %v797 = vadd.f32 0.0, %v796
  %v798 = vpop.f32.mrb[0].mxu0
  %799 = vmatprep.mubr.bf16.mxu0 %v532
  %800 = vmatmul.mubr.bf16.gmra.mrb[0].mxu0 %v352
  %v801 = vpop.f32.mrb[0].mxu0
  %v802 = vadd.f32 0.0, %v801
  %v803 = vpop.f32.mrb[0].mxu0
  %v804 = vpop.f32.mrb[0].mxu0
  %v805 = vadd.f32 0.0, %v804
  %v806 = vpop.f32.mrb[0].mxu0
  %807 = vmatprep.mubr.bf16.mxu0 %v535
  %808 = vmatmul.mubr.bf16.gmra.mrb[0].mxu0 %v354
  %v809 = vpop.f32.mrb[0].mxu0
  %v810 = vadd.f32 0.0, %v809
  %v811 = vpop.f32.mrb[0].mxu0
  %v812 = vpop.f32.mrb[0].mxu0
  %v813 = vadd.f32 0.0, %v812
  %v814 = vpop.f32.mrb[0].mxu0
  %815 = vmatprep.mubr.bf16.mxu0 %v538
  %816 = vmatmul.mubr.bf16.gmra.mrb[0].mxu0 %v356
  %v817 = vpop.f32.mrb[0].mxu0
  %v818 = vadd.f32 0.0, %v817
  %v819 = vpop.f32.mrb[0].mxu0
  %v820 = vpop.f32.mrb[0].mxu0
  %v821 = vadd.f32 0.0, %v820
  %v822 = vpop.f32.mrb[0].mxu0
  %823 = vmatprep.mubr.bf16.mxu0 %v541
  %824 = vmatmul.mubr.bf16.gmra.mrb[0].mxu0 %v358
  %v825 = vpop.f32.mrb[0].mxu0
  %v826 = vadd.f32 0.0, %v825
  %v827 = vpop.f32.mrb[0].mxu0
  %v828 = vpop.f32.mrb[0].mxu0
  %v829 = vadd.f32 0.0, %v828
  %v830 = vpop.f32.mrb[0].mxu0
  %831 = vdwg.mxu0
  %v832 = vpack.c.bf16 %v581, %v578
  %v833 = vpack.c.bf16 %v589, %v586
  %v834 = vpack.c.bf16 %v597, %v594
  %v835 = vpack.c.bf16 %v605, %v602
  %v836 = vpack.c.bf16 %v613, %v610
  %v837 = vpack.c.bf16 %v621, %v618
  %v838 = vpack.c.bf16 %v629, %v626
  %v839 = vpack.c.bf16 %v637, %v634
  %v840 = vpack.c.bf16 %v645, %v642
  %v841 = vpack.c.bf16 %v653, %v650
  %v842 = vpack.c.bf16 %v661, %v658
  %v843 = vpack.c.bf16 %v669, %v666
  %v844 = vpack.c.bf16 %v677, %v674
  %v845 = vpack.c.bf16 %v685, %v682
  %v846 = vpack.c.bf16 %v693, %v690
  %v847 = vpack.c.bf16 %v701, %v698
  %v848 = vpack.c.bf16 %v709, %v706
  %v849 = vpack.c.bf16 %v717, %v714
  %v850 = vpack.c.bf16 %v725, %v722
  %v851 = vpack.c.bf16 %v733, %v730
  %v852 = vpack.c.bf16 %v741, %v738
  %v853 = vpack.c.bf16 %v749, %v746
  %v854 = vpack.c.bf16 %v757, %v754
  %v855 = vpack.c.bf16 %v765, %v762
  %v856 = vpack.c.bf16 %v773, %v770
  %v857 = vpack.c.bf16 %v781, %v778
  %v858 = vpack.c.bf16 %v789, %v786
  %v859 = vpack.c.bf16 %v797, %v794
  %v860 = vpack.c.bf16 %v805, %v802
  %v861 = vpack.c.bf16 %v813, %v810
  %v862 = vpack.c.bf16 %v821, %v818
  %v863 = vpack.c.bf16 %v829, %v826
  %v896 = vunpack.c.l.b16 %v832
  %v897 = vunpack.c.h.b16 %v832
  %v898 = vunpack.c.l.b16 %v833
  %v899 = vunpack.c.h.b16 %v833
  %v900 = vunpack.c.l.b16 %v834
  %v901 = vunpack.c.h.b16 %v834
  %v902 = vunpack.c.l.b16 %v835
  %v903 = vunpack.c.h.b16 %v835
  %v904 = vunpack.c.l.b16 %v836
  %v905 = vunpack.c.h.b16 %v836
  %v906 = vunpack.c.l.b16 %v837
  %v907 = vunpack.c.h.b16 %v837
  %v908 = vunpack.c.l.b16 %v838
  %v909 = vunpack.c.h.b16 %v838
  %v910 = vunpack.c.l.b16 %v839
  %v911 = vunpack.c.h.b16 %v839
  %v912 = vunpack.c.l.b16 %v840
  %v913 = vunpack.c.h.b16 %v840
  %v914 = vunpack.c.l.b16 %v841
  %v915 = vunpack.c.h.b16 %v841
  %v916 = vunpack.c.l.b16 %v842
  %v917 = vunpack.c.h.b16 %v842
  %v918 = vunpack.c.l.b16 %v843
  %v919 = vunpack.c.h.b16 %v843
  %v920 = vunpack.c.l.b16 %v844
  %v921 = vunpack.c.h.b16 %v844
  %v922 = vunpack.c.l.b16 %v845
  %v923 = vunpack.c.h.b16 %v845
  %v924 = vunpack.c.l.b16 %v846
  %v925 = vunpack.c.h.b16 %v846
  %v926 = vunpack.c.l.b16 %v847
  %v927 = vunpack.c.h.b16 %v847
  %v928 = vunpack.c.l.b16 %v848
  %v929 = vunpack.c.h.b16 %v848
  %v930 = vunpack.c.l.b16 %v849
  %v931 = vunpack.c.h.b16 %v849
  %v932 = vunpack.c.l.b16 %v850
  %v933 = vunpack.c.h.b16 %v850
  %v934 = vunpack.c.l.b16 %v851
  %v935 = vunpack.c.h.b16 %v851
  %v936 = vunpack.c.l.b16 %v852
  %v937 = vunpack.c.h.b16 %v852
  %v938 = vunpack.c.l.b16 %v853
  %v939 = vunpack.c.h.b16 %v853
  %v940 = vunpack.c.l.b16 %v854
  %v941 = vunpack.c.h.b16 %v854
  %v942 = vunpack.c.l.b16 %v855
  %v943 = vunpack.c.h.b16 %v855
  %v944 = vunpack.c.l.b16 %v856
  %v945 = vunpack.c.h.b16 %v856
  %v946 = vunpack.c.l.b16 %v857
  %v947 = vunpack.c.h.b16 %v857
  %v948 = vunpack.c.l.b16 %v858
  %v949 = vunpack.c.h.b16 %v858
  %v950 = vunpack.c.l.b16 %v859
  %v951 = vunpack.c.h.b16 %v859
  %v952 = vunpack.c.l.b16 %v860
  %v953 = vunpack.c.h.b16 %v860
  %v954 = vunpack.c.l.b16 %v861
  %v955 = vunpack.c.h.b16 %v861
  %v956 = vunpack.c.l.b16 %v862
  %v957 = vunpack.c.h.b16 %v862
  %v958 = vunpack.c.l.b16 %v863
  %v959 = vunpack.c.h.b16 %v863
  %v960 = vpack.c.b16 %v896, %v896
  %v961 = vpack.c.b16 %v897, %v897
  %v962 = vpack.c.b16 %v898, %v898
  %v963 = vpack.c.b16 %v899, %v899
  %v964 = vpack.c.b16 %v900, %v900
  %v965 = vpack.c.b16 %v901, %v901
  %v966 = vpack.c.b16 %v902, %v902
  %v967 = vpack.c.b16 %v903, %v903
  %v968 = vpack.c.b16 %v904, %v904
  %v969 = vpack.c.b16 %v905, %v905
  %v970 = vpack.c.b16 %v906, %v906
  %v971 = vpack.c.b16 %v907, %v907
  %v972 = vpack.c.b16 %v908, %v908
  %v973 = vpack.c.b16 %v909, %v909
  %v974 = vpack.c.b16 %v910, %v910
  %v975 = vpack.c.b16 %v911, %v911
  %v976 = vpack.c.b16 %v912, %v912
  %v977 = vpack.c.b16 %v913, %v913
  %v978 = vpack.c.b16 %v914, %v914
  %v979 = vpack.c.b16 %v915, %v915
  %v980 = vpack.c.b16 %v916, %v916
  %v981 = vpack.c.b16 %v917, %v917
  %v982 = vpack.c.b16 %v918, %v918
  %v983 = vpack.c.b16 %v919, %v919
  %v984 = vpack.c.b16 %v920, %v920
  %v985 = vpack.c.b16 %v921, %v921
  %v986 = vpack.c.b16 %v922, %v922
  %v987 = vpack.c.b16 %v923, %v923
  %v988 = vpack.c.b16 %v924, %v924
  %v989 = vpack.c.b16 %v925, %v925
  %v990 = vpack.c.b16 %v926, %v926
  %v991 = vpack.c.b16 %v927, %v927
  %v992 = vpack.c.b16 %v928, %v928
  %v993 = vpack.c.b16 %v929, %v929
  %v994 = vpack.c.b16 %v930, %v930
  %v995 = vpack.c.b16 %v931, %v931
  %v996 = vpack.c.b16 %v932, %v932
  %v997 = vpack.c.b16 %v933, %v933
  %v998 = vpack.c.b16 %v934, %v934
  %v999 = vpack.c.b16 %v935, %v935
  %v1000 = vpack.c.b16 %v936, %v936
  %v1001 = vpack.c.b16 %v937, %v937
  %v1002 = vpack.c.b16 %v938, %v938
  %v1003 = vpack.c.b16 %v939, %v939
  %v1004 = vpack.c.b16 %v940, %v940
  %v1005 = vpack.c.b16 %v941, %v941
  %v1006 = vpack.c.b16 %v942, %v942
  %v1007 = vpack.c.b16 %v943, %v943
  %v1008 = vpack.c.b16 %v944, %v944
  %v1009 = vpack.c.b16 %v945, %v945
  %v1010 = vpack.c.b16 %v946, %v946
  %v1011 = vpack.c.b16 %v947, %v947
  %v1012 = vpack.c.b16 %v948, %v948
  %v1013 = vpack.c.b16 %v949, %v949
  %v1014 = vpack.c.b16 %v950, %v950
  %v1015 = vpack.c.b16 %v951, %v951
  %v1016 = vpack.c.b16 %v952, %v952
  %v1017 = vpack.c.b16 %v953, %v953
  %v1018 = vpack.c.b16 %v954, %v954
  %v1019 = vpack.c.b16 %v955, %v955
  %v1020 = vpack.c.b16 %v956, %v956
  %v1021 = vpack.c.b16 %v957, %v957
  %v1022 = vpack.c.b16 %v958, %v958
  %v1023 = vpack.c.b16 %v959, %v959
  %vm1088 = vcmask 257024
  %1089 = vst.msk [vmem:[%s2] sm:$0xf] %vm1088, %v960
  %1090 = vst.msk [vmem:[%s2 + $0x4] sm:$0xf] %vm1088, %v961
  %1091 = vst.msk [vmem:[%s2 + $0x8] sm:$0xf] %vm1088, %v962
  %1092 = vst.msk [vmem:[%s2 + $0xc] sm:$0xf] %vm1088, %v963
  %1093 = vst.msk [vmem:[%s2 + $0x10] sm:$0xf] %vm1088, %v964
  %1094 = vst.msk [vmem:[%s2 + $0x14] sm:$0xf] %vm1088, %v965
  %1095 = vst.msk [vmem:[%s2 + $0x18] sm:$0xf] %vm1088, %v966
  %1096 = vst.msk [vmem:[%s2 + $0x1c] sm:$0xf] %vm1088, %v967
  %1097 = vst.msk [vmem:[%s2 + $0x20] sm:$0xf] %vm1088, %v968
  %1098 = vst.msk [vmem:[%s2 + $0x24] sm:$0xf] %vm1088, %v969
  %1099 = vst.msk [vmem:[%s2 + $0x28] sm:$0xf] %vm1088, %v970
  %1100 = vst.msk [vmem:[%s2 + $0x2c] sm:$0xf] %vm1088, %v971
  %1101 = vst.msk [vmem:[%s2 + $0x30] sm:$0xf] %vm1088, %v972
  %1102 = vst.msk [vmem:[%s2 + $0x34] sm:$0xf] %vm1088, %v973
  %1103 = vst.msk [vmem:[%s2 + $0x38] sm:$0xf] %vm1088, %v974
  %1104 = vst.msk [vmem:[%s2 + $0x3c] sm:$0xf] %vm1088, %v975
  %1105 = vst.msk [vmem:[%s2 + $0x40] sm:$0xf] %vm1088, %v976
  %1106 = vst.msk [vmem:[%s2 + $0x44] sm:$0xf] %vm1088, %v977
  %1107 = vst.msk [vmem:[%s2 + $0x48] sm:$0xf] %vm1088, %v978
  %1108 = vst.msk [vmem:[%s2 + $0x4c] sm:$0xf] %vm1088, %v979
  %1109 = vst.msk [vmem:[%s2 + $0x50] sm:$0xf] %vm1088, %v980
  %1110 = vst.msk [vmem:[%s2 + $0x54] sm:$0xf] %vm1088, %v981
  %1111 = vst.msk [vmem:[%s2 + $0x58] sm:$0xf] %vm1088, %v982
  %1112 = vst.msk [vmem:[%s2 + $0x5c] sm:$0xf] %vm1088, %v983
  %1113 = vst.msk [vmem:[%s2 + $0x60] sm:$0xf] %vm1088, %v984
  %1114 = vst.msk [vmem:[%s2 + $0x64] sm:$0xf] %vm1088, %v985
  %1115 = vst.msk [vmem:[%s2 + $0x68] sm:$0xf] %vm1088, %v986
  %1116 = vst.msk [vmem:[%s2 + $0x6c] sm:$0xf] %vm1088, %v987
  %1117 = vst.msk [vmem:[%s2 + $0x70] sm:$0xf] %vm1088, %v988
  %1118 = vst.msk [vmem:[%s2 + $0x74] sm:$0xf] %vm1088, %v989
  %1119 = vst.msk [vmem:[%s2 + $0x78] sm:$0xf] %vm1088, %v990
  %1120 = vst.msk [vmem:[%s2 + $0x7c] sm:$0xf] %vm1088, %v991
  %1121 = vst.msk [vmem:[%s2 + $0x80] sm:$0xf] %vm1088, %v992
  %1122 = vst.msk [vmem:[%s2 + $0x84] sm:$0xf] %vm1088, %v993
  %1123 = vst.msk [vmem:[%s2 + $0x88] sm:$0xf] %vm1088, %v994
  %1124 = vst.msk [vmem:[%s2 + $0x8c] sm:$0xf] %vm1088, %v995
  %1125 = vst.msk [vmem:[%s2 + $0x90] sm:$0xf] %vm1088, %v996
  %1126 = vst.msk [vmem:[%s2 + $0x94] sm:$0xf] %vm1088, %v997
  %1127 = vst.msk [vmem:[%s2 + $0x98] sm:$0xf] %vm1088, %v998
  %1128 = vst.msk [vmem:[%s2 + $0x9c] sm:$0xf] %vm1088, %v999
  %1129 = vst.msk [vmem:[%s2 + $0xa0] sm:$0xf] %vm1088, %v1000
  %1130 = vst.msk [vmem:[%s2 + $0xa4] sm:$0xf] %vm1088, %v1001
  %1131 = vst.msk [vmem:[%s2 + $0xa8] sm:$0xf] %vm1088, %v1002
  %1132 = vst.msk [vmem:[%s2 + $0xac] sm:$0xf] %vm1088, %v1003
  %1133 = vst.msk [vmem:[%s2 + $0xb0] sm:$0xf] %vm1088, %v1004
  %1134 = vst.msk [vmem:[%s2 + $0xb4] sm:$0xf] %vm1088, %v1005
  %1135 = vst.msk [vmem:[%s2 + $0xb8] sm:$0xf] %vm1088, %v1006
  %1136 = vst.msk [vmem:[%s2 + $0xbc] sm:$0xf] %vm1088, %v1007
  %1137 = vst.msk [vmem:[%s2 + $0xc0] sm:$0xf] %vm1088, %v1008
  %1138 = vst.msk [vmem:[%s2 + $0xc4] sm:$0xf] %vm1088, %v1009
  %1139 = vst.msk [vmem:[%s2 + $0xc8] sm:$0xf] %vm1088, %v1010
  %1140 = vst.msk [vmem:[%s2 + $0xcc] sm:$0xf] %vm1088, %v1011
  %1141 = vst.msk [vmem:[%s2 + $0xd0] sm:$0xf] %vm1088, %v1012
  %1142 = vst.msk [vmem:[%s2 + $0xd4] sm:$0xf] %vm1088, %v1013
  %1143 = vst.msk [vmem:[%s2 + $0xd8] sm:$0xf] %vm1088, %v1014
  %1144 = vst.msk [vmem:[%s2 + $0xdc] sm:$0xf] %vm1088, %v1015
  %1145 = vst.msk [vmem:[%s2 + $0xe0] sm:$0xf] %vm1088, %v1016
  %1146 = vst.msk [vmem:[%s2 + $0xe4] sm:$0xf] %vm1088, %v1017
  %1147 = vst.msk [vmem:[%s2 + $0xe8] sm:$0xf] %vm1088, %v1018
  %1148 = vst.msk [vmem:[%s2 + $0xec] sm:$0xf] %vm1088, %v1019
  %1149 = vst.msk [vmem:[%s2 + $0xf0] sm:$0xf] %vm1088, %v1020
  %1150 = vst.msk [vmem:[%s2 + $0xf4] sm:$0xf] %vm1088, %v1021
  %1151 = vst.msk [vmem:[%s2 + $0xf8] sm:$0xf] %vm1088, %v1022
  %1152 = vst.msk [vmem:[%s2 + $0xfc] sm:$0xf] %vm1088, %v1023
  %v1153 = vld [vmem:[%s3] sm:$0x1]
  %vm1154 = vcmask 261120
  %v1155 = vsel %vm1154, %v578, 0.0
  %v1156 = vsel %vm1154, %v581, 0.0
  %v1157 = vadd.f32 %v1155, %v1156
  %v1158 = vsel %vm1154, %v586, 0.0
  %v1159 = vadd.f32 %v1157, %v1158
  %v1160 = vsel %vm1154, %v589, 0.0
  %v1161 = vadd.f32 %v1159, %v1160
  %v1162 = vsel %vm1154, %v594, 0.0
  %v1163 = vadd.f32 %v1161, %v1162
  %v1164 = vsel %vm1154, %v597, 0.0
  %v1165 = vadd.f32 %v1163, %v1164
  %v1166 = vsel %vm1154, %v602, 0.0
  %v1167 = vadd.f32 %v1165, %v1166
  %v1168 = vsel %vm1154, %v605, 0.0
  %v1169 = vadd.f32 %v1167, %v1168
  %v1170 = vsel %vm1154, %v610, 0.0
  %v1171 = vadd.f32 %v1169, %v1170
  %v1172 = vsel %vm1154, %v613, 0.0
  %v1173 = vadd.f32 %v1171, %v1172
  %v1174 = vsel %vm1154, %v618, 0.0
  %v1175 = vadd.f32 %v1173, %v1174
  %v1176 = vsel %vm1154, %v621, 0.0
  %v1177 = vadd.f32 %v1175, %v1176
  %v1178 = vsel %vm1154, %v626, 0.0
  %v1179 = vadd.f32 %v1177, %v1178
  %v1180 = vsel %vm1154, %v629, 0.0
  %v1181 = vadd.f32 %v1179, %v1180
  %v1182 = vsel %vm1154, %v634, 0.0
  %v1183 = vadd.f32 %v1181, %v1182
  %v1184 = vsel %vm1154, %v637, 0.0
  %v1185 = vadd.f32 %v1183, %v1184
  %v1186 = vsel %vm1154, %v642, 0.0
  %v1187 = vadd.f32 %v1185, %v1186
  %v1188 = vsel %vm1154, %v645, 0.0
  %v1189 = vadd.f32 %v1187, %v1188
  %v1190 = vsel %vm1154, %v650, 0.0
  %v1191 = vadd.f32 %v1189, %v1190
  %v1192 = vsel %vm1154, %v653, 0.0
  %v1193 = vadd.f32 %v1191, %v1192
  %v1194 = vsel %vm1154, %v658, 0.0
  %v1195 = vadd.f32 %v1193, %v1194
  %v1196 = vsel %vm1154, %v661, 0.0
  %v1197 = vadd.f32 %v1195, %v1196
  %v1198 = vsel %vm1154, %v666, 0.0
  %v1199 = vadd.f32 %v1197, %v1198
  %v1200 = vsel %vm1154, %v669, 0.0
  %v1201 = vadd.f32 %v1199, %v1200
  %v1202 = vsel %vm1154, %v674, 0.0
  %v1203 = vadd.f32 %v1201, %v1202
  %v1204 = vsel %vm1154, %v677, 0.0
  %v1205 = vadd.f32 %v1203, %v1204
  %v1206 = vsel %vm1154, %v682, 0.0
  %v1207 = vadd.f32 %v1205, %v1206
  %v1208 = vsel %vm1154, %v685, 0.0
  %v1209 = vadd.f32 %v1207, %v1208
  %v1210 = vsel %vm1154, %v690, 0.0
  %v1211 = vadd.f32 %v1209, %v1210
  %v1212 = vsel %vm1154, %v693, 0.0
  %v1213 = vadd.f32 %v1211, %v1212
  %v1214 = vsel %vm1154, %v698, 0.0
  %v1215 = vadd.f32 %v1213, %v1214
  %v1216 = vsel %vm1154, %v701, 0.0
  %v1217 = vadd.f32 %v1215, %v1216
  %v1218 = vsel %vm1154, %v706, 0.0
  %v1219 = vadd.f32 %v1217, %v1218
  %v1220 = vsel %vm1154, %v709, 0.0
  %v1221 = vadd.f32 %v1219, %v1220
  %v1222 = vsel %vm1154, %v714, 0.0
  %v1223 = vadd.f32 %v1221, %v1222
  %v1224 = vsel %vm1154, %v717, 0.0
  %v1225 = vadd.f32 %v1223, %v1224
  %v1226 = vsel %vm1154, %v722, 0.0
  %v1227 = vadd.f32 %v1225, %v1226
  %v1228 = vsel %vm1154, %v725, 0.0
  %v1229 = vadd.f32 %v1227, %v1228
  %v1230 = vsel %vm1154, %v730, 0.0
  %v1231 = vadd.f32 %v1229, %v1230
  %v1232 = vsel %vm1154, %v733, 0.0
  %v1233 = vadd.f32 %v1231, %v1232
  %v1234 = vsel %vm1154, %v738, 0.0
  %v1235 = vadd.f32 %v1233, %v1234
  %v1236 = vsel %vm1154, %v741, 0.0
  %v1237 = vadd.f32 %v1235, %v1236
  %v1238 = vsel %vm1154, %v746, 0.0
  %v1239 = vadd.f32 %v1237, %v1238
  %v1240 = vsel %vm1154, %v749, 0.0
  %v1241 = vadd.f32 %v1239, %v1240
  %v1242 = vsel %vm1154, %v754, 0.0
  %v1243 = vadd.f32 %v1241, %v1242
  %v1244 = vsel %vm1154, %v757, 0.0
  %v1245 = vadd.f32 %v1243, %v1244
  %v1246 = vsel %vm1154, %v762, 0.0
  %v1247 = vadd.f32 %v1245, %v1246
  %v1248 = vsel %vm1154, %v765, 0.0
  %v1249 = vadd.f32 %v1247, %v1248
  %v1250 = vsel %vm1154, %v770, 0.0
  %v1251 = vadd.f32 %v1249, %v1250
  %v1252 = vsel %vm1154, %v773, 0.0
  %v1253 = vadd.f32 %v1251, %v1252
  %v1254 = vsel %vm1154, %v778, 0.0
  %v1255 = vadd.f32 %v1253, %v1254
  %v1256 = vsel %vm1154, %v781, 0.0
  %v1257 = vadd.f32 %v1255, %v1256
  %v1258 = vsel %vm1154, %v786, 0.0
  %v1259 = vadd.f32 %v1257, %v1258
  %v1260 = vsel %vm1154, %v789, 0.0
  %v1261 = vadd.f32 %v1259, %v1260
  %v1262 = vsel %vm1154, %v794, 0.0
  %v1263 = vadd.f32 %v1261, %v1262
  %v1264 = vsel %vm1154, %v797, 0.0
  %v1265 = vadd.f32 %v1263, %v1264
  %v1266 = vsel %vm1154, %v802, 0.0
  %v1267 = vadd.f32 %v1265, %v1266
  %v1268 = vsel %vm1154, %v805, 0.0
  %v1269 = vadd.f32 %v1267, %v1268
  %v1270 = vsel %vm1154, %v810, 0.0
  %v1271 = vadd.f32 %v1269, %v1270
  %v1272 = vsel %vm1154, %v813, 0.0
  %v1273 = vadd.f32 %v1271, %v1272
  %v1274 = vsel %vm1154, %v818, 0.0
  %v1275 = vadd.f32 %v1273, %v1274
  %v1276 = vsel %vm1154, %v821, 0.0
  %v1277 = vadd.f32 %v1275, %v1276
  %v1278 = vsel %vm1154, %v826, 0.0
  %v1279 = vadd.f32 %v1277, %v1278
  %v1280 = vsel %vm1154, %v829, 0.0
  %v1281 = vadd.f32 %v1279, %v1280
  %v1282 = vrot.slane %v1281, 4
  %v1283 = vadd.f32 %v1281, %v1282
  %v1284 = vrot.slane %v1283, 2
  %v1285 = vadd.f32 %v1283, %v1284
  %v1286 = vrot.slane %v1285, 1
  %v1287 = vadd.f32 %v1285, %v1286
  %v1288 = vadd.f32 %v1153, %v1287
  %vm1289 = vcmask 253952
  %1290 = vst.msk [vmem:[%s3] sm:$0x1] %vm1289, %v1288
  %v1291 = vld [vmem:[%s4] sm:$0x1]
  %v1292 = vmul.f32 %v578, %v578
  %v1293 = vmul.f32 %v581, %v581
  %v1294 = vmul.f32 %v586, %v586
  %v1295 = vmul.f32 %v589, %v589
  %v1296 = vmul.f32 %v594, %v594
  %v1297 = vmul.f32 %v597, %v597
  %v1298 = vmul.f32 %v602, %v602
  %v1299 = vmul.f32 %v605, %v605
  %v1300 = vmul.f32 %v610, %v610
  %v1301 = vmul.f32 %v613, %v613
  %v1302 = vmul.f32 %v618, %v618
  %v1303 = vmul.f32 %v621, %v621
  %v1304 = vmul.f32 %v626, %v626
  %v1305 = vmul.f32 %v629, %v629
  %v1306 = vmul.f32 %v634, %v634
  %v1307 = vmul.f32 %v637, %v637
  %v1308 = vmul.f32 %v642, %v642
  %v1309 = vmul.f32 %v645, %v645
  %v1310 = vmul.f32 %v650, %v650
  %v1311 = vmul.f32 %v653, %v653
  %v1312 = vmul.f32 %v658, %v658
  %v1313 = vmul.f32 %v661, %v661
  %v1314 = vmul.f32 %v666, %v666
  %v1315 = vmul.f32 %v669, %v669
  %v1316 = vmul.f32 %v674, %v674
  %v1317 = vmul.f32 %v677, %v677
  %v1318 = vmul.f32 %v682, %v682
  %v1319 = vmul.f32 %v685, %v685
  %v1320 = vmul.f32 %v690, %v690
  %v1321 = vmul.f32 %v693, %v693
  %v1322 = vmul.f32 %v698, %v698
  %v1323 = vmul.f32 %v701, %v701
  %v1324 = vmul.f32 %v706, %v706
  %v1325 = vmul.f32 %v709, %v709
  %v1326 = vmul.f32 %v714, %v714
  %v1327 = vmul.f32 %v717, %v717
  %v1328 = vmul.f32 %v722, %v722
  %v1329 = vmul.f32 %v725, %v725
  %v1330 = vmul.f32 %v730, %v730
  %v1331 = vmul.f32 %v733, %v733
  %v1332 = vmul.f32 %v738, %v738
  %v1333 = vmul.f32 %v741, %v741
  %v1334 = vmul.f32 %v746, %v746
  %v1335 = vmul.f32 %v749, %v749
  %v1336 = vmul.f32 %v754, %v754
  %v1337 = vmul.f32 %v757, %v757
  %v1338 = vmul.f32 %v762, %v762
  %v1339 = vmul.f32 %v765, %v765
  %v1340 = vmul.f32 %v770, %v770
  %v1341 = vmul.f32 %v773, %v773
  %v1342 = vmul.f32 %v778, %v778
  %v1343 = vmul.f32 %v781, %v781
  %v1344 = vmul.f32 %v786, %v786
  %v1345 = vmul.f32 %v789, %v789
  %v1346 = vmul.f32 %v794, %v794
  %v1347 = vmul.f32 %v797, %v797
  %v1348 = vmul.f32 %v802, %v802
  %v1349 = vmul.f32 %v805, %v805
  %v1350 = vmul.f32 %v810, %v810
  %v1351 = vmul.f32 %v813, %v813
  %v1352 = vmul.f32 %v818, %v818
  %v1353 = vmul.f32 %v821, %v821
  %v1354 = vmul.f32 %v826, %v826
  %v1355 = vmul.f32 %v829, %v829
  %v1356 = vsel %vm1154, %v1292, 0.0
  %v1357 = vsel %vm1154, %v1293, 0.0
  %v1358 = vadd.f32 %v1356, %v1357
  %v1359 = vsel %vm1154, %v1294, 0.0
  %v1360 = vadd.f32 %v1358, %v1359
  %v1361 = vsel %vm1154, %v1295, 0.0
  %v1362 = vadd.f32 %v1360, %v1361
  %v1363 = vsel %vm1154, %v1296, 0.0
  %v1364 = vadd.f32 %v1362, %v1363
  %v1365 = vsel %vm1154, %v1297, 0.0
  %v1366 = vadd.f32 %v1364, %v1365
  %v1367 = vsel %vm1154, %v1298, 0.0
  %v1368 = vadd.f32 %v1366, %v1367
  %v1369 = vsel %vm1154, %v1299, 0.0
  %v1370 = vadd.f32 %v1368, %v1369
  %v1371 = vsel %vm1154, %v1300, 0.0
  %v1372 = vadd.f32 %v1370, %v1371
  %v1373 = vsel %vm1154, %v1301, 0.0
  %v1374 = vadd.f32 %v1372, %v1373
  %v1375 = vsel %vm1154, %v1302, 0.0
  %v1376 = vadd.f32 %v1374, %v1375
  %v1377 = vsel %vm1154, %v1303, 0.0
  %v1378 = vadd.f32 %v1376, %v1377
  %v1379 = vsel %vm1154, %v1304, 0.0
  %v1380 = vadd.f32 %v1378, %v1379
  %v1381 = vsel %vm1154, %v1305, 0.0
  %v1382 = vadd.f32 %v1380, %v1381
  %v1383 = vsel %vm1154, %v1306, 0.0
  %v1384 = vadd.f32 %v1382, %v1383
  %v1385 = vsel %vm1154, %v1307, 0.0
  %v1386 = vadd.f32 %v1384, %v1385
  %v1387 = vsel %vm1154, %v1308, 0.0
  %v1388 = vadd.f32 %v1386, %v1387
  %v1389 = vsel %vm1154, %v1309, 0.0
  %v1390 = vadd.f32 %v1388, %v1389
  %v1391 = vsel %vm1154, %v1310, 0.0
  %v1392 = vadd.f32 %v1390, %v1391
  %v1393 = vsel %vm1154, %v1311, 0.0
  %v1394 = vadd.f32 %v1392, %v1393
  %v1395 = vsel %vm1154, %v1312, 0.0
  %v1396 = vadd.f32 %v1394, %v1395
  %v1397 = vsel %vm1154, %v1313, 0.0
  %v1398 = vadd.f32 %v1396, %v1397
  %v1399 = vsel %vm1154, %v1314, 0.0
  %v1400 = vadd.f32 %v1398, %v1399
  %v1401 = vsel %vm1154, %v1315, 0.0
  %v1402 = vadd.f32 %v1400, %v1401
  %v1403 = vsel %vm1154, %v1316, 0.0
  %v1404 = vadd.f32 %v1402, %v1403
  %v1405 = vsel %vm1154, %v1317, 0.0
  %v1406 = vadd.f32 %v1404, %v1405
  %v1407 = vsel %vm1154, %v1318, 0.0
  %v1408 = vadd.f32 %v1406, %v1407
  %v1409 = vsel %vm1154, %v1319, 0.0
  %v1410 = vadd.f32 %v1408, %v1409
  %v1411 = vsel %vm1154, %v1320, 0.0
  %v1412 = vadd.f32 %v1410, %v1411
  %v1413 = vsel %vm1154, %v1321, 0.0
  %v1414 = vadd.f32 %v1412, %v1413
  %v1415 = vsel %vm1154, %v1322, 0.0
  %v1416 = vadd.f32 %v1414, %v1415
  %v1417 = vsel %vm1154, %v1323, 0.0
  %v1418 = vadd.f32 %v1416, %v1417
  %v1419 = vsel %vm1154, %v1324, 0.0
  %v1420 = vadd.f32 %v1418, %v1419
  %v1421 = vsel %vm1154, %v1325, 0.0
  %v1422 = vadd.f32 %v1420, %v1421
  %v1423 = vsel %vm1154, %v1326, 0.0
  %v1424 = vadd.f32 %v1422, %v1423
  %v1425 = vsel %vm1154, %v1327, 0.0
  %v1426 = vadd.f32 %v1424, %v1425
  %v1427 = vsel %vm1154, %v1328, 0.0
  %v1428 = vadd.f32 %v1426, %v1427
  %v1429 = vsel %vm1154, %v1329, 0.0
  %v1430 = vadd.f32 %v1428, %v1429
  %v1431 = vsel %vm1154, %v1330, 0.0
  %v1432 = vadd.f32 %v1430, %v1431
  %v1433 = vsel %vm1154, %v1331, 0.0
  %v1434 = vadd.f32 %v1432, %v1433
  %v1435 = vsel %vm1154, %v1332, 0.0
  %v1436 = vadd.f32 %v1434, %v1435
  %v1437 = vsel %vm1154, %v1333, 0.0
  %v1438 = vadd.f32 %v1436, %v1437
  %v1439 = vsel %vm1154, %v1334, 0.0
  %v1440 = vadd.f32 %v1438, %v1439
  %v1441 = vsel %vm1154, %v1335, 0.0
  %v1442 = vadd.f32 %v1440, %v1441
  %v1443 = vsel %vm1154, %v1336, 0.0
  %v1444 = vadd.f32 %v1442, %v1443
  %v1445 = vsel %vm1154, %v1337, 0.0
  %v1446 = vadd.f32 %v1444, %v1445
  %v1447 = vsel %vm1154, %v1338, 0.0
  %v1448 = vadd.f32 %v1446, %v1447
  %v1449 = vsel %vm1154, %v1339, 0.0
  %v1450 = vadd.f32 %v1448, %v1449
  %v1451 = vsel %vm1154, %v1340, 0.0
  %v1452 = vadd.f32 %v1450, %v1451
  %v1453 = vsel %vm1154, %v1341, 0.0
  %v1454 = vadd.f32 %v1452, %v1453
  %v1455 = vsel %vm1154, %v1342, 0.0
  %v1456 = vadd.f32 %v1454, %v1455
  %v1457 = vsel %vm1154, %v1343, 0.0
  %v1458 = vadd.f32 %v1456, %v1457
  %v1459 = vsel %vm1154, %v1344, 0.0
  %v1460 = vadd.f32 %v1458, %v1459
  %v1461 = vsel %vm1154, %v1345, 0.0
  %v1462 = vadd.f32 %v1460, %v1461
  %v1463 = vsel %vm1154, %v1346, 0.0
  %v1464 = vadd.f32 %v1462, %v1463
  %v1465 = vsel %vm1154, %v1347, 0.0
  %v1466 = vadd.f32 %v1464, %v1465
  %v1467 = vsel %vm1154, %v1348, 0.0
  %v1468 = vadd.f32 %v1466, %v1467
  %v1469 = vsel %vm1154, %v1349, 0.0
  %v1470 = vadd.f32 %v1468, %v1469
  %v1471 = vsel %vm1154, %v1350, 0.0
  %v1472 = vadd.f32 %v1470, %v1471
  %v1473 = vsel %vm1154, %v1351, 0.0
  %v1474 = vadd.f32 %v1472, %v1473
  %v1475 = vsel %vm1154, %v1352, 0.0
  %v1476 = vadd.f32 %v1474, %v1475
  %v1477 = vsel %vm1154, %v1353, 0.0
  %v1478 = vadd.f32 %v1476, %v1477
  %v1479 = vsel %vm1154, %v1354, 0.0
  %v1480 = vadd.f32 %v1478, %v1479
  %v1481 = vsel %vm1154, %v1355, 0.0
  %v1482 = vadd.f32 %v1480, %v1481
  %v1483 = vrot.slane %v1482, 4
  %v1484 = vadd.f32 %v1482, %v1483
  %v1485 = vrot.slane %v1484, 2
  %v1486 = vadd.f32 %v1484, %v1485
  %v1487 = vrot.slane %v1486, 1
  %v1488 = vadd.f32 %v1486, %v1487
  %v1489 = vadd.f32 %v1291, %v1488
  %1490 = vst.msk [vmem:[%s4] sm:$0x1] %vm1289, %v1489
  // Predicated region
  $region14: #{_lambda_.20} parent=0 // pred_check
    _
  $region15: #{_lambda_.20} parent=0 // pred_check_branch
    %1492 = sbr.rel (0) target = $region17
  $region16: #{_lambda_.20} parent=0 // pred_region
    _
  $region17: #{_lambda_.20} parent=0 // pred_fallthru
    _
  // Predicated region
  $region18: #{_lambda_.20} parent=0 // pred_check
    _
  $region19: #{_lambda_.20} parent=0 // pred_check_branch
    %1494 = sbr.rel (0) target = $region21
  $region20: #{_lambda_.20} parent=0 // pred_region
    _
  $region21: #{_lambda_.20} parent=0 // pred_fallthru
    _
  // Predicated region
  $region22: #{_lambda_.20} parent=0 // pred_check
    _
  $region23: #{_lambda_.20} parent=0 // pred_check_branch
    %1496 = sbr.rel (0) target = $region25
  $region24: #{_lambda_.20} parent=0 // pred_region
    _
  $region25: #{_lambda_.20} parent=0 // pred_fallthru
    _
  // Predicated region
  $region26: #{_lambda_.20} parent=0 // pred_check
    _
  $region27: #{_lambda_.20} parent=0 // pred_check_branch
    %1498 = sbr.rel (0) target = $region29
  $region28: #{_lambda_.20} parent=0 // pred_region
    _
  $region29: #{_lambda_.20} parent=0 // pred_fallthru
    _
  // Predicated region
  $region30: #{_lambda_.20} parent=0 // pred_check
    _
  $region31: #{_lambda_.20} parent=0 // pred_check_branch
    %1500 = sbr.rel (0) target = $region33
  $region32: #{_lambda_.20} parent=0 // pred_region
    _
  $region33: #{_lambda_.20} parent=0 // pred_fallthru
    _
  // Predicated region
  $region34: #{_lambda_.20} parent=0 // pred_check
    _
  $region35: #{_lambda_.20} parent=0 // pred_check_branch
    %1502 = sbr.rel (0) target = $region37
  $region36: #{_lambda_.20} parent=0 // pred_region
    _
  $region37: #{_lambda_.20} parent=0 // pred_fallthru
    _

// kernel: _lambda_.21
$region0: #{_lambda_.21}
  #allocation0 [shape = 'u32[]', space=smem, size = 0x4, offset = 0x4, fixed_abs, tag = 'smem constant byte address 0x4 - core index']
  #allocation1 [shape = 'u32[144,128]{1,0:T(1,128)}', space=vmem, size = 0x12000, scoped, tag = 'internal scratch']
  %s0 = inlined_call_operand.vmem [shape: bf16[128,128], index: 0, kind: input, shape index: {}]
  %s1 = inlined_call_operand.vmem [shape: f32[1,128], index: 1, kind: input, shape index: {}]
  %s2 = inlined_call_operand.vmem [shape: f32[1,128], index: 2, kind: input, shape index: {}]
  %s3 = inlined_call_operand.vmem [shape: bf16[128,128], index: 3, kind: output, shape index: {}]
  %s4 = sld [smem:[#allocation0]]
  $region22: #{_lambda_.21} parent=0
    _
  %s6 = ssub.s32 1, %s4
  %s7 = scalar_select 0, %s6, %s4
  // Predicated region
  $region2: #{_lambda_.21} parent=0 // pred_check
    _
  $region3: #{_lambda_.21} parent=0 // pred_check_branch
    %9 = sbr.rel (0) target = $region5
  $region4: #{_lambda_.21} parent=0 // pred_region
    _
  $region5: #{_lambda_.21} parent=0 // pred_fallthru
    _
  // Predicated region
  $region6: #{_lambda_.21} parent=0 // pred_check
    _
  $region7: #{_lambda_.21} parent=0 // pred_check_branch
    %11 = sbr.rel (0) target = $region9
  $region8: #{_lambda_.21} parent=0 // pred_region
    _
  $region9: #{_lambda_.21} parent=0 // pred_fallthru
    _
  // Predicated region
  $region10: #{_lambda_.21} parent=0 // pred_check
    _
  $region11: #{_lambda_.21} parent=0 // pred_check_branch
    %13 = sbr.rel (0) target = $region13
  $region12: #{_lambda_.21} parent=0 // pred_region
    _
  $region13: #{_lambda_.21} parent=0 // pred_fallthru
    _
  %v14 = vld [vmem:[%s0] sm:$0xf]
  %v15 = vld [vmem:[%s0 + $0x4] sm:$0xf]
  %v16 = vld [vmem:[%s0 + $0x8] sm:$0xf]
  %v17 = vld [vmem:[%s0 + $0xc] sm:$0xf]
  %v18 = vld [vmem:[%s0 + $0x10] sm:$0xf]
  %v19 = vld [vmem:[%s0 + $0x14] sm:$0xf]
  %v20 = vld [vmem:[%s0 + $0x18] sm:$0xf]
  %v21 = vld [vmem:[%s0 + $0x1c] sm:$0xf]
  %v22 = vld [vmem:[%s0 + $0x20] sm:$0xf]
  %v23 = vld [vmem:[%s0 + $0x24] sm:$0xf]
  %v24 = vld [vmem:[%s0 + $0x28] sm:$0xf]
  %v25 = vld [vmem:[%s0 + $0x2c] sm:$0xf]
  %v26 = vld [vmem:[%s0 + $0x30] sm:$0xf]
  %v27 = vld [vmem:[%s0 + $0x34] sm:$0xf]
  %v28 = vld [vmem:[%s0 + $0x38] sm:$0xf]
  %v29 = vld [vmem:[%s0 + $0x3c] sm:$0xf]
  %v30 = vunpack.c.l.bf16 %v14
  %v31 = vunpack.c.l.bf16 %v15
  %v32 = vunpack.c.l.bf16 %v16
  %v33 = vunpack.c.l.bf16 %v17
  %v34 = vunpack.c.l.bf16 %v18
  %v35 = vunpack.c.l.bf16 %v19
  %v36 = vunpack.c.l.bf16 %v20
  %v37 = vunpack.c.l.bf16 %v21
  %v38 = vunpack.c.l.bf16 %v22
  %v39 = vunpack.c.l.bf16 %v23
  %v40 = vunpack.c.l.bf16 %v24
  %v41 = vunpack.c.l.bf16 %v25
  %v42 = vunpack.c.l.bf16 %v26
  %v43 = vunpack.c.l.bf16 %v27
  %v44 = vunpack.c.l.bf16 %v28
  %v45 = vunpack.c.l.bf16 %v29
  %v46 = vld [vmem:[%s1] sm:$0x1]
  %v48 = vlaneseq
  %v49 = vshrl.u32 %v48, 7
  %v50 = vsub.s32 0, %v49
  %v51 = vrot.slane %v46, %v50
  %v53 = vmul.f32 %v30, %v51
  %v54 = vmul.f32 %v31, %v51
  %v55 = vmul.f32 %v32, %v51
  %v56 = vmul.f32 %v33, %v51
  %v57 = vmul.f32 %v34, %v51
  %v58 = vmul.f32 %v35, %v51
  %v59 = vmul.f32 %v36, %v51
  %v60 = vmul.f32 %v37, %v51
  %v61 = vmul.f32 %v38, %v51
  %v62 = vmul.f32 %v39, %v51
  %v63 = vmul.f32 %v40, %v51
  %v64 = vmul.f32 %v41, %v51
  %v65 = vmul.f32 %v42, %v51
  %v66 = vmul.f32 %v43, %v51
  %v67 = vmul.f32 %v44, %v51
  %v68 = vmul.f32 %v45, %v51
  %v69 = vld [vmem:[%s2] sm:$0x1]
  %v71 = vlaneseq
  %v72 = vshrl.u32 %v71, 7
  %v73 = vsub.s32 0, %v72
  %v74 = vrot.slane %v69, %v73
  %v76 = vadd.f32 %v53, %v74
  %v77 = vadd.f32 %v54, %v74
  %v78 = vadd.f32 %v55, %v74
  %v79 = vadd.f32 %v56, %v74
  %v80 = vadd.f32 %v57, %v74
  %v81 = vadd.f32 %v58, %v74
  %v82 = vadd.f32 %v59, %v74
  %v83 = vadd.f32 %v60, %v74
  %v84 = vadd.f32 %v61, %v74
  %v85 = vadd.f32 %v62, %v74
  %v86 = vadd.f32 %v63, %v74
  %v87 = vadd.f32 %v64, %v74
  %v88 = vadd.f32 %v65, %v74
  %v89 = vadd.f32 %v66, %v74
  %v90 = vadd.f32 %v67, %v74
  %v91 = vadd.f32 %v68, %v74
  %v92 = vmax.f32 %v76, 0.0
  %v93 = vmax.f32 %v77, 0.0
  %v94 = vmax.f32 %v78, 0.0
  %v95 = vmax.f32 %v79, 0.0
  %v96 = vmax.f32 %v80, 0.0
  %v97 = vmax.f32 %v81, 0.0
  %v98 = vmax.f32 %v82, 0.0
  %v99 = vmax.f32 %v83, 0.0
  %v100 = vmax.f32 %v84, 0.0
  %v101 = vmax.f32 %v85, 0.0
  %v102 = vmax.f32 %v86, 0.0
  %v103 = vmax.f32 %v87, 0.0
  %v104 = vmax.f32 %v88, 0.0
  %v105 = vmax.f32 %v89, 0.0
  %v106 = vmax.f32 %v90, 0.0
  %v107 = vmax.f32 %v91, 0.0
  %v108 = vpack.c.bf16 %v93, %v92
  %v109 = vpack.c.bf16 %v95, %v94
  %v110 = vpack.c.bf16 %v97, %v96
  %v111 = vpack.c.bf16 %v99, %v98
  %v112 = vpack.c.bf16 %v101, %v100
  %v113 = vpack.c.bf16 %v103, %v102
  %v114 = vpack.c.bf16 %v105, %v104
  %v115 = vpack.c.bf16 %v107, %v106
  %v124 = vunpack.c.l.b16 %v108
  %v125 = vunpack.c.h.b16 %v108
  %v126 = vunpack.c.l.b16 %v109
  %v127 = vunpack.c.h.b16 %v109
  %v128 = vunpack.c.l.b16 %v110
  %v129 = vunpack.c.h.b16 %v110
  %v130 = vunpack.c.l.b16 %v111
  %v131 = vunpack.c.h.b16 %v111
  %v132 = vunpack.c.l.b16 %v112
  %v133 = vunpack.c.h.b16 %v112
  %v134 = vunpack.c.l.b16 %v113
  %v135 = vunpack.c.h.b16 %v113
  %v136 = vunpack.c.l.b16 %v114
  %v137 = vunpack.c.h.b16 %v114
  %v138 = vunpack.c.l.b16 %v115
  %v139 = vunpack.c.h.b16 %v115
  %v140 = vpack.c.b16 %v124, %v124
  %v141 = vpack.c.b16 %v125, %v125
  %v142 = vpack.c.b16 %v126, %v126
  %v143 = vpack.c.b16 %v127, %v127
  %v144 = vpack.c.b16 %v128, %v128
  %v145 = vpack.c.b16 %v129, %v129
  %v146 = vpack.c.b16 %v130, %v130
  %v147 = vpack.c.b16 %v131, %v131
  %v148 = vpack.c.b16 %v132, %v132
  %v149 = vpack.c.b16 %v133, %v133
  %v150 = vpack.c.b16 %v134, %v134
  %v151 = vpack.c.b16 %v135, %v135
  %v152 = vpack.c.b16 %v136, %v136
  %v153 = vpack.c.b16 %v137, %v137
  %v154 = vpack.c.b16 %v138, %v138
  %v155 = vpack.c.b16 %v139, %v139
  %172 = vst [vmem:[%s3] sm:$0xf] %v140
  %173 = vst [vmem:[%s3 + $0x4] sm:$0xf] %v141
  %174 = vst [vmem:[%s3 + $0x8] sm:$0xf] %v142
  %175 = vst [vmem:[%s3 + $0xc] sm:$0xf] %v143
  %176 = vst [vmem:[%s3 + $0x10] sm:$0xf] %v144
  %177 = vst [vmem:[%s3 + $0x14] sm:$0xf] %v145
  %178 = vst [vmem:[%s3 + $0x18] sm:$0xf] %v146
  %179 = vst [vmem:[%s3 + $0x1c] sm:$0xf] %v147
  %180 = vst [vmem:[%s3 + $0x20] sm:$0xf] %v148
  %181 = vst [vmem:[%s3 + $0x24] sm:$0xf] %v149
  %182 = vst [vmem:[%s3 + $0x28] sm:$0xf] %v150
  %183 = vst [vmem:[%s3 + $0x2c] sm:$0xf] %v151
  %184 = vst [vmem:[%s3 + $0x30] sm:$0xf] %v152
  %185 = vst [vmem:[%s3 + $0x34] sm:$0xf] %v153
  %186 = vst [vmem:[%s3 + $0x38] sm:$0xf] %v154
  %187 = vst [vmem:[%s3 + $0x3c] sm:$0xf] %v155
  // Predicated region
  $region14: #{_lambda_.21} parent=0 // pred_check
    _
  $region15: #{_lambda_.21} parent=0 // pred_check_branch
    %189 = sbr.rel (0) target = $region17
  $region16: #{_lambda_.21} parent=0 // pred_region
    _
  $region17: #{_lambda_.21} parent=0 // pred_fallthru
    _
  // Predicated region
  $region18: #{_lambda_.21} parent=0 // pred_check
    _
  $region19: #{_lambda_.21} parent=0 // pred_check_branch
    %191 = sbr.rel (0) target = $region21
  $region20: #{_lambda_.21} parent=0 // pred_region
    _
  $region21: #{_lambda_.21} parent=0 // pred_fallthru
    _

// kernel: _lambda_.22
$region0: #{_lambda_.22}
  #allocation0 [shape = 'u32[]', space=smem, size = 0x4, offset = 0x4, fixed_abs, tag = 'smem constant byte address 0x4 - core index']
  #allocation1 [shape = 'u32[144,128]{1,0:T(1,128)}', space=vmem, size = 0x12000, scoped, tag = 'internal scratch']
  %s0 = inlined_call_operand.vmem [shape: bf16[512,304], index: 0, kind: input, shape index: {}]
  %s1 = inlined_call_operand.vmem [shape: bf16[304,32], index: 1, kind: input, shape index: {}]
  %s2 = inlined_call_operand.vmem [shape: bf16[512,32], index: 2, kind: output, shape index: {0}]
  %s3 = inlined_call_operand.vmem [shape: f32[1,32], index: 3, kind: output, shape index: {1}]
  %s4 = inlined_call_operand.vmem [shape: f32[1,32], index: 4, kind: output, shape index: {2}]
  %5 = xla_tuple %s2, %s3, %s4
  %s6 = sld [smem:[#allocation0]]
  $region38: #{_lambda_.22} parent=0
    _
  %s8 = ssub.s32 1, %s6
  %s9 = scalar_select 0, %s8, %s6
  // Predicated region
  $region2: #{_lambda_.22} parent=0 // pred_check
    _
  $region3: #{_lambda_.22} parent=0 // pred_check_branch
    %11 = sbr.rel (0) target = $region5
  $region4: #{_lambda_.22} parent=0 // pred_region
    _
  $region5: #{_lambda_.22} parent=0 // pred_fallthru
    _
  // Predicated region
  $region6: #{_lambda_.22} parent=0 // pred_check
    _
  $region7: #{_lambda_.22} parent=0 // pred_check_branch
    %13 = sbr.rel (0) target = $region9
  $region8: #{_lambda_.22} parent=0 // pred_region
    _
  $region9: #{_lambda_.22} parent=0 // pred_fallthru
    _
  %p15 = scmp.eq.s32.totalorder 0, 0
  // Predicated region
  $region10: #{_lambda_.22} parent=0 // pred_check
    %p16 = pneg %p15
  $region11: #{_lambda_.22} parent=0 // pred_check_branch
    %18 = sbr.rel (%p16) target = $region13
  $region12: #{_lambda_.22} parent=0 // pred_region
    %vm19 = vcmask 253952
    %20 = vst.msk [vmem:[%s3] sm:$0x1] %vm19, 0.0
    %21 = vst.msk [vmem:[%s4] sm:$0x1] %vm19, 0.0
  $region13: #{_lambda_.22} parent=0 // pred_fallthru
    _
  %v22 = vld [vmem:[%s0] sm:$0xff]
  %v23 = vld [vmem:[%s0 + $0x8] sm:$0xf]
  %v24 = vld [vmem:[%s0 + $0xc] sm:$0xff]
  %v25 = vld [vmem:[%s0 + $0x14] sm:$0xf]
  %v26 = vld [vmem:[%s0 + $0x18] sm:$0xff]
  %v27 = vld [vmem:[%s0 + $0x20] sm:$0xf]
  %v28 = vld [vmem:[%s0 + $0x24] sm:$0xff]
  %v29 = vld [vmem:[%s0 + $0x2c] sm:$0xf]
  %v30 = vld [vmem:[%s0 + $0x30] sm:$0xff]
  %v31 = vld [vmem:[%s0 + $0x38] sm:$0xf]
  %v32 = vld [vmem:[%s0 + $0x3c] sm:$0xff]
  %v33 = vld [vmem:[%s0 + $0x44] sm:$0xf]
  %v34 = vld [vmem:[%s0 + $0x48] sm:$0xff]
  %v35 = vld [vmem:[%s0 + $0x50] sm:$0xf]
  %v36 = vld [vmem:[%s0 + $0x54] sm:$0xff]
  %v37 = vld [vmem:[%s0 + $0x5c] sm:$0xf]
  %v38 = vld [vmem:[%s0 + $0x60] sm:$0xff]
  %v39 = vld [vmem:[%s0 + $0x68] sm:$0xf]
  %v40 = vld [vmem:[%s0 + $0x6c] sm:$0xff]
  %v41 = vld [vmem:[%s0 + $0x74] sm:$0xf]
  %v42 = vld [vmem:[%s0 + $0x78] sm:$0xff]
  %v43 = vld [vmem:[%s0 + $0x80] sm:$0xf]
  %v44 = vld [vmem:[%s0 + $0x84] sm:$0xff]
  %v45 = vld [vmem:[%s0 + $0x8c] sm:$0xf]
  %v46 = vld [vmem:[%s0 + $0x90] sm:$0xff]
  %v47 = vld [vmem:[%s0 + $0x98] sm:$0xf]
  %v48 = vld [vmem:[%s0 + $0x9c] sm:$0xff]
  %v49 = vld [vmem:[%s0 + $0xa4] sm:$0xf]
  %v50 = vld [vmem:[%s0 + $0xa8] sm:$0xff]
  %v51 = vld [vmem:[%s0 + $0xb0] sm:$0xf]
  %v52 = vld [vmem:[%s0 + $0xb4] sm:$0xff]
  %v53 = vld [vmem:[%s0 + $0xbc] sm:$0xf]
  %v54 = vld [vmem:[%s0 + $0xc0] sm:$0xff]
  %v55 = vld [vmem:[%s0 + $0xc8] sm:$0xf]
  %v56 = vld [vmem:[%s0 + $0xcc] sm:$0xff]
  %v57 = vld [vmem:[%s0 + $0xd4] sm:$0xf]
  %v58 = vld [vmem:[%s0 + $0xd8] sm:$0xff]
  %v59 = vld [vmem:[%s0 + $0xe0] sm:$0xf]
  %v60 = vld [vmem:[%s0 + $0xe4] sm:$0xff]
  %v61 = vld [vmem:[%s0 + $0xec] sm:$0xf]
  %v62 = vld [vmem:[%s0 + $0xf0] sm:$0xff]
  %v63 = vld [vmem:[%s0 + $0xf8] sm:$0xf]
  %v64 = vld [vmem:[%s0 + $0xfc] sm:$0xff]
  %v65 = vld [vmem:[%s0 + $0x104] sm:$0xf]
  %v66 = vld [vmem:[%s0 + $0x108] sm:$0xff]
  %v67 = vld [vmem:[%s0 + $0x110] sm:$0xf]
  %v68 = vld [vmem:[%s0 + $0x114] sm:$0xff]
  %v69 = vld [vmem:[%s0 + $0x11c] sm:$0xf]
  %v70 = vld [vmem:[%s0 + $0x120] sm:$0xff]
  %v71 = vld [vmem:[%s0 + $0x128] sm:$0xf]
  %v72 = vld [vmem:[%s0 + $0x12c] sm:$0xff]
  %v73 = vld [vmem:[%s0 + $0x134] sm:$0xf]
  %v74 = vld [vmem:[%s0 + $0x138] sm:$0xff]
  %v75 = vld [vmem:[%s0 + $0x140] sm:$0xf]
  %v76 = vld [vmem:[%s0 + $0x144] sm:$0xff]
  %v77 = vld [vmem:[%s0 + $0x14c] sm:$0xf]
  %v78 = vld [vmem:[%s0 + $0x150] sm:$0xff]
  %v79 = vld [vmem:[%s0 + $0x158] sm:$0xf]
  %v80 = vld [vmem:[%s0 + $0x15c] sm:$0xff]
  %v81 = vld [vmem:[%s0 + $0x164] sm:$0xf]
  %v82 = vld [vmem:[%s0 + $0x168] sm:$0xff]
  %v83 = vld [vmem:[%s0 + $0x170] sm:$0xf]
  %v84 = vld [vmem:[%s0 + $0x174] sm:$0xff]
  %v85 = vld [vmem:[%s0 + $0x17c] sm:$0xf]
  %v86 = vld [vmem:[%s0 + $0x180] sm:$0xff]
  %v87 = vld [vmem:[%s0 + $0x188] sm:$0xf]
  %v88 = vld [vmem:[%s0 + $0x18c] sm:$0xff]
  %v89 = vld [vmem:[%s0 + $0x194] sm:$0xf]
  %v90 = vld [vmem:[%s0 + $0x198] sm:$0xff]
  %v91 = vld [vmem:[%s0 + $0x1a0] sm:$0xf]
  %v92 = vld [vmem:[%s0 + $0x1a4] sm:$0xff]
  %v93 = vld [vmem:[%s0 + $0x1ac] sm:$0xf]
  %v94 = vld [vmem:[%s0 + $0x1b0] sm:$0xff]
  %v95 = vld [vmem:[%s0 + $0x1b8] sm:$0xf]
  %v96 = vld [vmem:[%s0 + $0x1bc] sm:$0xff]
  %v97 = vld [vmem:[%s0 + $0x1c4] sm:$0xf]
  %v98 = vld [vmem:[%s0 + $0x1c8] sm:$0xff]
  %v99 = vld [vmem:[%s0 + $0x1d0] sm:$0xf]
  %v100 = vld [vmem:[%s0 + $0x1d4] sm:$0xff]
  %v101 = vld [vmem:[%s0 + $0x1dc] sm:$0xf]
  %v102 = vld [vmem:[%s0 + $0x1e0] sm:$0xff]
  %v103 = vld [vmem:[%s0 + $0x1e8] sm:$0xf]
  %v104 = vld [vmem:[%s0 + $0x1ec] sm:$0xff]
  %v105 = vld [vmem:[%s0 + $0x1f4] sm:$0xf]
  %v106 = vld [vmem:[%s0 + $0x1f8] sm:$0xff]
  %v107 = vld [vmem:[%s0 + $0x200] sm:$0xf]
  %v108 = vld [vmem:[%s0 + $0x204] sm:$0xff]
  %v109 = vld [vmem:[%s0 + $0x20c] sm:$0xf]
  %v110 = vld [vmem:[%s0 + $0x210] sm:$0xff]
  %v111 = vld [vmem:[%s0 + $0x218] sm:$0xf]
  %v112 = vld [vmem:[%s0 + $0x21c] sm:$0xff]
  %v113 = vld [vmem:[%s0 + $0x224] sm:$0xf]
  %v114 = vld [vmem:[%s0 + $0x228] sm:$0xff]
  %v115 = vld [vmem:[%s0 + $0x230] sm:$0xf]
  %v116 = vld [vmem:[%s0 + $0x234] sm:$0xff]
  %v117 = vld [vmem:[%s0 + $0x23c] sm:$0xf]
  %v118 = vld [vmem:[%s0 + $0x240] sm:$0xff]
  %v119 = vld [vmem:[%s0 + $0x248] sm:$0xf]
  %v120 = vld [vmem:[%s0 + $0x24c] sm:$0xff]
  %v121 = vld [vmem:[%s0 + $0x254] sm:$0xf]
  %v122 = vld [vmem:[%s0 + $0x258] sm:$0xff]
  %v123 = vld [vmem:[%s0 + $0x260] sm:$0xf]
  %v124 = vld [vmem:[%s0 + $0x264] sm:$0xff]
  %v125 = vld [vmem:[%s0 + $0x26c] sm:$0xf]
  %v126 = vld [vmem:[%s0 + $0x270] sm:$0xff]
  %v127 = vld [vmem:[%s0 + $0x278] sm:$0xf]
  %v128 = vld [vmem:[%s0 + $0x27c] sm:$0xff]
  %v129 = vld [vmem:[%s0 + $0x284] sm:$0xf]
  %v130 = vld [vmem:[%s0 + $0x288] sm:$0xff]
  %v131 = vld [vmem:[%s0 + $0x290] sm:$0xf]
  %v132 = vld [vmem:[%s0 + $0x294] sm:$0xff]
  %v133 = vld [vmem:[%s0 + $0x29c] sm:$0xf]
  %v134 = vld [vmem:[%s0 + $0x2a0] sm:$0xff]
  %v135 = vld [vmem:[%s0 + $0x2a8] sm:$0xf]
  %v136 = vld [vmem:[%s0 + $0x2ac] sm:$0xff]
  %v137 = vld [vmem:[%s0 + $0x2b4] sm:$0xf]
  %v138 = vld [vmem:[%s0 + $0x2b8] sm:$0xff]
  %v139 = vld [vmem:[%s0 + $0x2c0] sm:$0xf]
  %v140 = vld [vmem:[%s0 + $0x2c4] sm:$0xff]
  %v141 = vld [vmem:[%s0 + $0x2cc] sm:$0xf]
  %v142 = vld [vmem:[%s0 + $0x2d0] sm:$0xff]
  %v143 = vld [vmem:[%s0 + $0x2d8] sm:$0xf]
  %v144 = vld [vmem:[%s0 + $0x2dc] sm:$0xff]
  %v145 = vld [vmem:[%s0 + $0x2e4] sm:$0xf]
  %v146 = vld [vmem:[%s0 + $0x2e8] sm:$0xff]
  %v147 = vld [vmem:[%s0 + $0x2f0] sm:$0xf]
  %v148 = vld [vmem:[%s0 + $0x2f4] sm:$0xff]
  %v149 = vld [vmem:[%s0 + $0x2fc] sm:$0xf]
  %v150 = vld [vmem:[%s1] sm:$0xf]
  %v151 = vld [vmem:[%s1 + $0x4] sm:$0xf]
  %v152 = vld [vmem:[%s1 + $0x8] sm:$0xf]
  %v153 = vld [vmem:[%s1 + $0xc] sm:$0xf]
  %v154 = vld [vmem:[%s1 + $0x10] sm:$0xf]
  %v155 = vld [vmem:[%s1 + $0x14] sm:$0xf]
  %v156 = vld [vmem:[%s1 + $0x18] sm:$0xf]
  %v157 = vld [vmem:[%s1 + $0x1c] sm:$0xf]
  %v158 = vld [vmem:[%s1 + $0x20] sm:$0xf]
  %v159 = vld [vmem:[%s1 + $0x24] sm:$0xf]
  %v160 = vld [vmem:[%s1 + $0x28] sm:$0xf]
  %v161 = vld [vmem:[%s1 + $0x2c] sm:$0xf]
  %v162 = vld [vmem:[%s1 + $0x30] sm:$0xf]
  %v163 = vld [vmem:[%s1 + $0x34] sm:$0xf]
  %v164 = vld [vmem:[%s1 + $0x38] sm:$0xf]
  %v165 = vld [vmem:[%s1 + $0x3c] sm:$0xf]
  %v166 = vld [vmem:[%s1 + $0x40] sm:$0xf]
  %v167 = vld [vmem:[%s1 + $0x44] sm:$0xf]
  %v168 = vld [vmem:[%s1 + $0x48] sm:$0xf]
  %v169 = vld [vmem:[%s1 + $0x4c] sm:$0xf]
  %v170 = vld [vmem:[%s1 + $0x50] sm:$0xf]
  %v171 = vld [vmem:[%s1 + $0x54] sm:$0xf]
  %v172 = vld [vmem:[%s1 + $0x58] sm:$0xf]
  %v173 = vld [vmem:[%s1 + $0x5c] sm:$0xf]
  %v174 = vld [vmem:[%s1 + $0x60] sm:$0xf]
  %v175 = vld [vmem:[%s1 + $0x64] sm:$0xf]
  %v176 = vld [vmem:[%s1 + $0x68] sm:$0xf]
  %v177 = vld [vmem:[%s1 + $0x6c] sm:$0xf]
  %v178 = vld [vmem:[%s1 + $0x70] sm:$0xf]
  %v179 = vld [vmem:[%s1 + $0x74] sm:$0xf]
  %v180 = vld [vmem:[%s1 + $0x78] sm:$0xf]
  %v181 = vld [vmem:[%s1 + $0x7c] sm:$0xf]
  %v182 = vld [vmem:[%s1 + $0x80] sm:$0xf]
  %v183 = vld [vmem:[%s1 + $0x84] sm:$0xf]
  %v184 = vld [vmem:[%s1 + $0x88] sm:$0xf]
  %v185 = vld [vmem:[%s1 + $0x8c] sm:$0xf]
  %v186 = vld [vmem:[%s1 + $0x90] sm:$0xf]
  %v187 = vld [vmem:[%s1 + $0x94] sm:$0xf]
  %v316 = vunpack.c.l.b16 %v22
  %v317 = vunpack.c.h.b16 %v22
  %v318 = vunpack.c.l.b16 %v23
  %v319 = vunpack.c.l.b16 %v24
  %v320 = vunpack.c.h.b16 %v24
  %v321 = vunpack.c.l.b16 %v25
  %v322 = vunpack.c.l.b16 %v26
  %v323 = vunpack.c.h.b16 %v26
  %v324 = vunpack.c.l.b16 %v27
  %v325 = vunpack.c.l.b16 %v28
  %v326 = vunpack.c.h.b16 %v28
  %v327 = vunpack.c.l.b16 %v29
  %v328 = vunpack.c.l.b16 %v30
  %v329 = vunpack.c.h.b16 %v30
  %v330 = vunpack.c.l.b16 %v31
  %v331 = vunpack.c.l.b16 %v32
  %v332 = vunpack.c.h.b16 %v32
  %v333 = vunpack.c.l.b16 %v33
  %v334 = vunpack.c.l.b16 %v34
  %v335 = vunpack.c.h.b16 %v34
  %v336 = vunpack.c.l.b16 %v35
  %v337 = vunpack.c.l.b16 %v36
  %v338 = vunpack.c.h.b16 %v36
  %v339 = vunpack.c.l.b16 %v37
  %v340 = vunpack.c.l.b16 %v38
  %v341 = vunpack.c.h.b16 %v38
  %v342 = vunpack.c.l.b16 %v39
  %v343 = vunpack.c.l.b16 %v40
  %v344 = vunpack.c.h.b16 %v40
  %v345 = vunpack.c.l.b16 %v41
  %v346 = vunpack.c.l.b16 %v42
  %v347 = vunpack.c.h.b16 %v42
  %v348 = vunpack.c.l.b16 %v43
  %v349 = vunpack.c.l.b16 %v44
  %v350 = vunpack.c.h.b16 %v44
  %v351 = vunpack.c.l.b16 %v45
  %v352 = vunpack.c.l.b16 %v46
  %v353 = vunpack.c.h.b16 %v46
  %v354 = vunpack.c.l.b16 %v47
  %v355 = vunpack.c.l.b16 %v48
  %v356 = vunpack.c.h.b16 %v48
  %v357 = vunpack.c.l.b16 %v49
  %v358 = vunpack.c.l.b16 %v50
  %v359 = vunpack.c.h.b16 %v50
  %v360 = vunpack.c.l.b16 %v51
  %v361 = vunpack.c.l.b16 %v52
  %v362 = vunpack.c.h.b16 %v52
  %v363 = vunpack.c.l.b16 %v53
  %v364 = vunpack.c.l.b16 %v54
  %v365 = vunpack.c.h.b16 %v54
  %v366 = vunpack.c.l.b16 %v55
  %v367 = vunpack.c.l.b16 %v56
  %v368 = vunpack.c.h.b16 %v56
  %v369 = vunpack.c.l.b16 %v57
  %v370 = vunpack.c.l.b16 %v58
  %v371 = vunpack.c.h.b16 %v58
  %v372 = vunpack.c.l.b16 %v59
  %v373 = vunpack.c.l.b16 %v60
  %v374 = vunpack.c.h.b16 %v60
  %v375 = vunpack.c.l.b16 %v61
  %v376 = vunpack.c.l.b16 %v62
  %v377 = vunpack.c.h.b16 %v62
  %v378 = vunpack.c.l.b16 %v63
  %v379 = vunpack.c.l.b16 %v64
  %v380 = vunpack.c.h.b16 %v64
  %v381 = vunpack.c.l.b16 %v65
  %v382 = vunpack.c.l.b16 %v66
  %v383 = vunpack.c.h.b16 %v66
  %v384 = vunpack.c.l.b16 %v67
  %v385 = vunpack.c.l.b16 %v68
  %v386 = vunpack.c.h.b16 %v68
  %v387 = vunpack.c.l.b16 %v69
  %v388 = vunpack.c.l.b16 %v70
  %v389 = vunpack.c.h.b16 %v70
  %v390 = vunpack.c.l.b16 %v71
  %v391 = vunpack.c.l.b16 %v72
  %v392 = vunpack.c.h.b16 %v72
  %v393 = vunpack.c.l.b16 %v73
  %v394 = vunpack.c.l.b16 %v74
  %v395 = vunpack.c.h.b16 %v74
  %v396 = vunpack.c.l.b16 %v75
  %v397 = vunpack.c.l.b16 %v76
  %v398 = vunpack.c.h.b16 %v76
  %v399 = vunpack.c.l.b16 %v77
  %v400 = vunpack.c.l.b16 %v78
  %v401 = vunpack.c.h.b16 %v78
  %v402 = vunpack.c.l.b16 %v79
  %v403 = vunpack.c.l.b16 %v80
  %v404 = vunpack.c.h.b16 %v80
  %v405 = vunpack.c.l.b16 %v81
  %v406 = vunpack.c.l.b16 %v82
  %v407 = vunpack.c.h.b16 %v82
  %v408 = vunpack.c.l.b16 %v83
  %v409 = vunpack.c.l.b16 %v84
  %v410 = vunpack.c.h.b16 %v84
  %v411 = vunpack.c.l.b16 %v85
  %v412 = vunpack.c.l.b16 %v86
  %v413 = vunpack.c.h.b16 %v86
  %v414 = vunpack.c.l.b16 %v87
  %v415 = vunpack.c.l.b16 %v88
  %v416 = vunpack.c.h.b16 %v88
  %v417 = vunpack.c.l.b16 %v89
  %v418 = vunpack.c.l.b16 %v90
  %v419 = vunpack.c.h.b16 %v90
  %v420 = vunpack.c.l.b16 %v91
  %v421 = vunpack.c.l.b16 %v92
  %v422 = vunpack.c.h.b16 %v92
  %v423 = vunpack.c.l.b16 %v93
  %v424 = vunpack.c.l.b16 %v94
  %v425 = vunpack.c.h.b16 %v94
  %v426 = vunpack.c.l.b16 %v95
  %v427 = vunpack.c.l.b16 %v96
  %v428 = vunpack.c.h.b16 %v96
  %v429 = vunpack.c.l.b16 %v97
  %v430 = vunpack.c.l.b16 %v98
  %v431 = vunpack.c.h.b16 %v98
  %v432 = vunpack.c.l.b16 %v99
  %v433 = vunpack.c.l.b16 %v100
  %v434 = vunpack.c.h.b16 %v100
  %v435 = vunpack.c.l.b16 %v101
  %v436 = vunpack.c.l.b16 %v102
  %v437 = vunpack.c.h.b16 %v102
  %v438 = vunpack.c.l.b16 %v103
  %v439 = vunpack.c.l.b16 %v104
  %v440 = vunpack.c.h.b16 %v104
  %v441 = vunpack.c.l.b16 %v105
  %v442 = vunpack.c.l.b16 %v106
  %v443 = vunpack.c.h.b16 %v106
  %v444 = vunpack.c.l.b16 %v107
  %v445 = vunpack.c.l.b16 %v108
  %v446 = vunpack.c.h.b16 %v108
  %v447 = vunpack.c.l.b16 %v109
  %v448 = vunpack.c.l.b16 %v110
  %v449 = vunpack.c.h.b16 %v110
  %v450 = vunpack.c.l.b16 %v111
  %v451 = vunpack.c.l.b16 %v112
  %v452 = vunpack.c.h.b16 %v112
  %v453 = vunpack.c.l.b16 %v113
  %v454 = vunpack.c.l.b16 %v114
  %v455 = vunpack.c.h.b16 %v114
  %v456 = vunpack.c.l.b16 %v115
  %v457 = vunpack.c.l.b16 %v116
  %v458 = vunpack.c.h.b16 %v116
  %v459 = vunpack.c.l.b16 %v117
  %v460 = vunpack.c.l.b16 %v118
  %v461 = vunpack.c.h.b16 %v118
  %v462 = vunpack.c.l.b16 %v119
  %v463 = vunpack.c.l.b16 %v120
  %v464 = vunpack.c.h.b16 %v120
  %v465 = vunpack.c.l.b16 %v121
  %v466 = vunpack.c.l.b16 %v122
  %v467 = vunpack.c.h.b16 %v122
  %v468 = vunpack.c.l.b16 %v123
  %v469 = vunpack.c.l.b16 %v124
  %v470 = vunpack.c.h.b16 %v124
  %v471 = vunpack.c.l.b16 %v125
  %v472 = vunpack.c.l.b16 %v126
  %v473 = vunpack.c.h.b16 %v126
  %v474 = vunpack.c.l.b16 %v127
  %v475 = vunpack.c.l.b16 %v128
  %v476 = vunpack.c.h.b16 %v128
  %v477 = vunpack.c.l.b16 %v129
  %v478 = vunpack.c.l.b16 %v130
  %v479 = vunpack.c.h.b16 %v130
  %v480 = vunpack.c.l.b16 %v131
  %v481 = vunpack.c.l.b16 %v132
  %v482 = vunpack.c.h.b16 %v132
  %v483 = vunpack.c.l.b16 %v133
  %v484 = vunpack.c.l.b16 %v134
  %v485 = vunpack.c.h.b16 %v134
  %v486 = vunpack.c.l.b16 %v135
  %v487 = vunpack.c.l.b16 %v136
  %v488 = vunpack.c.h.b16 %v136
  %v489 = vunpack.c.l.b16 %v137
  %v490 = vunpack.c.l.b16 %v138
  %v491 = vunpack.c.h.b16 %v138
  %v492 = vunpack.c.l.b16 %v139
  %v493 = vunpack.c.l.b16 %v140
  %v494 = vunpack.c.h.b16 %v140
  %v495 = vunpack.c.l.b16 %v141
  %v496 = vunpack.c.l.b16 %v142
  %v497 = vunpack.c.h.b16 %v142
  %v498 = vunpack.c.l.b16 %v143
  %v499 = vunpack.c.l.b16 %v144
  %v500 = vunpack.c.h.b16 %v144
  %v501 = vunpack.c.l.b16 %v145
  %v502 = vunpack.c.l.b16 %v146
  %v503 = vunpack.c.h.b16 %v146
  %v504 = vunpack.c.l.b16 %v147
  %v505 = vunpack.c.l.b16 %v148
  %v506 = vunpack.c.h.b16 %v148
  %v507 = vunpack.c.l.b16 %v149
  %v508 = vpack.c.b16 %v319, %v316
  %v509 = vpack.c.b16 %v320, %v317
  %v510 = vpack.c.b16 %v321, %v318
  %v511 = vpack.c.b16 %v325, %v322
  %v512 = vpack.c.b16 %v326, %v323
  %v513 = vpack.c.b16 %v327, %v324
  %v514 = vpack.c.b16 %v331, %v328
  %v515 = vpack.c.b16 %v332, %v329
  %v516 = vpack.c.b16 %v333, %v330
  %v517 = vpack.c.b16 %v337, %v334
  %v518 = vpack.c.b16 %v338, %v335
  %v519 = vpack.c.b16 %v339, %v336
  %v520 = vpack.c.b16 %v343, %v340
  %v521 = vpack.c.b16 %v344, %v341
  %v522 = vpack.c.b16 %v345, %v342
  %v523 = vpack.c.b16 %v349, %v346
  %v524 = vpack.c.b16 %v350, %v347
  %v525 = vpack.c.b16 %v351, %v348
  %v526 = vpack.c.b16 %v355, %v352
  %v527 = vpack.c.b16 %v356, %v353
  %v528 = vpack.c.b16 %v357, %v354
  %v529 = vpack.c.b16 %v361, %v358
  %v530 = vpack.c.b16 %v362, %v359
  %v531 = vpack.c.b16 %v363, %v360
  %v532 = vpack.c.b16 %v367, %v364
  %v533 = vpack.c.b16 %v368, %v365
  %v534 = vpack.c.b16 %v369, %v366
  %v535 = vpack.c.b16 %v373, %v370
  %v536 = vpack.c.b16 %v374, %v371
  %v537 = vpack.c.b16 %v375, %v372
  %v538 = vpack.c.b16 %v379, %v376
  %v539 = vpack.c.b16 %v380, %v377
  %v540 = vpack.c.b16 %v381, %v378
  %v541 = vpack.c.b16 %v385, %v382
  %v542 = vpack.c.b16 %v386, %v383
  %v543 = vpack.c.b16 %v387, %v384
  %v544 = vpack.c.b16 %v391, %v388
  %v545 = vpack.c.b16 %v392, %v389
  %v546 = vpack.c.b16 %v393, %v390
  %v547 = vpack.c.b16 %v397, %v394
  %v548 = vpack.c.b16 %v398, %v395
  %v549 = vpack.c.b16 %v399, %v396
  %v550 = vpack.c.b16 %v403, %v400
  %v551 = vpack.c.b16 %v404, %v401
  %v552 = vpack.c.b16 %v405, %v402
  %v553 = vpack.c.b16 %v409, %v406
  %v554 = vpack.c.b16 %v410, %v407
  %v555 = vpack.c.b16 %v411, %v408
  %v556 = vpack.c.b16 %v415, %v412
  %v557 = vpack.c.b16 %v416, %v413
  %v558 = vpack.c.b16 %v417, %v414
  %v559 = vpack.c.b16 %v421, %v418
  %v560 = vpack.c.b16 %v422, %v419
  %v561 = vpack.c.b16 %v423, %v420
  %v562 = vpack.c.b16 %v427, %v424
  %v563 = vpack.c.b16 %v428, %v425
  %v564 = vpack.c.b16 %v429, %v426
  %v565 = vpack.c.b16 %v433, %v430
  %v566 = vpack.c.b16 %v434, %v431
  %v567 = vpack.c.b16 %v435, %v432
  %v568 = vpack.c.b16 %v439, %v436
  %v569 = vpack.c.b16 %v440, %v437
  %v570 = vpack.c.b16 %v441, %v438
  %v571 = vpack.c.b16 %v445, %v442
  %v572 = vpack.c.b16 %v446, %v443
  %v573 = vpack.c.b16 %v447, %v444
  %v574 = vpack.c.b16 %v451, %v448
  %v575 = vpack.c.b16 %v452, %v449
  %v576 = vpack.c.b16 %v453, %v450
  %v577 = vpack.c.b16 %v457, %v454
  %v578 = vpack.c.b16 %v458, %v455
  %v579 = vpack.c.b16 %v459, %v456
  %v580 = vpack.c.b16 %v463, %v460
  %v581 = vpack.c.b16 %v464, %v461
  %v582 = vpack.c.b16 %v465, %v462
  %v583 = vpack.c.b16 %v469, %v466
  %v584 = vpack.c.b16 %v470, %v467
  %v585 = vpack.c.b16 %v471, %v468
  %v586 = vpack.c.b16 %v475, %v472
  %v587 = vpack.c.b16 %v476, %v473
  %v588 = vpack.c.b16 %v477, %v474
  %v589 = vpack.c.b16 %v481, %v478
  %v590 = vpack.c.b16 %v482, %v479
  %v591 = vpack.c.b16 %v483, %v480
  %v592 = vpack.c.b16 %v487, %v484
  %v593 = vpack.c.b16 %v488, %v485
  %v594 = vpack.c.b16 %v489, %v486
  %v595 = vpack.c.b16 %v493, %v490
  %v596 = vpack.c.b16 %v494, %v491
  %v597 = vpack.c.b16 %v495, %v492
  %v598 = vpack.c.b16 %v499, %v496
  %v599 = vpack.c.b16 %v500, %v497
  %v600 = vpack.c.b16 %v501, %v498
  %v601 = vpack.c.b16 %v505, %v502
  %v602 = vpack.c.b16 %v506, %v503
  %v603 = vpack.c.b16 %v507, %v504
  %v706 = vunpack.c.l.b16 %v150
  %v707 = vunpack.c.l.b16 %v151
  %v708 = vunpack.c.l.b16 %v152
  %v709 = vunpack.c.l.b16 %v153
  %v710 = vunpack.c.l.b16 %v154
  %v711 = vunpack.c.l.b16 %v155
  %v712 = vunpack.c.l.b16 %v156
  %v713 = vunpack.c.l.b16 %v157
  %v714 = vunpack.c.l.b16 %v158
  %v715 = vunpack.c.l.b16 %v159
  %v716 = vunpack.c.l.b16 %v160
  %v717 = vunpack.c.l.b16 %v161
  %v718 = vunpack.c.l.b16 %v162
  %v719 = vunpack.c.l.b16 %v163
  %v720 = vunpack.c.l.b16 %v164
  %v721 = vunpack.c.l.b16 %v165
  %v722 = vunpack.c.l.b16 %v166
  %v723 = vunpack.c.l.b16 %v167
  %v724 = vunpack.c.l.b16 %v168
  %v725 = vunpack.c.l.b16 %v169
  %v726 = vunpack.c.l.b16 %v170
  %v727 = vunpack.c.l.b16 %v171
  %v728 = vunpack.c.l.b16 %v172
  %v729 = vunpack.c.l.b16 %v173
  %v730 = vunpack.c.l.b16 %v174
  %v731 = vunpack.c.l.b16 %v175
  %v732 = vunpack.c.l.b16 %v176
  %v733 = vunpack.c.l.b16 %v177
  %v734 = vunpack.c.l.b16 %v178
  %v735 = vunpack.c.l.b16 %v179
  %v736 = vunpack.c.l.b16 %v180
  %v737 = vunpack.c.l.b16 %v181
  %v738 = vunpack.c.l.b16 %v182
  %v739 = vunpack.c.l.b16 %v183
  %v740 = vunpack.c.l.b16 %v184
  %v741 = vunpack.c.l.b16 %v185
  %v742 = vunpack.c.l.b16 %v186
  %v743 = vunpack.c.l.b16 %v187
  %v744 = vpack.c.b16 %v707, %v706
  %v745 = vpack.c.b16 %v709, %v708
  %v746 = vpack.c.b16 %v711, %v710
  %v747 = vpack.c.b16 %v713, %v712
  %v748 = vpack.c.b16 %v715, %v714
  %v749 = vpack.c.b16 %v717, %v716
  %v750 = vpack.c.b16 %v719, %v718
  %v751 = vpack.c.b16 %v721, %v720
  %v752 = vpack.c.b16 %v723, %v722
  %v753 = vpack.c.b16 %v725, %v724
  %v754 = vpack.c.b16 %v727, %v726
  %v755 = vpack.c.b16 %v729, %v728
  %v756 = vpack.c.b16 %v731, %v730
  %v757 = vpack.c.b16 %v733, %v732
  %v758 = vpack.c.b16 %v735, %v734
  %v759 = vpack.c.b16 %v737, %v736
  %v760 = vpack.c.b16 %v739, %v738
  %v761 = vpack.c.b16 %v741, %v740
  %v762 = vpack.c.b16 %v743, %v742
  %vm782 = vcmask 392192
  %v784 = vsel %vm782, %v510, 0
  %v787 = vsel %vm782, %v513, 0
  %v790 = vsel %vm782, %v516, 0
  %v793 = vsel %vm782, %v519, 0
  %v796 = vsel %vm782, %v522, 0
  %v799 = vsel %vm782, %v525, 0
  %v802 = vsel %vm782, %v528, 0
  %v805 = vsel %vm782, %v531, 0
  %v808 = vsel %vm782, %v534, 0
  %v811 = vsel %vm782, %v537, 0
  %v814 = vsel %vm782, %v540, 0
  %v817 = vsel %vm782, %v543, 0
  %v820 = vsel %vm782, %v546, 0
  %v823 = vsel %vm782, %v549, 0
  %v826 = vsel %vm782, %v552, 0
  %v829 = vsel %vm782, %v555, 0
  %v832 = vsel %vm782, %v558, 0
  %v835 = vsel %vm782, %v561, 0
  %v838 = vsel %vm782, %v564, 0
  %v841 = vsel %vm782, %v567, 0
  %v844 = vsel %vm782, %v570, 0
  %v847 = vsel %vm782, %v573, 0
  %v850 = vsel %vm782, %v576, 0
  %v853 = vsel %vm782, %v579, 0
  %v856 = vsel %vm782, %v582, 0
  %v859 = vsel %vm782, %v585, 0
  %v862 = vsel %vm782, %v588, 0
  %v865 = vsel %vm782, %v591, 0
  %v868 = vsel %vm782, %v594, 0
  %v871 = vsel %vm782, %v597, 0
  %v874 = vsel %vm782, %v600, 0
  %v877 = vsel %vm782, %v603, 0
  %879 = vmatprep.subr.bf16.mxu0 0
  %880 = vmatpush1.bf16.msra.mxu0 %v744
  %881 = vmatprep.subr.bf16.mxu0 0
  %882 = vmatpush1.bf16.msra.mxu0 %v745
  %883 = vmatprep.subr.bf16.mxu0 0
  %884 = vmatpush1.bf16.msra.mxu0 %v746
  %885 = vmatprep.subr.bf16.mxu0 0
  %886 = vmatpush1.bf16.msra.mxu0 %v747
  %887 = vmatprep.subr.bf16.mxu0 0
  %888 = vmatpush1.bf16.msra.mxu0 %v748
  %889 = vmatprep.subr.bf16.mxu0 0
  %890 = vmatpush1.bf16.msra.mxu0 %v749
  %891 = vmatprep.subr.bf16.mxu0 0
  %892 = vmatpush1.bf16.msra.mxu0 %v750
  %893 = vmatprep.subr.bf16.mxu0 0
  %894 = vmatpush1.bf16.msra.mxu0 %v751
  %895 = vmatprep.subr.bf16.mxu0 0
  %896 = vmatpush1.bf16.msra.mxu0 %v752
  %897 = vmatprep.subr.bf16.mxu0 0
  %898 = vmatpush1.bf16.msra.mxu0 %v753
  %899 = vmatprep.subr.bf16.mxu0 0
  %900 = vmatpush1.bf16.msra.mxu0 %v754
  %901 = vmatprep.subr.bf16.mxu0 0
  %902 = vmatpush1.bf16.msra.mxu0 %v755
  %903 = vmatprep.subr.bf16.mxu0 0
  %904 = vmatpush1.bf16.msra.mxu0 %v756
  %905 = vmatprep.subr.bf16.mxu0 0
  %906 = vmatpush1.bf16.msra.mxu0 %v757
  %907 = vmatprep.subr.bf16.mxu0 0
  %908 = vmatpush1.bf16.msra.mxu0 %v758
  %909 = vmatprep.subr.bf16.mxu0 0
  %910 = vmatpush1.bf16.msra.mxu0 %v759
  %911 = vmatprep.mubr.bf16.mxu0 %v509
  %912 = vmatmul.mubr.bf16.gmra.mrb[0].mxu0 %v508
  %v913 = vpop.f32.mrb[0].mxu0
  %v914 = vadd.f32 0.0, %v913
  %v915 = vpop.f32.mrb[0].mxu0
  %v916 = vpop.f32.mrb[0].mxu0
  %v917 = vadd.f32 0.0, %v916
  %v918 = vpop.f32.mrb[0].mxu0
  %919 = vmatprep.mubr.bf16.mxu0 %v512
  %920 = vmatmul.mubr.bf16.gmra.mrb[0].mxu0 %v511
  %v921 = vpop.f32.mrb[0].mxu0
  %v922 = vadd.f32 0.0, %v921
  %v923 = vpop.f32.mrb[0].mxu0
  %v924 = vpop.f32.mrb[0].mxu0
  %v925 = vadd.f32 0.0, %v924
  %v926 = vpop.f32.mrb[0].mxu0
  %927 = vmatprep.mubr.bf16.mxu0 %v515
  %928 = vmatmul.mubr.bf16.gmra.mrb[0].mxu0 %v514
  %v929 = vpop.f32.mrb[0].mxu0
  %v930 = vadd.f32 0.0, %v929
  %v931 = vpop.f32.mrb[0].mxu0
  %v932 = vpop.f32.mrb[0].mxu0
  %v933 = vadd.f32 0.0, %v932
  %v934 = vpop.f32.mrb[0].mxu0
  %935 = vmatprep.mubr.bf16.mxu0 %v518
  %936 = vmatmul.mubr.bf16.gmra.mrb[0].mxu0 %v517
  %v937 = vpop.f32.mrb[0].mxu0
  %v938 = vadd.f32 0.0, %v937
  %v939 = vpop.f32.mrb[0].mxu0
  %v940 = vpop.f32.mrb[0].mxu0
  %v941 = vadd.f32 0.0, %v940
  %v942 = vpop.f32.mrb[0].mxu0
  %943 = vmatprep.mubr.bf16.mxu0 %v521
  %944 = vmatmul.mubr.bf16.gmra.mrb[0].mxu0 %v520
  %v945 = vpop.f32.mrb[0].mxu0
  %v946 = vadd.f32 0.0, %v945
  %v947 = vpop.f32.mrb[0].mxu0
  %v948 = vpop.f32.mrb[0].mxu0
  %v949 = vadd.f32 0.0, %v948
  %v950 = vpop.f32.mrb[0].mxu0
  %951 = vmatprep.mubr.bf16.mxu0 %v524
  %952 = vmatmul.mubr.bf16.gmra.mrb[0].mxu0 %v523
  %v953 = vpop.f32.mrb[0].mxu0
  %v954 = vadd.f32 0.0, %v953
  %v955 = vpop.f32.mrb[0].mxu0
  %v956 = vpop.f32.mrb[0].mxu0
  %v957 = vadd.f32 0.0, %v956
  %v958 = vpop.f32.mrb[0].mxu0
  %959 = vmatprep.mubr.bf16.mxu0 %v527
  %960 = vmatmul.mubr.bf16.gmra.mrb[0].mxu0 %v526
  %v961 = vpop.f32.mrb[0].mxu0
  %v962 = vadd.f32 0.0, %v961
  %v963 = vpop.f32.mrb[0].mxu0
  %v964 = vpop.f32.mrb[0].mxu0
  %v965 = vadd.f32 0.0, %v964
  %v966 = vpop.f32.mrb[0].mxu0
  %967 = vmatprep.mubr.bf16.mxu0 %v530
  %968 = vmatmul.mubr.bf16.gmra.mrb[0].mxu0 %v529
  %v969 = vpop.f32.mrb[0].mxu0
  %v970 = vadd.f32 0.0, %v969
  %v971 = vpop.f32.mrb[0].mxu0
  %v972 = vpop.f32.mrb[0].mxu0
  %v973 = vadd.f32 0.0, %v972
  %v974 = vpop.f32.mrb[0].mxu0
  %975 = vmatprep.mubr.bf16.mxu0 %v533
  %976 = vmatmul.mubr.bf16.gmra.mrb[0].mxu0 %v532
  %v977 = vpop.f32.mrb[0].mxu0
  %v978 = vadd.f32 0.0, %v977
  %v979 = vpop.f32.mrb[0].mxu0
  %v980 = vpop.f32.mrb[0].mxu0
  %v981 = vadd.f32 0.0, %v980
  %v982 = vpop.f32.mrb[0].mxu0
  %983 = vmatprep.mubr.bf16.mxu0 %v536
  %984 = vmatmul.mubr.bf16.gmra.mrb[0].mxu0 %v535
  %v985 = vpop.f32.mrb[0].mxu0
  %v986 = vadd.f32 0.0, %v985
  %v987 = vpop.f32.mrb[0].mxu0
  %v988 = vpop.f32.mrb[0].mxu0
  %v989 = vadd.f32 0.0, %v988
  %v990 = vpop.f32.mrb[0].mxu0
  %991 = vmatprep.mubr.bf16.mxu0 %v539
  %992 = vmatmul.mubr.bf16.gmra.mrb[0].mxu0 %v538
  %v993 = vpop.f32.mrb[0].mxu0
  %v994 = vadd.f32 0.0, %v993
  %v995 = vpop.f32.mrb[0].mxu0
  %v996 = vpop.f32.mrb[0].mxu0
  %v997 = vadd.f32 0.0, %v996
  %v998 = vpop.f32.mrb[0].mxu0
  %999 = vmatprep.mubr.bf16.mxu0 %v542
  %1000 = vmatmul.mubr.bf16.gmra.mrb[0].mxu0 %v541
  %v1001 = vpop.f32.mrb[0].mxu0
  %v1002 = vadd.f32 0.0, %v1001
  %v1003 = vpop.f32.mrb[0].mxu0
  %v1004 = vpop.f32.mrb[0].mxu0
  %v1005 = vadd.f32 0.0, %v1004
  %v1006 = vpop.f32.mrb[0].mxu0
  %1007 = vmatprep.mubr.bf16.mxu0 %v545
  %1008 = vmatmul.mubr.bf16.gmra.mrb[0].mxu0 %v544
  %v1009 = vpop.f32.mrb[0].mxu0
  %v1010 = vadd.f32 0.0, %v1009
  %v1011 = vpop.f32.mrb[0].mxu0
  %v1012 = vpop.f32.mrb[0].mxu0
  %v1013 = vadd.f32 0.0, %v1012
  %v1014 = vpop.f32.mrb[0].mxu0
  %1015 = vmatprep.mubr.bf16.mxu0 %v548
  %1016 = vmatmul.mubr.bf16.gmra.mrb[0].mxu0 %v547
  %v1017 = vpop.f32.mrb[0].mxu0
  %v1018 = vadd.f32 0.0, %v1017
  %v1019 = vpop.f32.mrb[0].mxu0
  %v1020 = vpop.f32.mrb[0].mxu0
  %v1021 = vadd.f32 0.0, %v1020
  %v1022 = vpop.f32.mrb[0].mxu0
  %1023 = vmatprep.mubr.bf16.mxu0 %v551
  %1024 = vmatmul.mubr.bf16.gmra.mrb[0].mxu0 %v550
  %v1025 = vpop.f32.mrb[0].mxu0
  %v1026 = vadd.f32 0.0, %v1025
  %v1027 = vpop.f32.mrb[0].mxu0
  %v1028 = vpop.f32.mrb[0].mxu0
  %v1029 = vadd.f32 0.0, %v1028
  %v1030 = vpop.f32.mrb[0].mxu0
  %1031 = vmatprep.mubr.bf16.mxu0 %v554
  %1032 = vmatmul.mubr.bf16.gmra.mrb[0].mxu0 %v553
  %v1033 = vpop.f32.mrb[0].mxu0
  %v1034 = vadd.f32 0.0, %v1033
  %v1035 = vpop.f32.mrb[0].mxu0
  %v1036 = vpop.f32.mrb[0].mxu0
  %v1037 = vadd.f32 0.0, %v1036
  %v1038 = vpop.f32.mrb[0].mxu0
  %1039 = vmatprep.mubr.bf16.mxu0 %v557
  %1040 = vmatmul.mubr.bf16.gmra.mrb[0].mxu0 %v556
  %v1041 = vpop.f32.mrb[0].mxu0
  %v1042 = vadd.f32 0.0, %v1041
  %v1043 = vpop.f32.mrb[0].mxu0
  %v1044 = vpop.f32.mrb[0].mxu0
  %v1045 = vadd.f32 0.0, %v1044
  %v1046 = vpop.f32.mrb[0].mxu0
  %1047 = vmatprep.mubr.bf16.mxu0 %v560
  %1048 = vmatmul.mubr.bf16.gmra.mrb[0].mxu0 %v559
  %v1049 = vpop.f32.mrb[0].mxu0
  %v1050 = vadd.f32 0.0, %v1049
  %v1051 = vpop.f32.mrb[0].mxu0
  %v1052 = vpop.f32.mrb[0].mxu0
  %v1053 = vadd.f32 0.0, %v1052
  %v1054 = vpop.f32.mrb[0].mxu0
  %1055 = vmatprep.mubr.bf16.mxu0 %v563
  %1056 = vmatmul.mubr.bf16.gmra.mrb[0].mxu0 %v562
  %v1057 = vpop.f32.mrb[0].mxu0
  %v1058 = vadd.f32 0.0, %v1057
  %v1059 = vpop.f32.mrb[0].mxu0
  %v1060 = vpop.f32.mrb[0].mxu0
  %v1061 = vadd.f32 0.0, %v1060
  %v1062 = vpop.f32.mrb[0].mxu0
  %1063 = vmatprep.mubr.bf16.mxu0 %v566
  %1064 = vmatmul.mubr.bf16.gmra.mrb[0].mxu0 %v565
  %v1065 = vpop.f32.mrb[0].mxu0
  %v1066 = vadd.f32 0.0, %v1065
  %v1067 = vpop.f32.mrb[0].mxu0
  %v1068 = vpop.f32.mrb[0].mxu0
  %v1069 = vadd.f32 0.0, %v1068
  %v1070 = vpop.f32.mrb[0].mxu0
  %1071 = vmatprep.mubr.bf16.mxu0 %v569
  %1072 = vmatmul.mubr.bf16.gmra.mrb[0].mxu0 %v568
  %v1073 = vpop.f32.mrb[0].mxu0
  %v1074 = vadd.f32 0.0, %v1073
  %v1075 = vpop.f32.mrb[0].mxu0
  %v1076 = vpop.f32.mrb[0].mxu0
  %v1077 = vadd.f32 0.0, %v1076
  %v1078 = vpop.f32.mrb[0].mxu0
  %1079 = vmatprep.mubr.bf16.mxu0 %v572
  %1080 = vmatmul.mubr.bf16.gmra.mrb[0].mxu0 %v571
  %v1081 = vpop.f32.mrb[0].mxu0
  %v1082 = vadd.f32 0.0, %v1081
  %v1083 = vpop.f32.mrb[0].mxu0
  %v1084 = vpop.f32.mrb[0].mxu0
  %v1085 = vadd.f32 0.0, %v1084
  %v1086 = vpop.f32.mrb[0].mxu0
  %1087 = vmatprep.mubr.bf16.mxu0 %v575
  %1088 = vmatmul.mubr.bf16.gmra.mrb[0].mxu0 %v574
  %v1089 = vpop.f32.mrb[0].mxu0
  %v1090 = vadd.f32 0.0, %v1089
  %v1091 = vpop.f32.mrb[0].mxu0
  %v1092 = vpop.f32.mrb[0].mxu0
  %v1093 = vadd.f32 0.0, %v1092
  %v1094 = vpop.f32.mrb[0].mxu0
  %1095 = vmatprep.mubr.bf16.mxu0 %v578
  %1096 = vmatmul.mubr.bf16.gmra.mrb[0].mxu0 %v577
  %v1097 = vpop.f32.mrb[0].mxu0
  %v1098 = vadd.f32 0.0, %v1097
  %v1099 = vpop.f32.mrb[0].mxu0
  %v1100 = vpop.f32.mrb[0].mxu0
  %v1101 = vadd.f32 0.0, %v1100
  %v1102 = vpop.f32.mrb[0].mxu0
  %1103 = vmatprep.mubr.bf16.mxu0 %v581
  %1104 = vmatmul.mubr.bf16.gmra.mrb[0].mxu0 %v580
  %v1105 = vpop.f32.mrb[0].mxu0
  %v1106 = vadd.f32 0.0, %v1105
  %v1107 = vpop.f32.mrb[0].mxu0
  %v1108 = vpop.f32.mrb[0].mxu0
  %v1109 = vadd.f32 0.0, %v1108
  %v1110 = vpop.f32.mrb[0].mxu0
  %1111 = vmatprep.mubr.bf16.mxu0 %v584
  %1112 = vmatmul.mubr.bf16.gmra.mrb[0].mxu0 %v583
  %v1113 = vpop.f32.mrb[0].mxu0
  %v1114 = vadd.f32 0.0, %v1113
  %v1115 = vpop.f32.mrb[0].mxu0
  %v1116 = vpop.f32.mrb[0].mxu0
  %v1117 = vadd.f32 0.0, %v1116
  %v1118 = vpop.f32.mrb[0].mxu0
  %1119 = vmatprep.mubr.bf16.mxu0 %v587
  %1120 = vmatmul.mubr.bf16.gmra.mrb[0].mxu0 %v586
  %v1121 = vpop.f32.mrb[0].mxu0
  %v1122 = vadd.f32 0.0, %v1121
  %v1123 = vpop.f32.mrb[0].mxu0
  %v1124 = vpop.f32.mrb[0].mxu0
  %v1125 = vadd.f32 0.0, %v1124
  %v1126 = vpop.f32.mrb[0].mxu0
  %1127 = vmatprep.mubr.bf16.mxu0 %v590
  %1128 = vmatmul.mubr.bf16.gmra.mrb[0].mxu0 %v589
  %v1129 = vpop.f32.mrb[0].mxu0
  %v1130 = vadd.f32 0.0, %v1129
  %v1131 = vpop.f32.mrb[0].mxu0
  %v1132 = vpop.f32.mrb[0].mxu0
  %v1133 = vadd.f32 0.0, %v1132
  %v1134 = vpop.f32.mrb[0].mxu0
  %1135 = vmatprep.mubr.bf16.mxu0 %v593
  %1136 = vmatmul.mubr.bf16.gmra.mrb[0].mxu0 %v592
  %v1137 = vpop.f32.mrb[0].mxu0
  %v1138 = vadd.f32 0.0, %v1137
  %v1139 = vpop.f32.mrb[0].mxu0
  %v1140 = vpop.f32.mrb[0].mxu0
  %v1141 = vadd.f32 0.0, %v1140
  %v1142 = vpop.f32.mrb[0].mxu0
  %1143 = vmatprep.mubr.bf16.mxu0 %v596
  %1144 = vmatmul.mubr.bf16.gmra.mrb[0].mxu0 %v595
  %v1145 = vpop.f32.mrb[0].mxu0
  %v1146 = vadd.f32 0.0, %v1145
  %v1147 = vpop.f32.mrb[0].mxu0
  %v1148 = vpop.f32.mrb[0].mxu0
  %v1149 = vadd.f32 0.0, %v1148
  %v1150 = vpop.f32.mrb[0].mxu0
  %1151 = vmatprep.mubr.bf16.mxu0 %v599
  %1152 = vmatmul.mubr.bf16.gmra.mrb[0].mxu0 %v598
  %v1153 = vpop.f32.mrb[0].mxu0
  %v1154 = vadd.f32 0.0, %v1153
  %v1155 = vpop.f32.mrb[0].mxu0
  %v1156 = vpop.f32.mrb[0].mxu0
  %v1157 = vadd.f32 0.0, %v1156
  %v1158 = vpop.f32.mrb[0].mxu0
  %1159 = vmatprep.mubr.bf16.mxu0 %v602
  %1160 = vmatmul.mubr.bf16.gmra.mrb[0].mxu0 %v601
  %v1161 = vpop.f32.mrb[0].mxu0
  %v1162 = vadd.f32 0.0, %v1161
  %v1163 = vpop.f32.mrb[0].mxu0
  %v1164 = vpop.f32.mrb[0].mxu0
  %v1165 = vadd.f32 0.0, %v1164
  %v1166 = vpop.f32.mrb[0].mxu0
  %1167 = vdwg.mxu0
  %1168 = vmatprep.subr.bf16.mxu0 0
  %1169 = vmatpush1.bf16.msra.mxu0 %v760
  %1170 = vmatprep.subr.bf16.mxu0 0
  %1171 = vmatpush1.bf16.msra.mxu0 %v761
  %1172 = vmatprep.subr.bf16.mxu0 0
  %1173 = vmatpush1.bf16.msra.mxu0 %v762
  %1174 = vmatprep.subr.bf16.mxu0 0
  %1175 = vmatpush1.bf16.msra.mxu0 0
  %1176 = vmatprep.subr.bf16.mxu0 0
  %1177 = vmatpush1.bf16.msra.mxu0 0
  %1178 = vmatprep.subr.bf16.mxu0 0
  %1179 = vmatpush1.bf16.msra.mxu0 0
  %1180 = vmatprep.subr.bf16.mxu0 0
  %1181 = vmatpush1.bf16.msra.mxu0 0
  %1182 = vmatprep.subr.bf16.mxu0 0
  %1183 = vmatpush1.bf16.msra.mxu0 0
  %1184 = vmatprep.subr.bf16.mxu0 0
  %1185 = vmatpush1.bf16.msra.mxu0 0
  %1186 = vmatprep.subr.bf16.mxu0 0
  %1187 = vmatpush1.bf16.msra.mxu0 0
  %1188 = vmatprep.subr.bf16.mxu0 0
  %1189 = vmatpush1.bf16.msra.mxu0 0
  %1190 = vmatprep.subr.bf16.mxu0 0
  %1191 = vmatpush1.bf16.msra.mxu0 0
  %1192 = vmatprep.subr.bf16.mxu0 0
  %1193 = vmatpush1.bf16.msra.mxu0 0
  %1194 = vmatprep.subr.bf16.mxu0 0
  %1195 = vmatpush1.bf16.msra.mxu0 0
  %1196 = vmatprep.subr.bf16.mxu0 0
  %1197 = vmatpush1.bf16.msra.mxu0 0
  %1198 = vmatprep.subr.bf16.mxu0 0
  %1199 = vmatpush1.bf16.msra.mxu0 0
  %1200 = vmatprep.mubr.bf16.mxu0 0
  %1201 = vmatmul.mubr.bf16.gmra.mrb[0].mxu0 %v784
  %v1202 = vpop.f32.mrb[0].mxu0
  %v1203 = vadd.f32 %v914, %v1202
  %v1204 = vpop.f32.mrb[0].mxu0
  %v1205 = vpop.f32.mrb[0].mxu0
  %v1206 = vadd.f32 %v917, %v1205
  %v1207 = vpop.f32.mrb[0].mxu0
  %1208 = vmatprep.mubr.bf16.mxu0 0
  %1209 = vmatmul.mubr.bf16.gmra.mrb[0].mxu0 %v787
  %v1210 = vpop.f32.mrb[0].mxu0
  %v1211 = vadd.f32 %v922, %v1210
  %v1212 = vpop.f32.mrb[0].mxu0
  %v1213 = vpop.f32.mrb[0].mxu0
  %v1214 = vadd.f32 %v925, %v1213
  %v1215 = vpop.f32.mrb[0].mxu0
  %1216 = vmatprep.mubr.bf16.mxu0 0
  %1217 = vmatmul.mubr.bf16.gmra.mrb[0].mxu0 %v790
  %v1218 = vpop.f32.mrb[0].mxu0
  %v1219 = vadd.f32 %v930, %v1218
  %v1220 = vpop.f32.mrb[0].mxu0
  %v1221 = vpop.f32.mrb[0].mxu0
  %v1222 = vadd.f32 %v933, %v1221
  %v1223 = vpop.f32.mrb[0].mxu0
  %1224 = vmatprep.mubr.bf16.mxu0 0
  %1225 = vmatmul.mubr.bf16.gmra.mrb[0].mxu0 %v793
  %v1226 = vpop.f32.mrb[0].mxu0
  %v1227 = vadd.f32 %v938, %v1226
  %v1228 = vpop.f32.mrb[0].mxu0
  %v1229 = vpop.f32.mrb[0].mxu0
  %v1230 = vadd.f32 %v941, %v1229
  %v1231 = vpop.f32.mrb[0].mxu0
  %1232 = vmatprep.mubr.bf16.mxu0 0
  %1233 = vmatmul.mubr.bf16.gmra.mrb[0].mxu0 %v796
  %v1234 = vpop.f32.mrb[0].mxu0
  %v1235 = vadd.f32 %v946, %v1234
  %v1236 = vpop.f32.mrb[0].mxu0
  %v1237 = vpop.f32.mrb[0].mxu0
  %v1238 = vadd.f32 %v949, %v1237
  %v1239 = vpop.f32.mrb[0].mxu0
  %1240 = vmatprep.mubr.bf16.mxu0 0
  %1241 = vmatmul.mubr.bf16.gmra.mrb[0].mxu0 %v799
  %v1242 = vpop.f32.mrb[0].mxu0
  %v1243 = vadd.f32 %v954, %v1242
  %v1244 = vpop.f32.mrb[0].mxu0
  %v1245 = vpop.f32.mrb[0].mxu0
  %v1246 = vadd.f32 %v957, %v1245
  %v1247 = vpop.f32.mrb[0].mxu0
  %1248 = vmatprep.mubr.bf16.mxu0 0
  %1249 = vmatmul.mubr.bf16.gmra.mrb[0].mxu0 %v802
  %v1250 = vpop.f32.mrb[0].mxu0
  %v1251 = vadd.f32 %v962, %v1250
  %v1252 = vpop.f32.mrb[0].mxu0
  %v1253 = vpop.f32.mrb[0].mxu0
  %v1254 = vadd.f32 %v965, %v1253
  %v1255 = vpop.f32.mrb[0].mxu0
  %1256 = vmatprep.mubr.bf16.mxu0 0
  %1257 = vmatmul.mubr.bf16.gmra.mrb[0].mxu0 %v805
  %v1258 = vpop.f32.mrb[0].mxu0
  %v1259 = vadd.f32 %v970, %v1258
  %v1260 = vpop.f32.mrb[0].mxu0
  %v1261 = vpop.f32.mrb[0].mxu0
  %v1262 = vadd.f32 %v973, %v1261
  %v1263 = vpop.f32.mrb[0].mxu0
  %1264 = vmatprep.mubr.bf16.mxu0 0
  %1265 = vmatmul.mubr.bf16.gmra.mrb[0].mxu0 %v808
  %v1266 = vpop.f32.mrb[0].mxu0
  %v1267 = vadd.f32 %v978, %v1266
  %v1268 = vpop.f32.mrb[0].mxu0
  %v1269 = vpop.f32.mrb[0].mxu0
  %v1270 = vadd.f32 %v981, %v1269
  %v1271 = vpop.f32.mrb[0].mxu0
  %1272 = vmatprep.mubr.bf16.mxu0 0
  %1273 = vmatmul.mubr.bf16.gmra.mrb[0].mxu0 %v811
  %v1274 = vpop.f32.mrb[0].mxu0
  %v1275 = vadd.f32 %v986, %v1274
  %v1276 = vpop.f32.mrb[0].mxu0
  %v1277 = vpop.f32.mrb[0].mxu0
  %v1278 = vadd.f32 %v989, %v1277
  %v1279 = vpop.f32.mrb[0].mxu0
  %1280 = vmatprep.mubr.bf16.mxu0 0
  %1281 = vmatmul.mubr.bf16.gmra.mrb[0].mxu0 %v814
  %v1282 = vpop.f32.mrb[0].mxu0
  %v1283 = vadd.f32 %v994, %v1282
  %v1284 = vpop.f32.mrb[0].mxu0
  %v1285 = vpop.f32.mrb[0].mxu0
  %v1286 = vadd.f32 %v997, %v1285
  %v1287 = vpop.f32.mrb[0].mxu0
  %1288 = vmatprep.mubr.bf16.mxu0 0
  %1289 = vmatmul.mubr.bf16.gmra.mrb[0].mxu0 %v817
  %v1290 = vpop.f32.mrb[0].mxu0
  %v1291 = vadd.f32 %v1002, %v1290
  %v1292 = vpop.f32.mrb[0].mxu0
  %v1293 = vpop.f32.mrb[0].mxu0
  %v1294 = vadd.f32 %v1005, %v1293
  %v1295 = vpop.f32.mrb[0].mxu0
  %1296 = vmatprep.mubr.bf16.mxu0 0
  %1297 = vmatmul.mubr.bf16.gmra.mrb[0].mxu0 %v820
  %v1298 = vpop.f32.mrb[0].mxu0
  %v1299 = vadd.f32 %v1010, %v1298
  %v1300 = vpop.f32.mrb[0].mxu0
  %v1301 = vpop.f32.mrb[0].mxu0
  %v1302 = vadd.f32 %v1013, %v1301
  %v1303 = vpop.f32.mrb[0].mxu0
  %1304 = vmatprep.mubr.bf16.mxu0 0
  %1305 = vmatmul.mubr.bf16.gmra.mrb[0].mxu0 %v823
  %v1306 = vpop.f32.mrb[0].mxu0
  %v1307 = vadd.f32 %v1018, %v1306
  %v1308 = vpop.f32.mrb[0].mxu0
  %v1309 = vpop.f32.mrb[0].mxu0
  %v1310 = vadd.f32 %v1021, %v1309
  %v1311 = vpop.f32.mrb[0].mxu0
  %1312 = vmatprep.mubr.bf16.mxu0 0
  %1313 = vmatmul.mubr.bf16.gmra.mrb[0].mxu0 %v826
  %v1314 = vpop.f32.mrb[0].mxu0
  %v1315 = vadd.f32 %v1026, %v1314
  %v1316 = vpop.f32.mrb[0].mxu0
  %v1317 = vpop.f32.mrb[0].mxu0
  %v1318 = vadd.f32 %v1029, %v1317
  %v1319 = vpop.f32.mrb[0].mxu0
  %1320 = vmatprep.mubr.bf16.mxu0 0
  %1321 = vmatmul.mubr.bf16.gmra.mrb[0].mxu0 %v829
  %v1322 = vpop.f32.mrb[0].mxu0
  %v1323 = vadd.f32 %v1034, %v1322
  %v1324 = vpop.f32.mrb[0].mxu0
  %v1325 = vpop.f32.mrb[0].mxu0
  %v1326 = vadd.f32 %v1037, %v1325
  %v1327 = vpop.f32.mrb[0].mxu0
  %1328 = vmatprep.mubr.bf16.mxu0 0
  %1329 = vmatmul.mubr.bf16.gmra.mrb[0].mxu0 %v832
  %v1330 = vpop.f32.mrb[0].mxu0
  %v1331 = vadd.f32 %v1042, %v1330
  %v1332 = vpop.f32.mrb[0].mxu0
  %v1333 = vpop.f32.mrb[0].mxu0
  %v1334 = vadd.f32 %v1045, %v1333
  %v1335 = vpop.f32.mrb[0].mxu0
  %1336 = vmatprep.mubr.bf16.mxu0 0
  %1337 = vmatmul.mubr.bf16.gmra.mrb[0].mxu0 %v835
  %v1338 = vpop.f32.mrb[0].mxu0
  %v1339 = vadd.f32 %v1050, %v1338
  %v1340 = vpop.f32.mrb[0].mxu0
  %v1341 = vpop.f32.mrb[0].mxu0
  %v1342 = vadd.f32 %v1053, %v1341
  %v1343 = vpop.f32.mrb[0].mxu0
  %1344 = vmatprep.mubr.bf16.mxu0 0
  %1345 = vmatmul.mubr.bf16.gmra.mrb[0].mxu0 %v838
  %v1346 = vpop.f32.mrb[0].mxu0
  %v1347 = vadd.f32 %v1058, %v1346
  %v1348 = vpop.f32.mrb[0].mxu0
  %v1349 = vpop.f32.mrb[0].mxu0
  %v1350 = vadd.f32 %v1061, %v1349
  %v1351 = vpop.f32.mrb[0].mxu0
  %1352 = vmatprep.mubr.bf16.mxu0 0
  %1353 = vmatmul.mubr.bf16.gmra.mrb[0].mxu0 %v841
  %v1354 = vpop.f32.mrb[0].mxu0
  %v1355 = vadd.f32 %v1066, %v1354
  %v1356 = vpop.f32.mrb[0].mxu0
  %v1357 = vpop.f32.mrb[0].mxu0
  %v1358 = vadd.f32 %v1069, %v1357
  %v1359 = vpop.f32.mrb[0].mxu0
  %1360 = vmatprep.mubr.bf16.mxu0 0
  %1361 = vmatmul.mubr.bf16.gmra.mrb[0].mxu0 %v844
  %v1362 = vpop.f32.mrb[0].mxu0
  %v1363 = vadd.f32 %v1074, %v1362
  %v1364 = vpop.f32.mrb[0].mxu0
  %v1365 = vpop.f32.mrb[0].mxu0
  %v1366 = vadd.f32 %v1077, %v1365
  %v1367 = vpop.f32.mrb[0].mxu0
  %1368 = vmatprep.mubr.bf16.mxu0 0
  %1369 = vmatmul.mubr.bf16.gmra.mrb[0].mxu0 %v847
  %v1370 = vpop.f32.mrb[0].mxu0
  %v1371 = vadd.f32 %v1082, %v1370
  %v1372 = vpop.f32.mrb[0].mxu0
  %v1373 = vpop.f32.mrb[0].mxu0
  %v1374 = vadd.f32 %v1085, %v1373
  %v1375 = vpop.f32.mrb[0].mxu0
  %1376 = vmatprep.mubr.bf16.mxu0 0
  %1377 = vmatmul.mubr.bf16.gmra.mrb[0].mxu0 %v850
  %v1378 = vpop.f32.mrb[0].mxu0
  %v1379 = vadd.f32 %v1090, %v1378
  %v1380 = vpop.f32.mrb[0].mxu0
  %v1381 = vpop.f32.mrb[0].mxu0
  %v1382 = vadd.f32 %v1093, %v1381
  %v1383 = vpop.f32.mrb[0].mxu0
  %1384 = vmatprep.mubr.bf16.mxu0 0
  %1385 = vmatmul.mubr.bf16.gmra.mrb[0].mxu0 %v853
  %v1386 = vpop.f32.mrb[0].mxu0
  %v1387 = vadd.f32 %v1098, %v1386
  %v1388 = vpop.f32.mrb[0].mxu0
  %v1389 = vpop.f32.mrb[0].mxu0
  %v1390 = vadd.f32 %v1101, %v1389
  %v1391 = vpop.f32.mrb[0].mxu0
  %1392 = vmatprep.mubr.bf16.mxu0 0
  %1393 = vmatmul.mubr.bf16.gmra.mrb[0].mxu0 %v856
  %v1394 = vpop.f32.mrb[0].mxu0
  %v1395 = vadd.f32 %v1106, %v1394
  %v1396 = vpop.f32.mrb[0].mxu0
  %v1397 = vpop.f32.mrb[0].mxu0
  %v1398 = vadd.f32 %v1109, %v1397
  %v1399 = vpop.f32.mrb[0].mxu0
  %1400 = vmatprep.mubr.bf16.mxu0 0
  %1401 = vmatmul.mubr.bf16.gmra.mrb[0].mxu0 %v859
  %v1402 = vpop.f32.mrb[0].mxu0
  %v1403 = vadd.f32 %v1114, %v1402
  %v1404 = vpop.f32.mrb[0].mxu0
  %v1405 = vpop.f32.mrb[0].mxu0
  %v1406 = vadd.f32 %v1117, %v1405
  %v1407 = vpop.f32.mrb[0].mxu0
  %1408 = vmatprep.mubr.bf16.mxu0 0
  %1409 = vmatmul.mubr.bf16.gmra.mrb[0].mxu0 %v862
  %v1410 = vpop.f32.mrb[0].mxu0
  %v1411 = vadd.f32 %v1122, %v1410
  %v1412 = vpop.f32.mrb[0].mxu0
  %v1413 = vpop.f32.mrb[0].mxu0
  %v1414 = vadd.f32 %v1125, %v1413
  %v1415 = vpop.f32.mrb[0].mxu0
  %1416 = vmatprep.mubr.bf16.mxu0 0
  %1417 = vmatmul.mubr.bf16.gmra.mrb[0].mxu0 %v865
  %v1418 = vpop.f32.mrb[0].mxu0
  %v1419 = vadd.f32 %v1130, %v1418
  %v1420 = vpop.f32.mrb[0].mxu0
  %v1421 = vpop.f32.mrb[0].mxu0
  %v1422 = vadd.f32 %v1133, %v1421
  %v1423 = vpop.f32.mrb[0].mxu0
  %1424 = vmatprep.mubr.bf16.mxu0 0
  %1425 = vmatmul.mubr.bf16.gmra.mrb[0].mxu0 %v868
  %v1426 = vpop.f32.mrb[0].mxu0
  %v1427 = vadd.f32 %v1138, %v1426
  %v1428 = vpop.f32.mrb[0].mxu0
  %v1429 = vpop.f32.mrb[0].mxu0
  %v1430 = vadd.f32 %v1141, %v1429
  %v1431 = vpop.f32.mrb[0].mxu0
  %1432 = vmatprep.mubr.bf16.mxu0 0
  %1433 = vmatmul.mubr.bf16.gmra.mrb[0].mxu0 %v871
  %v1434 = vpop.f32.mrb[0].mxu0
  %v1435 = vadd.f32 %v1146, %v1434
  %v1436 = vpop.f32.mrb[0].mxu0
  %v1437 = vpop.f32.mrb[0].mxu0
  %v1438 = vadd.f32 %v1149, %v1437
  %v1439 = vpop.f32.mrb[0].mxu0
  %1440 = vmatprep.mubr.bf16.mxu0 0
  %1441 = vmatmul.mubr.bf16.gmra.mrb[0].mxu0 %v874
  %v1442 = vpop.f32.mrb[0].mxu0
  %v1443 = vadd.f32 %v1154, %v1442
  %v1444 = vpop.f32.mrb[0].mxu0
  %v1445 = vpop.f32.mrb[0].mxu0
  %v1446 = vadd.f32 %v1157, %v1445
  %v1447 = vpop.f32.mrb[0].mxu0
  %1448 = vmatprep.mubr.bf16.mxu0 0
  %1449 = vmatmul.mubr.bf16.gmra.mrb[0].mxu0 %v877
  %v1450 = vpop.f32.mrb[0].mxu0
  %v1451 = vadd.f32 %v1162, %v1450
  %v1452 = vpop.f32.mrb[0].mxu0
  %v1453 = vpop.f32.mrb[0].mxu0
  %v1454 = vadd.f32 %v1165, %v1453
  %v1455 = vpop.f32.mrb[0].mxu0
  %1456 = vdwg.mxu0
  %v1457 = vpack.c.bf16 %v1206, %v1203
  %v1458 = vpack.c.bf16 %v1214, %v1211
  %v1459 = vpack.c.bf16 %v1222, %v1219
  %v1460 = vpack.c.bf16 %v1230, %v1227
  %v1461 = vpack.c.bf16 %v1238, %v1235
  %v1462 = vpack.c.bf16 %v1246, %v1243
  %v1463 = vpack.c.bf16 %v1254, %v1251
  %v1464 = vpack.c.bf16 %v1262, %v1259
  %v1465 = vpack.c.bf16 %v1270, %v1267
  %v1466 = vpack.c.bf16 %v1278, %v1275
  %v1467 = vpack.c.bf16 %v1286, %v1283
  %v1468 = vpack.c.bf16 %v1294, %v1291
  %v1469 = vpack.c.bf16 %v1302, %v1299
  %v1470 = vpack.c.bf16 %v1310, %v1307
  %v1471 = vpack.c.bf16 %v1318, %v1315
  %v1472 = vpack.c.bf16 %v1326, %v1323
  %v1473 = vpack.c.bf16 %v1334, %v1331
  %v1474 = vpack.c.bf16 %v1342, %v1339
  %v1475 = vpack.c.bf16 %v1350, %v1347
  %v1476 = vpack.c.bf16 %v1358, %v1355
  %v1477 = vpack.c.bf16 %v1366, %v1363
  %v1478 = vpack.c.bf16 %v1374, %v1371
  %v1479 = vpack.c.bf16 %v1382, %v1379
  %v1480 = vpack.c.bf16 %v1390, %v1387
  %v1481 = vpack.c.bf16 %v1398, %v1395
  %v1482 = vpack.c.bf16 %v1406, %v1403
  %v1483 = vpack.c.bf16 %v1414, %v1411
  %v1484 = vpack.c.bf16 %v1422, %v1419
  %v1485 = vpack.c.bf16 %v1430, %v1427
  %v1486 = vpack.c.bf16 %v1438, %v1435
  %v1487 = vpack.c.bf16 %v1446, %v1443
  %v1488 = vpack.c.bf16 %v1454, %v1451
  %v1521 = vunpack.c.l.b16 %v1457
  %v1522 = vunpack.c.h.b16 %v1457
  %v1523 = vunpack.c.l.b16 %v1458
  %v1524 = vunpack.c.h.b16 %v1458
  %v1525 = vunpack.c.l.b16 %v1459
  %v1526 = vunpack.c.h.b16 %v1459
  %v1527 = vunpack.c.l.b16 %v1460
  %v1528 = vunpack.c.h.b16 %v1460
  %v1529 = vunpack.c.l.b16 %v1461
  %v1530 = vunpack.c.h.b16 %v1461
  %v1531 = vunpack.c.l.b16 %v1462
  %v1532 = vunpack.c.h.b16 %v1462
  %v1533 = vunpack.c.l.b16 %v1463
  %v1534 = vunpack.c.h.b16 %v1463
  %v1535 = vunpack.c.l.b16 %v1464
  %v1536 = vunpack.c.h.b16 %v1464
  %v1537 = vunpack.c.l.b16 %v1465
  %v1538 = vunpack.c.h.b16 %v1465
  %v1539 = vunpack.c.l.b16 %v1466
  %v1540 = vunpack.c.h.b16 %v1466
  %v1541 = vunpack.c.l.b16 %v1467
  %v1542 = vunpack.c.h.b16 %v1467
  %v1543 = vunpack.c.l.b16 %v1468
  %v1544 = vunpack.c.h.b16 %v1468
  %v1545 = vunpack.c.l.b16 %v1469
  %v1546 = vunpack.c.h.b16 %v1469
  %v1547 = vunpack.c.l.b16 %v1470
  %v1548 = vunpack.c.h.b16 %v1470
  %v1549 = vunpack.c.l.b16 %v1471
  %v1550 = vunpack.c.h.b16 %v1471
  %v1551 = vunpack.c.l.b16 %v1472
  %v1552 = vunpack.c.h.b16 %v1472
  %v1553 = vunpack.c.l.b16 %v1473
  %v1554 = vunpack.c.h.b16 %v1473
  %v1555 = vunpack.c.l.b16 %v1474
  %v1556 = vunpack.c.h.b16 %v1474
  %v1557 = vunpack.c.l.b16 %v1475
  %v1558 = vunpack.c.h.b16 %v1475
  %v1559 = vunpack.c.l.b16 %v1476
  %v1560 = vunpack.c.h.b16 %v1476
  %v1561 = vunpack.c.l.b16 %v1477
  %v1562 = vunpack.c.h.b16 %v1477
  %v1563 = vunpack.c.l.b16 %v1478
  %v1564 = vunpack.c.h.b16 %v1478
  %v1565 = vunpack.c.l.b16 %v1479
  %v1566 = vunpack.c.h.b16 %v1479
  %v1567 = vunpack.c.l.b16 %v1480
  %v1568 = vunpack.c.h.b16 %v1480
  %v1569 = vunpack.c.l.b16 %v1481
  %v1570 = vunpack.c.h.b16 %v1481
  %v1571 = vunpack.c.l.b16 %v1482
  %v1572 = vunpack.c.h.b16 %v1482
  %v1573 = vunpack.c.l.b16 %v1483
  %v1574 = vunpack.c.h.b16 %v1483
  %v1575 = vunpack.c.l.b16 %v1484
  %v1576 = vunpack.c.h.b16 %v1484
  %v1577 = vunpack.c.l.b16 %v1485
  %v1578 = vunpack.c.h.b16 %v1485
  %v1579 = vunpack.c.l.b16 %v1486
  %v1580 = vunpack.c.h.b16 %v1486
  %v1581 = vunpack.c.l.b16 %v1487
  %v1582 = vunpack.c.h.b16 %v1487
  %v1583 = vunpack.c.l.b16 %v1488
  %v1584 = vunpack.c.h.b16 %v1488
  %v1585 = vpack.c.b16 %v1521, %v1521
  %v1586 = vpack.c.b16 %v1522, %v1522
  %v1587 = vpack.c.b16 %v1523, %v1523
  %v1588 = vpack.c.b16 %v1524, %v1524
  %v1589 = vpack.c.b16 %v1525, %v1525
  %v1590 = vpack.c.b16 %v1526, %v1526
  %v1591 = vpack.c.b16 %v1527, %v1527
  %v1592 = vpack.c.b16 %v1528, %v1528
  %v1593 = vpack.c.b16 %v1529, %v1529
  %v1594 = vpack.c.b16 %v1530, %v1530
  %v1595 = vpack.c.b16 %v1531, %v1531
  %v1596 = vpack.c.b16 %v1532, %v1532
  %v1597 = vpack.c.b16 %v1533, %v1533
  %v1598 = vpack.c.b16 %v1534, %v1534
  %v1599 = vpack.c.b16 %v1535, %v1535
  %v1600 = vpack.c.b16 %v1536, %v1536
  %v1601 = vpack.c.b16 %v1537, %v1537
  %v1602 = vpack.c.b16 %v1538, %v1538
  %v1603 = vpack.c.b16 %v1539, %v1539
  %v1604 = vpack.c.b16 %v1540, %v1540
  %v1605 = vpack.c.b16 %v1541, %v1541
  %v1606 = vpack.c.b16 %v1542, %v1542
  %v1607 = vpack.c.b16 %v1543, %v1543
  %v1608 = vpack.c.b16 %v1544, %v1544
  %v1609 = vpack.c.b16 %v1545, %v1545
  %v1610 = vpack.c.b16 %v1546, %v1546
  %v1611 = vpack.c.b16 %v1547, %v1547
  %v1612 = vpack.c.b16 %v1548, %v1548
  %v1613 = vpack.c.b16 %v1549, %v1549
  %v1614 = vpack.c.b16 %v1550, %v1550
  %v1615 = vpack.c.b16 %v1551, %v1551
  %v1616 = vpack.c.b16 %v1552, %v1552
  %v1617 = vpack.c.b16 %v1553, %v1553
  %v1618 = vpack.c.b16 %v1554, %v1554
  %v1619 = vpack.c.b16 %v1555, %v1555
  %v1620 = vpack.c.b16 %v1556, %v1556
  %v1621 = vpack.c.b16 %v1557, %v1557
  %v1622 = vpack.c.b16 %v1558, %v1558
  %v1623 = vpack.c.b16 %v1559, %v1559
  %v1624 = vpack.c.b16 %v1560, %v1560
  %v1625 = vpack.c.b16 %v1561, %v1561
  %v1626 = vpack.c.b16 %v1562, %v1562
  %v1627 = vpack.c.b16 %v1563, %v1563
  %v1628 = vpack.c.b16 %v1564, %v1564
  %v1629 = vpack.c.b16 %v1565, %v1565
  %v1630 = vpack.c.b16 %v1566, %v1566
  %v1631 = vpack.c.b16 %v1567, %v1567
  %v1632 = vpack.c.b16 %v1568, %v1568
  %v1633 = vpack.c.b16 %v1569, %v1569
  %v1634 = vpack.c.b16 %v1570, %v1570
  %v1635 = vpack.c.b16 %v1571, %v1571
  %v1636 = vpack.c.b16 %v1572, %v1572
  %v1637 = vpack.c.b16 %v1573, %v1573
  %v1638 = vpack.c.b16 %v1574, %v1574
  %v1639 = vpack.c.b16 %v1575, %v1575
  %v1640 = vpack.c.b16 %v1576, %v1576
  %v1641 = vpack.c.b16 %v1577, %v1577
  %v1642 = vpack.c.b16 %v1578, %v1578
  %v1643 = vpack.c.b16 %v1579, %v1579
  %v1644 = vpack.c.b16 %v1580, %v1580
  %v1645 = vpack.c.b16 %v1581, %v1581
  %v1646 = vpack.c.b16 %v1582, %v1582
  %v1647 = vpack.c.b16 %v1583, %v1583
  %v1648 = vpack.c.b16 %v1584, %v1584
  %vm1713 = vcmask 257024
  %1714 = vst.msk [vmem:[%s2] sm:$0xf] %vm1713, %v1585
  %1715 = vst.msk [vmem:[%s2 + $0x4] sm:$0xf] %vm1713, %v1586
  %1716 = vst.msk [vmem:[%s2 + $0x8] sm:$0xf] %vm1713, %v1587
  %1717 = vst.msk [vmem:[%s2 + $0xc] sm:$0xf] %vm1713, %v1588
  %1718 = vst.msk [vmem:[%s2 + $0x10] sm:$0xf] %vm1713, %v1589
  %1719 = vst.msk [vmem:[%s2 + $0x14] sm:$0xf] %vm1713, %v1590
  %1720 = vst.msk [vmem:[%s2 + $0x18] sm:$0xf] %vm1713, %v1591
  %1721 = vst.msk [vmem:[%s2 + $0x1c] sm:$0xf] %vm1713, %v1592
  %1722 = vst.msk [vmem:[%s2 + $0x20] sm:$0xf] %vm1713, %v1593
  %1723 = vst.msk [vmem:[%s2 + $0x24] sm:$0xf] %vm1713, %v1594
  %1724 = vst.msk [vmem:[%s2 + $0x28] sm:$0xf] %vm1713, %v1595
  %1725 = vst.msk [vmem:[%s2 + $0x2c] sm:$0xf] %vm1713, %v1596
  %1726 = vst.msk [vmem:[%s2 + $0x30] sm:$0xf] %vm1713, %v1597
  %1727 = vst.msk [vmem:[%s2 + $0x34] sm:$0xf] %vm1713, %v1598
  %1728 = vst.msk [vmem:[%s2 + $0x38] sm:$0xf] %vm1713, %v1599
  %1729 = vst.msk [vmem:[%s2 + $0x3c] sm:$0xf] %vm1713, %v1600
  %1730 = vst.msk [vmem:[%s2 + $0x40] sm:$0xf] %vm1713, %v1601
  %1731 = vst.msk [vmem:[%s2 + $0x44] sm:$0xf] %vm1713, %v1602
  %1732 = vst.msk [vmem:[%s2 + $0x48] sm:$0xf] %vm1713, %v1603
  %1733 = vst.msk [vmem:[%s2 + $0x4c] sm:$0xf] %vm1713, %v1604
  %1734 = vst.msk [vmem:[%s2 + $0x50] sm:$0xf] %vm1713, %v1605
  %1735 = vst.msk [vmem:[%s2 + $0x54] sm:$0xf] %vm1713, %v1606
  %1736 = vst.msk [vmem:[%s2 + $0x58] sm:$0xf] %vm1713, %v1607
  %1737 = vst.msk [vmem:[%s2 + $0x5c] sm:$0xf] %vm1713, %v1608
  %1738 = vst.msk [vmem:[%s2 + $0x60] sm:$0xf] %vm1713, %v1609
  %1739 = vst.msk [vmem:[%s2 + $0x64] sm:$0xf] %vm1713, %v1610
  %1740 = vst.msk [vmem:[%s2 + $0x68] sm:$0xf] %vm1713, %v1611
  %1741 = vst.msk [vmem:[%s2 + $0x6c] sm:$0xf] %vm1713, %v1612
  %1742 = vst.msk [vmem:[%s2 + $0x70] sm:$0xf] %vm1713, %v1613
  %1743 = vst.msk [vmem:[%s2 + $0x74] sm:$0xf] %vm1713, %v1614
  %1744 = vst.msk [vmem:[%s2 + $0x78] sm:$0xf] %vm1713, %v1615
  %1745 = vst.msk [vmem:[%s2 + $0x7c] sm:$0xf] %vm1713, %v1616
  %1746 = vst.msk [vmem:[%s2 + $0x80] sm:$0xf] %vm1713, %v1617
  %1747 = vst.msk [vmem:[%s2 + $0x84] sm:$0xf] %vm1713, %v1618
  %1748 = vst.msk [vmem:[%s2 + $0x88] sm:$0xf] %vm1713, %v1619
  %1749 = vst.msk [vmem:[%s2 + $0x8c] sm:$0xf] %vm1713, %v1620
  %1750 = vst.msk [vmem:[%s2 + $0x90] sm:$0xf] %vm1713, %v1621
  %1751 = vst.msk [vmem:[%s2 + $0x94] sm:$0xf] %vm1713, %v1622
  %1752 = vst.msk [vmem:[%s2 + $0x98] sm:$0xf] %vm1713, %v1623
  %1753 = vst.msk [vmem:[%s2 + $0x9c] sm:$0xf] %vm1713, %v1624
  %1754 = vst.msk [vmem:[%s2 + $0xa0] sm:$0xf] %vm1713, %v1625
  %1755 = vst.msk [vmem:[%s2 + $0xa4] sm:$0xf] %vm1713, %v1626
  %1756 = vst.msk [vmem:[%s2 + $0xa8] sm:$0xf] %vm1713, %v1627
  %1757 = vst.msk [vmem:[%s2 + $0xac] sm:$0xf] %vm1713, %v1628
  %1758 = vst.msk [vmem:[%s2 + $0xb0] sm:$0xf] %vm1713, %v1629
  %1759 = vst.msk [vmem:[%s2 + $0xb4] sm:$0xf] %vm1713, %v1630
  %1760 = vst.msk [vmem:[%s2 + $0xb8] sm:$0xf] %vm1713, %v1631
  %1761 = vst.msk [vmem:[%s2 + $0xbc] sm:$0xf] %vm1713, %v1632
  %1762 = vst.msk [vmem:[%s2 + $0xc0] sm:$0xf] %vm1713, %v1633
  %1763 = vst.msk [vmem:[%s2 + $0xc4] sm:$0xf] %vm1713, %v1634
  %1764 = vst.msk [vmem:[%s2 + $0xc8] sm:$0xf] %vm1713, %v1635
  %1765 = vst.msk [vmem:[%s2 + $0xcc] sm:$0xf] %vm1713, %v1636
  %1766 = vst.msk [vmem:[%s2 + $0xd0] sm:$0xf] %vm1713, %v1637
  %1767 = vst.msk [vmem:[%s2 + $0xd4] sm:$0xf] %vm1713, %v1638
  %1768 = vst.msk [vmem:[%s2 + $0xd8] sm:$0xf] %vm1713, %v1639
  %1769 = vst.msk [vmem:[%s2 + $0xdc] sm:$0xf] %vm1713, %v1640
  %1770 = vst.msk [vmem:[%s2 + $0xe0] sm:$0xf] %vm1713, %v1641
  %1771 = vst.msk [vmem:[%s2 + $0xe4] sm:$0xf] %vm1713, %v1642
  %1772 = vst.msk [vmem:[%s2 + $0xe8] sm:$0xf] %vm1713, %v1643
  %1773 = vst.msk [vmem:[%s2 + $0xec] sm:$0xf] %vm1713, %v1644
  %1774 = vst.msk [vmem:[%s2 + $0xf0] sm:$0xf] %vm1713, %v1645
  %1775 = vst.msk [vmem:[%s2 + $0xf4] sm:$0xf] %vm1713, %v1646
  %1776 = vst.msk [vmem:[%s2 + $0xf8] sm:$0xf] %vm1713, %v1647
  %1777 = vst.msk [vmem:[%s2 + $0xfc] sm:$0xf] %vm1713, %v1648
  %v1778 = vld [vmem:[%s3] sm:$0x1]
  %vm1779 = vcmask 261120
  %v1780 = vsel %vm1779, %v1203, 0.0
  %v1781 = vsel %vm1779, %v1206, 0.0
  %v1782 = vadd.f32 %v1780, %v1781
  %v1783 = vsel %vm1779, %v1211, 0.0
  %v1784 = vadd.f32 %v1782, %v1783
  %v1785 = vsel %vm1779, %v1214, 0.0
  %v1786 = vadd.f32 %v1784, %v1785
  %v1787 = vsel %vm1779, %v1219, 0.0
  %v1788 = vadd.f32 %v1786, %v1787
  %v1789 = vsel %vm1779, %v1222, 0.0
  %v1790 = vadd.f32 %v1788, %v1789
  %v1791 = vsel %vm1779, %v1227, 0.0
  %v1792 = vadd.f32 %v1790, %v1791
  %v1793 = vsel %vm1779, %v1230, 0.0
  %v1794 = vadd.f32 %v1792, %v1793
  %v1795 = vsel %vm1779, %v1235, 0.0
  %v1796 = vadd.f32 %v1794, %v1795
  %v1797 = vsel %vm1779, %v1238, 0.0
  %v1798 = vadd.f32 %v1796, %v1797
  %v1799 = vsel %vm1779, %v1243, 0.0
  %v1800 = vadd.f32 %v1798, %v1799
  %v1801 = vsel %vm1779, %v1246, 0.0
  %v1802 = vadd.f32 %v1800, %v1801
  %v1803 = vsel %vm1779, %v1251, 0.0
  %v1804 = vadd.f32 %v1802, %v1803
  %v1805 = vsel %vm1779, %v1254, 0.0
  %v1806 = vadd.f32 %v1804, %v1805
  %v1807 = vsel %vm1779, %v1259, 0.0
  %v1808 = vadd.f32 %v1806, %v1807
  %v1809 = vsel %vm1779, %v1262, 0.0
  %v1810 = vadd.f32 %v1808, %v1809
  %v1811 = vsel %vm1779, %v1267, 0.0
  %v1812 = vadd.f32 %v1810, %v1811
  %v1813 = vsel %vm1779, %v1270, 0.0
  %v1814 = vadd.f32 %v1812, %v1813
  %v1815 = vsel %vm1779, %v1275, 0.0
  %v1816 = vadd.f32 %v1814, %v1815
  %v1817 = vsel %vm1779, %v1278, 0.0
  %v1818 = vadd.f32 %v1816, %v1817
  %v1819 = vsel %vm1779, %v1283, 0.0
  %v1820 = vadd.f32 %v1818, %v1819
  %v1821 = vsel %vm1779, %v1286, 0.0
  %v1822 = vadd.f32 %v1820, %v1821
  %v1823 = vsel %vm1779, %v1291, 0.0
  %v1824 = vadd.f32 %v1822, %v1823
  %v1825 = vsel %vm1779, %v1294, 0.0
  %v1826 = vadd.f32 %v1824, %v1825
  %v1827 = vsel %vm1779, %v1299, 0.0
  %v1828 = vadd.f32 %v1826, %v1827
  %v1829 = vsel %vm1779, %v1302, 0.0
  %v1830 = vadd.f32 %v1828, %v1829
  %v1831 = vsel %vm1779, %v1307, 0.0
  %v1832 = vadd.f32 %v1830, %v1831
  %v1833 = vsel %vm1779, %v1310, 0.0
  %v1834 = vadd.f32 %v1832, %v1833
  %v1835 = vsel %vm1779, %v1315, 0.0
  %v1836 = vadd.f32 %v1834, %v1835
  %v1837 = vsel %vm1779, %v1318, 0.0
  %v1838 = vadd.f32 %v1836, %v1837
  %v1839 = vsel %vm1779, %v1323, 0.0
  %v1840 = vadd.f32 %v1838, %v1839
  %v1841 = vsel %vm1779, %v1326, 0.0
  %v1842 = vadd.f32 %v1840, %v1841
  %v1843 = vsel %vm1779, %v1331, 0.0
  %v1844 = vadd.f32 %v1842, %v1843
  %v1845 = vsel %vm1779, %v1334, 0.0
  %v1846 = vadd.f32 %v1844, %v1845
  %v1847 = vsel %vm1779, %v1339, 0.0
  %v1848 = vadd.f32 %v1846, %v1847
  %v1849 = vsel %vm1779, %v1342, 0.0
  %v1850 = vadd.f32 %v1848, %v1849
  %v1851 = vsel %vm1779, %v1347, 0.0
  %v1852 = vadd.f32 %v1850, %v1851
  %v1853 = vsel %vm1779, %v1350, 0.0
  %v1854 = vadd.f32 %v1852, %v1853
  %v1855 = vsel %vm1779, %v1355, 0.0
  %v1856 = vadd.f32 %v1854, %v1855
  %v1857 = vsel %vm1779, %v1358, 0.0
  %v1858 = vadd.f32 %v1856, %v1857
  %v1859 = vsel %vm1779, %v1363, 0.0
  %v1860 = vadd.f32 %v1858, %v1859
  %v1861 = vsel %vm1779, %v1366, 0.0
  %v1862 = vadd.f32 %v1860, %v1861
  %v1863 = vsel %vm1779, %v1371, 0.0
  %v1864 = vadd.f32 %v1862, %v1863
  %v1865 = vsel %vm1779, %v1374, 0.0
  %v1866 = vadd.f32 %v1864, %v1865
  %v1867 = vsel %vm1779, %v1379, 0.0
  %v1868 = vadd.f32 %v1866, %v1867
  %v1869 = vsel %vm1779, %v1382, 0.0
  %v1870 = vadd.f32 %v1868, %v1869
  %v1871 = vsel %vm1779, %v1387, 0.0
  %v1872 = vadd.f32 %v1870, %v1871
  %v1873 = vsel %vm1779, %v1390, 0.0
  %v1874 = vadd.f32 %v1872, %v1873
  %v1875 = vsel %vm1779, %v1395, 0.0
  %v1876 = vadd.f32 %v1874, %v1875
  %v1877 = vsel %vm1779, %v1398, 0.0
  %v1878 = vadd.f32 %v1876, %v1877
  %v1879 = vsel %vm1779, %v1403, 0.0
  %v1880 = vadd.f32 %v1878, %v1879
  %v1881 = vsel %vm1779, %v1406, 0.0
  %v1882 = vadd.f32 %v1880, %v1881
  %v1883 = vsel %vm1779, %v1411, 0.0
  %v1884 = vadd.f32 %v1882, %v1883
  %v1885 = vsel %vm1779, %v1414, 0.0
  %v1886 = vadd.f32 %v1884, %v1885
  %v1887 = vsel %vm1779, %v1419, 0.0
  %v1888 = vadd.f32 %v1886, %v1887
  %v1889 = vsel %vm1779, %v1422, 0.0
  %v1890 = vadd.f32 %v1888, %v1889
  %v1891 = vsel %vm1779, %v1427, 0.0
  %v1892 = vadd.f32 %v1890, %v1891
  %v1893 = vsel %vm1779, %v1430, 0.0
  %v1894 = vadd.f32 %v1892, %v1893
  %v1895 = vsel %vm1779, %v1435, 0.0
  %v1896 = vadd.f32 %v1894, %v1895
  %v1897 = vsel %vm1779, %v1438, 0.0
  %v1898 = vadd.f32 %v1896, %v1897
  %v1899 = vsel %vm1779, %v1443, 0.0
  %v1900 = vadd.f32 %v1898, %v1899
  %v1901 = vsel %vm1779, %v1446, 0.0
  %v1902 = vadd.f32 %v1900, %v1901
  %v1903 = vsel %vm1779, %v1451, 0.0
  %v1904 = vadd.f32 %v1902, %v1903
  %v1905 = vsel %vm1779, %v1454, 0.0
  %v1906 = vadd.f32 %v1904, %v1905
  %v1907 = vrot.slane %v1906, 4
  %v1908 = vadd.f32 %v1906, %v1907
  %v1909 = vrot.slane %v1908, 2
  %v1910 = vadd.f32 %v1908, %v1909
  %v1911 = vrot.slane %v1910, 1
  %v1912 = vadd.f32 %v1910, %v1911
  %v1913 = vadd.f32 %v1778, %v1912
  %vm1914 = vcmask 253952
  %1915 = vst.msk [vmem:[%s3] sm:$0x1] %vm1914, %v1913
  %v1916 = vld [vmem:[%s4] sm:$0x1]
  %v1917 = vmul.f32 %v1203, %v1203
  %v1918 = vmul.f32 %v1206, %v1206
  %v1919 = vmul.f32 %v1211, %v1211
  %v1920 = vmul.f32 %v1214, %v1214
  %v1921 = vmul.f32 %v1219, %v1219
  %v1922 = vmul.f32 %v1222, %v1222
  %v1923 = vmul.f32 %v1227, %v1227
  %v1924 = vmul.f32 %v1230, %v1230
  %v1925 = vmul.f32 %v1235, %v1235
  %v1926 = vmul.f32 %v1238, %v1238
  %v1927 = vmul.f32 %v1243, %v1243
  %v1928 = vmul.f32 %v1246, %v1246
  %v1929 = vmul.f32 %v1251, %v1251
  %v1930 = vmul.f32 %v1254, %v1254
  %v1931 = vmul.f32 %v1259, %v1259
  %v1932 = vmul.f32 %v1262, %v1262
  %v1933 = vmul.f32 %v1267, %v1267
  %v1934 = vmul.f32 %v1270, %v1270
  %v1935 = vmul.f32 %v1275, %v1275
  %v1936 = vmul.f32 %v1278, %v1278
  %v1937 = vmul.f32 %v1283, %v1283
  %v1938 = vmul.f32 %v1286, %v1286
  %v1939 = vmul.f32 %v1291, %v1291
  %v1940 = vmul.f32 %v1294, %v1294
  %v1941 = vmul.f32 %v1299, %v1299
  %v1942 = vmul.f32 %v1302, %v1302
  %v1943 = vmul.f32 %v1307, %v1307
  %v1944 = vmul.f32 %v1310, %v1310
  %v1945 = vmul.f32 %v1315, %v1315
  %v1946 = vmul.f32 %v1318, %v1318
  %v1947 = vmul.f32 %v1323, %v1323
  %v1948 = vmul.f32 %v1326, %v1326
  %v1949 = vmul.f32 %v1331, %v1331
  %v1950 = vmul.f32 %v1334, %v1334
  %v1951 = vmul.f32 %v1339, %v1339
  %v1952 = vmul.f32 %v1342, %v1342
  %v1953 = vmul.f32 %v1347, %v1347
  %v1954 = vmul.f32 %v1350, %v1350
  %v1955 = vmul.f32 %v1355, %v1355
  %v1956 = vmul.f32 %v1358, %v1358
  %v1957 = vmul.f32 %v1363, %v1363
  %v1958 = vmul.f32 %v1366, %v1366
  %v1959 = vmul.f32 %v1371, %v1371
  %v1960 = vmul.f32 %v1374, %v1374
  %v1961 = vmul.f32 %v1379, %v1379
  %v1962 = vmul.f32 %v1382, %v1382
  %v1963 = vmul.f32 %v1387, %v1387
  %v1964 = vmul.f32 %v1390, %v1390
  %v1965 = vmul.f32 %v1395, %v1395
  %v1966 = vmul.f32 %v1398, %v1398
  %v1967 = vmul.f32 %v1403, %v1403
  %v1968 = vmul.f32 %v1406, %v1406
  %v1969 = vmul.f32 %v1411, %v1411
  %v1970 = vmul.f32 %v1414, %v1414
  %v1971 = vmul.f32 %v1419, %v1419
  %v1972 = vmul.f32 %v1422, %v1422
  %v1973 = vmul.f32 %v1427, %v1427
  %v1974 = vmul.f32 %v1430, %v1430
  %v1975 = vmul.f32 %v1435, %v1435
  %v1976 = vmul.f32 %v1438, %v1438
  %v1977 = vmul.f32 %v1443, %v1443
  %v1978 = vmul.f32 %v1446, %v1446
  %v1979 = vmul.f32 %v1451, %v1451
  %v1980 = vmul.f32 %v1454, %v1454
  %v1981 = vsel %vm1779, %v1917, 0.0
  %v1982 = vsel %vm1779, %v1918, 0.0
  %v1983 = vadd.f32 %v1981, %v1982
  %v1984 = vsel %vm1779, %v1919, 0.0
  %v1985 = vadd.f32 %v1983, %v1984
  %v1986 = vsel %vm1779, %v1920, 0.0
  %v1987 = vadd.f32 %v1985, %v1986
  %v1988 = vsel %vm1779, %v1921, 0.0
  %v1989 = vadd.f32 %v1987, %v1988
  %v1990 = vsel %vm1779, %v1922, 0.0
  %v1991 = vadd.f32 %v1989, %v1990
  %v1992 = vsel %vm1779, %v1923, 0.0
  %v1993 = vadd.f32 %v1991, %v1992
  %v1994 = vsel %vm1779, %v1924, 0.0
  %v1995 = vadd.f32 %v1993, %v1994
  %v1996 = vsel %vm1779, %v1925, 0.0
  %v1997 = vadd.f32 %v1995, %v1996
  %v1998 = vsel %vm1779, %v1926, 0.0
  %v1999 = vadd.f32 %v1997, %v1998
  %v2000 = vsel %vm1779, %v1927, 0.0
  %v2001 = vadd.f32 %v1999, %v2000
  %v2002 = vsel %vm1779, %v1928, 0.0
  %v2003 = vadd.f32 %v2001, %v2002
  %v2004 = vsel %vm1779, %v1929, 0.0
  %v2005 = vadd.f32 %v2003, %v2004
  %v2006 = vsel %vm1779, %v1930, 0.0
  %v2007 = vadd.f32 %v2005, %v2006
  %v2008 = vsel %vm1779, %v1931, 0.0
  %v2009 = vadd.f32 %v2007, %v2008
  %v2010 = vsel %vm1779, %v1932, 0.0
  %v2011 = vadd.f32 %v2009, %v2010
  %v2012 = vsel %vm1779, %v1933, 0.0
  %v2013 = vadd.f32 %v2011, %v2012
  %v2014 = vsel %vm1779, %v1934, 0.0
  %v2015 = vadd.f32 %v2013, %v2014
  %v2016 = vsel %vm1779, %v1935, 0.0
  %v2017 = vadd.f32 %v2015, %v2016
  %v2018 = vsel %vm1779, %v1936, 0.0
  %v2019 = vadd.f32 %v2017, %v2018
  %v2020 = vsel %vm1779, %v1937, 0.0
  %v2021 = vadd.f32 %v2019, %v2020
  %v2022 = vsel %vm1779, %v1938, 0.0
  %v2023 = vadd.f32 %v2021, %v2022
  %v2024 = vsel %vm1779, %v1939, 0.0
  %v2025 = vadd.f32 %v2023, %v2024
  %v2026 = vsel %vm1779, %v1940, 0.0
  %v2027 = vadd.f32 %v2025, %v2026
  %v2028 = vsel %vm1779, %v1941, 0.0
  %v2029 = vadd.f32 %v2027, %v2028
  %v2030 = vsel %vm1779, %v1942, 0.0
  %v2031 = vadd.f32 %v2029, %v2030
  %v2032 = vsel %vm1779, %v1943, 0.0
  %v2033 = vadd.f32 %v2031, %v2032
  %v2034 = vsel %vm1779, %v1944, 0.0
  %v2035 = vadd.f32 %v2033, %v2034
  %v2036 = vsel %vm1779, %v1945, 0.0
  %v2037 = vadd.f32 %v2035, %v2036
  %v2038 = vsel %vm1779, %v1946, 0.0
  %v2039 = vadd.f32 %v2037, %v2038
  %v2040 = vsel %vm1779, %v1947, 0.0
  %v2041 = vadd.f32 %v2039, %v2040
  %v2042 = vsel %vm1779, %v1948, 0.0
  %v2043 = vadd.f32 %v2041, %v2042
  %v2044 = vsel %vm1779, %v1949, 0.0
  %v2045 = vadd.f32 %v2043, %v2044
  %v2046 = vsel %vm1779, %v1950, 0.0
  %v2047 = vadd.f32 %v2045, %v2046
  %v2048 = vsel %vm1779, %v1951, 0.0
  %v2049 = vadd.f32 %v2047, %v2048
  %v2050 = vsel %vm1779, %v1952, 0.0
  %v2051 = vadd.f32 %v2049, %v2050
  %v2052 = vsel %vm1779, %v1953, 0.0
  %v2053 = vadd.f32 %v2051, %v2052
  %v2054 = vsel %vm1779, %v1954, 0.0
  %v2055 = vadd.f32 %v2053, %v2054
  %v2056 = vsel %vm1779, %v1955, 0.0
  %v2057 = vadd.f32 %v2055, %v2056
  %v2058 = vsel %vm1779, %v1956, 0.0
  %v2059 = vadd.f32 %v2057, %v2058
  %v2060 = vsel %vm1779, %v1957, 0.0
  %v2061 = vadd.f32 %v2059, %v2060
  %v2062 = vsel %vm1779, %v1958, 0.0
  %v2063 = vadd.f32 %v2061, %v2062
  %v2064 = vsel %vm1779, %v1959, 0.0
  %v2065 = vadd.f32 %v2063, %v2064
  %v2066 = vsel %vm1779, %v1960, 0.0
  %v2067 = vadd.f32 %v2065, %v2066
  %v2068 = vsel %vm1779, %v1961, 0.0
  %v2069 = vadd.f32 %v2067, %v2068
  %v2070 = vsel %vm1779, %v1962, 0.0
  %v2071 = vadd.f32 %v2069, %v2070
  %v2072 = vsel %vm1779, %v1963, 0.0
  %v2073 = vadd.f32 %v2071, %v2072
  %v2074 = vsel %vm1779, %v1964, 0.0
  %v2075 = vadd.f32 %v2073, %v2074
  %v2076 = vsel %vm1779, %v1965, 0.0
  %v2077 = vadd.f32 %v2075, %v2076
  %v2078 = vsel %vm1779, %v1966, 0.0
  %v2079 = vadd.f32 %v2077, %v2078
  %v2080 = vsel %vm1779, %v1967, 0.0
  %v2081 = vadd.f32 %v2079, %v2080
  %v2082 = vsel %vm1779, %v1968, 0.0
  %v2083 = vadd.f32 %v2081, %v2082
  %v2084 = vsel %vm1779, %v1969, 0.0
  %v2085 = vadd.f32 %v2083, %v2084
  %v2086 = vsel %vm1779, %v1970, 0.0
  %v2087 = vadd.f32 %v2085, %v2086
  %v2088 = vsel %vm1779, %v1971, 0.0
  %v2089 = vadd.f32 %v2087, %v2088
  %v2090 = vsel %vm1779, %v1972, 0.0
  %v2091 = vadd.f32 %v2089, %v2090
  %v2092 = vsel %vm1779, %v1973, 0.0
  %v2093 = vadd.f32 %v2091, %v2092
  %v2094 = vsel %vm1779, %v1974, 0.0
  %v2095 = vadd.f32 %v2093, %v2094
  %v2096 = vsel %vm1779, %v1975, 0.0
  %v2097 = vadd.f32 %v2095, %v2096
  %v2098 = vsel %vm1779, %v1976, 0.0
  %v2099 = vadd.f32 %v2097, %v2098
  %v2100 = vsel %vm1779, %v1977, 0.0
  %v2101 = vadd.f32 %v2099, %v2100
  %v2102 = vsel %vm1779, %v1978, 0.0
  %v2103 = vadd.f32 %v2101, %v2102
  %v2104 = vsel %vm1779, %v1979, 0.0
  %v2105 = vadd.f32 %v2103, %v2104
  %v2106 = vsel %vm1779, %v1980, 0.0
  %v2107 = vadd.f32 %v2105, %v2106
  %v2108 = vrot.slane %v2107, 4
  %v2109 = vadd.f32 %v2107, %v2108
  %v2110 = vrot.slane %v2109, 2
  %v2111 = vadd.f32 %v2109, %v2110
  %v2112 = vrot.slane %v2111, 1
  %v2113 = vadd.f32 %v2111, %v2112
  %v2114 = vadd.f32 %v1916, %v2113
  %2115 = vst.msk [vmem:[%s4] sm:$0x1] %vm1914, %v2114
  // Predicated region
  $region14: #{_lambda_.22} parent=0 // pred_check
    _
  $region15: #{_lambda_.22} parent=0 // pred_check_branch
    %2117 = sbr.rel (0) target = $region17
  $region16: #{_lambda_.22} parent=0 // pred_region
    _
  $region17: #{_lambda_.22} parent=0 // pred_fallthru
    _
  // Predicated region
  $region18: #{_lambda_.22} parent=0 // pred_check
    _
  $region19: #{_lambda_.22} parent=0 // pred_check_branch
    %2119 = sbr.rel (0) target = $region21
  $region20: #{_lambda_.22} parent=0 // pred_region
    _
  $region21: #{_lambda_.22} parent=0 // pred_fallthru
    _
  // Predicated region
  $region22: #{_lambda_.22} parent=0 // pred_check
    _
  $region23: #{_lambda_.22} parent=0 // pred_check_branch
    %2121 = sbr.rel (0) target = $region25
  $region24: #{_lambda_.22} parent=0 // pred_region
    _
  $region25: #{_lambda_.22} parent=0 // pred_fallthru
    _
  // Predicated region
  $region26: #{_lambda_.22} parent=0 // pred_check
    _
  $region27: #{_lambda_.22} parent=0 // pred_check_branch
    %2123 = sbr.rel (0) target = $region29
  $region28: #{_lambda_.22} parent=0 // pred_region
    _
  $region29: #{_lambda_.22} parent=0 // pred_fallthru
    _
  // Predicated region
  $region30: #{_lambda_.22} parent=0 // pred_check
    _
  $region31: #{_lambda_.22} parent=0 // pred_check_branch
    %2125 = sbr.rel (0) target = $region33
  $region32: #{_lambda_.22} parent=0 // pred_region
    _
  $region33: #{_lambda_.22} parent=0 // pred_fallthru
    _
  // Predicated region
  $region34: #{_lambda_.22} parent=0 // pred_check
    _
  $region35: #{_lambda_.22} parent=0 // pred_check_branch
    %2127 = sbr.rel (0) target = $region37
  $region36: #{_lambda_.22} parent=0 // pred_region
    _
  $region37: #{_lambda_.22} parent=0 // pred_fallthru
    _

// kernel: tile.113
$region0: #{tile.113}
  #allocation0 [shape = 's32[1]{0}', space=sflag, size = 0x4, scoped, tag = 'scoped memory for tile.113']
  %s0 = inlined_call_operand.vmem [shape: f32[64], index: 0, kind: input, shape index: {}]
  %s1 = inlined_call_operand.vmem [shape: f32[2,64], index: 1, kind: output, shape index: {}]
  // Predicated region
  $region2: #{tile.113} parent=0 // pred_check
    _
  $region3: #{tile.113} parent=0 // pred_check_branch
    %3 = sbr.rel (0) target = $region5
  $region4: #{tile.113} parent=0 // pred_region
    _
  $region5: #{tile.113} parent=0 // pred_fallthru
    _
  %v4 = vld [vmem:[%s0] ss:$0 sm:$0xff]
  %5 = vst [vmem:[%s1] sm:$0x3] %v4

// kernel: tile.114
$region0: #{tile.114}
  %s0 = inlined_call_operand.vmem [shape: f32[2,64], index: 0, kind: input, shape index: {}]
  %s1 = inlined_call_operand.vmem [shape: f32[1,128], index: 1, kind: output, shape index: {}]
  $region1: #{tile.114} parent=0
    #allocation0 [shape = 'u8[4096]{0}', space=vmem, size = 0x1000, scoped, tag = 'scoped mem for output reshape']
    #allocation1 [shape = 'u8[4096]{0}', space=vmem, size = 0x1000, scoped, tag = 'scoped mem for input reshape']
    %s3 = sshllo.u32 0, 2
    %v4 = vld [vmem:[%s0] sm:%s3]
    %5 = vst [vmem:[#allocation1] sm:%s3] %v4
    %v6 = vld [vmem:[#allocation1] sm:$0x1]
    %vm7 = vcmask 523264
    %8 = vst.msk [vmem:[#allocation0] sm:$0x1] %vm7, %v6
    %s9 = scalar_lea.vmem [#allocation1], 1
    %v10 = vld [vmem:[%s9] sm:$0x1]
    %11 = vrot.lane.b32.xlu0 %v10, 64
    %v12 = vpop.permute.xlu0 %11
    %vm13 = vcmask 1048064
    %14 = vst.msk [vmem:[#allocation0] sm:$0x1] %vm13, %v12
    %s16 = sshllo.u32 0, 1
    %v18 = vld [vmem:[#allocation0] sm:%s16]
    %s19 = sshllo.u32 0, 1
    %20 = vst [vmem:[%s1] sm:%s19] %v18

// kernel: _lambda_.25
$region0: #{_lambda_.25}
  #allocation0 [shape = 'u32[]', space=smem, size = 0x4, offset = 0x4, fixed_abs, tag = 'smem constant byte address 0x4 - core index']
  #allocation1 [shape = 'u32[144,128]{1,0:T(1,128)}', space=vmem, size = 0x12000, scoped, tag = 'internal scratch']
  %s0 = inlined_call_operand.vmem [shape: bf16[64,128], index: 0, kind: input, shape index: {}]
  %s1 = inlined_call_operand.vmem [shape: f32[1,128], index: 1, kind: input, shape index: {}]
  %s2 = inlined_call_operand.vmem [shape: f32[1,128], index: 2, kind: input, shape index: {}]
  %s3 = inlined_call_operand.vmem [shape: bf16[64,128], index: 3, kind: output, shape index: {}]
  %s4 = sld [smem:[#allocation0]]
  $region22: #{_lambda_.25} parent=0
    _
  %s6 = ssub.s32 1, %s4
  %s7 = scalar_select 0, %s6, %s4
  // Predicated region
  $region2: #{_lambda_.25} parent=0 // pred_check
    _
  $region3: #{_lambda_.25} parent=0 // pred_check_branch
    %9 = sbr.rel (0) target = $region5
  $region4: #{_lambda_.25} parent=0 // pred_region
    _
  $region5: #{_lambda_.25} parent=0 // pred_fallthru
    _
  // Predicated region
  $region6: #{_lambda_.25} parent=0 // pred_check
    _
  $region7: #{_lambda_.25} parent=0 // pred_check_branch
    %11 = sbr.rel (0) target = $region9
  $region8: #{_lambda_.25} parent=0 // pred_region
    _
  $region9: #{_lambda_.25} parent=0 // pred_fallthru
    _
  // Predicated region
  $region10: #{_lambda_.25} parent=0 // pred_check
    _
  $region11: #{_lambda_.25} parent=0 // pred_check_branch
    %13 = sbr.rel (0) target = $region13
  $region12: #{_lambda_.25} parent=0 // pred_region
    _
  $region13: #{_lambda_.25} parent=0 // pred_fallthru
    _
  %v14 = vld [vmem:[%s0] sm:$0xf]
  %v15 = vld [vmem:[%s0 + $0x4] sm:$0xf]
  %v16 = vld [vmem:[%s0 + $0x8] sm:$0xf]
  %v17 = vld [vmem:[%s0 + $0xc] sm:$0xf]
  %v18 = vld [vmem:[%s0 + $0x10] sm:$0xf]
  %v19 = vld [vmem:[%s0 + $0x14] sm:$0xf]
  %v20 = vld [vmem:[%s0 + $0x18] sm:$0xf]
  %v21 = vld [vmem:[%s0 + $0x1c] sm:$0xf]
  %v22 = vunpack.c.l.bf16 %v14
  %v23 = vunpack.c.l.bf16 %v15
  %v24 = vunpack.c.l.bf16 %v16
  %v25 = vunpack.c.l.bf16 %v17
  %v26 = vunpack.c.l.bf16 %v18
  %v27 = vunpack.c.l.bf16 %v19
  %v28 = vunpack.c.l.bf16 %v20
  %v29 = vunpack.c.l.bf16 %v21
  %v30 = vld [vmem:[%s1] sm:$0x1]
  %v32 = vlaneseq
  %v33 = vshrl.u32 %v32, 7
  %v34 = vsub.s32 0, %v33
  %v35 = vrot.slane %v30, %v34
  %v37 = vmul.f32 %v22, %v35
  %v38 = vmul.f32 %v23, %v35
  %v39 = vmul.f32 %v24, %v35
  %v40 = vmul.f32 %v25, %v35
  %v41 = vmul.f32 %v26, %v35
  %v42 = vmul.f32 %v27, %v35
  %v43 = vmul.f32 %v28, %v35
  %v44 = vmul.f32 %v29, %v35
  %v45 = vld [vmem:[%s2] sm:$0x1]
  %v47 = vlaneseq
  %v48 = vshrl.u32 %v47, 7
  %v49 = vsub.s32 0, %v48
  %v50 = vrot.slane %v45, %v49
  %v52 = vadd.f32 %v37, %v50
  %v53 = vadd.f32 %v38, %v50
  %v54 = vadd.f32 %v39, %v50
  %v55 = vadd.f32 %v40, %v50
  %v56 = vadd.f32 %v41, %v50
  %v57 = vadd.f32 %v42, %v50
  %v58 = vadd.f32 %v43, %v50
  %v59 = vadd.f32 %v44, %v50
  %v60 = vmax.f32 %v52, 0.0
  %v61 = vmax.f32 %v53, 0.0
  %v62 = vmax.f32 %v54, 0.0
  %v63 = vmax.f32 %v55, 0.0
  %v64 = vmax.f32 %v56, 0.0
  %v65 = vmax.f32 %v57, 0.0
  %v66 = vmax.f32 %v58, 0.0
  %v67 = vmax.f32 %v59, 0.0
  %v68 = vpack.c.bf16 %v61, %v60
  %v69 = vpack.c.bf16 %v63, %v62
  %v70 = vpack.c.bf16 %v65, %v64
  %v71 = vpack.c.bf16 %v67, %v66
  %v76 = vunpack.c.l.b16 %v68
  %v77 = vunpack.c.h.b16 %v68
  %v78 = vunpack.c.l.b16 %v69
  %v79 = vunpack.c.h.b16 %v69
  %v80 = vunpack.c.l.b16 %v70
  %v81 = vunpack.c.h.b16 %v70
  %v82 = vunpack.c.l.b16 %v71
  %v83 = vunpack.c.h.b16 %v71
  %v84 = vpack.c.b16 %v76, %v76
  %v85 = vpack.c.b16 %v77, %v77
  %v86 = vpack.c.b16 %v78, %v78
  %v87 = vpack.c.b16 %v79, %v79
  %v88 = vpack.c.b16 %v80, %v80
  %v89 = vpack.c.b16 %v81, %v81
  %v90 = vpack.c.b16 %v82, %v82
  %v91 = vpack.c.b16 %v83, %v83
  %100 = vst [vmem:[%s3] sm:$0xf] %v84
  %101 = vst [vmem:[%s3 + $0x4] sm:$0xf] %v85
  %102 = vst [vmem:[%s3 + $0x8] sm:$0xf] %v86
  %103 = vst [vmem:[%s3 + $0xc] sm:$0xf] %v87
  %104 = vst [vmem:[%s3 + $0x10] sm:$0xf] %v88
  %105 = vst [vmem:[%s3 + $0x14] sm:$0xf] %v89
  %106 = vst [vmem:[%s3 + $0x18] sm:$0xf] %v90
  %107 = vst [vmem:[%s3 + $0x1c] sm:$0xf] %v91
  // Predicated region
  $region14: #{_lambda_.25} parent=0 // pred_check
    _
  $region15: #{_lambda_.25} parent=0 // pred_check_branch
    %109 = sbr.rel (0) target = $region17
  $region16: #{_lambda_.25} parent=0 // pred_region
    _
  $region17: #{_lambda_.25} parent=0 // pred_fallthru
    _
  // Predicated region
  $region18: #{_lambda_.25} parent=0 // pred_check
    _
  $region19: #{_lambda_.25} parent=0 // pred_check_branch
    %111 = sbr.rel (0) target = $region21
  $region20: #{_lambda_.25} parent=0 // pred_region
    _
  $region21: #{_lambda_.25} parent=0 // pred_fallthru
    _

// kernel: _lambda_.24
$region0: #{_lambda_.24}
  #allocation0 [shape = 'u32[]', space=smem, size = 0x4, offset = 0x4, fixed_abs, tag = 'smem constant byte address 0x4 - core index']
  #allocation1 [shape = 'u32[144,128]{1,0:T(1,128)}', space=vmem, size = 0x12000, scoped, tag = 'internal scratch']
  %s0 = inlined_call_operand.vmem [shape: bf16[128,288], index: 0, kind: input, shape index: {}]
  %s1 = inlined_call_operand.vmem [shape: bf16[288,64], index: 1, kind: input, shape index: {}]
  %s2 = inlined_call_operand.vmem [shape: bf16[128,64], index: 2, kind: output, shape index: {0}]
  %s3 = inlined_call_operand.vmem [shape: f32[1,64], index: 3, kind: output, shape index: {1}]
  %s4 = inlined_call_operand.vmem [shape: f32[1,64], index: 4, kind: output, shape index: {2}]
  %5 = xla_tuple %s2, %s3, %s4
  %s6 = sld [smem:[#allocation0]]
  $region38: #{_lambda_.24} parent=0
    _
  %s8 = ssub.s32 1, %s6
  %s9 = scalar_select 0, %s8, %s6
  // Predicated region
  $region2: #{_lambda_.24} parent=0 // pred_check
    _
  $region3: #{_lambda_.24} parent=0 // pred_check_branch
    %11 = sbr.rel (0) target = $region5
  $region4: #{_lambda_.24} parent=0 // pred_region
    _
  $region5: #{_lambda_.24} parent=0 // pred_fallthru
    _
  // Predicated region
  $region6: #{_lambda_.24} parent=0 // pred_check
    _
  $region7: #{_lambda_.24} parent=0 // pred_check_branch
    %13 = sbr.rel (0) target = $region9
  $region8: #{_lambda_.24} parent=0 // pred_region
    _
  $region9: #{_lambda_.24} parent=0 // pred_fallthru
    _
  %p15 = scmp.eq.s32.totalorder 0, 0
  // Predicated region
  $region10: #{_lambda_.24} parent=0 // pred_check
    %p16 = pneg %p15
  $region11: #{_lambda_.24} parent=0 // pred_check_branch
    %18 = sbr.rel (%p16) target = $region13
  $region12: #{_lambda_.24} parent=0 // pred_region
    %vm19 = vcmask 516096
    %20 = vst.msk [vmem:[%s3] sm:$0x1] %vm19, 0.0
    %21 = vst.msk [vmem:[%s4] sm:$0x1] %vm19, 0.0
  $region13: #{_lambda_.24} parent=0 // pred_fallthru
    _
  %v22 = vld [vmem:[%s0] sm:$0xff]
  %v23 = vld [vmem:[%s0 + $0x8] sm:$0xf]
  %v24 = vld [vmem:[%s0 + $0xc] sm:$0xff]
  %v25 = vld [vmem:[%s0 + $0x14] sm:$0xf]
  %v26 = vld [vmem:[%s0 + $0x18] sm:$0xff]
  %v27 = vld [vmem:[%s0 + $0x20] sm:$0xf]
  %v28 = vld [vmem:[%s0 + $0x24] sm:$0xff]
  %v29 = vld [vmem:[%s0 + $0x2c] sm:$0xf]
  %v30 = vld [vmem:[%s0 + $0x30] sm:$0xff]
  %v31 = vld [vmem:[%s0 + $0x38] sm:$0xf]
  %v32 = vld [vmem:[%s0 + $0x3c] sm:$0xff]
  %v33 = vld [vmem:[%s0 + $0x44] sm:$0xf]
  %v34 = vld [vmem:[%s0 + $0x48] sm:$0xff]
  %v35 = vld [vmem:[%s0 + $0x50] sm:$0xf]
  %v36 = vld [vmem:[%s0 + $0x54] sm:$0xff]
  %v37 = vld [vmem:[%s0 + $0x5c] sm:$0xf]
  %v38 = vld [vmem:[%s0 + $0x60] sm:$0xff]
  %v39 = vld [vmem:[%s0 + $0x68] sm:$0xf]
  %v40 = vld [vmem:[%s0 + $0x6c] sm:$0xff]
  %v41 = vld [vmem:[%s0 + $0x74] sm:$0xf]
  %v42 = vld [vmem:[%s0 + $0x78] sm:$0xff]
  %v43 = vld [vmem:[%s0 + $0x80] sm:$0xf]
  %v44 = vld [vmem:[%s0 + $0x84] sm:$0xff]
  %v45 = vld [vmem:[%s0 + $0x8c] sm:$0xf]
  %v46 = vld [vmem:[%s0 + $0x90] sm:$0xff]
  %v47 = vld [vmem:[%s0 + $0x98] sm:$0xf]
  %v48 = vld [vmem:[%s0 + $0x9c] sm:$0xff]
  %v49 = vld [vmem:[%s0 + $0xa4] sm:$0xf]
  %v50 = vld [vmem:[%s0 + $0xa8] sm:$0xff]
  %v51 = vld [vmem:[%s0 + $0xb0] sm:$0xf]
  %v52 = vld [vmem:[%s0 + $0xb4] sm:$0xff]
  %v53 = vld [vmem:[%s0 + $0xbc] sm:$0xf]
  %v54 = vld [vmem:[%s1] sm:$0xf]
  %v55 = vld [vmem:[%s1 + $0x4] sm:$0xf]
  %v56 = vld [vmem:[%s1 + $0x8] sm:$0xf]
  %v57 = vld [vmem:[%s1 + $0xc] sm:$0xf]
  %v58 = vld [vmem:[%s1 + $0x10] sm:$0xf]
  %v59 = vld [vmem:[%s1 + $0x14] sm:$0xf]
  %v60 = vld [vmem:[%s1 + $0x18] sm:$0xf]
  %v61 = vld [vmem:[%s1 + $0x1c] sm:$0xf]
  %v62 = vld [vmem:[%s1 + $0x20] sm:$0xf]
  %v63 = vld [vmem:[%s1 + $0x24] sm:$0xf]
  %v64 = vld [vmem:[%s1 + $0x28] sm:$0xf]
  %v65 = vld [vmem:[%s1 + $0x2c] sm:$0xf]
  %v66 = vld [vmem:[%s1 + $0x30] sm:$0xf]
  %v67 = vld [vmem:[%s1 + $0x34] sm:$0xf]
  %v68 = vld [vmem:[%s1 + $0x38] sm:$0xf]
  %v69 = vld [vmem:[%s1 + $0x3c] sm:$0xf]
  %v70 = vld [vmem:[%s1 + $0x40] sm:$0xf]
  %v71 = vld [vmem:[%s1 + $0x44] sm:$0xf]
  %v72 = vld [vmem:[%s1 + $0x48] sm:$0xf]
  %v73 = vld [vmem:[%s1 + $0x4c] sm:$0xf]
  %v74 = vld [vmem:[%s1 + $0x50] sm:$0xf]
  %v75 = vld [vmem:[%s1 + $0x54] sm:$0xf]
  %v76 = vld [vmem:[%s1 + $0x58] sm:$0xf]
  %v77 = vld [vmem:[%s1 + $0x5c] sm:$0xf]
  %v78 = vld [vmem:[%s1 + $0x60] sm:$0xf]
  %v79 = vld [vmem:[%s1 + $0x64] sm:$0xf]
  %v80 = vld [vmem:[%s1 + $0x68] sm:$0xf]
  %v81 = vld [vmem:[%s1 + $0x6c] sm:$0xf]
  %v82 = vld [vmem:[%s1 + $0x70] sm:$0xf]
  %v83 = vld [vmem:[%s1 + $0x74] sm:$0xf]
  %v84 = vld [vmem:[%s1 + $0x78] sm:$0xf]
  %v85 = vld [vmem:[%s1 + $0x7c] sm:$0xf]
  %v86 = vld [vmem:[%s1 + $0x80] sm:$0xf]
  %v87 = vld [vmem:[%s1 + $0x84] sm:$0xf]
  %v88 = vld [vmem:[%s1 + $0x88] sm:$0xf]
  %v89 = vld [vmem:[%s1 + $0x8c] sm:$0xf]
  %v122 = vunpack.c.l.b16 %v22
  %v123 = vunpack.c.h.b16 %v22
  %v124 = vunpack.c.l.b16 %v23
  %v125 = vunpack.c.l.b16 %v24
  %v126 = vunpack.c.h.b16 %v24
  %v127 = vunpack.c.l.b16 %v25
  %v128 = vunpack.c.l.b16 %v26
  %v129 = vunpack.c.h.b16 %v26
  %v130 = vunpack.c.l.b16 %v27
  %v131 = vunpack.c.l.b16 %v28
  %v132 = vunpack.c.h.b16 %v28
  %v133 = vunpack.c.l.b16 %v29
  %v134 = vunpack.c.l.b16 %v30
  %v135 = vunpack.c.h.b16 %v30
  %v136 = vunpack.c.l.b16 %v31
  %v137 = vunpack.c.l.b16 %v32
  %v138 = vunpack.c.h.b16 %v32
  %v139 = vunpack.c.l.b16 %v33
  %v140 = vunpack.c.l.b16 %v34
  %v141 = vunpack.c.h.b16 %v34
  %v142 = vunpack.c.l.b16 %v35
  %v143 = vunpack.c.l.b16 %v36
  %v144 = vunpack.c.h.b16 %v36
  %v145 = vunpack.c.l.b16 %v37
  %v146 = vunpack.c.l.b16 %v38
  %v147 = vunpack.c.h.b16 %v38
  %v148 = vunpack.c.l.b16 %v39
  %v149 = vunpack.c.l.b16 %v40
  %v150 = vunpack.c.h.b16 %v40
  %v151 = vunpack.c.l.b16 %v41
  %v152 = vunpack.c.l.b16 %v42
  %v153 = vunpack.c.h.b16 %v42
  %v154 = vunpack.c.l.b16 %v43
  %v155 = vunpack.c.l.b16 %v44
  %v156 = vunpack.c.h.b16 %v44
  %v157 = vunpack.c.l.b16 %v45
  %v158 = vunpack.c.l.b16 %v46
  %v159 = vunpack.c.h.b16 %v46
  %v160 = vunpack.c.l.b16 %v47
  %v161 = vunpack.c.l.b16 %v48
  %v162 = vunpack.c.h.b16 %v48
  %v163 = vunpack.c.l.b16 %v49
  %v164 = vunpack.c.l.b16 %v50
  %v165 = vunpack.c.h.b16 %v50
  %v166 = vunpack.c.l.b16 %v51
  %v167 = vunpack.c.l.b16 %v52
  %v168 = vunpack.c.h.b16 %v52
  %v169 = vunpack.c.l.b16 %v53
  %v170 = vpack.c.b16 %v125, %v122
  %v171 = vpack.c.b16 %v126, %v123
  %v172 = vpack.c.b16 %v127, %v124
  %v173 = vpack.c.b16 %v131, %v128
  %v174 = vpack.c.b16 %v132, %v129
  %v175 = vpack.c.b16 %v133, %v130
  %v176 = vpack.c.b16 %v137, %v134
  %v177 = vpack.c.b16 %v138, %v135
  %v178 = vpack.c.b16 %v139, %v136
  %v179 = vpack.c.b16 %v143, %v140
  %v180 = vpack.c.b16 %v144, %v141
  %v181 = vpack.c.b16 %v145, %v142
  %v182 = vpack.c.b16 %v149, %v146
  %v183 = vpack.c.b16 %v150, %v147
  %v184 = vpack.c.b16 %v151, %v148
  %v185 = vpack.c.b16 %v155, %v152
  %v186 = vpack.c.b16 %v156, %v153
  %v187 = vpack.c.b16 %v157, %v154
  %v188 = vpack.c.b16 %v161, %v158
  %v189 = vpack.c.b16 %v162, %v159
  %v190 = vpack.c.b16 %v163, %v160
  %v191 = vpack.c.b16 %v167, %v164
  %v192 = vpack.c.b16 %v168, %v165
  %v193 = vpack.c.b16 %v169, %v166
  %v246 = vunpack.c.l.b16 %v54
  %v247 = vunpack.c.l.b16 %v55
  %v248 = vunpack.c.l.b16 %v56
  %v249 = vunpack.c.l.b16 %v57
  %v250 = vunpack.c.l.b16 %v58
  %v251 = vunpack.c.l.b16 %v59
  %v252 = vunpack.c.l.b16 %v60
  %v253 = vunpack.c.l.b16 %v61
  %v254 = vunpack.c.l.b16 %v62
  %v255 = vunpack.c.l.b16 %v63
  %v256 = vunpack.c.l.b16 %v64
  %v257 = vunpack.c.l.b16 %v65
  %v258 = vunpack.c.l.b16 %v66
  %v259 = vunpack.c.l.b16 %v67
  %v260 = vunpack.c.l.b16 %v68
  %v261 = vunpack.c.l.b16 %v69
  %v262 = vunpack.c.l.b16 %v70
  %v263 = vunpack.c.l.b16 %v71
  %v264 = vunpack.c.l.b16 %v72
  %v265 = vunpack.c.l.b16 %v73
  %v266 = vunpack.c.l.b16 %v74
  %v267 = vunpack.c.l.b16 %v75
  %v268 = vunpack.c.l.b16 %v76
  %v269 = vunpack.c.l.b16 %v77
  %v270 = vunpack.c.l.b16 %v78
  %v271 = vunpack.c.l.b16 %v79
  %v272 = vunpack.c.l.b16 %v80
  %v273 = vunpack.c.l.b16 %v81
  %v274 = vunpack.c.l.b16 %v82
  %v275 = vunpack.c.l.b16 %v83
  %v276 = vunpack.c.l.b16 %v84
  %v277 = vunpack.c.l.b16 %v85
  %v278 = vunpack.c.l.b16 %v86
  %v279 = vunpack.c.l.b16 %v87
  %v280 = vunpack.c.l.b16 %v88
  %v281 = vunpack.c.l.b16 %v89
  %v282 = vpack.c.b16 %v247, %v246
  %v283 = vpack.c.b16 %v249, %v248
  %v284 = vpack.c.b16 %v251, %v250
  %v285 = vpack.c.b16 %v253, %v252
  %v286 = vpack.c.b16 %v255, %v254
  %v287 = vpack.c.b16 %v257, %v256
  %v288 = vpack.c.b16 %v259, %v258
  %v289 = vpack.c.b16 %v261, %v260
  %v290 = vpack.c.b16 %v263, %v262
  %v291 = vpack.c.b16 %v265, %v264
  %v292 = vpack.c.b16 %v267, %v266
  %v293 = vpack.c.b16 %v269, %v268
  %v294 = vpack.c.b16 %v271, %v270
  %v295 = vpack.c.b16 %v273, %v272
  %v296 = vpack.c.b16 %v275, %v274
  %v297 = vpack.c.b16 %v277, %v276
  %v298 = vpack.c.b16 %v279, %v278
  %v299 = vpack.c.b16 %v281, %v280
  %vm318 = vcmask 261120
  %v320 = vsel %vm318, %v172, 0
  %v323 = vsel %vm318, %v175, 0
  %v326 = vsel %vm318, %v178, 0
  %v329 = vsel %vm318, %v181, 0
  %v332 = vsel %vm318, %v184, 0
  %v335 = vsel %vm318, %v187, 0
  %v338 = vsel %vm318, %v190, 0
  %v341 = vsel %vm318, %v193, 0
  %343 = vmatprep.subr.bf16.mxu0 0
  %344 = vmatpush1.bf16.msra.mxu0 %v282
  %345 = vmatprep.subr.bf16.mxu0 0
  %346 = vmatpush1.bf16.msra.mxu0 %v283
  %347 = vmatprep.subr.bf16.mxu0 0
  %348 = vmatpush1.bf16.msra.mxu0 %v284
  %349 = vmatprep.subr.bf16.mxu0 0
  %350 = vmatpush1.bf16.msra.mxu0 %v285
  %351 = vmatprep.subr.bf16.mxu0 0
  %352 = vmatpush1.bf16.msra.mxu0 %v286
  %353 = vmatprep.subr.bf16.mxu0 0
  %354 = vmatpush1.bf16.msra.mxu0 %v287
  %355 = vmatprep.subr.bf16.mxu0 0
  %356 = vmatpush1.bf16.msra.mxu0 %v288
  %357 = vmatprep.subr.bf16.mxu0 0
  %358 = vmatpush1.bf16.msra.mxu0 %v289
  %359 = vmatprep.subr.bf16.mxu0 0
  %360 = vmatpush1.bf16.msra.mxu0 %v290
  %361 = vmatprep.subr.bf16.mxu0 0
  %362 = vmatpush1.bf16.msra.mxu0 %v291
  %363 = vmatprep.subr.bf16.mxu0 0
  %364 = vmatpush1.bf16.msra.mxu0 %v292
  %365 = vmatprep.subr.bf16.mxu0 0
  %366 = vmatpush1.bf16.msra.mxu0 %v293
  %367 = vmatprep.subr.bf16.mxu0 0
  %368 = vmatpush1.bf16.msra.mxu0 %v294
  %369 = vmatprep.subr.bf16.mxu0 0
  %370 = vmatpush1.bf16.msra.mxu0 %v295
  %371 = vmatprep.subr.bf16.mxu0 0
  %372 = vmatpush1.bf16.msra.mxu0 %v296
  %373 = vmatprep.subr.bf16.mxu0 0
  %374 = vmatpush1.bf16.msra.mxu0 %v297
  %375 = vmatprep.mubr.bf16.mxu0 %v171
  %376 = vmatmul.mubr.bf16.gmra.mrb[0].mxu0 %v170
  %v377 = vpop.f32.mrb[0].mxu0
  %v378 = vadd.f32 0.0, %v377
  %v379 = vpop.f32.mrb[0].mxu0
  %v380 = vpop.f32.mrb[0].mxu0
  %v381 = vadd.f32 0.0, %v380
  %v382 = vpop.f32.mrb[0].mxu0
  %383 = vmatprep.mubr.bf16.mxu0 %v174
  %384 = vmatmul.mubr.bf16.gmra.mrb[0].mxu0 %v173
  %v385 = vpop.f32.mrb[0].mxu0
  %v386 = vadd.f32 0.0, %v385
  %v387 = vpop.f32.mrb[0].mxu0
  %v388 = vpop.f32.mrb[0].mxu0
  %v389 = vadd.f32 0.0, %v388
  %v390 = vpop.f32.mrb[0].mxu0
  %391 = vmatprep.mubr.bf16.mxu0 %v177
  %392 = vmatmul.mubr.bf16.gmra.mrb[0].mxu0 %v176
  %v393 = vpop.f32.mrb[0].mxu0
  %v394 = vadd.f32 0.0, %v393
  %v395 = vpop.f32.mrb[0].mxu0
  %v396 = vpop.f32.mrb[0].mxu0
  %v397 = vadd.f32 0.0, %v396
  %v398 = vpop.f32.mrb[0].mxu0
  %399 = vmatprep.mubr.bf16.mxu0 %v180
  %400 = vmatmul.mubr.bf16.gmra.mrb[0].mxu0 %v179
  %v401 = vpop.f32.mrb[0].mxu0
  %v402 = vadd.f32 0.0, %v401
  %v403 = vpop.f32.mrb[0].mxu0
  %v404 = vpop.f32.mrb[0].mxu0
  %v405 = vadd.f32 0.0, %v404
  %v406 = vpop.f32.mrb[0].mxu0
  %407 = vmatprep.mubr.bf16.mxu0 %v183
  %408 = vmatmul.mubr.bf16.gmra.mrb[0].mxu0 %v182
  %v409 = vpop.f32.mrb[0].mxu0
  %v410 = vadd.f32 0.0, %v409
  %v411 = vpop.f32.mrb[0].mxu0
  %v412 = vpop.f32.mrb[0].mxu0
  %v413 = vadd.f32 0.0, %v412
  %v414 = vpop.f32.mrb[0].mxu0
  %415 = vmatprep.mubr.bf16.mxu0 %v186
  %416 = vmatmul.mubr.bf16.gmra.mrb[0].mxu0 %v185
  %v417 = vpop.f32.mrb[0].mxu0
  %v418 = vadd.f32 0.0, %v417
  %v419 = vpop.f32.mrb[0].mxu0
  %v420 = vpop.f32.mrb[0].mxu0
  %v421 = vadd.f32 0.0, %v420
  %v422 = vpop.f32.mrb[0].mxu0
  %423 = vmatprep.mubr.bf16.mxu0 %v189
  %424 = vmatmul.mubr.bf16.gmra.mrb[0].mxu0 %v188
  %v425 = vpop.f32.mrb[0].mxu0
  %v426 = vadd.f32 0.0, %v425
  %v427 = vpop.f32.mrb[0].mxu0
  %v428 = vpop.f32.mrb[0].mxu0
  %v429 = vadd.f32 0.0, %v428
  %v430 = vpop.f32.mrb[0].mxu0
  %431 = vmatprep.mubr.bf16.mxu0 %v192
  %432 = vmatmul.mubr.bf16.gmra.mrb[0].mxu0 %v191
  %v433 = vpop.f32.mrb[0].mxu0
  %v434 = vadd.f32 0.0, %v433
  %v435 = vpop.f32.mrb[0].mxu0
  %v436 = vpop.f32.mrb[0].mxu0
  %v437 = vadd.f32 0.0, %v436
  %v438 = vpop.f32.mrb[0].mxu0
  %439 = vdwg.mxu0
  %440 = vmatprep.subr.bf16.mxu0 0
  %441 = vmatpush1.bf16.msra.mxu0 %v298
  %442 = vmatprep.subr.bf16.mxu0 0
  %443 = vmatpush1.bf16.msra.mxu0 %v299
  %444 = vmatprep.subr.bf16.mxu0 0
  %445 = vmatpush1.bf16.msra.mxu0 0
  %446 = vmatprep.subr.bf16.mxu0 0
  %447 = vmatpush1.bf16.msra.mxu0 0
  %448 = vmatprep.subr.bf16.mxu0 0
  %449 = vmatpush1.bf16.msra.mxu0 0
  %450 = vmatprep.subr.bf16.mxu0 0
  %451 = vmatpush1.bf16.msra.mxu0 0
  %452 = vmatprep.subr.bf16.mxu0 0
  %453 = vmatpush1.bf16.msra.mxu0 0
  %454 = vmatprep.subr.bf16.mxu0 0
  %455 = vmatpush1.bf16.msra.mxu0 0
  %456 = vmatprep.subr.bf16.mxu0 0
  %457 = vmatpush1.bf16.msra.mxu0 0
  %458 = vmatprep.subr.bf16.mxu0 0
  %459 = vmatpush1.bf16.msra.mxu0 0
  %460 = vmatprep.subr.bf16.mxu0 0
  %461 = vmatpush1.bf16.msra.mxu0 0
  %462 = vmatprep.subr.bf16.mxu0 0
  %463 = vmatpush1.bf16.msra.mxu0 0
  %464 = vmatprep.subr.bf16.mxu0 0
  %465 = vmatpush1.bf16.msra.mxu0 0
  %466 = vmatprep.subr.bf16.mxu0 0
  %467 = vmatpush1.bf16.msra.mxu0 0
  %468 = vmatprep.subr.bf16.mxu0 0
  %469 = vmatpush1.bf16.msra.mxu0 0
  %470 = vmatprep.subr.bf16.mxu0 0
  %471 = vmatpush1.bf16.msra.mxu0 0
  %472 = vmatprep.mubr.bf16.mxu0 0
  %473 = vmatmul.mubr.bf16.gmra.mrb[0].mxu0 %v320
  %v474 = vpop.f32.mrb[0].mxu0
  %v475 = vadd.f32 %v378, %v474
  %v476 = vpop.f32.mrb[0].mxu0
  %v477 = vpop.f32.mrb[0].mxu0
  %v478 = vadd.f32 %v381, %v477
  %v479 = vpop.f32.mrb[0].mxu0
  %480 = vmatprep.mubr.bf16.mxu0 0
  %481 = vmatmul.mubr.bf16.gmra.mrb[0].mxu0 %v323
  %v482 = vpop.f32.mrb[0].mxu0
  %v483 = vadd.f32 %v386, %v482
  %v484 = vpop.f32.mrb[0].mxu0
  %v485 = vpop.f32.mrb[0].mxu0
  %v486 = vadd.f32 %v389, %v485
  %v487 = vpop.f32.mrb[0].mxu0
  %488 = vmatprep.mubr.bf16.mxu0 0
  %489 = vmatmul.mubr.bf16.gmra.mrb[0].mxu0 %v326
  %v490 = vpop.f32.mrb[0].mxu0
  %v491 = vadd.f32 %v394, %v490
  %v492 = vpop.f32.mrb[0].mxu0
  %v493 = vpop.f32.mrb[0].mxu0
  %v494 = vadd.f32 %v397, %v493
  %v495 = vpop.f32.mrb[0].mxu0
  %496 = vmatprep.mubr.bf16.mxu0 0
  %497 = vmatmul.mubr.bf16.gmra.mrb[0].mxu0 %v329
  %v498 = vpop.f32.mrb[0].mxu0
  %v499 = vadd.f32 %v402, %v498
  %v500 = vpop.f32.mrb[0].mxu0
  %v501 = vpop.f32.mrb[0].mxu0
  %v502 = vadd.f32 %v405, %v501
  %v503 = vpop.f32.mrb[0].mxu0
  %504 = vmatprep.mubr.bf16.mxu0 0
  %505 = vmatmul.mubr.bf16.gmra.mrb[0].mxu0 %v332
  %v506 = vpop.f32.mrb[0].mxu0
  %v507 = vadd.f32 %v410, %v506
  %v508 = vpop.f32.mrb[0].mxu0
  %v509 = vpop.f32.mrb[0].mxu0
  %v510 = vadd.f32 %v413, %v509
  %v511 = vpop.f32.mrb[0].mxu0
  %512 = vmatprep.mubr.bf16.mxu0 0
  %513 = vmatmul.mubr.bf16.gmra.mrb[0].mxu0 %v335
  %v514 = vpop.f32.mrb[0].mxu0
  %v515 = vadd.f32 %v418, %v514
  %v516 = vpop.f32.mrb[0].mxu0
  %v517 = vpop.f32.mrb[0].mxu0
  %v518 = vadd.f32 %v421, %v517
  %v519 = vpop.f32.mrb[0].mxu0
  %520 = vmatprep.mubr.bf16.mxu0 0
  %521 = vmatmul.mubr.bf16.gmra.mrb[0].mxu0 %v338
  %v522 = vpop.f32.mrb[0].mxu0
  %v523 = vadd.f32 %v426, %v522
  %v524 = vpop.f32.mrb[0].mxu0
  %v525 = vpop.f32.mrb[0].mxu0
  %v526 = vadd.f32 %v429, %v525
  %v527 = vpop.f32.mrb[0].mxu0
  %528 = vmatprep.mubr.bf16.mxu0 0
  %529 = vmatmul.mubr.bf16.gmra.mrb[0].mxu0 %v341
  %v530 = vpop.f32.mrb[0].mxu0
  %v531 = vadd.f32 %v434, %v530
  %v532 = vpop.f32.mrb[0].mxu0
  %v533 = vpop.f32.mrb[0].mxu0
  %v534 = vadd.f32 %v437, %v533
  %v535 = vpop.f32.mrb[0].mxu0
  %536 = vdwg.mxu0
  %v537 = vpack.c.bf16 %v478, %v475
  %v538 = vpack.c.bf16 %v486, %v483
  %v539 = vpack.c.bf16 %v494, %v491
  %v540 = vpack.c.bf16 %v502, %v499
  %v541 = vpack.c.bf16 %v510, %v507
  %v542 = vpack.c.bf16 %v518, %v515
  %v543 = vpack.c.bf16 %v526, %v523
  %v544 = vpack.c.bf16 %v534, %v531
  %v553 = vunpack.c.l.b16 %v537
  %v554 = vunpack.c.h.b16 %v537
  %v555 = vunpack.c.l.b16 %v538
  %v556 = vunpack.c.h.b16 %v538
  %v557 = vunpack.c.l.b16 %v539
  %v558 = vunpack.c.h.b16 %v539
  %v559 = vunpack.c.l.b16 %v540
  %v560 = vunpack.c.h.b16 %v540
  %v561 = vunpack.c.l.b16 %v541
  %v562 = vunpack.c.h.b16 %v541
  %v563 = vunpack.c.l.b16 %v542
  %v564 = vunpack.c.h.b16 %v542
  %v565 = vunpack.c.l.b16 %v543
  %v566 = vunpack.c.h.b16 %v543
  %v567 = vunpack.c.l.b16 %v544
  %v568 = vunpack.c.h.b16 %v544
  %v569 = vpack.c.b16 %v553, %v553
  %v570 = vpack.c.b16 %v554, %v554
  %v571 = vpack.c.b16 %v555, %v555
  %v572 = vpack.c.b16 %v556, %v556
  %v573 = vpack.c.b16 %v557, %v557
  %v574 = vpack.c.b16 %v558, %v558
  %v575 = vpack.c.b16 %v559, %v559
  %v576 = vpack.c.b16 %v560, %v560
  %v577 = vpack.c.b16 %v561, %v561
  %v578 = vpack.c.b16 %v562, %v562
  %v579 = vpack.c.b16 %v563, %v563
  %v580 = vpack.c.b16 %v564, %v564
  %v581 = vpack.c.b16 %v565, %v565
  %v582 = vpack.c.b16 %v566, %v566
  %v583 = vpack.c.b16 %v567, %v567
  %v584 = vpack.c.b16 %v568, %v568
  %vm601 = vcmask 519168
  %602 = vst.msk [vmem:[%s2] sm:$0xf] %vm601, %v569
  %603 = vst.msk [vmem:[%s2 + $0x4] sm:$0xf] %vm601, %v570
  %604 = vst.msk [vmem:[%s2 + $0x8] sm:$0xf] %vm601, %v571
  %605 = vst.msk [vmem:[%s2 + $0xc] sm:$0xf] %vm601, %v572
  %606 = vst.msk [vmem:[%s2 + $0x10] sm:$0xf] %vm601, %v573
  %607 = vst.msk [vmem:[%s2 + $0x14] sm:$0xf] %vm601, %v574
  %608 = vst.msk [vmem:[%s2 + $0x18] sm:$0xf] %vm601, %v575
  %609 = vst.msk [vmem:[%s2 + $0x1c] sm:$0xf] %vm601, %v576
  %610 = vst.msk [vmem:[%s2 + $0x20] sm:$0xf] %vm601, %v577
  %611 = vst.msk [vmem:[%s2 + $0x24] sm:$0xf] %vm601, %v578
  %612 = vst.msk [vmem:[%s2 + $0x28] sm:$0xf] %vm601, %v579
  %613 = vst.msk [vmem:[%s2 + $0x2c] sm:$0xf] %vm601, %v580
  %614 = vst.msk [vmem:[%s2 + $0x30] sm:$0xf] %vm601, %v581
  %615 = vst.msk [vmem:[%s2 + $0x34] sm:$0xf] %vm601, %v582
  %616 = vst.msk [vmem:[%s2 + $0x38] sm:$0xf] %vm601, %v583
  %617 = vst.msk [vmem:[%s2 + $0x3c] sm:$0xf] %vm601, %v584
  %v618 = vld [vmem:[%s3] sm:$0x1]
  %vm619 = vcmask 523264
  %v620 = vsel %vm619, %v475, 0.0
  %v621 = vsel %vm619, %v478, 0.0
  %v622 = vadd.f32 %v620, %v621
  %v623 = vsel %vm619, %v483, 0.0
  %v624 = vadd.f32 %v622, %v623
  %v625 = vsel %vm619, %v486, 0.0
  %v626 = vadd.f32 %v624, %v625
  %v627 = vsel %vm619, %v491, 0.0
  %v628 = vadd.f32 %v626, %v627
  %v629 = vsel %vm619, %v494, 0.0
  %v630 = vadd.f32 %v628, %v629
  %v631 = vsel %vm619, %v499, 0.0
  %v632 = vadd.f32 %v630, %v631
  %v633 = vsel %vm619, %v502, 0.0
  %v634 = vadd.f32 %v632, %v633
  %v635 = vsel %vm619, %v507, 0.0
  %v636 = vadd.f32 %v634, %v635
  %v637 = vsel %vm619, %v510, 0.0
  %v638 = vadd.f32 %v636, %v637
  %v639 = vsel %vm619, %v515, 0.0
  %v640 = vadd.f32 %v638, %v639
  %v641 = vsel %vm619, %v518, 0.0
  %v642 = vadd.f32 %v640, %v641
  %v643 = vsel %vm619, %v523, 0.0
  %v644 = vadd.f32 %v642, %v643
  %v645 = vsel %vm619, %v526, 0.0
  %v646 = vadd.f32 %v644, %v645
  %v647 = vsel %vm619, %v531, 0.0
  %v648 = vadd.f32 %v646, %v647
  %v649 = vsel %vm619, %v534, 0.0
  %v650 = vadd.f32 %v648, %v649
  %v651 = vrot.slane %v650, 4
  %v652 = vadd.f32 %v650, %v651
  %v653 = vrot.slane %v652, 2
  %v654 = vadd.f32 %v652, %v653
  %v655 = vrot.slane %v654, 1
  %v656 = vadd.f32 %v654, %v655
  %v657 = vadd.f32 %v618, %v656
  %vm658 = vcmask 516096
  %659 = vst.msk [vmem:[%s3] sm:$0x1] %vm658, %v657
  %v660 = vld [vmem:[%s4] sm:$0x1]
  %v661 = vmul.f32 %v475, %v475
  %v662 = vmul.f32 %v478, %v478
  %v663 = vmul.f32 %v483, %v483
  %v664 = vmul.f32 %v486, %v486
  %v665 = vmul.f32 %v491, %v491
  %v666 = vmul.f32 %v494, %v494
  %v667 = vmul.f32 %v499, %v499
  %v668 = vmul.f32 %v502, %v502
  %v669 = vmul.f32 %v507, %v507
  %v670 = vmul.f32 %v510, %v510
  %v671 = vmul.f32 %v515, %v515
  %v672 = vmul.f32 %v518, %v518
  %v673 = vmul.f32 %v523, %v523
  %v674 = vmul.f32 %v526, %v526
  %v675 = vmul.f32 %v531, %v531
  %v676 = vmul.f32 %v534, %v534
  %v677 = vsel %vm619, %v661, 0.0
  %v678 = vsel %vm619, %v662, 0.0
  %v679 = vadd.f32 %v677, %v678
  %v680 = vsel %vm619, %v663, 0.0
  %v681 = vadd.f32 %v679, %v680
  %v682 = vsel %vm619, %v664, 0.0
  %v683 = vadd.f32 %v681, %v682
  %v684 = vsel %vm619, %v665, 0.0
  %v685 = vadd.f32 %v683, %v684
  %v686 = vsel %vm619, %v666, 0.0
  %v687 = vadd.f32 %v685, %v686
  %v688 = vsel %vm619, %v667, 0.0
  %v689 = vadd.f32 %v687, %v688
  %v690 = vsel %vm619, %v668, 0.0
  %v691 = vadd.f32 %v689, %v690
  %v692 = vsel %vm619, %v669, 0.0
  %v693 = vadd.f32 %v691, %v692
  %v694 = vsel %vm619, %v670, 0.0
  %v695 = vadd.f32 %v693, %v694
  %v696 = vsel %vm619, %v671, 0.0
  %v697 = vadd.f32 %v695, %v696
  %v698 = vsel %vm619, %v672, 0.0
  %v699 = vadd.f32 %v697, %v698
  %v700 = vsel %vm619, %v673, 0.0
  %v701 = vadd.f32 %v699, %v700
  %v702 = vsel %vm619, %v674, 0.0
  %v703 = vadd.f32 %v701, %v702
  %v704 = vsel %vm619, %v675, 0.0
  %v705 = vadd.f32 %v703, %v704
  %v706 = vsel %vm619, %v676, 0.0
  %v707 = vadd.f32 %v705, %v706
  %v708 = vrot.slane %v707, 4
  %v709 = vadd.f32 %v707, %v708
  %v710 = vrot.slane %v709, 2
  %v711 = vadd.f32 %v709, %v710
  %v712 = vrot.slane %v711, 1
  %v713 = vadd.f32 %v711, %v712
  %v714 = vadd.f32 %v660, %v713
  %715 = vst.msk [vmem:[%s4] sm:$0x1] %vm658, %v714
  // Predicated region
  $region14: #{_lambda_.24} parent=0 // pred_check
    _
  $region15: #{_lambda_.24} parent=0 // pred_check_branch
    %717 = sbr.rel (0) target = $region17
  $region16: #{_lambda_.24} parent=0 // pred_region
    _
  $region17: #{_lambda_.24} parent=0 // pred_fallthru
    _
  // Predicated region
  $region18: #{_lambda_.24} parent=0 // pred_check
    _
  $region19: #{_lambda_.24} parent=0 // pred_check_branch
    %719 = sbr.rel (0) target = $region21
  $region20: #{_lambda_.24} parent=0 // pred_region
    _
  $region21: #{_lambda_.24} parent=0 // pred_fallthru
    _
  // Predicated region
  $region22: #{_lambda_.24} parent=0 // pred_check
    _
  $region23: #{_lambda_.24} parent=0 // pred_check_branch
    %721 = sbr.rel (0) target = $region25
  $region24: #{_lambda_.24} parent=0 // pred_region
    _
  $region25: #{_lambda_.24} parent=0 // pred_fallthru
    _
  // Predicated region
  $region26: #{_lambda_.24} parent=0 // pred_check
    _
  $region27: #{_lambda_.24} parent=0 // pred_check_branch
    %723 = sbr.rel (0) target = $region29
  $region28: #{_lambda_.24} parent=0 // pred_region
    _
  $region29: #{_lambda_.24} parent=0 // pred_fallthru
    _
  // Predicated region
  $region30: #{_lambda_.24} parent=0 // pred_check
    _
  $region31: #{_lambda_.24} parent=0 // pred_check_branch
    %725 = sbr.rel (0) target = $region33
  $region32: #{_lambda_.24} parent=0 // pred_region
    _
  $region33: #{_lambda_.24} parent=0 // pred_fallthru
    _
  // Predicated region
  $region34: #{_lambda_.24} parent=0 // pred_check
    _
  $region35: #{_lambda_.24} parent=0 // pred_check_branch
    %727 = sbr.rel (0) target = $region37
  $region36: #{_lambda_.24} parent=0 // pred_region
    _
  $region37: #{_lambda_.24} parent=0 // pred_fallthru
    _

// kernel: _lambda_.27
$region0: #{_lambda_.27}
  #allocation0 [shape = 'u32[]', space=smem, size = 0x4, offset = 0x4, fixed_abs, tag = 'smem constant byte address 0x4 - core index']
  #allocation1 [shape = 'u32[144,128]{1,0:T(1,128)}', space=vmem, size = 0x12000, scoped, tag = 'internal scratch']
  %s0 = inlined_call_operand.vmem [shape: bf16[2,64,64], index: 0, kind: input, shape index: {}]
  %s1 = inlined_call_operand.vmem [shape: f32[1,1,64], index: 1, kind: input, shape index: {}]
  %s2 = inlined_call_operand.vmem [shape: f32[1,1,64], index: 2, kind: input, shape index: {}]
  %s3 = inlined_call_operand.hbm [shape: f32[2,64], index: 3, kind: output, shape index: {}]
  %s4 = sld [smem:[#allocation0]]
  $region22: #{_lambda_.27} parent=0
    _
  %s6 = ssub.s32 1, %s4
  %s7 = scalar_select 0, %s6, %s4
  $region1: #{_lambda_.27} parent=0
    #allocation2 [shape = 'u8[1024]{0}', space=vmem, size = 0x400, scoped, tag = 'output window, operand 0, single buffered']
    #allocation3 [shape = 's32[1]{0}', space=sflag, size = 0x4, scoped, tag = 'scoped memory for _lambda_.27']
    %8 = vsyncpa [#allocation3], 0
    // Predicated region
    $region2: #{_lambda_.27} parent=1 // pred_check
      _
    $region3: #{_lambda_.27} parent=1 // pred_check_branch
      %10 = sbr.rel (0) target = $region5
    $region4: #{_lambda_.27} parent=1 // pred_region
      _
    $region5: #{_lambda_.27} parent=1 // pred_fallthru
      _
    // Predicated region
    $region6: #{_lambda_.27} parent=1 // pred_check
      _
    $region7: #{_lambda_.27} parent=1 // pred_check_branch
      %12 = sbr.rel (0) target = $region9
    $region8: #{_lambda_.27} parent=1 // pred_region
      _
    $region9: #{_lambda_.27} parent=1 // pred_fallthru
      _
    // Predicated region
    $region10: #{_lambda_.27} parent=1 // pred_check
      _
    $region11: #{_lambda_.27} parent=1 // pred_check_branch
      %14 = sbr.rel (0) target = $region13
    $region12: #{_lambda_.27} parent=1 // pred_region
      _
    $region13: #{_lambda_.27} parent=1 // pred_fallthru
      _
    %v15 = vld [vmem:[%s0] sm:$0xf]
    %v16 = vld [vmem:[%s0 + $0x4] sm:$0xf]
    %v17 = vld [vmem:[%s0 + $0x8] sm:$0xf]
    %v18 = vld [vmem:[%s0 + $0xc] sm:$0xf]
    %v19 = vld [vmem:[%s0 + $0x10] sm:$0xf]
    %v20 = vld [vmem:[%s0 + $0x14] sm:$0xf]
    %v21 = vld [vmem:[%s0 + $0x18] sm:$0xf]
    %v22 = vld [vmem:[%s0 + $0x1c] sm:$0xf]
    %v23 = vld [vmem:[%s0 + $0x20] sm:$0xf]
    %v24 = vld [vmem:[%s0 + $0x24] sm:$0xf]
    %v25 = vld [vmem:[%s0 + $0x28] sm:$0xf]
    %v26 = vld [vmem:[%s0 + $0x2c] sm:$0xf]
    %v27 = vld [vmem:[%s0 + $0x30] sm:$0xf]
    %v28 = vld [vmem:[%s0 + $0x34] sm:$0xf]
    %v29 = vld [vmem:[%s0 + $0x38] sm:$0xf]
    %v30 = vld [vmem:[%s0 + $0x3c] sm:$0xf]
    %v31 = vunpack.c.l.bf16 %v15
    %v32 = vunpack.c.l.bf16 %v16
    %v33 = vunpack.c.l.bf16 %v17
    %v34 = vunpack.c.l.bf16 %v18
    %v35 = vunpack.c.l.bf16 %v19
    %v36 = vunpack.c.l.bf16 %v20
    %v37 = vunpack.c.l.bf16 %v21
    %v38 = vunpack.c.l.bf16 %v22
    %v39 = vunpack.c.l.bf16 %v23
    %v40 = vunpack.c.l.bf16 %v24
    %v41 = vunpack.c.l.bf16 %v25
    %v42 = vunpack.c.l.bf16 %v26
    %v43 = vunpack.c.l.bf16 %v27
    %v44 = vunpack.c.l.bf16 %v28
    %v45 = vunpack.c.l.bf16 %v29
    %v46 = vunpack.c.l.bf16 %v30
    %v47 = vld [vmem:[%s1] sm:$0x1]
    %v49 = vlaneseq
    %v50 = vshrl.u32 %v49, 7
    %v51 = vsub.s32 0, %v50
    %v52 = vrot.slane %v47, %v51
    %v54 = vmul.f32 %v31, %v52
    %v55 = vmul.f32 %v32, %v52
    %v56 = vmul.f32 %v33, %v52
    %v57 = vmul.f32 %v34, %v52
    %v58 = vmul.f32 %v35, %v52
    %v59 = vmul.f32 %v36, %v52
    %v60 = vmul.f32 %v37, %v52
    %v61 = vmul.f32 %v38, %v52
    %v62 = vmul.f32 %v39, %v52
    %v63 = vmul.f32 %v40, %v52
    %v64 = vmul.f32 %v41, %v52
    %v65 = vmul.f32 %v42, %v52
    %v66 = vmul.f32 %v43, %v52
    %v67 = vmul.f32 %v44, %v52
    %v68 = vmul.f32 %v45, %v52
    %v69 = vmul.f32 %v46, %v52
    %v70 = vld [vmem:[%s2] sm:$0x1]
    %v72 = vlaneseq
    %v73 = vshrl.u32 %v72, 7
    %v74 = vsub.s32 0, %v73
    %v75 = vrot.slane %v70, %v74
    %v77 = vadd.f32 %v54, %v75
    %v78 = vadd.f32 %v55, %v75
    %v79 = vadd.f32 %v56, %v75
    %v80 = vadd.f32 %v57, %v75
    %v81 = vadd.f32 %v58, %v75
    %v82 = vadd.f32 %v59, %v75
    %v83 = vadd.f32 %v60, %v75
    %v84 = vadd.f32 %v61, %v75
    %v85 = vadd.f32 %v62, %v75
    %v86 = vadd.f32 %v63, %v75
    %v87 = vadd.f32 %v64, %v75
    %v88 = vadd.f32 %v65, %v75
    %v89 = vadd.f32 %v66, %v75
    %v90 = vadd.f32 %v67, %v75
    %v91 = vadd.f32 %v68, %v75
    %v92 = vadd.f32 %v69, %v75
    %v93 = vmax.f32 %v77, 0.0
    %v94 = vmax.f32 %v78, 0.0
    %v95 = vmax.f32 %v79, 0.0
    %v96 = vmax.f32 %v80, 0.0
    %v97 = vmax.f32 %v81, 0.0
    %v98 = vmax.f32 %v82, 0.0
    %v99 = vmax.f32 %v83, 0.0
    %v100 = vmax.f32 %v84, 0.0
    %v101 = vmax.f32 %v85, 0.0
    %v102 = vmax.f32 %v86, 0.0
    %v103 = vmax.f32 %v87, 0.0
    %v104 = vmax.f32 %v88, 0.0
    %v105 = vmax.f32 %v89, 0.0
    %v106 = vmax.f32 %v90, 0.0
    %v107 = vmax.f32 %v91, 0.0
    %v108 = vmax.f32 %v92, 0.0
    %vm109 = vcmask 523264
    %v110 = vsel %vm109, %v93, 0.0
    %v111 = vsel %vm109, %v94, 0.0
    %v112 = vadd.f32 %v110, %v111
    %v113 = vsel %vm109, %v95, 0.0
    %v114 = vadd.f32 %v112, %v113
    %v115 = vsel %vm109, %v96, 0.0
    %v116 = vadd.f32 %v114, %v115
    %v117 = vsel %vm109, %v97, 0.0
    %v118 = vadd.f32 %v116, %v117
    %v119 = vsel %vm109, %v98, 0.0
    %v120 = vadd.f32 %v118, %v119
    %v121 = vsel %vm109, %v99, 0.0
    %v122 = vadd.f32 %v120, %v121
    %v123 = vsel %vm109, %v100, 0.0
    %v124 = vadd.f32 %v122, %v123
    %v125 = vrot.slane %v124, 4
    %v126 = vadd.f32 %v124, %v125
    %v127 = vrot.slane %v126, 2
    %v128 = vadd.f32 %v126, %v127
    %v129 = vrot.slane %v128, 1
    %v130 = vadd.f32 %v128, %v129
    %v131 = vsel %vm109, %v101, 0.0
    %v132 = vsel %vm109, %v102, 0.0
    %v133 = vadd.f32 %v131, %v132
    %v134 = vsel %vm109, %v103, 0.0
    %v135 = vadd.f32 %v133, %v134
    %v136 = vsel %vm109, %v104, 0.0
    %v137 = vadd.f32 %v135, %v136
    %v138 = vsel %vm109, %v105, 0.0
    %v139 = vadd.f32 %v137, %v138
    %v140 = vsel %vm109, %v106, 0.0
    %v141 = vadd.f32 %v139, %v140
    %v142 = vsel %vm109, %v107, 0.0
    %v143 = vadd.f32 %v141, %v142
    %v144 = vsel %vm109, %v108, 0.0
    %v145 = vadd.f32 %v143, %v144
    %v146 = vrot.slane %v145, 4
    %v147 = vadd.f32 %v145, %v146
    %v148 = vrot.slane %v147, 2
    %v149 = vadd.f32 %v147, %v148
    %v150 = vrot.slane %v149, 1
    %v151 = vadd.f32 %v149, %v150
    %v152 = vrcp.pop 64.0
    %v153 = vmul.f32 %v130, %v152
    %v154 = vmul.f32 %v151, %v152
    %vm157 = vcmask 1041409
    %v158 = vsel %vm157, %v154, %v153
    %vm160 = vcmask 517120
    %161 = vst.msk [vmem:[#allocation2] sm:$0x3] %vm160, %v158
    // Predicated region
    $region14: #{_lambda_.27} parent=1 // pred_check
      _
    $region15: #{_lambda_.27} parent=1 // pred_check_branch
      %163 = sbr.rel (0) target = $region17
    $region16: #{_lambda_.27} parent=1 // pred_region
      %s165 = ssub.s32 32, 32
      %166 = vsyncadd [#allocation3], %s165
      %s168 = sshll.u32 [#allocation2], 4
      %s169 = int_to_ptr.vmem [resolvable:$true] %s168
      %171 = dma.vmem_to_hbm [thread:$0]  %s169, 32, %s3, [#allocation3]
    $region17: #{_lambda_.27} parent=1 // pred_fallthru
      _
    // Predicated region
    $region18: #{_lambda_.27} parent=1 // pred_check
      _
    $region19: #{_lambda_.27} parent=1 // pred_check_branch
      %173 = sbr.rel (0) target = $region21
    $region20: #{_lambda_.27} parent=1 // pred_region
      %174 = dma.done [#allocation3], 32
    $region21: #{_lambda_.27} parent=1 // pred_fallthru
      _
    %175 = vsyncpa [#allocation3], 1

// kernel: _lambda_.26
$region0: #{_lambda_.26}
  #allocation0 [shape = 'u32[]', space=smem, size = 0x4, offset = 0x4, fixed_abs, tag = 'smem constant byte address 0x4 - core index']
  #allocation1 [shape = 'u32[144,128]{1,0:T(1,128)}', space=vmem, size = 0x12000, scoped, tag = 'internal scratch']
  %s0 = inlined_call_operand.vmem [shape: bf16[128,608], index: 0, kind: input, shape index: {}]
  %s1 = inlined_call_operand.vmem [shape: bf16[608,64], index: 1, kind: input, shape index: {}]
  %s2 = inlined_call_operand.vmem [shape: bf16[128,64], index: 2, kind: output, shape index: {0}]
  %s3 = inlined_call_operand.vmem [shape: f32[1,64], index: 3, kind: output, shape index: {1}]
  %s4 = inlined_call_operand.vmem [shape: f32[1,64], index: 4, kind: output, shape index: {2}]
  %5 = xla_tuple %s2, %s3, %s4
  %s6 = sld [smem:[#allocation0]]
  $region38: #{_lambda_.26} parent=0
    _
  %s8 = ssub.s32 1, %s6
  %s9 = scalar_select 0, %s8, %s6
  // Predicated region
  $region2: #{_lambda_.26} parent=0 // pred_check
    _
  $region3: #{_lambda_.26} parent=0 // pred_check_branch
    %11 = sbr.rel (0) target = $region5
  $region4: #{_lambda_.26} parent=0 // pred_region
    _
  $region5: #{_lambda_.26} parent=0 // pred_fallthru
    _
  // Predicated region
  $region6: #{_lambda_.26} parent=0 // pred_check
    _
  $region7: #{_lambda_.26} parent=0 // pred_check_branch
    %13 = sbr.rel (0) target = $region9
  $region8: #{_lambda_.26} parent=0 // pred_region
    _
  $region9: #{_lambda_.26} parent=0 // pred_fallthru
    _
  %p15 = scmp.eq.s32.totalorder 0, 0
  // Predicated region
  $region10: #{_lambda_.26} parent=0 // pred_check
    %p16 = pneg %p15
  $region11: #{_lambda_.26} parent=0 // pred_check_branch
    %18 = sbr.rel (%p16) target = $region13
  $region12: #{_lambda_.26} parent=0 // pred_region
    %vm19 = vcmask 516096
    %20 = vst.msk [vmem:[%s3] sm:$0x1] %vm19, 0.0
    %21 = vst.msk [vmem:[%s4] sm:$0x1] %vm19, 0.0
  $region13: #{_lambda_.26} parent=0 // pred_fallthru
    _
  %v22 = vld [vmem:[%s0] sm:$0xff]
  %v23 = vld [vmem:[%s0 + $0x8] sm:$0xff]
  %v24 = vld [vmem:[%s0 + $0x10] sm:$0xf]
  %v25 = vld [vmem:[%s0 + $0x14] sm:$0xff]
  %v26 = vld [vmem:[%s0 + $0x1c] sm:$0xff]
  %v27 = vld [vmem:[%s0 + $0x24] sm:$0xf]
  %v28 = vld [vmem:[%s0 + $0x28] sm:$0xff]
  %v29 = vld [vmem:[%s0 + $0x30] sm:$0xff]
  %v30 = vld [vmem:[%s0 + $0x38] sm:$0xf]
  %v31 = vld [vmem:[%s0 + $0x3c] sm:$0xff]
  %v32 = vld [vmem:[%s0 + $0x44] sm:$0xff]
  %v33 = vld [vmem:[%s0 + $0x4c] sm:$0xf]
  %v34 = vld [vmem:[%s0 + $0x50] sm:$0xff]
  %v35 = vld [vmem:[%s0 + $0x58] sm:$0xff]
  %v36 = vld [vmem:[%s0 + $0x60] sm:$0xf]
  %v37 = vld [vmem:[%s0 + $0x64] sm:$0xff]
  %v38 = vld [vmem:[%s0 + $0x6c] sm:$0xff]
  %v39 = vld [vmem:[%s0 + $0x74] sm:$0xf]
  %v40 = vld [vmem:[%s0 + $0x78] sm:$0xff]
  %v41 = vld [vmem:[%s0 + $0x80] sm:$0xff]
  %v42 = vld [vmem:[%s0 + $0x88] sm:$0xf]
  %v43 = vld [vmem:[%s0 + $0x8c] sm:$0xff]
  %v44 = vld [vmem:[%s0 + $0x94] sm:$0xff]
  %v45 = vld [vmem:[%s0 + $0x9c] sm:$0xf]
  %v46 = vld [vmem:[%s0 + $0xa0] sm:$0xff]
  %v47 = vld [vmem:[%s0 + $0xa8] sm:$0xff]
  %v48 = vld [vmem:[%s0 + $0xb0] sm:$0xf]
  %v49 = vld [vmem:[%s0 + $0xb4] sm:$0xff]
  %v50 = vld [vmem:[%s0 + $0xbc] sm:$0xff]
  %v51 = vld [vmem:[%s0 + $0xc4] sm:$0xf]
  %v52 = vld [vmem:[%s0 + $0xc8] sm:$0xff]
  %v53 = vld [vmem:[%s0 + $0xd0] sm:$0xff]
  %v54 = vld [vmem:[%s0 + $0xd8] sm:$0xf]
  %v55 = vld [vmem:[%s0 + $0xdc] sm:$0xff]
  %v56 = vld [vmem:[%s0 + $0xe4] sm:$0xff]
  %v57 = vld [vmem:[%s0 + $0xec] sm:$0xf]
  %v58 = vld [vmem:[%s0 + $0xf0] sm:$0xff]
  %v59 = vld [vmem:[%s0 + $0xf8] sm:$0xff]
  %v60 = vld [vmem:[%s0 + $0x100] sm:$0xf]
  %v61 = vld [vmem:[%s0 + $0x104] sm:$0xff]
  %v62 = vld [vmem:[%s0 + $0x10c] sm:$0xff]
  %v63 = vld [vmem:[%s0 + $0x114] sm:$0xf]
  %v64 = vld [vmem:[%s0 + $0x118] sm:$0xff]
  %v65 = vld [vmem:[%s0 + $0x120] sm:$0xff]
  %v66 = vld [vmem:[%s0 + $0x128] sm:$0xf]
  %v67 = vld [vmem:[%s0 + $0x12c] sm:$0xff]
  %v68 = vld [vmem:[%s0 + $0x134] sm:$0xff]
  %v69 = vld [vmem:[%s0 + $0x13c] sm:$0xf]
  %v70 = vld [vmem:[%s1] sm:$0xf]
  %v71 = vld [vmem:[%s1 + $0x4] sm:$0xf]
  %v72 = vld [vmem:[%s1 + $0x8] sm:$0xf]
  %v73 = vld [vmem:[%s1 + $0xc] sm:$0xf]
  %v74 = vld [vmem:[%s1 + $0x10] sm:$0xf]
  %v75 = vld [vmem:[%s1 + $0x14] sm:$0xf]
  %v76 = vld [vmem:[%s1 + $0x18] sm:$0xf]
  %v77 = vld [vmem:[%s1 + $0x1c] sm:$0xf]
  %v78 = vld [vmem:[%s1 + $0x20] sm:$0xf]
  %v79 = vld [vmem:[%s1 + $0x24] sm:$0xf]
  %v80 = vld [vmem:[%s1 + $0x28] sm:$0xf]
  %v81 = vld [vmem:[%s1 + $0x2c] sm:$0xf]
  %v82 = vld [vmem:[%s1 + $0x30] sm:$0xf]
  %v83 = vld [vmem:[%s1 + $0x34] sm:$0xf]
  %v84 = vld [vmem:[%s1 + $0x38] sm:$0xf]
  %v85 = vld [vmem:[%s1 + $0x3c] sm:$0xf]
  %v86 = vld [vmem:[%s1 + $0x40] sm:$0xf]
  %v87 = vld [vmem:[%s1 + $0x44] sm:$0xf]
  %v88 = vld [vmem:[%s1 + $0x48] sm:$0xf]
  %v89 = vld [vmem:[%s1 + $0x4c] sm:$0xf]
  %v90 = vld [vmem:[%s1 + $0x50] sm:$0xf]
  %v91 = vld [vmem:[%s1 + $0x54] sm:$0xf]
  %v92 = vld [vmem:[%s1 + $0x58] sm:$0xf]
  %v93 = vld [vmem:[%s1 + $0x5c] sm:$0xf]
  %v94 = vld [vmem:[%s1 + $0x60] sm:$0xf]
  %v95 = vld [vmem:[%s1 + $0x64] sm:$0xf]
  %v96 = vld [vmem:[%s1 + $0x68] sm:$0xf]
  %v97 = vld [vmem:[%s1 + $0x6c] sm:$0xf]
  %v98 = vld [vmem:[%s1 + $0x70] sm:$0xf]
  %v99 = vld [vmem:[%s1 + $0x74] sm:$0xf]
  %v100 = vld [vmem:[%s1 + $0x78] sm:$0xf]
  %v101 = vld [vmem:[%s1 + $0x7c] sm:$0xf]
  %v102 = vld [vmem:[%s1 + $0x80] sm:$0xf]
  %v103 = vld [vmem:[%s1 + $0x84] sm:$0xf]
  %v104 = vld [vmem:[%s1 + $0x88] sm:$0xf]
  %v105 = vld [vmem:[%s1 + $0x8c] sm:$0xf]
  %v106 = vld [vmem:[%s1 + $0x90] sm:$0xf]
  %v107 = vld [vmem:[%s1 + $0x94] sm:$0xf]
  %v108 = vld [vmem:[%s1 + $0x98] sm:$0xf]
  %v109 = vld [vmem:[%s1 + $0x9c] sm:$0xf]
  %v110 = vld [vmem:[%s1 + $0xa0] sm:$0xf]
  %v111 = vld [vmem:[%s1 + $0xa4] sm:$0xf]
  %v112 = vld [vmem:[%s1 + $0xa8] sm:$0xf]
  %v113 = vld [vmem:[%s1 + $0xac] sm:$0xf]
  %v114 = vld [vmem:[%s1 + $0xb0] sm:$0xf]
  %v115 = vld [vmem:[%s1 + $0xb4] sm:$0xf]
  %v116 = vld [vmem:[%s1 + $0xb8] sm:$0xf]
  %v117 = vld [vmem:[%s1 + $0xbc] sm:$0xf]
  %v118 = vld [vmem:[%s1 + $0xc0] sm:$0xf]
  %v119 = vld [vmem:[%s1 + $0xc4] sm:$0xf]
  %v120 = vld [vmem:[%s1 + $0xc8] sm:$0xf]
  %v121 = vld [vmem:[%s1 + $0xcc] sm:$0xf]
  %v122 = vld [vmem:[%s1 + $0xd0] sm:$0xf]
  %v123 = vld [vmem:[%s1 + $0xd4] sm:$0xf]
  %v124 = vld [vmem:[%s1 + $0xd8] sm:$0xf]
  %v125 = vld [vmem:[%s1 + $0xdc] sm:$0xf]
  %v126 = vld [vmem:[%s1 + $0xe0] sm:$0xf]
  %v127 = vld [vmem:[%s1 + $0xe4] sm:$0xf]
  %v128 = vld [vmem:[%s1 + $0xe8] sm:$0xf]
  %v129 = vld [vmem:[%s1 + $0xec] sm:$0xf]
  %v130 = vld [vmem:[%s1 + $0xf0] sm:$0xf]
  %v131 = vld [vmem:[%s1 + $0xf4] sm:$0xf]
  %v132 = vld [vmem:[%s1 + $0xf8] sm:$0xf]
  %v133 = vld [vmem:[%s1 + $0xfc] sm:$0xf]
  %v134 = vld [vmem:[%s1 + $0x100] sm:$0xf]
  %v135 = vld [vmem:[%s1 + $0x104] sm:$0xf]
  %v136 = vld [vmem:[%s1 + $0x108] sm:$0xf]
  %v137 = vld [vmem:[%s1 + $0x10c] sm:$0xf]
  %v138 = vld [vmem:[%s1 + $0x110] sm:$0xf]
  %v139 = vld [vmem:[%s1 + $0x114] sm:$0xf]
  %v140 = vld [vmem:[%s1 + $0x118] sm:$0xf]
  %v141 = vld [vmem:[%s1 + $0x11c] sm:$0xf]
  %v142 = vld [vmem:[%s1 + $0x120] sm:$0xf]
  %v143 = vld [vmem:[%s1 + $0x124] sm:$0xf]
  %v144 = vld [vmem:[%s1 + $0x128] sm:$0xf]
  %v145 = vld [vmem:[%s1 + $0x12c] sm:$0xf]
  %v194 = vunpack.c.l.b16 %v22
  %v195 = vunpack.c.h.b16 %v22
  %v196 = vunpack.c.l.b16 %v23
  %v197 = vunpack.c.h.b16 %v23
  %v198 = vunpack.c.l.b16 %v24
  %v199 = vunpack.c.l.b16 %v25
  %v200 = vunpack.c.h.b16 %v25
  %v201 = vunpack.c.l.b16 %v26
  %v202 = vunpack.c.h.b16 %v26
  %v203 = vunpack.c.l.b16 %v27
  %v204 = vunpack.c.l.b16 %v28
  %v205 = vunpack.c.h.b16 %v28
  %v206 = vunpack.c.l.b16 %v29
  %v207 = vunpack.c.h.b16 %v29
  %v208 = vunpack.c.l.b16 %v30
  %v209 = vunpack.c.l.b16 %v31
  %v210 = vunpack.c.h.b16 %v31
  %v211 = vunpack.c.l.b16 %v32
  %v212 = vunpack.c.h.b16 %v32
  %v213 = vunpack.c.l.b16 %v33
  %v214 = vunpack.c.l.b16 %v34
  %v215 = vunpack.c.h.b16 %v34
  %v216 = vunpack.c.l.b16 %v35
  %v217 = vunpack.c.h.b16 %v35
  %v218 = vunpack.c.l.b16 %v36
  %v219 = vunpack.c.l.b16 %v37
  %v220 = vunpack.c.h.b16 %v37
  %v221 = vunpack.c.l.b16 %v38
  %v222 = vunpack.c.h.b16 %v38
  %v223 = vunpack.c.l.b16 %v39
  %v224 = vunpack.c.l.b16 %v40
  %v225 = vunpack.c.h.b16 %v40
  %v226 = vunpack.c.l.b16 %v41
  %v227 = vunpack.c.h.b16 %v41
  %v228 = vunpack.c.l.b16 %v42
  %v229 = vunpack.c.l.b16 %v43
  %v230 = vunpack.c.h.b16 %v43
  %v231 = vunpack.c.l.b16 %v44
  %v232 = vunpack.c.h.b16 %v44
  %v233 = vunpack.c.l.b16 %v45
  %v234 = vunpack.c.l.b16 %v46
  %v235 = vunpack.c.h.b16 %v46
  %v236 = vunpack.c.l.b16 %v47
  %v237 = vunpack.c.h.b16 %v47
  %v238 = vunpack.c.l.b16 %v48
  %v239 = vunpack.c.l.b16 %v49
  %v240 = vunpack.c.h.b16 %v49
  %v241 = vunpack.c.l.b16 %v50
  %v242 = vunpack.c.h.b16 %v50
  %v243 = vunpack.c.l.b16 %v51
  %v244 = vunpack.c.l.b16 %v52
  %v245 = vunpack.c.h.b16 %v52
  %v246 = vunpack.c.l.b16 %v53
  %v247 = vunpack.c.h.b16 %v53
  %v248 = vunpack.c.l.b16 %v54
  %v249 = vunpack.c.l.b16 %v55
  %v250 = vunpack.c.h.b16 %v55
  %v251 = vunpack.c.l.b16 %v56
  %v252 = vunpack.c.h.b16 %v56
  %v253 = vunpack.c.l.b16 %v57
  %v254 = vunpack.c.l.b16 %v58
  %v255 = vunpack.c.h.b16 %v58
  %v256 = vunpack.c.l.b16 %v59
  %v257 = vunpack.c.h.b16 %v59
  %v258 = vunpack.c.l.b16 %v60
  %v259 = vunpack.c.l.b16 %v61
  %v260 = vunpack.c.h.b16 %v61
  %v261 = vunpack.c.l.b16 %v62
  %v262 = vunpack.c.h.b16 %v62
  %v263 = vunpack.c.l.b16 %v63
  %v264 = vunpack.c.l.b16 %v64
  %v265 = vunpack.c.h.b16 %v64
  %v266 = vunpack.c.l.b16 %v65
  %v267 = vunpack.c.h.b16 %v65
  %v268 = vunpack.c.l.b16 %v66
  %v269 = vunpack.c.l.b16 %v67
  %v270 = vunpack.c.h.b16 %v67
  %v271 = vunpack.c.l.b16 %v68
  %v272 = vunpack.c.h.b16 %v68
  %v273 = vunpack.c.l.b16 %v69
  %v274 = vpack.c.b16 %v199, %v194
  %v275 = vpack.c.b16 %v200, %v195
  %v276 = vpack.c.b16 %v201, %v196
  %v277 = vpack.c.b16 %v202, %v197
  %v278 = vpack.c.b16 %v203, %v198
  %v279 = vpack.c.b16 %v209, %v204
  %v280 = vpack.c.b16 %v210, %v205
  %v281 = vpack.c.b16 %v211, %v206
  %v282 = vpack.c.b16 %v212, %v207
  %v283 = vpack.c.b16 %v213, %v208
  %v284 = vpack.c.b16 %v219, %v214
  %v285 = vpack.c.b16 %v220, %v215
  %v286 = vpack.c.b16 %v221, %v216
  %v287 = vpack.c.b16 %v222, %v217
  %v288 = vpack.c.b16 %v223, %v218
  %v289 = vpack.c.b16 %v229, %v224
  %v290 = vpack.c.b16 %v230, %v225
  %v291 = vpack.c.b16 %v231, %v226
  %v292 = vpack.c.b16 %v232, %v227
  %v293 = vpack.c.b16 %v233, %v228
  %v294 = vpack.c.b16 %v239, %v234
  %v295 = vpack.c.b16 %v240, %v235
  %v296 = vpack.c.b16 %v241, %v236
  %v297 = vpack.c.b16 %v242, %v237
  %v298 = vpack.c.b16 %v243, %v238
  %v299 = vpack.c.b16 %v249, %v244
  %v300 = vpack.c.b16 %v250, %v245
  %v301 = vpack.c.b16 %v251, %v246
  %v302 = vpack.c.b16 %v252, %v247
  %v303 = vpack.c.b16 %v253, %v248
  %v304 = vpack.c.b16 %v259, %v254
  %v305 = vpack.c.b16 %v260, %v255
  %v306 = vpack.c.b16 %v261, %v256
  %v307 = vpack.c.b16 %v262, %v257
  %v308 = vpack.c.b16 %v263, %v258
  %v309 = vpack.c.b16 %v269, %v264
  %v310 = vpack.c.b16 %v270, %v265
  %v311 = vpack.c.b16 %v271, %v266
  %v312 = vpack.c.b16 %v272, %v267
  %v313 = vpack.c.b16 %v273, %v268
  %v422 = vunpack.c.l.b16 %v70
  %v423 = vunpack.c.l.b16 %v71
  %v424 = vunpack.c.l.b16 %v72
  %v425 = vunpack.c.l.b16 %v73
  %v426 = vunpack.c.l.b16 %v74
  %v427 = vunpack.c.l.b16 %v75
  %v428 = vunpack.c.l.b16 %v76
  %v429 = vunpack.c.l.b16 %v77
  %v430 = vunpack.c.l.b16 %v78
  %v431 = vunpack.c.l.b16 %v79
  %v432 = vunpack.c.l.b16 %v80
  %v433 = vunpack.c.l.b16 %v81
  %v434 = vunpack.c.l.b16 %v82
  %v435 = vunpack.c.l.b16 %v83
  %v436 = vunpack.c.l.b16 %v84
  %v437 = vunpack.c.l.b16 %v85
  %v438 = vunpack.c.l.b16 %v86
  %v439 = vunpack.c.l.b16 %v87
  %v440 = vunpack.c.l.b16 %v88
  %v441 = vunpack.c.l.b16 %v89
  %v442 = vunpack.c.l.b16 %v90
  %v443 = vunpack.c.l.b16 %v91
  %v444 = vunpack.c.l.b16 %v92
  %v445 = vunpack.c.l.b16 %v93
  %v446 = vunpack.c.l.b16 %v94
  %v447 = vunpack.c.l.b16 %v95
  %v448 = vunpack.c.l.b16 %v96
  %v449 = vunpack.c.l.b16 %v97
  %v450 = vunpack.c.l.b16 %v98
  %v451 = vunpack.c.l.b16 %v99
  %v452 = vunpack.c.l.b16 %v100
  %v453 = vunpack.c.l.b16 %v101
  %v454 = vunpack.c.l.b16 %v102
  %v455 = vunpack.c.l.b16 %v103
  %v456 = vunpack.c.l.b16 %v104
  %v457 = vunpack.c.l.b16 %v105
  %v458 = vunpack.c.l.b16 %v106
  %v459 = vunpack.c.l.b16 %v107
  %v460 = vunpack.c.l.b16 %v108
  %v461 = vunpack.c.l.b16 %v109
  %v462 = vunpack.c.l.b16 %v110
  %v463 = vunpack.c.l.b16 %v111
  %v464 = vunpack.c.l.b16 %v112
  %v465 = vunpack.c.l.b16 %v113
  %v466 = vunpack.c.l.b16 %v114
  %v467 = vunpack.c.l.b16 %v115
  %v468 = vunpack.c.l.b16 %v116
  %v469 = vunpack.c.l.b16 %v117
  %v470 = vunpack.c.l.b16 %v118
  %v471 = vunpack.c.l.b16 %v119
  %v472 = vunpack.c.l.b16 %v120
  %v473 = vunpack.c.l.b16 %v121
  %v474 = vunpack.c.l.b16 %v122
  %v475 = vunpack.c.l.b16 %v123
  %v476 = vunpack.c.l.b16 %v124
  %v477 = vunpack.c.l.b16 %v125
  %v478 = vunpack.c.l.b16 %v126
  %v479 = vunpack.c.l.b16 %v127
  %v480 = vunpack.c.l.b16 %v128
  %v481 = vunpack.c.l.b16 %v129
  %v482 = vunpack.c.l.b16 %v130
  %v483 = vunpack.c.l.b16 %v131
  %v484 = vunpack.c.l.b16 %v132
  %v485 = vunpack.c.l.b16 %v133
  %v486 = vunpack.c.l.b16 %v134
  %v487 = vunpack.c.l.b16 %v135
  %v488 = vunpack.c.l.b16 %v136
  %v489 = vunpack.c.l.b16 %v137
  %v490 = vunpack.c.l.b16 %v138
  %v491 = vunpack.c.l.b16 %v139
  %v492 = vunpack.c.l.b16 %v140
  %v493 = vunpack.c.l.b16 %v141
  %v494 = vunpack.c.l.b16 %v142
  %v495 = vunpack.c.l.b16 %v143
  %v496 = vunpack.c.l.b16 %v144
  %v497 = vunpack.c.l.b16 %v145
  %v498 = vpack.c.b16 %v423, %v422
  %v499 = vpack.c.b16 %v425, %v424
  %v500 = vpack.c.b16 %v427, %v426
  %v501 = vpack.c.b16 %v429, %v428
  %v502 = vpack.c.b16 %v431, %v430
  %v503 = vpack.c.b16 %v433, %v432
  %v504 = vpack.c.b16 %v435, %v434
  %v505 = vpack.c.b16 %v437, %v436
  %v506 = vpack.c.b16 %v439, %v438
  %v507 = vpack.c.b16 %v441, %v440
  %v508 = vpack.c.b16 %v443, %v442
  %v509 = vpack.c.b16 %v445, %v444
  %v510 = vpack.c.b16 %v447, %v446
  %v511 = vpack.c.b16 %v449, %v448
  %v512 = vpack.c.b16 %v451, %v450
  %v513 = vpack.c.b16 %v453, %v452
  %v514 = vpack.c.b16 %v455, %v454
  %v515 = vpack.c.b16 %v457, %v456
  %v516 = vpack.c.b16 %v459, %v458
  %v517 = vpack.c.b16 %v461, %v460
  %v518 = vpack.c.b16 %v463, %v462
  %v519 = vpack.c.b16 %v465, %v464
  %v520 = vpack.c.b16 %v467, %v466
  %v521 = vpack.c.b16 %v469, %v468
  %v522 = vpack.c.b16 %v471, %v470
  %v523 = vpack.c.b16 %v473, %v472
  %v524 = vpack.c.b16 %v475, %v474
  %v525 = vpack.c.b16 %v477, %v476
  %v526 = vpack.c.b16 %v479, %v478
  %v527 = vpack.c.b16 %v481, %v480
  %v528 = vpack.c.b16 %v483, %v482
  %v529 = vpack.c.b16 %v485, %v484
  %v530 = vpack.c.b16 %v487, %v486
  %v531 = vpack.c.b16 %v489, %v488
  %v532 = vpack.c.b16 %v491, %v490
  %v533 = vpack.c.b16 %v493, %v492
  %v534 = vpack.c.b16 %v495, %v494
  %v535 = vpack.c.b16 %v497, %v496
  %vm574 = vcmask 785408
  %v576 = vsel %vm574, %v278, 0
  %v579 = vsel %vm574, %v283, 0
  %v582 = vsel %vm574, %v288, 0
  %v585 = vsel %vm574, %v293, 0
  %v588 = vsel %vm574, %v298, 0
  %v591 = vsel %vm574, %v303, 0
  %v594 = vsel %vm574, %v308, 0
  %v597 = vsel %vm574, %v313, 0
  %599 = vmatprep.subr.bf16.mxu0 0
  %600 = vmatpush1.bf16.msra.mxu0 %v498
  %601 = vmatprep.subr.bf16.mxu0 0
  %602 = vmatpush1.bf16.msra.mxu0 %v499
  %603 = vmatprep.subr.bf16.mxu0 0
  %604 = vmatpush1.bf16.msra.mxu0 %v500
  %605 = vmatprep.subr.bf16.mxu0 0
  %606 = vmatpush1.bf16.msra.mxu0 %v501
  %607 = vmatprep.subr.bf16.mxu0 0
  %608 = vmatpush1.bf16.msra.mxu0 %v502
  %609 = vmatprep.subr.bf16.mxu0 0
  %610 = vmatpush1.bf16.msra.mxu0 %v503
  %611 = vmatprep.subr.bf16.mxu0 0
  %612 = vmatpush1.bf16.msra.mxu0 %v504
  %613 = vmatprep.subr.bf16.mxu0 0
  %614 = vmatpush1.bf16.msra.mxu0 %v505
  %615 = vmatprep.subr.bf16.mxu0 0
  %616 = vmatpush1.bf16.msra.mxu0 %v506
  %617 = vmatprep.subr.bf16.mxu0 0
  %618 = vmatpush1.bf16.msra.mxu0 %v507
  %619 = vmatprep.subr.bf16.mxu0 0
  %620 = vmatpush1.bf16.msra.mxu0 %v508
  %621 = vmatprep.subr.bf16.mxu0 0
  %622 = vmatpush1.bf16.msra.mxu0 %v509
  %623 = vmatprep.subr.bf16.mxu0 0
  %624 = vmatpush1.bf16.msra.mxu0 %v510
  %625 = vmatprep.subr.bf16.mxu0 0
  %626 = vmatpush1.bf16.msra.mxu0 %v511
  %627 = vmatprep.subr.bf16.mxu0 0
  %628 = vmatpush1.bf16.msra.mxu0 %v512
  %629 = vmatprep.subr.bf16.mxu0 0
  %630 = vmatpush1.bf16.msra.mxu0 %v513
  %631 = vmatprep.mubr.bf16.mxu0 %v275
  %632 = vmatmul.mubr.bf16.gmra.mrb[0].mxu0 %v274
  %v633 = vpop.f32.mrb[0].mxu0
  %v634 = vadd.f32 0.0, %v633
  %v635 = vpop.f32.mrb[0].mxu0
  %v636 = vpop.f32.mrb[0].mxu0
  %v637 = vadd.f32 0.0, %v636
  %v638 = vpop.f32.mrb[0].mxu0
  %639 = vmatprep.mubr.bf16.mxu0 %v280
  %640 = vmatmul.mubr.bf16.gmra.mrb[0].mxu0 %v279
  %v641 = vpop.f32.mrb[0].mxu0
  %v642 = vadd.f32 0.0, %v641
  %v643 = vpop.f32.mrb[0].mxu0
  %v644 = vpop.f32.mrb[0].mxu0
  %v645 = vadd.f32 0.0, %v644
  %v646 = vpop.f32.mrb[0].mxu0
  %647 = vmatprep.mubr.bf16.mxu0 %v285
  %648 = vmatmul.mubr.bf16.gmra.mrb[0].mxu0 %v284
  %v649 = vpop.f32.mrb[0].mxu0
  %v650 = vadd.f32 0.0, %v649
  %v651 = vpop.f32.mrb[0].mxu0
  %v652 = vpop.f32.mrb[0].mxu0
  %v653 = vadd.f32 0.0, %v652
  %v654 = vpop.f32.mrb[0].mxu0
  %655 = vmatprep.mubr.bf16.mxu0 %v290
  %656 = vmatmul.mubr.bf16.gmra.mrb[0].mxu0 %v289
  %v657 = vpop.f32.mrb[0].mxu0
  %v658 = vadd.f32 0.0, %v657
  %v659 = vpop.f32.mrb[0].mxu0
  %v660 = vpop.f32.mrb[0].mxu0
  %v661 = vadd.f32 0.0, %v660
  %v662 = vpop.f32.mrb[0].mxu0
  %663 = vmatprep.mubr.bf16.mxu0 %v295
  %664 = vmatmul.mubr.bf16.gmra.mrb[0].mxu0 %v294
  %v665 = vpop.f32.mrb[0].mxu0
  %v666 = vadd.f32 0.0, %v665
  %v667 = vpop.f32.mrb[0].mxu0
  %v668 = vpop.f32.mrb[0].mxu0
  %v669 = vadd.f32 0.0, %v668
  %v670 = vpop.f32.mrb[0].mxu0
  %671 = vmatprep.mubr.bf16.mxu0 %v300
  %672 = vmatmul.mubr.bf16.gmra.mrb[0].mxu0 %v299
  %v673 = vpop.f32.mrb[0].mxu0
  %v674 = vadd.f32 0.0, %v673
  %v675 = vpop.f32.mrb[0].mxu0
  %v676 = vpop.f32.mrb[0].mxu0
  %v677 = vadd.f32 0.0, %v676
  %v678 = vpop.f32.mrb[0].mxu0
  %679 = vmatprep.mubr.bf16.mxu0 %v305
  %680 = vmatmul.mubr.bf16.gmra.mrb[0].mxu0 %v304
  %v681 = vpop.f32.mrb[0].mxu0
  %v682 = vadd.f32 0.0, %v681
  %v683 = vpop.f32.mrb[0].mxu0
  %v684 = vpop.f32.mrb[0].mxu0
  %v685 = vadd.f32 0.0, %v684
  %v686 = vpop.f32.mrb[0].mxu0
  %687 = vmatprep.mubr.bf16.mxu0 %v310
  %688 = vmatmul.mubr.bf16.gmra.mrb[0].mxu0 %v309
  %v689 = vpop.f32.mrb[0].mxu0
  %v690 = vadd.f32 0.0, %v689
  %v691 = vpop.f32.mrb[0].mxu0
  %v692 = vpop.f32.mrb[0].mxu0
  %v693 = vadd.f32 0.0, %v692
  %v694 = vpop.f32.mrb[0].mxu0
  %695 = vdwg.mxu0
  %696 = vmatprep.subr.bf16.mxu0 0
  %697 = vmatpush1.bf16.msra.mxu0 %v514
  %698 = vmatprep.subr.bf16.mxu0 0
  %699 = vmatpush1.bf16.msra.mxu0 %v515
  %700 = vmatprep.subr.bf16.mxu0 0
  %701 = vmatpush1.bf16.msra.mxu0 %v516
  %702 = vmatprep.subr.bf16.mxu0 0
  %703 = vmatpush1.bf16.msra.mxu0 %v517
  %704 = vmatprep.subr.bf16.mxu0 0
  %705 = vmatpush1.bf16.msra.mxu0 %v518
  %706 = vmatprep.subr.bf16.mxu0 0
  %707 = vmatpush1.bf16.msra.mxu0 %v519
  %708 = vmatprep.subr.bf16.mxu0 0
  %709 = vmatpush1.bf16.msra.mxu0 %v520
  %710 = vmatprep.subr.bf16.mxu0 0
  %711 = vmatpush1.bf16.msra.mxu0 %v521
  %712 = vmatprep.subr.bf16.mxu0 0
  %713 = vmatpush1.bf16.msra.mxu0 %v522
  %714 = vmatprep.subr.bf16.mxu0 0
  %715 = vmatpush1.bf16.msra.mxu0 %v523
  %716 = vmatprep.subr.bf16.mxu0 0
  %717 = vmatpush1.bf16.msra.mxu0 %v524
  %718 = vmatprep.subr.bf16.mxu0 0
  %719 = vmatpush1.bf16.msra.mxu0 %v525
  %720 = vmatprep.subr.bf16.mxu0 0
  %721 = vmatpush1.bf16.msra.mxu0 %v526
  %722 = vmatprep.subr.bf16.mxu0 0
  %723 = vmatpush1.bf16.msra.mxu0 %v527
  %724 = vmatprep.subr.bf16.mxu0 0
  %725 = vmatpush1.bf16.msra.mxu0 %v528
  %726 = vmatprep.subr.bf16.mxu0 0
  %727 = vmatpush1.bf16.msra.mxu0 %v529
  %728 = vmatprep.mubr.bf16.mxu0 %v277
  %729 = vmatmul.mubr.bf16.gmra.mrb[0].mxu0 %v276
  %v730 = vpop.f32.mrb[0].mxu0
  %v731 = vadd.f32 %v634, %v730
  %v732 = vpop.f32.mrb[0].mxu0
  %v733 = vpop.f32.mrb[0].mxu0
  %v734 = vadd.f32 %v637, %v733
  %v735 = vpop.f32.mrb[0].mxu0
  %736 = vmatprep.mubr.bf16.mxu0 %v282
  %737 = vmatmul.mubr.bf16.gmra.mrb[0].mxu0 %v281
  %v738 = vpop.f32.mrb[0].mxu0
  %v739 = vadd.f32 %v642, %v738
  %v740 = vpop.f32.mrb[0].mxu0
  %v741 = vpop.f32.mrb[0].mxu0
  %v742 = vadd.f32 %v645, %v741
  %v743 = vpop.f32.mrb[0].mxu0
  %744 = vmatprep.mubr.bf16.mxu0 %v287
  %745 = vmatmul.mubr.bf16.gmra.mrb[0].mxu0 %v286
  %v746 = vpop.f32.mrb[0].mxu0
  %v747 = vadd.f32 %v650, %v746
  %v748 = vpop.f32.mrb[0].mxu0
  %v749 = vpop.f32.mrb[0].mxu0
  %v750 = vadd.f32 %v653, %v749
  %v751 = vpop.f32.mrb[0].mxu0
  %752 = vmatprep.mubr.bf16.mxu0 %v292
  %753 = vmatmul.mubr.bf16.gmra.mrb[0].mxu0 %v291
  %v754 = vpop.f32.mrb[0].mxu0
  %v755 = vadd.f32 %v658, %v754
  %v756 = vpop.f32.mrb[0].mxu0
  %v757 = vpop.f32.mrb[0].mxu0
  %v758 = vadd.f32 %v661, %v757
  %v759 = vpop.f32.mrb[0].mxu0
  %760 = vmatprep.mubr.bf16.mxu0 %v297
  %761 = vmatmul.mubr.bf16.gmra.mrb[0].mxu0 %v296
  %v762 = vpop.f32.mrb[0].mxu0
  %v763 = vadd.f32 %v666, %v762
  %v764 = vpop.f32.mrb[0].mxu0
  %v765 = vpop.f32.mrb[0].mxu0
  %v766 = vadd.f32 %v669, %v765
  %v767 = vpop.f32.mrb[0].mxu0
  %768 = vmatprep.mubr.bf16.mxu0 %v302
  %769 = vmatmul.mubr.bf16.gmra.mrb[0].mxu0 %v301
  %v770 = vpop.f32.mrb[0].mxu0
  %v771 = vadd.f32 %v674, %v770
  %v772 = vpop.f32.mrb[0].mxu0
  %v773 = vpop.f32.mrb[0].mxu0
  %v774 = vadd.f32 %v677, %v773
  %v775 = vpop.f32.mrb[0].mxu0
  %776 = vmatprep.mubr.bf16.mxu0 %v307
  %777 = vmatmul.mubr.bf16.gmra.mrb[0].mxu0 %v306
  %v778 = vpop.f32.mrb[0].mxu0
  %v779 = vadd.f32 %v682, %v778
  %v780 = vpop.f32.mrb[0].mxu0
  %v781 = vpop.f32.mrb[0].mxu0
  %v782 = vadd.f32 %v685, %v781
  %v783 = vpop.f32.mrb[0].mxu0
  %784 = vmatprep.mubr.bf16.mxu0 %v312
  %785 = vmatmul.mubr.bf16.gmra.mrb[0].mxu0 %v311
  %v786 = vpop.f32.mrb[0].mxu0
  %v787 = vadd.f32 %v690, %v786
  %v788 = vpop.f32.mrb[0].mxu0
  %v789 = vpop.f32.mrb[0].mxu0
  %v790 = vadd.f32 %v693, %v789
  %v791 = vpop.f32.mrb[0].mxu0
  %792 = vdwg.mxu0
  %793 = vmatprep.subr.bf16.mxu0 0
  %794 = vmatpush1.bf16.msra.mxu0 %v530
  %795 = vmatprep.subr.bf16.mxu0 0
  %796 = vmatpush1.bf16.msra.mxu0 %v531
  %797 = vmatprep.subr.bf16.mxu0 0
  %798 = vmatpush1.bf16.msra.mxu0 %v532
  %799 = vmatprep.subr.bf16.mxu0 0
  %800 = vmatpush1.bf16.msra.mxu0 %v533
  %801 = vmatprep.subr.bf16.mxu0 0
  %802 = vmatpush1.bf16.msra.mxu0 %v534
  %803 = vmatprep.subr.bf16.mxu0 0
  %804 = vmatpush1.bf16.msra.mxu0 %v535
  %805 = vmatprep.subr.bf16.mxu0 0
  %806 = vmatpush1.bf16.msra.mxu0 0
  %807 = vmatprep.subr.bf16.mxu0 0
  %808 = vmatpush1.bf16.msra.mxu0 0
  %809 = vmatprep.subr.bf16.mxu0 0
  %810 = vmatpush1.bf16.msra.mxu0 0
  %811 = vmatprep.subr.bf16.mxu0 0
  %812 = vmatpush1.bf16.msra.mxu0 0
  %813 = vmatprep.subr.bf16.mxu0 0
  %814 = vmatpush1.bf16.msra.mxu0 0
  %815 = vmatprep.subr.bf16.mxu0 0
  %816 = vmatpush1.bf16.msra.mxu0 0
  %817 = vmatprep.subr.bf16.mxu0 0
  %818 = vmatpush1.bf16.msra.mxu0 0
  %819 = vmatprep.subr.bf16.mxu0 0
  %820 = vmatpush1.bf16.msra.mxu0 0
  %821 = vmatprep.subr.bf16.mxu0 0
  %822 = vmatpush1.bf16.msra.mxu0 0
  %823 = vmatprep.subr.bf16.mxu0 0
  %824 = vmatpush1.bf16.msra.mxu0 0
  %825 = vmatprep.mubr.bf16.mxu0 0
  %826 = vmatmul.mubr.bf16.gmra.mrb[0].mxu0 %v576
  %v827 = vpop.f32.mrb[0].mxu0
  %v828 = vadd.f32 %v731, %v827
  %v829 = vpop.f32.mrb[0].mxu0
  %v830 = vpop.f32.mrb[0].mxu0
  %v831 = vadd.f32 %v734, %v830
  %v832 = vpop.f32.mrb[0].mxu0
  %833 = vmatprep.mubr.bf16.mxu0 0
  %834 = vmatmul.mubr.bf16.gmra.mrb[0].mxu0 %v579
  %v835 = vpop.f32.mrb[0].mxu0
  %v836 = vadd.f32 %v739, %v835
  %v837 = vpop.f32.mrb[0].mxu0
  %v838 = vpop.f32.mrb[0].mxu0
  %v839 = vadd.f32 %v742, %v838
  %v840 = vpop.f32.mrb[0].mxu0
  %841 = vmatprep.mubr.bf16.mxu0 0
  %842 = vmatmul.mubr.bf16.gmra.mrb[0].mxu0 %v582
  %v843 = vpop.f32.mrb[0].mxu0
  %v844 = vadd.f32 %v747, %v843
  %v845 = vpop.f32.mrb[0].mxu0
  %v846 = vpop.f32.mrb[0].mxu0
  %v847 = vadd.f32 %v750, %v846
  %v848 = vpop.f32.mrb[0].mxu0
  %849 = vmatprep.mubr.bf16.mxu0 0
  %850 = vmatmul.mubr.bf16.gmra.mrb[0].mxu0 %v585
  %v851 = vpop.f32.mrb[0].mxu0
  %v852 = vadd.f32 %v755, %v851
  %v853 = vpop.f32.mrb[0].mxu0
  %v854 = vpop.f32.mrb[0].mxu0
  %v855 = vadd.f32 %v758, %v854
  %v856 = vpop.f32.mrb[0].mxu0
  %857 = vmatprep.mubr.bf16.mxu0 0
  %858 = vmatmul.mubr.bf16.gmra.mrb[0].mxu0 %v588
  %v859 = vpop.f32.mrb[0].mxu0
  %v860 = vadd.f32 %v763, %v859
  %v861 = vpop.f32.mrb[0].mxu0
  %v862 = vpop.f32.mrb[0].mxu0
  %v863 = vadd.f32 %v766, %v862
  %v864 = vpop.f32.mrb[0].mxu0
  %865 = vmatprep.mubr.bf16.mxu0 0
  %866 = vmatmul.mubr.bf16.gmra.mrb[0].mxu0 %v591
  %v867 = vpop.f32.mrb[0].mxu0
  %v868 = vadd.f32 %v771, %v867
  %v869 = vpop.f32.mrb[0].mxu0
  %v870 = vpop.f32.mrb[0].mxu0
  %v871 = vadd.f32 %v774, %v870
  %v872 = vpop.f32.mrb[0].mxu0
  %873 = vmatprep.mubr.bf16.mxu0 0
  %874 = vmatmul.mubr.bf16.gmra.mrb[0].mxu0 %v594
  %v875 = vpop.f32.mrb[0].mxu0
  %v876 = vadd.f32 %v779, %v875
  %v877 = vpop.f32.mrb[0].mxu0
  %v878 = vpop.f32.mrb[0].mxu0
  %v879 = vadd.f32 %v782, %v878
  %v880 = vpop.f32.mrb[0].mxu0
  %881 = vmatprep.mubr.bf16.mxu0 0
  %882 = vmatmul.mubr.bf16.gmra.mrb[0].mxu0 %v597
  %v883 = vpop.f32.mrb[0].mxu0
  %v884 = vadd.f32 %v787, %v883
  %v885 = vpop.f32.mrb[0].mxu0
  %v886 = vpop.f32.mrb[0].mxu0
  %v887 = vadd.f32 %v790, %v886
  %v888 = vpop.f32.mrb[0].mxu0
  %889 = vdwg.mxu0
  %v890 = vpack.c.bf16 %v831, %v828
  %v891 = vpack.c.bf16 %v839, %v836
  %v892 = vpack.c.bf16 %v847, %v844
  %v893 = vpack.c.bf16 %v855, %v852
  %v894 = vpack.c.bf16 %v863, %v860
  %v895 = vpack.c.bf16 %v871, %v868
  %v896 = vpack.c.bf16 %v879, %v876
  %v897 = vpack.c.bf16 %v887, %v884
  %v906 = vunpack.c.l.b16 %v890
  %v907 = vunpack.c.h.b16 %v890
  %v908 = vunpack.c.l.b16 %v891
  %v909 = vunpack.c.h.b16 %v891
  %v910 = vunpack.c.l.b16 %v892
  %v911 = vunpack.c.h.b16 %v892
  %v912 = vunpack.c.l.b16 %v893
  %v913 = vunpack.c.h.b16 %v893
  %v914 = vunpack.c.l.b16 %v894
  %v915 = vunpack.c.h.b16 %v894
  %v916 = vunpack.c.l.b16 %v895
  %v917 = vunpack.c.h.b16 %v895
  %v918 = vunpack.c.l.b16 %v896
  %v919 = vunpack.c.h.b16 %v896
  %v920 = vunpack.c.l.b16 %v897
  %v921 = vunpack.c.h.b16 %v897
  %v922 = vpack.c.b16 %v906, %v906
  %v923 = vpack.c.b16 %v907, %v907
  %v924 = vpack.c.b16 %v908, %v908
  %v925 = vpack.c.b16 %v909, %v909
  %v926 = vpack.c.b16 %v910, %v910
  %v927 = vpack.c.b16 %v911, %v911
  %v928 = vpack.c.b16 %v912, %v912
  %v929 = vpack.c.b16 %v913, %v913
  %v930 = vpack.c.b16 %v914, %v914
  %v931 = vpack.c.b16 %v915, %v915
  %v932 = vpack.c.b16 %v916, %v916
  %v933 = vpack.c.b16 %v917, %v917
  %v934 = vpack.c.b16 %v918, %v918
  %v935 = vpack.c.b16 %v919, %v919
  %v936 = vpack.c.b16 %v920, %v920
  %v937 = vpack.c.b16 %v921, %v921
  %vm954 = vcmask 519168
  %955 = vst.msk [vmem:[%s2] sm:$0xf] %vm954, %v922
  %956 = vst.msk [vmem:[%s2 + $0x4] sm:$0xf] %vm954, %v923
  %957 = vst.msk [vmem:[%s2 + $0x8] sm:$0xf] %vm954, %v924
  %958 = vst.msk [vmem:[%s2 + $0xc] sm:$0xf] %vm954, %v925
  %959 = vst.msk [vmem:[%s2 + $0x10] sm:$0xf] %vm954, %v926
  %960 = vst.msk [vmem:[%s2 + $0x14] sm:$0xf] %vm954, %v927
  %961 = vst.msk [vmem:[%s2 + $0x18] sm:$0xf] %vm954, %v928
  %962 = vst.msk [vmem:[%s2 + $0x1c] sm:$0xf] %vm954, %v929
  %963 = vst.msk [vmem:[%s2 + $0x20] sm:$0xf] %vm954, %v930
  %964 = vst.msk [vmem:[%s2 + $0x24] sm:$0xf] %vm954, %v931
  %965 = vst.msk [vmem:[%s2 + $0x28] sm:$0xf] %vm954, %v932
  %966 = vst.msk [vmem:[%s2 + $0x2c] sm:$0xf] %vm954, %v933
  %967 = vst.msk [vmem:[%s2 + $0x30] sm:$0xf] %vm954, %v934
  %968 = vst.msk [vmem:[%s2 + $0x34] sm:$0xf] %vm954, %v935
  %969 = vst.msk [vmem:[%s2 + $0x38] sm:$0xf] %vm954, %v936
  %970 = vst.msk [vmem:[%s2 + $0x3c] sm:$0xf] %vm954, %v937
  %v971 = vld [vmem:[%s3] sm:$0x1]
  %vm972 = vcmask 523264
  %v973 = vsel %vm972, %v828, 0.0
  %v974 = vsel %vm972, %v831, 0.0
  %v975 = vadd.f32 %v973, %v974
  %v976 = vsel %vm972, %v836, 0.0
  %v977 = vadd.f32 %v975, %v976
  %v978 = vsel %vm972, %v839, 0.0
  %v979 = vadd.f32 %v977, %v978
  %v980 = vsel %vm972, %v844, 0.0
  %v981 = vadd.f32 %v979, %v980
  %v982 = vsel %vm972, %v847, 0.0
  %v983 = vadd.f32 %v981, %v982
  %v984 = vsel %vm972, %v852, 0.0
  %v985 = vadd.f32 %v983, %v984
  %v986 = vsel %vm972, %v855, 0.0
  %v987 = vadd.f32 %v985, %v986
  %v988 = vsel %vm972, %v860, 0.0
  %v989 = vadd.f32 %v987, %v988
  %v990 = vsel %vm972, %v863, 0.0
  %v991 = vadd.f32 %v989, %v990
  %v992 = vsel %vm972, %v868, 0.0
  %v993 = vadd.f32 %v991, %v992
  %v994 = vsel %vm972, %v871, 0.0
  %v995 = vadd.f32 %v993, %v994
  %v996 = vsel %vm972, %v876, 0.0
  %v997 = vadd.f32 %v995, %v996
  %v998 = vsel %vm972, %v879, 0.0
  %v999 = vadd.f32 %v997, %v998
  %v1000 = vsel %vm972, %v884, 0.0
  %v1001 = vadd.f32 %v999, %v1000
  %v1002 = vsel %vm972, %v887, 0.0
  %v1003 = vadd.f32 %v1001, %v1002
  %v1004 = vrot.slane %v1003, 4
  %v1005 = vadd.f32 %v1003, %v1004
  %v1006 = vrot.slane %v1005, 2
  %v1007 = vadd.f32 %v1005, %v1006
  %v1008 = vrot.slane %v1007, 1
  %v1009 = vadd.f32 %v1007, %v1008
  %v1010 = vadd.f32 %v971, %v1009
  %vm1011 = vcmask 516096
  %1012 = vst.msk [vmem:[%s3] sm:$0x1] %vm1011, %v1010
  %v1013 = vld [vmem:[%s4] sm:$0x1]
  %v1014 = vmul.f32 %v828, %v828
  %v1015 = vmul.f32 %v831, %v831
  %v1016 = vmul.f32 %v836, %v836
  %v1017 = vmul.f32 %v839, %v839
  %v1018 = vmul.f32 %v844, %v844
  %v1019 = vmul.f32 %v847, %v847
  %v1020 = vmul.f32 %v852, %v852
  %v1021 = vmul.f32 %v855, %v855
  %v1022 = vmul.f32 %v860, %v860
  %v1023 = vmul.f32 %v863, %v863
  %v1024 = vmul.f32 %v868, %v868
  %v1025 = vmul.f32 %v871, %v871
  %v1026 = vmul.f32 %v876, %v876
  %v1027 = vmul.f32 %v879, %v879
  %v1028 = vmul.f32 %v884, %v884
  %v1029 = vmul.f32 %v887, %v887
  %v1030 = vsel %vm972, %v1014, 0.0
  %v1031 = vsel %vm972, %v1015, 0.0
  %v1032 = vadd.f32 %v1030, %v1031
  %v1033 = vsel %vm972, %v1016, 0.0
  %v1034 = vadd.f32 %v1032, %v1033
  %v1035 = vsel %vm972, %v1017, 0.0
  %v1036 = vadd.f32 %v1034, %v1035
  %v1037 = vsel %vm972, %v1018, 0.0
  %v1038 = vadd.f32 %v1036, %v1037
  %v1039 = vsel %vm972, %v1019, 0.0
  %v1040 = vadd.f32 %v1038, %v1039
  %v1041 = vsel %vm972, %v1020, 0.0
  %v1042 = vadd.f32 %v1040, %v1041
  %v1043 = vsel %vm972, %v1021, 0.0
  %v1044 = vadd.f32 %v1042, %v1043
  %v1045 = vsel %vm972, %v1022, 0.0
  %v1046 = vadd.f32 %v1044, %v1045
  %v1047 = vsel %vm972, %v1023, 0.0
  %v1048 = vadd.f32 %v1046, %v1047
  %v1049 = vsel %vm972, %v1024, 0.0
  %v1050 = vadd.f32 %v1048, %v1049
  %v1051 = vsel %vm972, %v1025, 0.0
  %v1052 = vadd.f32 %v1050, %v1051
  %v1053 = vsel %vm972, %v1026, 0.0
  %v1054 = vadd.f32 %v1052, %v1053
  %v1055 = vsel %vm972, %v1027, 0.0
  %v1056 = vadd.f32 %v1054, %v1055
  %v1057 = vsel %vm972, %v1028, 0.0
  %v1058 = vadd.f32 %v1056, %v1057
  %v1059 = vsel %vm972, %v1029, 0.0
  %v1060 = vadd.f32 %v1058, %v1059
  %v1061 = vrot.slane %v1060, 4
  %v1062 = vadd.f32 %v1060, %v1061
  %v1063 = vrot.slane %v1062, 2
  %v1064 = vadd.f32 %v1062, %v1063
  %v1065 = vrot.slane %v1064, 1
  %v1066 = vadd.f32 %v1064, %v1065
  %v1067 = vadd.f32 %v1013, %v1066
  %1068 = vst.msk [vmem:[%s4] sm:$0x1] %vm1011, %v1067
  // Predicated region
  $region14: #{_lambda_.26} parent=0 // pred_check
    _
  $region15: #{_lambda_.26} parent=0 // pred_check_branch
    %1070 = sbr.rel (0) target = $region17
  $region16: #{_lambda_.26} parent=0 // pred_region
    _
  $region17: #{_lambda_.26} parent=0 // pred_fallthru
    _
  // Predicated region
  $region18: #{_lambda_.26} parent=0 // pred_check
    _
  $region19: #{_lambda_.26} parent=0 // pred_check_branch
    %1072 = sbr.rel (0) target = $region21
  $region20: #{_lambda_.26} parent=0 // pred_region
    _
  $region21: #{_lambda_.26} parent=0 // pred_fallthru
    _
  // Predicated region
  $region22: #{_lambda_.26} parent=0 // pred_check
    _
  $region23: #{_lambda_.26} parent=0 // pred_check_branch
    %1074 = sbr.rel (0) target = $region25
  $region24: #{_lambda_.26} parent=0 // pred_region
    _
  $region25: #{_lambda_.26} parent=0 // pred_fallthru
    _
  // Predicated region
  $region26: #{_lambda_.26} parent=0 // pred_check
    _
  $region27: #{_lambda_.26} parent=0 // pred_check_branch
    %1076 = sbr.rel (0) target = $region29
  $region28: #{_lambda_.26} parent=0 // pred_region
    _
  $region29: #{_lambda_.26} parent=0 // pred_fallthru
    _
  // Predicated region
  $region30: #{_lambda_.26} parent=0 // pred_check
    _
  $region31: #{_lambda_.26} parent=0 // pred_check_branch
    %1078 = sbr.rel (0) target = $region33
  $region32: #{_lambda_.26} parent=0 // pred_region
    _
  $region33: #{_lambda_.26} parent=0 // pred_fallthru
    _
  // Predicated region
  $region34: #{_lambda_.26} parent=0 // pred_check
    _
  $region35: #{_lambda_.26} parent=0 // pred_check_branch
    %1080 = sbr.rel (0) target = $region37
  $region36: #{_lambda_.26} parent=0 // pred_region
    _
  $region37: #{_lambda_.26} parent=0 // pred_fallthru
    _

</llo_original>
